<compile_context>
chip_gen: v6e
topology: v6e:2x2x1
jax: 0.10.0
libtpu: 0.0.40
codegen_flags: <defaults>
</compile_context>

<pallas_src>
import math
import numpy as np
import jax
import jax.numpy as jnp
from jax.experimental import pallas as pl
from jax.experimental.pallas import tpu as pltpu

# ----------------------------- config ---------------------------------------
CFG = dict(
    ORDERS=[0, 1, 2],     # local-window orders (0 == global)
    IMG_SCALE=4,          # image feature map is IMG_SCALE x IMG_SCALE tokens
    len=20,               # text sequence length
    hidden_size=32,
    ffn_size=64,
    multihead=4,
    dropout=0.0,
    routing='soft',
    pooling='avg',
    orders=3,             # == len(ORDERS)
    BINARIZE=False,
    tau_max=10.0,
    layer=2,
)
NEG_INF = -1e9
LN_EPS = 1e-6

# fixed flattened order of the per-layer (stacked) weight tensors fed to the kernel
W_ORDER = (
    'm1_wq', 'm1_bq', 'm1_wkv', 'm1_bkv', 'm1_wm', 'm1_bm', 'm1_rw1', 'm1_rw2', 'm1_rb2',
    'm2_wq', 'm2_bq', 'm2_wkv', 'm2_bkv', 'm2_wm', 'm2_bm', 'm2_rw1', 'm2_rw2', 'm2_rb2',
    'm3_wqkv', 'm3_bqkv', 'm3_wm', 'm3_bm',
    'f_w1', 'f_b1', 'f_w2', 'f_b2',
    'ln_g', 'ln_b',
)


# ----------------------------- fused model kernel ----------------------------
def _make_model_kernel(S2, Ly, D, H, n_ord):
    hd = D // H
    Lxy = S2 + Ly
    scale = 1.0 / math.sqrt(hd)

    def layer_norm(s, g, b):
        # TRAR LayerNorm: g * (x - mean) / (std + eps) + b, with torch's unbiased std.
        mu = jnp.mean(s, axis=-1, keepdims=True)
        var = jnp.sum((s - mu) ** 2, axis=-1, keepdims=True) / (D - 1)
        inv = 1.0 / (jnp.sqrt(var) + LN_EPS)
        return g * (s - mu) * inv + b

    def soft_route(feat, rw1, rw2, rb2):
        # SoftRoutingBlock(pooling='avg'): token-mean -> Linear(no bias) -> ReLU -> Linear
        # -> softmax.  (tau is unused for soft routing.)
        pooled = jnp.mean(feat, axis=0, keepdims=True)                        # (1, D)
        hmid = jnp.maximum(
            jnp.dot(pooled, rw1, preferred_element_type=jnp.float32), 0.0)    # (1, D//2)
        logits = jnp.dot(hmid, rw2, preferred_element_type=jnp.float32) + rb2 # (1, n_ord)
        logits = logits - jnp.max(logits, axis=-1, keepdims=True)
        e = jnp.exp(logits)
        return e / jnp.sum(e, axis=-1, keepdims=True)                         # (1, n_ord)

    def mh_attention(q, k, v, masks, alphas, wm, bm):
        # q: (Lq, D) projected queries; k, v: (Lk, D) projected keys/values.
        # masks: list of (Lq, Lk) float {0,1} (1 == masked); alphas: (1, n_masks) or None.
        # Returns merge(concat_heads(mix_l alpha_l*softmax_l(QK^T/sqrt)  @ V)) computed as
        # sum_h head_h @ Wm[h*hd:(h+1)*hd]  (+ bm)  -> lane-dense (Lq, D), no head concat.
        keeps = [1.0 - m for m in masks]          # hoisted out of the head loop
        negs = [NEG_INF * m for m in masks]
        out = None
        for h in range(H):
            lo, hi = h * hd, (h + 1) * hd
            qh, kh, vh = q[:, lo:hi], k[:, lo:hi], v[:, lo:hi]
            sc = jax.lax.dot_general(qh, kh, (((1,), (1,)), ((), ())),
                                     preferred_element_type=jnp.float32) * scale
            att = None
            for i in range(len(masks)):           # routing over mask orders (unrolled)
                s = sc * keeps[i] + negs[i]       # exact masked_fill(mask, -1e9)
                s = s - jnp.max(s, axis=-1, keepdims=True)
                p = jnp.exp(s)
                p = p * pl.reciprocal(jnp.sum(p, axis=-1, keepdims=True), approx=True)
                if alphas is not None:
                    p = p * alphas[:, i:i + 1]    # einsum('bl,blcnm->bcnm') mix
                att = p if att is None else att + p
            head = jnp.dot(att, vh, preferred_element_type=jnp.float32)       # (Lq, hd)
            contrib = jnp.dot(head, wm[lo:hi, :], preferred_element_type=jnp.float32)
            out = contrib if out is None else out + contrib
        return out + bm

    def sa_routing(q_in, kv_in, masks, wq, bq, wkv, bkv, wm, bm, rw1, rw2, rb2):
        # SARoutingBlock: routing weights come from the *value* input (== kv_in here).
        alphas = soft_route(kv_in, rw1, rw2, rb2)
        q = jnp.dot(q_in, wq, preferred_element_type=jnp.float32) + bq
        kv = jnp.dot(kv_in, wkv, preferred_element_type=jnp.float32) + bkv    # K | V fused
        return mh_attention(q, kv[:, :D], kv[:, D:], masks, alphas, wm, bm)

    def kernel(x_in, y_in, ymask, xmask, xymask, *rest):
        w = dict(zip(W_ORDER, rest[:len(W_ORDER)]))
        x_out, y_out, xy_s = rest[len(W_ORDER):]

        l = pl.program_id(1)

        # layer 0: bring the input activations into the persistent VMEM scratch
        @pl.when(l == 0)
        def _():
            xy_s[pl.ds(0, S2), :] = x_in[0]
            xy_s[pl.ds(S2, Ly), :] = y_in[0]

        x = xy_s[pl.ds(0, S2), :]        # (S2, D)  image tokens
        y = xy_s[pl.ds(S2, Ly), :]       # (Ly, D)  text tokens

        lng = w['ln_g'][0]               # (4, D)
        lnb = w['ln_b'][0]

        # ---- sub-layer 1: image tokens attend over text tokens (routed) --------------
        d = sa_routing(x, y, [ymask[i, 0] for i in range(n_ord)],
                       w['m1_wq'][0], w['m1_bq'][0], w['m1_wkv'][0], w['m1_bkv'][0],
                       w['m1_wm'][0], w['m1_bm'][0],
                       w['m1_rw1'][0], w['m1_rw2'][0], w['m1_rb2'][0])
        x = layer_norm(x + d, lng[0:1, :], lnb[0:1, :])

        # ---- sub-layer 2: text tokens attend over (updated) image tokens (routed) ----
        d = sa_routing(y, x, [xmask[i, 0] for i in range(n_ord)],
                       w['m2_wq'][0], w['m2_bq'][0], w['m2_wkv'][0], w['m2_bkv'][0],
                       w['m2_wm'][0], w['m2_bm'][0],
                       w['m2_rw1'][0], w['m2_rw2'][0], w['m2_rb2'][0])
        y = layer_norm(y + d, lng[1:2, :], lnb[1:2, :])

        # ---- sub-layer 3: plain MHAtt over the joint sequence [x ; y] -----------------
        xy_s[pl.ds(0, S2), :] = x        # build the concat in the VMEM scratch
        xy_s[pl.ds(S2, Ly), :] = y
        xy = xy_s[...]                   # (Lxy, D)
        qkv = (jnp.dot(xy, w['m3_wqkv'][0], preferred_element_type=jnp.float32)
               + w['m3_bqkv'][0])        # Q | K | V fused, (Lxy, 3D)
        d = mh_attention(qkv[:, :D], qkv[:, D:2 * D], qkv[:, 2 * D:],
                         [xymask[0]], None, w['m3_wm'][0], w['m3_bm'][0])
        xy = layer_norm(xy + d, lng[2:3, :], lnb[2:3, :])

        # ---- sub-layer 4: FFN ----------------------------------------------------------
        h1 = jnp.maximum(
            jnp.dot(xy, w['f_w1'][0], preferred_element_type=jnp.float32) + w['f_b1'][0],
            0.0)
        d = jnp.dot(h1, w['f_w2'][0], preferred_element_type=jnp.float32) + w['f_b2'][0]
        xy = layer_norm(xy + d, lng[3:4, :], lnb[3:4, :])

        # persist activations for the next layer; emit the result on the last layer only
        xy_s[...] = xy

        @pl.when(l == pl.num_programs(1) - 1)
        def _():
            x_out[0] = xy[0:S2, :]
            y_out[0] = xy[S2:, :]

    return kernel


def bi_multitrar_sa_ed(params, y, x, y_masks, x_masks, xy_mask, n_heads):
    """Fused TRAR bi-modal encoder-decoder stack: one pallas_call for all layers.

    params: dict of per-layer-stacked weights (leading dim == n_layers).
    Returns (y_out, x_out) to match the PyTorch module's forward.
    """
    B, S2, D = x.shape
    Ly = y.shape[1]
    Lxy = S2 + Ly
    n_ord = y_masks.shape[0]
    NL = params['m1_wq'].shape[0]

    def layer_spec(name):
        shp = params[name].shape
        nrest = len(shp) - 1
        # stream one layer's slice of the stacked weight per inner grid step
        return pl.BlockSpec((1,) + tuple(shp[1:]),
                            lambda b, l, _n=nrest: (l,) + (0,) * _n)

    kern = _make_model_kernel(S2, Ly, D, n_heads, n_ord)

    x_out, y_out = pl.pallas_call(
        kern,
        grid=(B, NL),                                                  # batch x layers
        in_specs=[
            pl.BlockSpec((1, S2, D), lambda b, l: (b, 0, 0)),          # x (image tokens)
            pl.BlockSpec((1, Ly, D), lambda b, l: (b, 0, 0)),          # y (text tokens)
            pl.BlockSpec((n_ord, 1, S2, Ly), lambda b, l: (0, b, 0, 0)),  # y_masks
            pl.BlockSpec((n_ord, 1, Ly, S2), lambda b, l: (0, b, 0, 0)),  # x_masks
            pl.BlockSpec((1, Lxy, Lxy), lambda b, l: (b, 0, 0)),       # joint mask
        ] + [layer_spec(name) for name in W_ORDER],
        out_specs=[
            pl.BlockSpec((1, S2, D), lambda b, l: (b, 0, 0)),
            pl.BlockSpec((1, Ly, D), lambda b, l: (b, 0, 0)),
        ],
        out_shape=[jax.ShapeDtypeStruct((B, S2, D), jnp.float32),
                   jax.ShapeDtypeStruct((B, Ly, D), jnp.float32)],
        scratch_shapes=[pltpu.VMEM((Lxy, D), jnp.float32)],            # resident activations
        compiler_params=pltpu.CompilerParams(
            dimension_semantics=("parallel", "arbitrary")),            # batch -> 2 TCs on v7x
    )(x, y, y_masks, x_masks, xy_mask, *[params[name] for name in W_ORDER])

    return y_out, x_out


# ----------------------------- host-side mask glue ----------------------------
# TODO(synk): getImgMasks / getTextMasks / getMasks_*_multimodal are pure python/numpy
# glue in the reference; reproduced on the host (no Pallas equivalent needed).
def getImgMasks_np(scale, order):
    masks = []
    for i in range(scale):
        for j in range(scale):
            m = np.ones([scale, scale], dtype=np.float32)
            for xx in range(i - order, i + order + 1):
                for yy in range(j - order, j + order + 1):
                    if 0 <= xx < scale and 0 <= yy < scale:
                        m[xx][yy] = 0
            masks.append(m.reshape(scale * scale))
    return np.array(masks).astype(bool)


def getTextMasks_np(text_len, order):
    masks = []
    for i in range(text_len):
        m = np.ones([text_len], dtype=np.float32)
        for xx in range(i - order, i + order + 1):
            if 0 <= xx < text_len:
                m[xx] = 0
        masks.append(m)
    return np.array(masks).astype(bool)


def getMasks_img_multimodal_np(x_mask, cfg):
    out = []
    S2 = cfg['IMG_SCALE'] ** 2
    L = cfg['len']
    for order in cfg['ORDERS']:
        if order == 0:
            out.append(x_mask)                                    # (B,1,1,S2)
        else:
            mi = getImgMasks_np(cfg['IMG_SCALE'], order)          # (S2, S2)
            parts = [mi] * (L // S2) + [mi[:L % S2, :]]
            m = np.concatenate(parts, axis=0)                     # (L, S2)
            out.append(np.logical_or(x_mask, m))                  # (B,1,L,S2)
    return out


def getMasks_txt_multimodal_np(y_mask, cfg):
    out = []
    S2 = cfg['IMG_SCALE'] ** 2
    L = cfg['len']
    for order in cfg['ORDERS']:
        if order == 0:
            out.append(y_mask)                                    # (B,1,1,L)
        else:
            mt = getTextMasks_np(L, order)                        # (L, L)
            n_full = L // S2
            splits = np.split(mt[:n_full * S2], n_full, axis=0)   # n_full x (S2, L)
            m = np.concatenate([mt[n_full * S2:],
                                np.zeros((S2 - L % S2, L), dtype=bool)], axis=0)  # (S2, L)
            for s in splits:
                m = np.logical_or(s, m)
            out.append(np.logical_or(y_mask, m))                  # (B,1,S2,L)
    return out


# ----------------------------- deterministic params ---------------------------
def init_params(key, D, FF, n_ord, n_layers):
    def lin(k, din, dout):
        kw, kb = jax.random.split(k)
        return (jax.random.normal(kw, (din, dout), jnp.float32) * 0.05,
                jax.random.normal(kb, (1, dout), jnp.float32) * 0.05)

    def sa_block(k):
        kv, kk, kq, km, k1, k2 = jax.random.split(k, 6)
        vw, vb = lin(kv, D, D)
        kw_, kb_ = lin(kk, D, D)
        qw, qb = lin(kq, D, D)
        mw, mb = lin(km, D, D)
        rw1 = jax.random.normal(k1, (D, D // 2), jnp.float32) * 0.05   # Linear(no bias)
        rw2, rb2 = lin(k2, D // 2, n_ord)
        return dict(wq=qw, bq=qb,
                    wkv=jnp.concatenate([kw_, vw], axis=1),           # K | V fused
                    bkv=jnp.concatenate([kb_, vb], axis=1),
                    wm=mw, bm=mb, rw1=rw1, rw2=rw2, rb2=rb2)

    def mh_block(k):
        kv, kk, kq, km = jax.random.split(k, 4)
        vw, vb = lin(kv, D, D)
        kw_, kb_ = lin(kk, D, D)
        qw, qb = lin(kq, D, D)
        mw, mb = lin(km, D, D)
        return dict(wqkv=jnp.concatenate([qw, kw_, vw], axis=1),      # Q | K | V fused
                    bqkv=jnp.concatenate([qb, kb_, vb], axis=1),
                    wm=mw, bm=mb)

    layers = []
    for lk in jax.random.split(key, n_layers):
        k1, k2, k3, k4, k5 = jax.random.split(lk, 5)
        m1, m2, m3 = sa_block(k1), sa_block(k2), mh_block(k3)
        fw1, fb1 = lin(k4, D, FF)
        fw2, fb2 = lin(k5, FF, D)
        layers.append(dict(
            m1_wq=m1['wq'], m1_bq=m1['bq'], m1_wkv=m1['wkv'], m1_bkv=m1['bkv'],
            m1_wm=m1['wm'], m1_bm=m1['bm'],
            m1_rw1=m1['rw1'], m1_rw2=m1['rw2'], m1_rb2=m1['rb2'],
            m2_wq=m2['wq'], m2_bq=m2['bq'], m2_wkv=m2['wkv'], m2_bkv=m2['bkv'],
            m2_wm=m2['wm'], m2_bm=m2['bm'],
            m2_rw1=m2['rw1'], m2_rw2=m2['rw2'], m2_rb2=m2['rb2'],
            m3_wqkv=m3['wqkv'], m3_bqkv=m3['bqkv'], m3_wm=m3['wm'], m3_bm=m3['bm'],
            f_w1=fw1, f_b1=fb1, f_w2=fw2, f_b2=fb2,
            ln_g=jnp.ones((4, D), jnp.float32),     # norm1..norm4 gammas
            ln_b=jnp.zeros((4, D), jnp.float32),    # norm1..norm4 betas
        ))
    # stack along a leading layer axis so one pallas_call can stream per-layer blocks
    return {name: jnp.stack([lyr[name] for lyr in layers], axis=0) for name in W_ORDER}


# ----------------------------- main -------------------------------------------
if __name__ == "__main__":
    B = 2
    S2 = CFG['IMG_SCALE'] ** 2          # 16 image tokens
    Ly = CFG['len']                     # 20 text tokens
    D = CFG['hidden_size']
    H = CFG['multihead']
    Lxy = S2 + Ly

    key = jax.random.PRNGKey(0)
    kx, ky, kp = jax.random.split(key, 3)
    x = jax.random.normal(kx, (B, S2, D), jnp.float32)   # image grid features
    y = jax.random.normal(ky, (B, Ly, D), jnp.float32)   # text features

    # padding masks (True == padded / masked), PyTorch byte-mask convention
    x_mask_np = np.zeros((B, 1, 1, S2), dtype=bool)
    y_mask_np = np.zeros((B, 1, 1, Ly), dtype=bool)
    y_mask_np[0, ..., Ly - 2:] = True
    y_mask_np[1, ..., Ly - 4:] = True

    x_masks_list = getMasks_img_multimodal_np(x_mask_np, CFG)
    y_masks_list = getMasks_txt_multimodal_np(y_mask_np, CFG)

    # dense float masks for the kernel: (n_masks, B, Lq, Lk)
    y_masks = np.stack([np.broadcast_to(m, (B, 1, S2, Ly))[:, 0] for m in y_masks_list],
                       axis=0).astype(np.float32)                    # q = image, k = text
    x_masks = np.stack([np.broadcast_to(m, (B, 1, Ly, S2))[:, 0] for m in x_masks_list],
                       axis=0).astype(np.float32)                    # q = text,  k = image
    xy_mask_np = np.concatenate([x_mask_np, y_mask_np], axis=-1)     # (B,1,1,Lxy)
    xy_mask = np.broadcast_to(xy_mask_np, (B, 1, Lxy, Lxy))[:, 0].astype(np.float32)

    params = init_params(kp, D, CFG['ffn_size'], CFG['orders'], CFG['layer'])

    fwd = jax.jit(lambda prm, yy, xx, ym, xm, xym:
                  bi_multitrar_sa_ed(prm, yy, xx, ym, xm, xym, H))
    y_out, x_out = fwd(params, y, x,
                       jnp.asarray(y_masks), jnp.asarray(x_masks), jnp.asarray(xy_mask))
    jax.block_until_ready((y_out, x_out))

    assert y_out.shape == (B, Ly, D) and x_out.shape == (B, S2, D)
    assert np.isfinite(np.asarray(y_out)).all() and np.isfinite(np.asarray(x_out)).all()
    print("KERNEL_OK")
</pallas_src>

<mosaic_0001>
module attributes {stable_mosaic.version = 11 : i64} {
  func.func @kernel(%arg0: i32, %arg1: i32, %arg2: memref<1x16x32xf32, #tpu.memory_space<vmem>>, %arg3: memref<1x20x32xf32, #tpu.memory_space<vmem>>, %arg4: memref<3x1x16x20xf32, #tpu.memory_space<vmem>>, %arg5: memref<3x1x20x16xf32, #tpu.memory_space<vmem>>, %arg6: memref<1x36x36xf32, #tpu.memory_space<vmem>>, %arg7: memref<1x32x32xf32, #tpu.memory_space<vmem>>, %arg8: memref<1x1x32xf32, #tpu.memory_space<vmem>>, %arg9: memref<1x32x64xf32, #tpu.memory_space<vmem>>, %arg10: memref<1x1x64xf32, #tpu.memory_space<vmem>>, %arg11: memref<1x32x32xf32, #tpu.memory_space<vmem>>, %arg12: memref<1x1x32xf32, #tpu.memory_space<vmem>>, %arg13: memref<1x32x16xf32, #tpu.memory_space<vmem>>, %arg14: memref<1x16x3xf32, #tpu.memory_space<vmem>>, %arg15: memref<1x1x3xf32, #tpu.memory_space<vmem>>, %arg16: memref<1x32x32xf32, #tpu.memory_space<vmem>>, %arg17: memref<1x1x32xf32, #tpu.memory_space<vmem>>, %arg18: memref<1x32x64xf32, #tpu.memory_space<vmem>>, %arg19: memref<1x1x64xf32, #tpu.memory_space<vmem>>, %arg20: memref<1x32x32xf32, #tpu.memory_space<vmem>>, %arg21: memref<1x1x32xf32, #tpu.memory_space<vmem>>, %arg22: memref<1x32x16xf32, #tpu.memory_space<vmem>>, %arg23: memref<1x16x3xf32, #tpu.memory_space<vmem>>, %arg24: memref<1x1x3xf32, #tpu.memory_space<vmem>>, %arg25: memref<1x32x96xf32, #tpu.memory_space<vmem>>, %arg26: memref<1x1x96xf32, #tpu.memory_space<vmem>>, %arg27: memref<1x32x32xf32, #tpu.memory_space<vmem>>, %arg28: memref<1x1x32xf32, #tpu.memory_space<vmem>>, %arg29: memref<1x32x64xf32, #tpu.memory_space<vmem>>, %arg30: memref<1x1x64xf32, #tpu.memory_space<vmem>>, %arg31: memref<1x64x32xf32, #tpu.memory_space<vmem>>, %arg32: memref<1x1x32xf32, #tpu.memory_space<vmem>>, %arg33: memref<1x4x32xf32, #tpu.memory_space<vmem>>, %arg34: memref<1x4x32xf32, #tpu.memory_space<vmem>>, %arg35: memref<1x16x32xf32, #tpu.memory_space<vmem>>, %arg36: memref<1x20x32xf32, #tpu.memory_space<vmem>>, %arg37: memref<36x32xf32, #tpu.memory_space<vmem>>) attributes {dimension_semantics = [#tpu.dimension_semantics<parallel>, #tpu.dimension_semantics<arbitrary>], iteration_bounds = array<i64: 2, 2>, scalar_prefetch = 0 : i64, scratch_operands = 1 : i64, tpu.core_type = #tpu.core_type<tc>, window_params = [{transform_indices = @transform_0, window_bounds = array<i64: 1, 16, 32>}, {transform_indices = @transform_1, window_bounds = array<i64: 1, 20, 32>}, {transform_indices = @transform_2, window_bounds = array<i64: 3, 1, 16, 20>}, {transform_indices = @transform_3, window_bounds = array<i64: 3, 1, 20, 16>}, {transform_indices = @transform_4, window_bounds = array<i64: 1, 36, 36>}, {transform_indices = @transform_5, window_bounds = array<i64: 1, 32, 32>}, {transform_indices = @transform_6, window_bounds = array<i64: 1, 1, 32>}, {transform_indices = @transform_7, window_bounds = array<i64: 1, 32, 64>}, {transform_indices = @transform_8, window_bounds = array<i64: 1, 1, 64>}, {transform_indices = @transform_9, window_bounds = array<i64: 1, 32, 32>}, {transform_indices = @transform_10, window_bounds = array<i64: 1, 1, 32>}, {transform_indices = @transform_11, window_bounds = array<i64: 1, 32, 16>}, {transform_indices = @transform_12, window_bounds = array<i64: 1, 16, 3>}, {transform_indices = @transform_13, window_bounds = array<i64: 1, 1, 3>}, {transform_indices = @transform_14, window_bounds = array<i64: 1, 32, 32>}, {transform_indices = @transform_15, window_bounds = array<i64: 1, 1, 32>}, {transform_indices = @transform_16, window_bounds = array<i64: 1, 32, 64>}, {transform_indices = @transform_17, window_bounds = array<i64: 1, 1, 64>}, {transform_indices = @transform_18, window_bounds = array<i64: 1, 32, 32>}, {transform_indices = @transform_19, window_bounds = array<i64: 1, 1, 32>}, {transform_indices = @transform_20, window_bounds = array<i64: 1, 32, 16>}, {transform_indices = @transform_21, window_bounds = array<i64: 1, 16, 3>}, {transform_indices = @transform_22, window_bounds = array<i64: 1, 1, 3>}, {transform_indices = @transform_23, window_bounds = array<i64: 1, 32, 96>}, {transform_indices = @transform_24, window_bounds = array<i64: 1, 1, 96>}, {transform_indices = @transform_25, window_bounds = array<i64: 1, 32, 32>}, {transform_indices = @transform_26, window_bounds = array<i64: 1, 1, 32>}, {transform_indices = @transform_27, window_bounds = array<i64: 1, 32, 64>}, {transform_indices = @transform_28, window_bounds = array<i64: 1, 1, 64>}, {transform_indices = @transform_29, window_bounds = array<i64: 1, 64, 32>}, {transform_indices = @transform_30, window_bounds = array<i64: 1, 1, 32>}, {transform_indices = @transform_31, window_bounds = array<i64: 1, 4, 32>}, {transform_indices = @transform_32, window_bounds = array<i64: 1, 4, 32>}, {transform_indices = @transform_33, window_bounds = array<i64: 1, 16, 32>}, {transform_indices = @transform_34, window_bounds = array<i64: 1, 20, 32>}]} {
    %c0_i32 = arith.constant 0 : i32
    %0 = arith.cmpi eq, %arg1, %c0_i32 : i32
    %1 = arith.extui %0 : i1 to i32
    %c0_i32_0 = arith.constant 0 : i32
    %2 = arith.cmpi ne, %1, %c0_i32_0 : i32
    scf.if %2 {
      %c0_284 = arith.constant 0 : index
      %c0_285 = arith.constant 0 : index
      %c0_286 = arith.constant 0 : index
      %831 = vector.load %arg2[%c0_284, %c0_285, %c0_286] : memref<1x16x32xf32, #tpu.memory_space<vmem>>, vector<1x16x32xf32>
      %832 = vector.shape_cast %831 : vector<1x16x32xf32> to vector<16x32xf32>
      %c0_287 = arith.constant 0 : index
      %c0_288 = arith.constant 0 : index
      %833 = vector.load %arg37[%c0_287, %c0_288] : memref<36x32xf32, #tpu.memory_space<vmem>>, vector<16x32xf32>
      tpu.vector_store %arg37[%c0_287, %c0_288], %832 {strides = array<i32>} : memref<36x32xf32, #tpu.memory_space<vmem>>, vector<16x32xf32>,
      %c0_289 = arith.constant 0 : index
      %c0_290 = arith.constant 0 : index
      %c0_291 = arith.constant 0 : index
      %834 = vector.load %arg3[%c0_289, %c0_290, %c0_291] : memref<1x20x32xf32, #tpu.memory_space<vmem>>, vector<1x20x32xf32>
      %835 = vector.shape_cast %834 : vector<1x20x32xf32> to vector<20x32xf32>
      %c16_292 = arith.constant 16 : index
      %c0_293 = arith.constant 0 : index
      %836 = vector.load %arg37[%c16_292, %c0_293] : memref<36x32xf32, #tpu.memory_space<vmem>>, vector<20x32xf32>
      tpu.vector_store %arg37[%c16_292, %c0_293], %835 {strides = array<i32>} : memref<36x32xf32, #tpu.memory_space<vmem>>, vector<20x32xf32>,
    } else {
    }
    %c0 = arith.constant 0 : index
    %c0_1 = arith.constant 0 : index
    %3 = vector.load %arg37[%c0, %c0_1] : memref<36x32xf32, #tpu.memory_space<vmem>>, vector<16x32xf32>
    %c16 = arith.constant 16 : index
    %c0_2 = arith.constant 0 : index
    %4 = vector.load %arg37[%c16, %c0_2] : memref<36x32xf32, #tpu.memory_space<vmem>>, vector<20x32xf32>
    %c0_3 = arith.constant 0 : index
    %c0_4 = arith.constant 0 : index
    %c0_5 = arith.constant 0 : index
    %5 = vector.load %arg33[%c0_3, %c0_4, %c0_5] : memref<1x4x32xf32, #tpu.memory_space<vmem>>, vector<1x4x32xf32>
    %6 = vector.shape_cast %5 : vector<1x4x32xf32> to vector<4x32xf32>
    %c0_6 = arith.constant 0 : index
    %c0_7 = arith.constant 0 : index
    %c0_8 = arith.constant 0 : index
    %7 = vector.load %arg34[%c0_6, %c0_7, %c0_8] : memref<1x4x32xf32, #tpu.memory_space<vmem>>, vector<1x4x32xf32>
    %8 = vector.shape_cast %7 : vector<1x4x32xf32> to vector<4x32xf32>
    %c0_9 = arith.constant 0 : index
    %c0_10 = arith.constant 0 : index
    %c0_11 = arith.constant 0 : index
    %c0_12 = arith.constant 0 : index
    %9 = vector.load %arg4[%c0_9, %c0_10, %c0_11, %c0_12] : memref<3x1x16x20xf32, #tpu.memory_space<vmem>>, vector<1x1x16x20xf32>
    %10 = vector.shape_cast %9 : vector<1x1x16x20xf32> to vector<16x20xf32>
    %c1 = arith.constant 1 : index
    %c0_13 = arith.constant 0 : index
    %c0_14 = arith.constant 0 : index
    %c0_15 = arith.constant 0 : index
    %11 = vector.load %arg4[%c1, %c0_13, %c0_14, %c0_15] : memref<3x1x16x20xf32, #tpu.memory_space<vmem>>, vector<1x1x16x20xf32>
    %12 = vector.shape_cast %11 : vector<1x1x16x20xf32> to vector<16x20xf32>
    %c2 = arith.constant 2 : index
    %c0_16 = arith.constant 0 : index
    %c0_17 = arith.constant 0 : index
    %c0_18 = arith.constant 0 : index
    %13 = vector.load %arg4[%c2, %c0_16, %c0_17, %c0_18] : memref<3x1x16x20xf32, #tpu.memory_space<vmem>>, vector<1x1x16x20xf32>
    %14 = vector.shape_cast %13 : vector<1x1x16x20xf32> to vector<16x20xf32>
    %c0_19 = arith.constant 0 : index
    %c0_20 = arith.constant 0 : index
    %c0_21 = arith.constant 0 : index
    %15 = vector.load %arg7[%c0_19, %c0_20, %c0_21] : memref<1x32x32xf32, #tpu.memory_space<vmem>>, vector<1x32x32xf32>
    %16 = vector.shape_cast %15 : vector<1x32x32xf32> to vector<32x32xf32>
    %c0_22 = arith.constant 0 : index
    %c0_23 = arith.constant 0 : index
    %c0_24 = arith.constant 0 : index
    %17 = vector.load %arg8[%c0_22, %c0_23, %c0_24] : memref<1x1x32xf32, #tpu.memory_space<vmem>>, vector<1x1x32xf32>
    %18 = vector.shape_cast %17 : vector<1x1x32xf32> to vector<1x32xf32>
    %c0_25 = arith.constant 0 : index
    %c0_26 = arith.constant 0 : index
    %c0_27 = arith.constant 0 : index
    %19 = vector.load %arg9[%c0_25, %c0_26, %c0_27] : memref<1x32x64xf32, #tpu.memory_space<vmem>>, vector<1x32x64xf32>
    %20 = vector.shape_cast %19 : vector<1x32x64xf32> to vector<32x64xf32>
    %c0_28 = arith.constant 0 : index
    %c0_29 = arith.constant 0 : index
    %c0_30 = arith.constant 0 : index
    %21 = vector.load %arg10[%c0_28, %c0_29, %c0_30] : memref<1x1x64xf32, #tpu.memory_space<vmem>>, vector<1x1x64xf32>
    %22 = vector.shape_cast %21 : vector<1x1x64xf32> to vector<1x64xf32>
    %c0_31 = arith.constant 0 : index
    %c0_32 = arith.constant 0 : index
    %c0_33 = arith.constant 0 : index
    %23 = vector.load %arg11[%c0_31, %c0_32, %c0_33] : memref<1x32x32xf32, #tpu.memory_space<vmem>>, vector<1x32x32xf32>
    %24 = vector.shape_cast %23 : vector<1x32x32xf32> to vector<32x32xf32>
    %c0_34 = arith.constant 0 : index
    %c0_35 = arith.constant 0 : index
    %c0_36 = arith.constant 0 : index
    %25 = vector.load %arg12[%c0_34, %c0_35, %c0_36] : memref<1x1x32xf32, #tpu.memory_space<vmem>>, vector<1x1x32xf32>
    %26 = vector.shape_cast %25 : vector<1x1x32xf32> to vector<1x32xf32>
    %c0_37 = arith.constant 0 : index
    %c0_38 = arith.constant 0 : index
    %c0_39 = arith.constant 0 : index
    %27 = vector.load %arg13[%c0_37, %c0_38, %c0_39] : memref<1x32x16xf32, #tpu.memory_space<vmem>>, vector<1x32x16xf32>
    %28 = vector.shape_cast %27 : vector<1x32x16xf32> to vector<32x16xf32>
    %c0_40 = arith.constant 0 : index
    %c0_41 = arith.constant 0 : index
    %c0_42 = arith.constant 0 : index
    %29 = vector.load %arg14[%c0_40, %c0_41, %c0_42] : memref<1x16x3xf32, #tpu.memory_space<vmem>>, vector<1x16x3xf32>
    %30 = vector.shape_cast %29 : vector<1x16x3xf32> to vector<16x3xf32>
    %c0_43 = arith.constant 0 : index
    %c0_44 = arith.constant 0 : index
    %c0_45 = arith.constant 0 : index
    %31 = vector.load %arg15[%c0_43, %c0_44, %c0_45] : memref<1x1x3xf32, #tpu.memory_space<vmem>>, vector<1x1x3xf32>
    %32 = vector.shape_cast %31 : vector<1x1x3xf32> to vector<1x3xf32>
    %cst = arith.constant dense<0.000000e+00> : vector<32xf32>
    %33 = vector.multi_reduction <add>, %4, %cst [0] : vector<20x32xf32> to vector<32xf32>
    %34 = vector.shape_cast %33 : vector<32xf32> to vector<1x32xf32>
    %cst_46 = arith.constant 2.000000e+01 : f32
    %35 = vector.broadcast %cst_46 : f32 to vector<1x32xf32>
    %36 = arith.divf %34, %35 : vector<1x32xf32>
    %cst_47 = arith.constant dense<0.000000e+00> : vector<1x16xf32>
    %37 = tpu.matmul %36, %28, %cst_47 {dimension_numbers = #tpu.dot_dimension_numbers<[1], [0], [0], [1], [0, 0, 1, 1], [], []>} : vector<1x32xf32>, vector<32x16xf32>, vector<1x16xf32> -> vector<1x16xf32>
    %cst_48 = arith.constant 0.000000e+00 : f32
    %38 = vector.broadcast %cst_48 : f32 to vector<1x16xf32>
    %39 = arith.maximumf %37, %38 : vector<1x16xf32>
    %cst_49 = arith.constant dense<0.000000e+00> : vector<1x3xf32>
    %40 = tpu.matmul %39, %30, %cst_49 {dimension_numbers = #tpu.dot_dimension_numbers<[1], [0], [0], [1], [0, 0, 1, 1], [], []>} : vector<1x16xf32>, vector<16x3xf32>, vector<1x3xf32> -> vector<1x3xf32>
    %41 = arith.addf %40, %32 : vector<1x3xf32>
    %cst_50 = arith.constant dense<0xFF800000> : vector<1xf32>
    %42 = vector.multi_reduction <maximumf>, %41, %cst_50 [1] : vector<1x3xf32> to vector<1xf32>
    %43 = vector.shape_cast %42 : vector<1xf32> to vector<1x1xf32>
    %44 = vector.broadcast %43 : vector<1x1xf32> to vector<1x3xf32>
    %45 = arith.subf %41, %44 : vector<1x3xf32>
    %46 = math.exp %45 : vector<1x3xf32>
    %cst_51 = arith.constant dense<0.000000e+00> : vector<1xf32>
    %47 = vector.multi_reduction <add>, %46, %cst_51 [1] : vector<1x3xf32> to vector<1xf32>
    %48 = vector.shape_cast %47 : vector<1xf32> to vector<1x1xf32>
    %49 = vector.broadcast %48 : vector<1x1xf32> to vector<1x3xf32>
    %50 = arith.divf %46, %49 : vector<1x3xf32>
    %cst_52 = arith.constant dense<0.000000e+00> : vector<16x32xf32>
    %51 = tpu.matmul %3, %16, %cst_52 {dimension_numbers = #tpu.dot_dimension_numbers<[1], [0], [0], [1], [0, 0, 1, 1], [], []>} : vector<16x32xf32>, vector<32x32xf32>, vector<16x32xf32> -> vector<16x32xf32>
    %52 = vector.broadcast %18 : vector<1x32xf32> to vector<16x32xf32>
    %53 = arith.addf %51, %52 : vector<16x32xf32>
    %cst_53 = arith.constant dense<0.000000e+00> : vector<20x64xf32>
    %54 = tpu.matmul %4, %20, %cst_53 {dimension_numbers = #tpu.dot_dimension_numbers<[1], [0], [0], [1], [0, 0, 1, 1], [], []>} : vector<20x32xf32>, vector<32x64xf32>, vector<20x64xf32> -> vector<20x64xf32>
    %55 = vector.broadcast %22 : vector<1x64xf32> to vector<20x64xf32>
    %56 = arith.addf %54, %55 : vector<20x64xf32>
    %57 = vector.extract_strided_slice %56 {offsets = [0, 0], sizes = [20, 32], strides = [1, 1]} : vector<20x64xf32> to vector<20x32xf32>
    %58 = vector.extract_strided_slice %56 {offsets = [0, 32], sizes = [20, 32], strides = [1, 1]} : vector<20x64xf32> to vector<20x32xf32>
    %cst_54 = arith.constant 1.000000e+00 : f32
    %59 = vector.broadcast %cst_54 : f32 to vector<16x20xf32>
    %60 = arith.subf %59, %10 : vector<16x20xf32>
    %cst_55 = arith.constant 1.000000e+00 : f32
    %61 = vector.broadcast %cst_55 : f32 to vector<16x20xf32>
    %62 = arith.subf %61, %12 : vector<16x20xf32>
    %cst_56 = arith.constant 1.000000e+00 : f32
    %63 = vector.broadcast %cst_56 : f32 to vector<16x20xf32>
    %64 = arith.subf %63, %14 : vector<16x20xf32>
    %cst_57 = arith.constant -1.000000e+09 : f32
    %65 = vector.broadcast %cst_57 : f32 to vector<16x20xf32>
    %66 = arith.mulf %65, %10 : vector<16x20xf32>
    %cst_58 = arith.constant -1.000000e+09 : f32
    %67 = vector.broadcast %cst_58 : f32 to vector<16x20xf32>
    %68 = arith.mulf %67, %12 : vector<16x20xf32>
    %cst_59 = arith.constant -1.000000e+09 : f32
    %69 = vector.broadcast %cst_59 : f32 to vector<16x20xf32>
    %70 = arith.mulf %69, %14 : vector<16x20xf32>
    %71 = vector.extract_strided_slice %53 {offsets = [0, 0], sizes = [16, 8], strides = [1, 1]} : vector<16x32xf32> to vector<16x8xf32>
    %72 = vector.extract_strided_slice %57 {offsets = [0, 0], sizes = [20, 8], strides = [1, 1]} : vector<20x32xf32> to vector<20x8xf32>
    %73 = vector.extract_strided_slice %58 {offsets = [0, 0], sizes = [20, 8], strides = [1, 1]} : vector<20x32xf32> to vector<20x8xf32>
    %cst_60 = arith.constant dense<0.000000e+00> : vector<16x20xf32>
    %74 = tpu.matmul %71, %72, %cst_60 {dimension_numbers = #tpu.dot_dimension_numbers<[1], [1], [0], [0], [0, 0, 1, 0], [], []>} : vector<16x8xf32>, vector<20x8xf32>, vector<16x20xf32> -> vector<16x20xf32>
    %cst_61 = arith.constant 0.353553385 : f32
    %75 = vector.broadcast %cst_61 : f32 to vector<16x20xf32>
    %76 = arith.mulf %74, %75 : vector<16x20xf32>
    %77 = arith.mulf %76, %60 : vector<16x20xf32>
    %78 = arith.addf %77, %66 : vector<16x20xf32>
    %cst_62 = arith.constant dense<0xFF800000> : vector<16xf32>
    %79 = vector.multi_reduction <maximumf>, %78, %cst_62 [1] : vector<16x20xf32> to vector<16xf32>
    %80 = vector.shape_cast %79 : vector<16xf32> to vector<16x1xf32>
    %81 = vector.broadcast %80 : vector<16x1xf32> to vector<16x20xf32>
    %82 = arith.subf %78, %81 : vector<16x20xf32>
    %83 = math.exp %82 : vector<16x20xf32>
    %cst_63 = arith.constant dense<0.000000e+00> : vector<16xf32>
    %84 = vector.multi_reduction <add>, %83, %cst_63 [1] : vector<16x20xf32> to vector<16xf32>
    %85 = vector.shape_cast %84 : vector<16xf32> to vector<16x1xf32>
    %86 = tpu.reciprocal %85 {approx = true} : vector<16x1xf32> -> vector<16x1xf32>
    %87 = vector.broadcast %86 : vector<16x1xf32> to vector<16x20xf32>
    %88 = arith.mulf %83, %87 : vector<16x20xf32>
    %89 = vector.extract_strided_slice %50 {offsets = [0, 0], sizes = [1, 1], strides = [1, 1]} : vector<1x3xf32> to vector<1x1xf32>
    %90 = vector.broadcast %89 : vector<1x1xf32> to vector<16x20xf32>
    %91 = arith.mulf %88, %90 : vector<16x20xf32>
    %92 = arith.mulf %76, %62 : vector<16x20xf32>
    %93 = arith.addf %92, %68 : vector<16x20xf32>
    %cst_64 = arith.constant dense<0xFF800000> : vector<16xf32>
    %94 = vector.multi_reduction <maximumf>, %93, %cst_64 [1] : vector<16x20xf32> to vector<16xf32>
    %95 = vector.shape_cast %94 : vector<16xf32> to vector<16x1xf32>
    %96 = vector.broadcast %95 : vector<16x1xf32> to vector<16x20xf32>
    %97 = arith.subf %93, %96 : vector<16x20xf32>
    %98 = math.exp %97 : vector<16x20xf32>
    %cst_65 = arith.constant dense<0.000000e+00> : vector<16xf32>
    %99 = vector.multi_reduction <add>, %98, %cst_65 [1] : vector<16x20xf32> to vector<16xf32>
    %100 = vector.shape_cast %99 : vector<16xf32> to vector<16x1xf32>
    %101 = tpu.reciprocal %100 {approx = true} : vector<16x1xf32> -> vector<16x1xf32>
    %102 = vector.broadcast %101 : vector<16x1xf32> to vector<16x20xf32>
    %103 = arith.mulf %98, %102 : vector<16x20xf32>
    %104 = vector.extract_strided_slice %50 {offsets = [0, 1], sizes = [1, 1], strides = [1, 1]} : vector<1x3xf32> to vector<1x1xf32>
    %105 = vector.broadcast %104 : vector<1x1xf32> to vector<16x20xf32>
    %106 = arith.mulf %103, %105 : vector<16x20xf32>
    %107 = arith.addf %91, %106 : vector<16x20xf32>
    %108 = arith.mulf %76, %64 : vector<16x20xf32>
    %109 = arith.addf %108, %70 : vector<16x20xf32>
    %cst_66 = arith.constant dense<0xFF800000> : vector<16xf32>
    %110 = vector.multi_reduction <maximumf>, %109, %cst_66 [1] : vector<16x20xf32> to vector<16xf32>
    %111 = vector.shape_cast %110 : vector<16xf32> to vector<16x1xf32>
    %112 = vector.broadcast %111 : vector<16x1xf32> to vector<16x20xf32>
    %113 = arith.subf %109, %112 : vector<16x20xf32>
    %114 = math.exp %113 : vector<16x20xf32>
    %cst_67 = arith.constant dense<0.000000e+00> : vector<16xf32>
    %115 = vector.multi_reduction <add>, %114, %cst_67 [1] : vector<16x20xf32> to vector<16xf32>
    %116 = vector.shape_cast %115 : vector<16xf32> to vector<16x1xf32>
    %117 = tpu.reciprocal %116 {approx = true} : vector<16x1xf32> -> vector<16x1xf32>
    %118 = vector.broadcast %117 : vector<16x1xf32> to vector<16x20xf32>
    %119 = arith.mulf %114, %118 : vector<16x20xf32>
    %120 = vector.extract_strided_slice %50 {offsets = [0, 2], sizes = [1, 1], strides = [1, 1]} : vector<1x3xf32> to vector<1x1xf32>
    %121 = vector.broadcast %120 : vector<1x1xf32> to vector<16x20xf32>
    %122 = arith.mulf %119, %121 : vector<16x20xf32>
    %123 = arith.addf %107, %122 : vector<16x20xf32>
    %cst_68 = arith.constant dense<0.000000e+00> : vector<16x8xf32>
    %124 = tpu.matmul %123, %73, %cst_68 {dimension_numbers = #tpu.dot_dimension_numbers<[1], [0], [0], [1], [0, 0, 1, 1], [], []>} : vector<16x20xf32>, vector<20x8xf32>, vector<16x8xf32> -> vector<16x8xf32>
    %125 = vector.extract_strided_slice %24 {offsets = [0, 0], sizes = [8, 32], strides = [1, 1]} : vector<32x32xf32> to vector<8x32xf32>
    %cst_69 = arith.constant dense<0.000000e+00> : vector<16x32xf32>
    %126 = tpu.matmul %124, %125, %cst_69 {dimension_numbers = #tpu.dot_dimension_numbers<[1], [0], [0], [1], [0, 0, 1, 1], [], []>} : vector<16x8xf32>, vector<8x32xf32>, vector<16x32xf32> -> vector<16x32xf32>
    %127 = vector.extract_strided_slice %53 {offsets = [0, 8], sizes = [16, 8], strides = [1, 1]} : vector<16x32xf32> to vector<16x8xf32>
    %128 = vector.extract_strided_slice %57 {offsets = [0, 8], sizes = [20, 8], strides = [1, 1]} : vector<20x32xf32> to vector<20x8xf32>
    %129 = vector.extract_strided_slice %58 {offsets = [0, 8], sizes = [20, 8], strides = [1, 1]} : vector<20x32xf32> to vector<20x8xf32>
    %cst_70 = arith.constant dense<0.000000e+00> : vector<16x20xf32>
    %130 = tpu.matmul %127, %128, %cst_70 {dimension_numbers = #tpu.dot_dimension_numbers<[1], [1], [0], [0], [0, 0, 1, 0], [], []>} : vector<16x8xf32>, vector<20x8xf32>, vector<16x20xf32> -> vector<16x20xf32>
    %cst_71 = arith.constant 0.353553385 : f32
    %131 = vector.broadcast %cst_71 : f32 to vector<16x20xf32>
    %132 = arith.mulf %130, %131 : vector<16x20xf32>
    %133 = arith.mulf %132, %60 : vector<16x20xf32>
    %134 = arith.addf %133, %66 : vector<16x20xf32>
    %cst_72 = arith.constant dense<0xFF800000> : vector<16xf32>
    %135 = vector.multi_reduction <maximumf>, %134, %cst_72 [1] : vector<16x20xf32> to vector<16xf32>
    %136 = vector.shape_cast %135 : vector<16xf32> to vector<16x1xf32>
    %137 = vector.broadcast %136 : vector<16x1xf32> to vector<16x20xf32>
    %138 = arith.subf %134, %137 : vector<16x20xf32>
    %139 = math.exp %138 : vector<16x20xf32>
    %cst_73 = arith.constant dense<0.000000e+00> : vector<16xf32>
    %140 = vector.multi_reduction <add>, %139, %cst_73 [1] : vector<16x20xf32> to vector<16xf32>
    %141 = vector.shape_cast %140 : vector<16xf32> to vector<16x1xf32>
    %142 = tpu.reciprocal %141 {approx = true} : vector<16x1xf32> -> vector<16x1xf32>
    %143 = vector.broadcast %142 : vector<16x1xf32> to vector<16x20xf32>
    %144 = arith.mulf %139, %143 : vector<16x20xf32>
    %145 = vector.extract_strided_slice %50 {offsets = [0, 0], sizes = [1, 1], strides = [1, 1]} : vector<1x3xf32> to vector<1x1xf32>
    %146 = vector.broadcast %145 : vector<1x1xf32> to vector<16x20xf32>
    %147 = arith.mulf %144, %146 : vector<16x20xf32>
    %148 = arith.mulf %132, %62 : vector<16x20xf32>
    %149 = arith.addf %148, %68 : vector<16x20xf32>
    %cst_74 = arith.constant dense<0xFF800000> : vector<16xf32>
    %150 = vector.multi_reduction <maximumf>, %149, %cst_74 [1] : vector<16x20xf32> to vector<16xf32>
    %151 = vector.shape_cast %150 : vector<16xf32> to vector<16x1xf32>
    %152 = vector.broadcast %151 : vector<16x1xf32> to vector<16x20xf32>
    %153 = arith.subf %149, %152 : vector<16x20xf32>
    %154 = math.exp %153 : vector<16x20xf32>
    %cst_75 = arith.constant dense<0.000000e+00> : vector<16xf32>
    %155 = vector.multi_reduction <add>, %154, %cst_75 [1] : vector<16x20xf32> to vector<16xf32>
    %156 = vector.shape_cast %155 : vector<16xf32> to vector<16x1xf32>
    %157 = tpu.reciprocal %156 {approx = true} : vector<16x1xf32> -> vector<16x1xf32>
    %158 = vector.broadcast %157 : vector<16x1xf32> to vector<16x20xf32>
    %159 = arith.mulf %154, %158 : vector<16x20xf32>
    %160 = vector.extract_strided_slice %50 {offsets = [0, 1], sizes = [1, 1], strides = [1, 1]} : vector<1x3xf32> to vector<1x1xf32>
    %161 = vector.broadcast %160 : vector<1x1xf32> to vector<16x20xf32>
    %162 = arith.mulf %159, %161 : vector<16x20xf32>
    %163 = arith.addf %147, %162 : vector<16x20xf32>
    %164 = arith.mulf %132, %64 : vector<16x20xf32>
    %165 = arith.addf %164, %70 : vector<16x20xf32>
    %cst_76 = arith.constant dense<0xFF800000> : vector<16xf32>
    %166 = vector.multi_reduction <maximumf>, %165, %cst_76 [1] : vector<16x20xf32> to vector<16xf32>
    %167 = vector.shape_cast %166 : vector<16xf32> to vector<16x1xf32>
    %168 = vector.broadcast %167 : vector<16x1xf32> to vector<16x20xf32>
    %169 = arith.subf %165, %168 : vector<16x20xf32>
    %170 = math.exp %169 : vector<16x20xf32>
    %cst_77 = arith.constant dense<0.000000e+00> : vector<16xf32>
    %171 = vector.multi_reduction <add>, %170, %cst_77 [1] : vector<16x20xf32> to vector<16xf32>
    %172 = vector.shape_cast %171 : vector<16xf32> to vector<16x1xf32>
    %173 = tpu.reciprocal %172 {approx = true} : vector<16x1xf32> -> vector<16x1xf32>
    %174 = vector.broadcast %173 : vector<16x1xf32> to vector<16x20xf32>
    %175 = arith.mulf %170, %174 : vector<16x20xf32>
    %176 = vector.extract_strided_slice %50 {offsets = [0, 2], sizes = [1, 1], strides = [1, 1]} : vector<1x3xf32> to vector<1x1xf32>
    %177 = vector.broadcast %176 : vector<1x1xf32> to vector<16x20xf32>
    %178 = arith.mulf %175, %177 : vector<16x20xf32>
    %179 = arith.addf %163, %178 : vector<16x20xf32>
    %cst_78 = arith.constant dense<0.000000e+00> : vector<16x8xf32>
    %180 = tpu.matmul %179, %129, %cst_78 {dimension_numbers = #tpu.dot_dimension_numbers<[1], [0], [0], [1], [0, 0, 1, 1], [], []>} : vector<16x20xf32>, vector<20x8xf32>, vector<16x8xf32> -> vector<16x8xf32>
    %181 = vector.extract_strided_slice %24 {offsets = [8, 0], sizes = [8, 32], strides = [1, 1]} : vector<32x32xf32> to vector<8x32xf32>
    %cst_79 = arith.constant dense<0.000000e+00> : vector<16x32xf32>
    %182 = tpu.matmul %180, %181, %cst_79 {dimension_numbers = #tpu.dot_dimension_numbers<[1], [0], [0], [1], [0, 0, 1, 1], [], []>} : vector<16x8xf32>, vector<8x32xf32>, vector<16x32xf32> -> vector<16x32xf32>
    %183 = arith.addf %126, %182 : vector<16x32xf32>
    %184 = vector.extract_strided_slice %53 {offsets = [0, 16], sizes = [16, 8], strides = [1, 1]} : vector<16x32xf32> to vector<16x8xf32>
    %185 = vector.extract_strided_slice %57 {offsets = [0, 16], sizes = [20, 8], strides = [1, 1]} : vector<20x32xf32> to vector<20x8xf32>
    %186 = vector.extract_strided_slice %58 {offsets = [0, 16], sizes = [20, 8], strides = [1, 1]} : vector<20x32xf32> to vector<20x8xf32>
    %cst_80 = arith.constant dense<0.000000e+00> : vector<16x20xf32>
    %187 = tpu.matmul %184, %185, %cst_80 {dimension_numbers = #tpu.dot_dimension_numbers<[1], [1], [0], [0], [0, 0, 1, 0], [], []>} : vector<16x8xf32>, vector<20x8xf32>, vector<16x20xf32> -> vector<16x20xf32>
    %cst_81 = arith.constant 0.353553385 : f32
    %188 = vector.broadcast %cst_81 : f32 to vector<16x20xf32>
    %189 = arith.mulf %187, %188 : vector<16x20xf32>
    %190 = arith.mulf %189, %60 : vector<16x20xf32>
    %191 = arith.addf %190, %66 : vector<16x20xf32>
    %cst_82 = arith.constant dense<0xFF800000> : vector<16xf32>
    %192 = vector.multi_reduction <maximumf>, %191, %cst_82 [1] : vector<16x20xf32> to vector<16xf32>
    %193 = vector.shape_cast %192 : vector<16xf32> to vector<16x1xf32>
    %194 = vector.broadcast %193 : vector<16x1xf32> to vector<16x20xf32>
    %195 = arith.subf %191, %194 : vector<16x20xf32>
    %196 = math.exp %195 : vector<16x20xf32>
    %cst_83 = arith.constant dense<0.000000e+00> : vector<16xf32>
    %197 = vector.multi_reduction <add>, %196, %cst_83 [1] : vector<16x20xf32> to vector<16xf32>
    %198 = vector.shape_cast %197 : vector<16xf32> to vector<16x1xf32>
    %199 = tpu.reciprocal %198 {approx = true} : vector<16x1xf32> -> vector<16x1xf32>
    %200 = vector.broadcast %199 : vector<16x1xf32> to vector<16x20xf32>
    %201 = arith.mulf %196, %200 : vector<16x20xf32>
    %202 = vector.extract_strided_slice %50 {offsets = [0, 0], sizes = [1, 1], strides = [1, 1]} : vector<1x3xf32> to vector<1x1xf32>
    %203 = vector.broadcast %202 : vector<1x1xf32> to vector<16x20xf32>
    %204 = arith.mulf %201, %203 : vector<16x20xf32>
    %205 = arith.mulf %189, %62 : vector<16x20xf32>
    %206 = arith.addf %205, %68 : vector<16x20xf32>
    %cst_84 = arith.constant dense<0xFF800000> : vector<16xf32>
    %207 = vector.multi_reduction <maximumf>, %206, %cst_84 [1] : vector<16x20xf32> to vector<16xf32>
    %208 = vector.shape_cast %207 : vector<16xf32> to vector<16x1xf32>
    %209 = vector.broadcast %208 : vector<16x1xf32> to vector<16x20xf32>
    %210 = arith.subf %206, %209 : vector<16x20xf32>
    %211 = math.exp %210 : vector<16x20xf32>
    %cst_85 = arith.constant dense<0.000000e+00> : vector<16xf32>
    %212 = vector.multi_reduction <add>, %211, %cst_85 [1] : vector<16x20xf32> to vector<16xf32>
    %213 = vector.shape_cast %212 : vector<16xf32> to vector<16x1xf32>
    %214 = tpu.reciprocal %213 {approx = true} : vector<16x1xf32> -> vector<16x1xf32>
    %215 = vector.broadcast %214 : vector<16x1xf32> to vector<16x20xf32>
    %216 = arith.mulf %211, %215 : vector<16x20xf32>
    %217 = vector.extract_strided_slice %50 {offsets = [0, 1], sizes = [1, 1], strides = [1, 1]} : vector<1x3xf32> to vector<1x1xf32>
    %218 = vector.broadcast %217 : vector<1x1xf32> to vector<16x20xf32>
    %219 = arith.mulf %216, %218 : vector<16x20xf32>
    %220 = arith.addf %204, %219 : vector<16x20xf32>
    %221 = arith.mulf %189, %64 : vector<16x20xf32>
    %222 = arith.addf %221, %70 : vector<16x20xf32>
    %cst_86 = arith.constant dense<0xFF800000> : vector<16xf32>
    %223 = vector.multi_reduction <maximumf>, %222, %cst_86 [1] : vector<16x20xf32> to vector<16xf32>
    %224 = vector.shape_cast %223 : vector<16xf32> to vector<16x1xf32>
    %225 = vector.broadcast %224 : vector<16x1xf32> to vector<16x20xf32>
    %226 = arith.subf %222, %225 : vector<16x20xf32>
    %227 = math.exp %226 : vector<16x20xf32>
    %cst_87 = arith.constant dense<0.000000e+00> : vector<16xf32>
    %228 = vector.multi_reduction <add>, %227, %cst_87 [1] : vector<16x20xf32> to vector<16xf32>
    %229 = vector.shape_cast %228 : vector<16xf32> to vector<16x1xf32>
    %230 = tpu.reciprocal %229 {approx = true} : vector<16x1xf32> -> vector<16x1xf32>
    %231 = vector.broadcast %230 : vector<16x1xf32> to vector<16x20xf32>
    %232 = arith.mulf %227, %231 : vector<16x20xf32>
    %233 = vector.extract_strided_slice %50 {offsets = [0, 2], sizes = [1, 1], strides = [1, 1]} : vector<1x3xf32> to vector<1x1xf32>
    %234 = vector.broadcast %233 : vector<1x1xf32> to vector<16x20xf32>
    %235 = arith.mulf %232, %234 : vector<16x20xf32>
    %236 = arith.addf %220, %235 : vector<16x20xf32>
    %cst_88 = arith.constant dense<0.000000e+00> : vector<16x8xf32>
    %237 = tpu.matmul %236, %186, %cst_88 {dimension_numbers = #tpu.dot_dimension_numbers<[1], [0], [0], [1], [0, 0, 1, 1], [], []>} : vector<16x20xf32>, vector<20x8xf32>, vector<16x8xf32> -> vector<16x8xf32>
    %238 = vector.extract_strided_slice %24 {offsets = [16, 0], sizes = [8, 32], strides = [1, 1]} : vector<32x32xf32> to vector<8x32xf32>
    %cst_89 = arith.constant dense<0.000000e+00> : vector<16x32xf32>
    %239 = tpu.matmul %237, %238, %cst_89 {dimension_numbers = #tpu.dot_dimension_numbers<[1], [0], [0], [1], [0, 0, 1, 1], [], []>} : vector<16x8xf32>, vector<8x32xf32>, vector<16x32xf32> -> vector<16x32xf32>
    %240 = arith.addf %183, %239 : vector<16x32xf32>
    %241 = vector.extract_strided_slice %53 {offsets = [0, 24], sizes = [16, 8], strides = [1, 1]} : vector<16x32xf32> to vector<16x8xf32>
    %242 = vector.extract_strided_slice %57 {offsets = [0, 24], sizes = [20, 8], strides = [1, 1]} : vector<20x32xf32> to vector<20x8xf32>
    %243 = vector.extract_strided_slice %58 {offsets = [0, 24], sizes = [20, 8], strides = [1, 1]} : vector<20x32xf32> to vector<20x8xf32>
    %cst_90 = arith.constant dense<0.000000e+00> : vector<16x20xf32>
    %244 = tpu.matmul %241, %242, %cst_90 {dimension_numbers = #tpu.dot_dimension_numbers<[1], [1], [0], [0], [0, 0, 1, 0], [], []>} : vector<16x8xf32>, vector<20x8xf32>, vector<16x20xf32> -> vector<16x20xf32>
    %cst_91 = arith.constant 0.353553385 : f32
    %245 = vector.broadcast %cst_91 : f32 to vector<16x20xf32>
    %246 = arith.mulf %244, %245 : vector<16x20xf32>
    %247 = arith.mulf %246, %60 : vector<16x20xf32>
    %248 = arith.addf %247, %66 : vector<16x20xf32>
    %cst_92 = arith.constant dense<0xFF800000> : vector<16xf32>
    %249 = vector.multi_reduction <maximumf>, %248, %cst_92 [1] : vector<16x20xf32> to vector<16xf32>
    %250 = vector.shape_cast %249 : vector<16xf32> to vector<16x1xf32>
    %251 = vector.broadcast %250 : vector<16x1xf32> to vector<16x20xf32>
    %252 = arith.subf %248, %251 : vector<16x20xf32>
    %253 = math.exp %252 : vector<16x20xf32>
    %cst_93 = arith.constant dense<0.000000e+00> : vector<16xf32>
    %254 = vector.multi_reduction <add>, %253, %cst_93 [1] : vector<16x20xf32> to vector<16xf32>
    %255 = vector.shape_cast %254 : vector<16xf32> to vector<16x1xf32>
    %256 = tpu.reciprocal %255 {approx = true} : vector<16x1xf32> -> vector<16x1xf32>
    %257 = vector.broadcast %256 : vector<16x1xf32> to vector<16x20xf32>
    %258 = arith.mulf %253, %257 : vector<16x20xf32>
    %259 = vector.extract_strided_slice %50 {offsets = [0, 0], sizes = [1, 1], strides = [1, 1]} : vector<1x3xf32> to vector<1x1xf32>
    %260 = vector.broadcast %259 : vector<1x1xf32> to vector<16x20xf32>
    %261 = arith.mulf %258, %260 : vector<16x20xf32>
    %262 = arith.mulf %246, %62 : vector<16x20xf32>
    %263 = arith.addf %262, %68 : vector<16x20xf32>
    %cst_94 = arith.constant dense<0xFF800000> : vector<16xf32>
    %264 = vector.multi_reduction <maximumf>, %263, %cst_94 [1] : vector<16x20xf32> to vector<16xf32>
    %265 = vector.shape_cast %264 : vector<16xf32> to vector<16x1xf32>
    %266 = vector.broadcast %265 : vector<16x1xf32> to vector<16x20xf32>
    %267 = arith.subf %263, %266 : vector<16x20xf32>
    %268 = math.exp %267 : vector<16x20xf32>
    %cst_95 = arith.constant dense<0.000000e+00> : vector<16xf32>
    %269 = vector.multi_reduction <add>, %268, %cst_95 [1] : vector<16x20xf32> to vector<16xf32>
    %270 = vector.shape_cast %269 : vector<16xf32> to vector<16x1xf32>
    %271 = tpu.reciprocal %270 {approx = true} : vector<16x1xf32> -> vector<16x1xf32>
    %272 = vector.broadcast %271 : vector<16x1xf32> to vector<16x20xf32>
    %273 = arith.mulf %268, %272 : vector<16x20xf32>
    %274 = vector.extract_strided_slice %50 {offsets = [0, 1], sizes = [1, 1], strides = [1, 1]} : vector<1x3xf32> to vector<1x1xf32>
    %275 = vector.broadcast %274 : vector<1x1xf32> to vector<16x20xf32>
    %276 = arith.mulf %273, %275 : vector<16x20xf32>
    %277 = arith.addf %261, %276 : vector<16x20xf32>
    %278 = arith.mulf %246, %64 : vector<16x20xf32>
    %279 = arith.addf %278, %70 : vector<16x20xf32>
    %cst_96 = arith.constant dense<0xFF800000> : vector<16xf32>
    %280 = vector.multi_reduction <maximumf>, %279, %cst_96 [1] : vector<16x20xf32> to vector<16xf32>
    %281 = vector.shape_cast %280 : vector<16xf32> to vector<16x1xf32>
    %282 = vector.broadcast %281 : vector<16x1xf32> to vector<16x20xf32>
    %283 = arith.subf %279, %282 : vector<16x20xf32>
    %284 = math.exp %283 : vector<16x20xf32>
    %cst_97 = arith.constant dense<0.000000e+00> : vector<16xf32>
    %285 = vector.multi_reduction <add>, %284, %cst_97 [1] : vector<16x20xf32> to vector<16xf32>
    %286 = vector.shape_cast %285 : vector<16xf32> to vector<16x1xf32>
    %287 = tpu.reciprocal %286 {approx = true} : vector<16x1xf32> -> vector<16x1xf32>
    %288 = vector.broadcast %287 : vector<16x1xf32> to vector<16x20xf32>
    %289 = arith.mulf %284, %288 : vector<16x20xf32>
    %290 = vector.extract_strided_slice %50 {offsets = [0, 2], sizes = [1, 1], strides = [1, 1]} : vector<1x3xf32> to vector<1x1xf32>
    %291 = vector.broadcast %290 : vector<1x1xf32> to vector<16x20xf32>
    %292 = arith.mulf %289, %291 : vector<16x20xf32>
    %293 = arith.addf %277, %292 : vector<16x20xf32>
    %cst_98 = arith.constant dense<0.000000e+00> : vector<16x8xf32>
    %294 = tpu.matmul %293, %243, %cst_98 {dimension_numbers = #tpu.dot_dimension_numbers<[1], [0], [0], [1], [0, 0, 1, 1], [], []>} : vector<16x20xf32>, vector<20x8xf32>, vector<16x8xf32> -> vector<16x8xf32>
    %295 = vector.extract_strided_slice %24 {offsets = [24, 0], sizes = [8, 32], strides = [1, 1]} : vector<32x32xf32> to vector<8x32xf32>
    %cst_99 = arith.constant dense<0.000000e+00> : vector<16x32xf32>
    %296 = tpu.matmul %294, %295, %cst_99 {dimension_numbers = #tpu.dot_dimension_numbers<[1], [0], [0], [1], [0, 0, 1, 1], [], []>} : vector<16x8xf32>, vector<8x32xf32>, vector<16x32xf32> -> vector<16x32xf32>
    %297 = arith.addf %240, %296 : vector<16x32xf32>
    %298 = vector.broadcast %26 : vector<1x32xf32> to vector<16x32xf32>
    %299 = arith.addf %297, %298 : vector<16x32xf32>
    %300 = arith.addf %3, %299 : vector<16x32xf32>
    %301 = vector.extract_strided_slice %6 {offsets = [0, 0], sizes = [1, 32], strides = [1, 1]} : vector<4x32xf32> to vector<1x32xf32>
    %302 = vector.extract_strided_slice %8 {offsets = [0, 0], sizes = [1, 32], strides = [1, 1]} : vector<4x32xf32> to vector<1x32xf32>
    %cst_100 = arith.constant dense<0.000000e+00> : vector<16xf32>
    %303 = vector.multi_reduction <add>, %300, %cst_100 [1] : vector<16x32xf32> to vector<16xf32>
    %304 = vector.shape_cast %303 : vector<16xf32> to vector<16x1xf32>
    %cst_101 = arith.constant 3.200000e+01 : f32
    %305 = vector.broadcast %cst_101 : f32 to vector<16x1xf32>
    %306 = arith.divf %304, %305 : vector<16x1xf32>
    %307 = vector.broadcast %306 : vector<16x1xf32> to vector<16x32xf32>
    %308 = arith.subf %300, %307 : vector<16x32xf32>
    %309 = arith.mulf %308, %308 : vector<16x32xf32>
    %cst_102 = arith.constant dense<0.000000e+00> : vector<16xf32>
    %310 = vector.multi_reduction <add>, %309, %cst_102 [1] : vector<16x32xf32> to vector<16xf32>
    %311 = vector.shape_cast %310 : vector<16xf32> to vector<16x1xf32>
    %cst_103 = arith.constant 3.100000e+01 : f32
    %312 = vector.broadcast %cst_103 : f32 to vector<16x1xf32>
    %313 = arith.divf %311, %312 : vector<16x1xf32>
    %314 = math.sqrt %313 : vector<16x1xf32>
    %cst_104 = arith.constant 9.99999997E-7 : f32
    %315 = vector.broadcast %cst_104 : f32 to vector<16x1xf32>
    %316 = arith.addf %314, %315 : vector<16x1xf32>
    %cst_105 = arith.constant 1.000000e+00 : f32
    %317 = vector.broadcast %cst_105 : f32 to vector<16x1xf32>
    %318 = arith.divf %317, %316 : vector<16x1xf32>
    %319 = vector.broadcast %306 : vector<16x1xf32> to vector<16x32xf32>
    %320 = arith.subf %300, %319 : vector<16x32xf32>
    %321 = vector.broadcast %301 : vector<1x32xf32> to vector<16x32xf32>
    %322 = arith.mulf %321, %320 : vector<16x32xf32>
    %323 = vector.broadcast %318 : vector<16x1xf32> to vector<16x32xf32>
    %324 = arith.mulf %322, %323 : vector<16x32xf32>
    %325 = vector.broadcast %302 : vector<1x32xf32> to vector<16x32xf32>
    %326 = arith.addf %324, %325 : vector<16x32xf32>
    %c0_106 = arith.constant 0 : index
    %c0_107 = arith.constant 0 : index
    %c0_108 = arith.constant 0 : index
    %c0_109 = arith.constant 0 : index
    %327 = vector.load %arg5[%c0_106, %c0_107, %c0_108, %c0_109] : memref<3x1x20x16xf32, #tpu.memory_space<vmem>>, vector<1x1x20x16xf32>
    %328 = vector.shape_cast %327 : vector<1x1x20x16xf32> to vector<20x16xf32>
    %c1_110 = arith.constant 1 : index
    %c0_111 = arith.constant 0 : index
    %c0_112 = arith.constant 0 : index
    %c0_113 = arith.constant 0 : index
    %329 = vector.load %arg5[%c1_110, %c0_111, %c0_112, %c0_113] : memref<3x1x20x16xf32, #tpu.memory_space<vmem>>, vector<1x1x20x16xf32>
    %330 = vector.shape_cast %329 : vector<1x1x20x16xf32> to vector<20x16xf32>
    %c2_114 = arith.constant 2 : index
    %c0_115 = arith.constant 0 : index
    %c0_116 = arith.constant 0 : index
    %c0_117 = arith.constant 0 : index
    %331 = vector.load %arg5[%c2_114, %c0_115, %c0_116, %c0_117] : memref<3x1x20x16xf32, #tpu.memory_space<vmem>>, vector<1x1x20x16xf32>
    %332 = vector.shape_cast %331 : vector<1x1x20x16xf32> to vector<20x16xf32>
    %c0_118 = arith.constant 0 : index
    %c0_119 = arith.constant 0 : index
    %c0_120 = arith.constant 0 : index
    %333 = vector.load %arg16[%c0_118, %c0_119, %c0_120] : memref<1x32x32xf32, #tpu.memory_space<vmem>>, vector<1x32x32xf32>
    %334 = vector.shape_cast %333 : vector<1x32x32xf32> to vector<32x32xf32>
    %c0_121 = arith.constant 0 : index
    %c0_122 = arith.constant 0 : index
    %c0_123 = arith.constant 0 : index
    %335 = vector.load %arg17[%c0_121, %c0_122, %c0_123] : memref<1x1x32xf32, #tpu.memory_space<vmem>>, vector<1x1x32xf32>
    %336 = vector.shape_cast %335 : vector<1x1x32xf32> to vector<1x32xf32>
    %c0_124 = arith.constant 0 : index
    %c0_125 = arith.constant 0 : index
    %c0_126 = arith.constant 0 : index
    %337 = vector.load %arg18[%c0_124, %c0_125, %c0_126] : memref<1x32x64xf32, #tpu.memory_space<vmem>>, vector<1x32x64xf32>
    %338 = vector.shape_cast %337 : vector<1x32x64xf32> to vector<32x64xf32>
    %c0_127 = arith.constant 0 : index
    %c0_128 = arith.constant 0 : index
    %c0_129 = arith.constant 0 : index
    %339 = vector.load %arg19[%c0_127, %c0_128, %c0_129] : memref<1x1x64xf32, #tpu.memory_space<vmem>>, vector<1x1x64xf32>
    %340 = vector.shape_cast %339 : vector<1x1x64xf32> to vector<1x64xf32>
    %c0_130 = arith.constant 0 : index
    %c0_131 = arith.constant 0 : index
    %c0_132 = arith.constant 0 : index
    %341 = vector.load %arg20[%c0_130, %c0_131, %c0_132] : memref<1x32x32xf32, #tpu.memory_space<vmem>>, vector<1x32x32xf32>
    %342 = vector.shape_cast %341 : vector<1x32x32xf32> to vector<32x32xf32>
    %c0_133 = arith.constant 0 : index
    %c0_134 = arith.constant 0 : index
    %c0_135 = arith.constant 0 : index
    %343 = vector.load %arg21[%c0_133, %c0_134, %c0_135] : memref<1x1x32xf32, #tpu.memory_space<vmem>>, vector<1x1x32xf32>
    %344 = vector.shape_cast %343 : vector<1x1x32xf32> to vector<1x32xf32>
    %c0_136 = arith.constant 0 : index
    %c0_137 = arith.constant 0 : index
    %c0_138 = arith.constant 0 : index
    %345 = vector.load %arg22[%c0_136, %c0_137, %c0_138] : memref<1x32x16xf32, #tpu.memory_space<vmem>>, vector<1x32x16xf32>
    %346 = vector.shape_cast %345 : vector<1x32x16xf32> to vector<32x16xf32>
    %c0_139 = arith.constant 0 : index
    %c0_140 = arith.constant 0 : index
    %c0_141 = arith.constant 0 : index
    %347 = vector.load %arg23[%c0_139, %c0_140, %c0_141] : memref<1x16x3xf32, #tpu.memory_space<vmem>>, vector<1x16x3xf32>
    %348 = vector.shape_cast %347 : vector<1x16x3xf32> to vector<16x3xf32>
    %c0_142 = arith.constant 0 : index
    %c0_143 = arith.constant 0 : index
    %c0_144 = arith.constant 0 : index
    %349 = vector.load %arg24[%c0_142, %c0_143, %c0_144] : memref<1x1x3xf32, #tpu.memory_space<vmem>>, vector<1x1x3xf32>
    %350 = vector.shape_cast %349 : vector<1x1x3xf32> to vector<1x3xf32>
    %cst_145 = arith.constant dense<0.000000e+00> : vector<32xf32>
    %351 = vector.multi_reduction <add>, %326, %cst_145 [0] : vector<16x32xf32> to vector<32xf32>
    %352 = vector.shape_cast %351 : vector<32xf32> to vector<1x32xf32>
    %cst_146 = arith.constant 1.600000e+01 : f32
    %353 = vector.broadcast %cst_146 : f32 to vector<1x32xf32>
    %354 = arith.divf %352, %353 : vector<1x32xf32>
    %cst_147 = arith.constant dense<0.000000e+00> : vector<1x16xf32>
    %355 = tpu.matmul %354, %346, %cst_147 {dimension_numbers = #tpu.dot_dimension_numbers<[1], [0], [0], [1], [0, 0, 1, 1], [], []>} : vector<1x32xf32>, vector<32x16xf32>, vector<1x16xf32> -> vector<1x16xf32>
    %cst_148 = arith.constant 0.000000e+00 : f32
    %356 = vector.broadcast %cst_148 : f32 to vector<1x16xf32>
    %357 = arith.maximumf %355, %356 : vector<1x16xf32>
    %cst_149 = arith.constant dense<0.000000e+00> : vector<1x3xf32>
    %358 = tpu.matmul %357, %348, %cst_149 {dimension_numbers = #tpu.dot_dimension_numbers<[1], [0], [0], [1], [0, 0, 1, 1], [], []>} : vector<1x16xf32>, vector<16x3xf32>, vector<1x3xf32> -> vector<1x3xf32>
    %359 = arith.addf %358, %350 : vector<1x3xf32>
    %cst_150 = arith.constant dense<0xFF800000> : vector<1xf32>
    %360 = vector.multi_reduction <maximumf>, %359, %cst_150 [1] : vector<1x3xf32> to vector<1xf32>
    %361 = vector.shape_cast %360 : vector<1xf32> to vector<1x1xf32>
    %362 = vector.broadcast %361 : vector<1x1xf32> to vector<1x3xf32>
    %363 = arith.subf %359, %362 : vector<1x3xf32>
    %364 = math.exp %363 : vector<1x3xf32>
    %cst_151 = arith.constant dense<0.000000e+00> : vector<1xf32>
    %365 = vector.multi_reduction <add>, %364, %cst_151 [1] : vector<1x3xf32> to vector<1xf32>
    %366 = vector.shape_cast %365 : vector<1xf32> to vector<1x1xf32>
    %367 = vector.broadcast %366 : vector<1x1xf32> to vector<1x3xf32>
    %368 = arith.divf %364, %367 : vector<1x3xf32>
    %cst_152 = arith.constant dense<0.000000e+00> : vector<20x32xf32>
    %369 = tpu.matmul %4, %334, %cst_152 {dimension_numbers = #tpu.dot_dimension_numbers<[1], [0], [0], [1], [0, 0, 1, 1], [], []>} : vector<20x32xf32>, vector<32x32xf32>, vector<20x32xf32> -> vector<20x32xf32>
    %370 = vector.broadcast %336 : vector<1x32xf32> to vector<20x32xf32>
    %371 = arith.addf %369, %370 : vector<20x32xf32>
    %cst_153 = arith.constant dense<0.000000e+00> : vector<16x64xf32>
    %372 = tpu.matmul %326, %338, %cst_153 {dimension_numbers = #tpu.dot_dimension_numbers<[1], [0], [0], [1], [0, 0, 1, 1], [], []>} : vector<16x32xf32>, vector<32x64xf32>, vector<16x64xf32> -> vector<16x64xf32>
    %373 = vector.broadcast %340 : vector<1x64xf32> to vector<16x64xf32>
    %374 = arith.addf %372, %373 : vector<16x64xf32>
    %375 = vector.extract_strided_slice %374 {offsets = [0, 0], sizes = [16, 32], strides = [1, 1]} : vector<16x64xf32> to vector<16x32xf32>
    %376 = vector.extract_strided_slice %374 {offsets = [0, 32], sizes = [16, 32], strides = [1, 1]} : vector<16x64xf32> to vector<16x32xf32>
    %cst_154 = arith.constant 1.000000e+00 : f32
    %377 = vector.broadcast %cst_154 : f32 to vector<20x16xf32>
    %378 = arith.subf %377, %328 : vector<20x16xf32>
    %cst_155 = arith.constant 1.000000e+00 : f32
    %379 = vector.broadcast %cst_155 : f32 to vector<20x16xf32>
    %380 = arith.subf %379, %330 : vector<20x16xf32>
    %cst_156 = arith.constant 1.000000e+00 : f32
    %381 = vector.broadcast %cst_156 : f32 to vector<20x16xf32>
    %382 = arith.subf %381, %332 : vector<20x16xf32>
    %cst_157 = arith.constant -1.000000e+09 : f32
    %383 = vector.broadcast %cst_157 : f32 to vector<20x16xf32>
    %384 = arith.mulf %383, %328 : vector<20x16xf32>
    %cst_158 = arith.constant -1.000000e+09 : f32
    %385 = vector.broadcast %cst_158 : f32 to vector<20x16xf32>
    %386 = arith.mulf %385, %330 : vector<20x16xf32>
    %cst_159 = arith.constant -1.000000e+09 : f32
    %387 = vector.broadcast %cst_159 : f32 to vector<20x16xf32>
    %388 = arith.mulf %387, %332 : vector<20x16xf32>
    %389 = vector.extract_strided_slice %371 {offsets = [0, 0], sizes = [20, 8], strides = [1, 1]} : vector<20x32xf32> to vector<20x8xf32>
    %390 = vector.extract_strided_slice %375 {offsets = [0, 0], sizes = [16, 8], strides = [1, 1]} : vector<16x32xf32> to vector<16x8xf32>
    %391 = vector.extract_strided_slice %376 {offsets = [0, 0], sizes = [16, 8], strides = [1, 1]} : vector<16x32xf32> to vector<16x8xf32>
    %cst_160 = arith.constant dense<0.000000e+00> : vector<20x16xf32>
    %392 = tpu.matmul %389, %390, %cst_160 {dimension_numbers = #tpu.dot_dimension_numbers<[1], [1], [0], [0], [0, 0, 1, 0], [], []>} : vector<20x8xf32>, vector<16x8xf32>, vector<20x16xf32> -> vector<20x16xf32>
    %cst_161 = arith.constant 0.353553385 : f32
    %393 = vector.broadcast %cst_161 : f32 to vector<20x16xf32>
    %394 = arith.mulf %392, %393 : vector<20x16xf32>
    %395 = arith.mulf %394, %378 : vector<20x16xf32>
    %396 = arith.addf %395, %384 : vector<20x16xf32>
    %cst_162 = arith.constant dense<0xFF800000> : vector<20xf32>
    %397 = vector.multi_reduction <maximumf>, %396, %cst_162 [1] : vector<20x16xf32> to vector<20xf32>
    %398 = vector.shape_cast %397 : vector<20xf32> to vector<20x1xf32>
    %399 = vector.broadcast %398 : vector<20x1xf32> to vector<20x16xf32>
    %400 = arith.subf %396, %399 : vector<20x16xf32>
    %401 = math.exp %400 : vector<20x16xf32>
    %cst_163 = arith.constant dense<0.000000e+00> : vector<20xf32>
    %402 = vector.multi_reduction <add>, %401, %cst_163 [1] : vector<20x16xf32> to vector<20xf32>
    %403 = vector.shape_cast %402 : vector<20xf32> to vector<20x1xf32>
    %404 = tpu.reciprocal %403 {approx = true} : vector<20x1xf32> -> vector<20x1xf32>
    %405 = vector.broadcast %404 : vector<20x1xf32> to vector<20x16xf32>
    %406 = arith.mulf %401, %405 : vector<20x16xf32>
    %407 = vector.extract_strided_slice %368 {offsets = [0, 0], sizes = [1, 1], strides = [1, 1]} : vector<1x3xf32> to vector<1x1xf32>
    %408 = vector.broadcast %407 : vector<1x1xf32> to vector<20x16xf32>
    %409 = arith.mulf %406, %408 : vector<20x16xf32>
    %410 = arith.mulf %394, %380 : vector<20x16xf32>
    %411 = arith.addf %410, %386 : vector<20x16xf32>
    %cst_164 = arith.constant dense<0xFF800000> : vector<20xf32>
    %412 = vector.multi_reduction <maximumf>, %411, %cst_164 [1] : vector<20x16xf32> to vector<20xf32>
    %413 = vector.shape_cast %412 : vector<20xf32> to vector<20x1xf32>
    %414 = vector.broadcast %413 : vector<20x1xf32> to vector<20x16xf32>
    %415 = arith.subf %411, %414 : vector<20x16xf32>
    %416 = math.exp %415 : vector<20x16xf32>
    %cst_165 = arith.constant dense<0.000000e+00> : vector<20xf32>
    %417 = vector.multi_reduction <add>, %416, %cst_165 [1] : vector<20x16xf32> to vector<20xf32>
    %418 = vector.shape_cast %417 : vector<20xf32> to vector<20x1xf32>
    %419 = tpu.reciprocal %418 {approx = true} : vector<20x1xf32> -> vector<20x1xf32>
    %420 = vector.broadcast %419 : vector<20x1xf32> to vector<20x16xf32>
    %421 = arith.mulf %416, %420 : vector<20x16xf32>
    %422 = vector.extract_strided_slice %368 {offsets = [0, 1], sizes = [1, 1], strides = [1, 1]} : vector<1x3xf32> to vector<1x1xf32>
    %423 = vector.broadcast %422 : vector<1x1xf32> to vector<20x16xf32>
    %424 = arith.mulf %421, %423 : vector<20x16xf32>
    %425 = arith.addf %409, %424 : vector<20x16xf32>
    %426 = arith.mulf %394, %382 : vector<20x16xf32>
    %427 = arith.addf %426, %388 : vector<20x16xf32>
    %cst_166 = arith.constant dense<0xFF800000> : vector<20xf32>
    %428 = vector.multi_reduction <maximumf>, %427, %cst_166 [1] : vector<20x16xf32> to vector<20xf32>
    %429 = vector.shape_cast %428 : vector<20xf32> to vector<20x1xf32>
    %430 = vector.broadcast %429 : vector<20x1xf32> to vector<20x16xf32>
    %431 = arith.subf %427, %430 : vector<20x16xf32>
    %432 = math.exp %431 : vector<20x16xf32>
    %cst_167 = arith.constant dense<0.000000e+00> : vector<20xf32>
    %433 = vector.multi_reduction <add>, %432, %cst_167 [1] : vector<20x16xf32> to vector<20xf32>
    %434 = vector.shape_cast %433 : vector<20xf32> to vector<20x1xf32>
    %435 = tpu.reciprocal %434 {approx = true} : vector<20x1xf32> -> vector<20x1xf32>
    %436 = vector.broadcast %435 : vector<20x1xf32> to vector<20x16xf32>
    %437 = arith.mulf %432, %436 : vector<20x16xf32>
    %438 = vector.extract_strided_slice %368 {offsets = [0, 2], sizes = [1, 1], strides = [1, 1]} : vector<1x3xf32> to vector<1x1xf32>
    %439 = vector.broadcast %438 : vector<1x1xf32> to vector<20x16xf32>
    %440 = arith.mulf %437, %439 : vector<20x16xf32>
    %441 = arith.addf %425, %440 : vector<20x16xf32>
    %cst_168 = arith.constant dense<0.000000e+00> : vector<20x8xf32>
    %442 = tpu.matmul %441, %391, %cst_168 {dimension_numbers = #tpu.dot_dimension_numbers<[1], [0], [0], [1], [0, 0, 1, 1], [], []>} : vector<20x16xf32>, vector<16x8xf32>, vector<20x8xf32> -> vector<20x8xf32>
    %443 = vector.extract_strided_slice %342 {offsets = [0, 0], sizes = [8, 32], strides = [1, 1]} : vector<32x32xf32> to vector<8x32xf32>
    %cst_169 = arith.constant dense<0.000000e+00> : vector<20x32xf32>
    %444 = tpu.matmul %442, %443, %cst_169 {dimension_numbers = #tpu.dot_dimension_numbers<[1], [0], [0], [1], [0, 0, 1, 1], [], []>} : vector<20x8xf32>, vector<8x32xf32>, vector<20x32xf32> -> vector<20x32xf32>
    %445 = vector.extract_strided_slice %371 {offsets = [0, 8], sizes = [20, 8], strides = [1, 1]} : vector<20x32xf32> to vector<20x8xf32>
    %446 = vector.extract_strided_slice %375 {offsets = [0, 8], sizes = [16, 8], strides = [1, 1]} : vector<16x32xf32> to vector<16x8xf32>
    %447 = vector.extract_strided_slice %376 {offsets = [0, 8], sizes = [16, 8], strides = [1, 1]} : vector<16x32xf32> to vector<16x8xf32>
    %cst_170 = arith.constant dense<0.000000e+00> : vector<20x16xf32>
    %448 = tpu.matmul %445, %446, %cst_170 {dimension_numbers = #tpu.dot_dimension_numbers<[1], [1], [0], [0], [0, 0, 1, 0], [], []>} : vector<20x8xf32>, vector<16x8xf32>, vector<20x16xf32> -> vector<20x16xf32>
    %cst_171 = arith.constant 0.353553385 : f32
    %449 = vector.broadcast %cst_171 : f32 to vector<20x16xf32>
    %450 = arith.mulf %448, %449 : vector<20x16xf32>
    %451 = arith.mulf %450, %378 : vector<20x16xf32>
    %452 = arith.addf %451, %384 : vector<20x16xf32>
    %cst_172 = arith.constant dense<0xFF800000> : vector<20xf32>
    %453 = vector.multi_reduction <maximumf>, %452, %cst_172 [1] : vector<20x16xf32> to vector<20xf32>
    %454 = vector.shape_cast %453 : vector<20xf32> to vector<20x1xf32>
    %455 = vector.broadcast %454 : vector<20x1xf32> to vector<20x16xf32>
    %456 = arith.subf %452, %455 : vector<20x16xf32>
    %457 = math.exp %456 : vector<20x16xf32>
    %cst_173 = arith.constant dense<0.000000e+00> : vector<20xf32>
    %458 = vector.multi_reduction <add>, %457, %cst_173 [1] : vector<20x16xf32> to vector<20xf32>
    %459 = vector.shape_cast %458 : vector<20xf32> to vector<20x1xf32>
    %460 = tpu.reciprocal %459 {approx = true} : vector<20x1xf32> -> vector<20x1xf32>
    %461 = vector.broadcast %460 : vector<20x1xf32> to vector<20x16xf32>
    %462 = arith.mulf %457, %461 : vector<20x16xf32>
    %463 = vector.extract_strided_slice %368 {offsets = [0, 0], sizes = [1, 1], strides = [1, 1]} : vector<1x3xf32> to vector<1x1xf32>
    %464 = vector.broadcast %463 : vector<1x1xf32> to vector<20x16xf32>
    %465 = arith.mulf %462, %464 : vector<20x16xf32>
    %466 = arith.mulf %450, %380 : vector<20x16xf32>
    %467 = arith.addf %466, %386 : vector<20x16xf32>
    %cst_174 = arith.constant dense<0xFF800000> : vector<20xf32>
    %468 = vector.multi_reduction <maximumf>, %467, %cst_174 [1] : vector<20x16xf32> to vector<20xf32>
    %469 = vector.shape_cast %468 : vector<20xf32> to vector<20x1xf32>
    %470 = vector.broadcast %469 : vector<20x1xf32> to vector<20x16xf32>
    %471 = arith.subf %467, %470 : vector<20x16xf32>
    %472 = math.exp %471 : vector<20x16xf32>
    %cst_175 = arith.constant dense<0.000000e+00> : vector<20xf32>
    %473 = vector.multi_reduction <add>, %472, %cst_175 [1] : vector<20x16xf32> to vector<20xf32>
    %474 = vector.shape_cast %473 : vector<20xf32> to vector<20x1xf32>
    %475 = tpu.reciprocal %474 {approx = true} : vector<20x1xf32> -> vector<20x1xf32>
    %476 = vector.broadcast %475 : vector<20x1xf32> to vector<20x16xf32>
    %477 = arith.mulf %472, %476 : vector<20x16xf32>
    %478 = vector.extract_strided_slice %368 {offsets = [0, 1], sizes = [1, 1], strides = [1, 1]} : vector<1x3xf32> to vector<1x1xf32>
    %479 = vector.broadcast %478 : vector<1x1xf32> to vector<20x16xf32>
    %480 = arith.mulf %477, %479 : vector<20x16xf32>
    %481 = arith.addf %465, %480 : vector<20x16xf32>
    %482 = arith.mulf %450, %382 : vector<20x16xf32>
    %483 = arith.addf %482, %388 : vector<20x16xf32>
    %cst_176 = arith.constant dense<0xFF800000> : vector<20xf32>
    %484 = vector.multi_reduction <maximumf>, %483, %cst_176 [1] : vector<20x16xf32> to vector<20xf32>
    %485 = vector.shape_cast %484 : vector<20xf32> to vector<20x1xf32>
    %486 = vector.broadcast %485 : vector<20x1xf32> to vector<20x16xf32>
    %487 = arith.subf %483, %486 : vector<20x16xf32>
    %488 = math.exp %487 : vector<20x16xf32>
    %cst_177 = arith.constant dense<0.000000e+00> : vector<20xf32>
    %489 = vector.multi_reduction <add>, %488, %cst_177 [1] : vector<20x16xf32> to vector<20xf32>
    %490 = vector.shape_cast %489 : vector<20xf32> to vector<20x1xf32>
    %491 = tpu.reciprocal %490 {approx = true} : vector<20x1xf32> -> vector<20x1xf32>
    %492 = vector.broadcast %491 : vector<20x1xf32> to vector<20x16xf32>
    %493 = arith.mulf %488, %492 : vector<20x16xf32>
    %494 = vector.extract_strided_slice %368 {offsets = [0, 2], sizes = [1, 1], strides = [1, 1]} : vector<1x3xf32> to vector<1x1xf32>
    %495 = vector.broadcast %494 : vector<1x1xf32> to vector<20x16xf32>
    %496 = arith.mulf %493, %495 : vector<20x16xf32>
    %497 = arith.addf %481, %496 : vector<20x16xf32>
    %cst_178 = arith.constant dense<0.000000e+00> : vector<20x8xf32>
    %498 = tpu.matmul %497, %447, %cst_178 {dimension_numbers = #tpu.dot_dimension_numbers<[1], [0], [0], [1], [0, 0, 1, 1], [], []>} : vector<20x16xf32>, vector<16x8xf32>, vector<20x8xf32> -> vector<20x8xf32>
    %499 = vector.extract_strided_slice %342 {offsets = [8, 0], sizes = [8, 32], strides = [1, 1]} : vector<32x32xf32> to vector<8x32xf32>
    %cst_179 = arith.constant dense<0.000000e+00> : vector<20x32xf32>
    %500 = tpu.matmul %498, %499, %cst_179 {dimension_numbers = #tpu.dot_dimension_numbers<[1], [0], [0], [1], [0, 0, 1, 1], [], []>} : vector<20x8xf32>, vector<8x32xf32>, vector<20x32xf32> -> vector<20x32xf32>
    %501 = arith.addf %444, %500 : vector<20x32xf32>
    %502 = vector.extract_strided_slice %371 {offsets = [0, 16], sizes = [20, 8], strides = [1, 1]} : vector<20x32xf32> to vector<20x8xf32>
    %503 = vector.extract_strided_slice %375 {offsets = [0, 16], sizes = [16, 8], strides = [1, 1]} : vector<16x32xf32> to vector<16x8xf32>
    %504 = vector.extract_strided_slice %376 {offsets = [0, 16], sizes = [16, 8], strides = [1, 1]} : vector<16x32xf32> to vector<16x8xf32>
    %cst_180 = arith.constant dense<0.000000e+00> : vector<20x16xf32>
    %505 = tpu.matmul %502, %503, %cst_180 {dimension_numbers = #tpu.dot_dimension_numbers<[1], [1], [0], [0], [0, 0, 1, 0], [], []>} : vector<20x8xf32>, vector<16x8xf32>, vector<20x16xf32> -> vector<20x16xf32>
    %cst_181 = arith.constant 0.353553385 : f32
    %506 = vector.broadcast %cst_181 : f32 to vector<20x16xf32>
    %507 = arith.mulf %505, %506 : vector<20x16xf32>
    %508 = arith.mulf %507, %378 : vector<20x16xf32>
    %509 = arith.addf %508, %384 : vector<20x16xf32>
    %cst_182 = arith.constant dense<0xFF800000> : vector<20xf32>
    %510 = vector.multi_reduction <maximumf>, %509, %cst_182 [1] : vector<20x16xf32> to vector<20xf32>
    %511 = vector.shape_cast %510 : vector<20xf32> to vector<20x1xf32>
    %512 = vector.broadcast %511 : vector<20x1xf32> to vector<20x16xf32>
    %513 = arith.subf %509, %512 : vector<20x16xf32>
    %514 = math.exp %513 : vector<20x16xf32>
    %cst_183 = arith.constant dense<0.000000e+00> : vector<20xf32>
    %515 = vector.multi_reduction <add>, %514, %cst_183 [1] : vector<20x16xf32> to vector<20xf32>
    %516 = vector.shape_cast %515 : vector<20xf32> to vector<20x1xf32>
    %517 = tpu.reciprocal %516 {approx = true} : vector<20x1xf32> -> vector<20x1xf32>
    %518 = vector.broadcast %517 : vector<20x1xf32> to vector<20x16xf32>
    %519 = arith.mulf %514, %518 : vector<20x16xf32>
    %520 = vector.extract_strided_slice %368 {offsets = [0, 0], sizes = [1, 1], strides = [1, 1]} : vector<1x3xf32> to vector<1x1xf32>
    %521 = vector.broadcast %520 : vector<1x1xf32> to vector<20x16xf32>
    %522 = arith.mulf %519, %521 : vector<20x16xf32>
    %523 = arith.mulf %507, %380 : vector<20x16xf32>
    %524 = arith.addf %523, %386 : vector<20x16xf32>
    %cst_184 = arith.constant dense<0xFF800000> : vector<20xf32>
    %525 = vector.multi_reduction <maximumf>, %524, %cst_184 [1] : vector<20x16xf32> to vector<20xf32>
    %526 = vector.shape_cast %525 : vector<20xf32> to vector<20x1xf32>
    %527 = vector.broadcast %526 : vector<20x1xf32> to vector<20x16xf32>
    %528 = arith.subf %524, %527 : vector<20x16xf32>
    %529 = math.exp %528 : vector<20x16xf32>
    %cst_185 = arith.constant dense<0.000000e+00> : vector<20xf32>
    %530 = vector.multi_reduction <add>, %529, %cst_185 [1] : vector<20x16xf32> to vector<20xf32>
    %531 = vector.shape_cast %530 : vector<20xf32> to vector<20x1xf32>
    %532 = tpu.reciprocal %531 {approx = true} : vector<20x1xf32> -> vector<20x1xf32>
    %533 = vector.broadcast %532 : vector<20x1xf32> to vector<20x16xf32>
    %534 = arith.mulf %529, %533 : vector<20x16xf32>
    %535 = vector.extract_strided_slice %368 {offsets = [0, 1], sizes = [1, 1], strides = [1, 1]} : vector<1x3xf32> to vector<1x1xf32>
    %536 = vector.broadcast %535 : vector<1x1xf32> to vector<20x16xf32>
    %537 = arith.mulf %534, %536 : vector<20x16xf32>
    %538 = arith.addf %522, %537 : vector<20x16xf32>
    %539 = arith.mulf %507, %382 : vector<20x16xf32>
    %540 = arith.addf %539, %388 : vector<20x16xf32>
    %cst_186 = arith.constant dense<0xFF800000> : vector<20xf32>
    %541 = vector.multi_reduction <maximumf>, %540, %cst_186 [1] : vector<20x16xf32> to vector<20xf32>
    %542 = vector.shape_cast %541 : vector<20xf32> to vector<20x1xf32>
    %543 = vector.broadcast %542 : vector<20x1xf32> to vector<20x16xf32>
    %544 = arith.subf %540, %543 : vector<20x16xf32>
    %545 = math.exp %544 : vector<20x16xf32>
    %cst_187 = arith.constant dense<0.000000e+00> : vector<20xf32>
    %546 = vector.multi_reduction <add>, %545, %cst_187 [1] : vector<20x16xf32> to vector<20xf32>
    %547 = vector.shape_cast %546 : vector<20xf32> to vector<20x1xf32>
    %548 = tpu.reciprocal %547 {approx = true} : vector<20x1xf32> -> vector<20x1xf32>
    %549 = vector.broadcast %548 : vector<20x1xf32> to vector<20x16xf32>
    %550 = arith.mulf %545, %549 : vector<20x16xf32>
    %551 = vector.extract_strided_slice %368 {offsets = [0, 2], sizes = [1, 1], strides = [1, 1]} : vector<1x3xf32> to vector<1x1xf32>
    %552 = vector.broadcast %551 : vector<1x1xf32> to vector<20x16xf32>
    %553 = arith.mulf %550, %552 : vector<20x16xf32>
    %554 = arith.addf %538, %553 : vector<20x16xf32>
    %cst_188 = arith.constant dense<0.000000e+00> : vector<20x8xf32>
    %555 = tpu.matmul %554, %504, %cst_188 {dimension_numbers = #tpu.dot_dimension_numbers<[1], [0], [0], [1], [0, 0, 1, 1], [], []>} : vector<20x16xf32>, vector<16x8xf32>, vector<20x8xf32> -> vector<20x8xf32>
    %556 = vector.extract_strided_slice %342 {offsets = [16, 0], sizes = [8, 32], strides = [1, 1]} : vector<32x32xf32> to vector<8x32xf32>
    %cst_189 = arith.constant dense<0.000000e+00> : vector<20x32xf32>
    %557 = tpu.matmul %555, %556, %cst_189 {dimension_numbers = #tpu.dot_dimension_numbers<[1], [0], [0], [1], [0, 0, 1, 1], [], []>} : vector<20x8xf32>, vector<8x32xf32>, vector<20x32xf32> -> vector<20x32xf32>
    %558 = arith.addf %501, %557 : vector<20x32xf32>
    %559 = vector.extract_strided_slice %371 {offsets = [0, 24], sizes = [20, 8], strides = [1, 1]} : vector<20x32xf32> to vector<20x8xf32>
    %560 = vector.extract_strided_slice %375 {offsets = [0, 24], sizes = [16, 8], strides = [1, 1]} : vector<16x32xf32> to vector<16x8xf32>
    %561 = vector.extract_strided_slice %376 {offsets = [0, 24], sizes = [16, 8], strides = [1, 1]} : vector<16x32xf32> to vector<16x8xf32>
    %cst_190 = arith.constant dense<0.000000e+00> : vector<20x16xf32>
    %562 = tpu.matmul %559, %560, %cst_190 {dimension_numbers = #tpu.dot_dimension_numbers<[1], [1], [0], [0], [0, 0, 1, 0], [], []>} : vector<20x8xf32>, vector<16x8xf32>, vector<20x16xf32> -> vector<20x16xf32>
    %cst_191 = arith.constant 0.353553385 : f32
    %563 = vector.broadcast %cst_191 : f32 to vector<20x16xf32>
    %564 = arith.mulf %562, %563 : vector<20x16xf32>
    %565 = arith.mulf %564, %378 : vector<20x16xf32>
    %566 = arith.addf %565, %384 : vector<20x16xf32>
    %cst_192 = arith.constant dense<0xFF800000> : vector<20xf32>
    %567 = vector.multi_reduction <maximumf>, %566, %cst_192 [1] : vector<20x16xf32> to vector<20xf32>
    %568 = vector.shape_cast %567 : vector<20xf32> to vector<20x1xf32>
    %569 = vector.broadcast %568 : vector<20x1xf32> to vector<20x16xf32>
    %570 = arith.subf %566, %569 : vector<20x16xf32>
    %571 = math.exp %570 : vector<20x16xf32>
    %cst_193 = arith.constant dense<0.000000e+00> : vector<20xf32>
    %572 = vector.multi_reduction <add>, %571, %cst_193 [1] : vector<20x16xf32> to vector<20xf32>
    %573 = vector.shape_cast %572 : vector<20xf32> to vector<20x1xf32>
    %574 = tpu.reciprocal %573 {approx = true} : vector<20x1xf32> -> vector<20x1xf32>
    %575 = vector.broadcast %574 : vector<20x1xf32> to vector<20x16xf32>
    %576 = arith.mulf %571, %575 : vector<20x16xf32>
    %577 = vector.extract_strided_slice %368 {offsets = [0, 0], sizes = [1, 1], strides = [1, 1]} : vector<1x3xf32> to vector<1x1xf32>
    %578 = vector.broadcast %577 : vector<1x1xf32> to vector<20x16xf32>
    %579 = arith.mulf %576, %578 : vector<20x16xf32>
    %580 = arith.mulf %564, %380 : vector<20x16xf32>
    %581 = arith.addf %580, %386 : vector<20x16xf32>
    %cst_194 = arith.constant dense<0xFF800000> : vector<20xf32>
    %582 = vector.multi_reduction <maximumf>, %581, %cst_194 [1] : vector<20x16xf32> to vector<20xf32>
    %583 = vector.shape_cast %582 : vector<20xf32> to vector<20x1xf32>
    %584 = vector.broadcast %583 : vector<20x1xf32> to vector<20x16xf32>
    %585 = arith.subf %581, %584 : vector<20x16xf32>
    %586 = math.exp %585 : vector<20x16xf32>
    %cst_195 = arith.constant dense<0.000000e+00> : vector<20xf32>
    %587 = vector.multi_reduction <add>, %586, %cst_195 [1] : vector<20x16xf32> to vector<20xf32>
    %588 = vector.shape_cast %587 : vector<20xf32> to vector<20x1xf32>
    %589 = tpu.reciprocal %588 {approx = true} : vector<20x1xf32> -> vector<20x1xf32>
    %590 = vector.broadcast %589 : vector<20x1xf32> to vector<20x16xf32>
    %591 = arith.mulf %586, %590 : vector<20x16xf32>
    %592 = vector.extract_strided_slice %368 {offsets = [0, 1], sizes = [1, 1], strides = [1, 1]} : vector<1x3xf32> to vector<1x1xf32>
    %593 = vector.broadcast %592 : vector<1x1xf32> to vector<20x16xf32>
    %594 = arith.mulf %591, %593 : vector<20x16xf32>
    %595 = arith.addf %579, %594 : vector<20x16xf32>
    %596 = arith.mulf %564, %382 : vector<20x16xf32>
    %597 = arith.addf %596, %388 : vector<20x16xf32>
    %cst_196 = arith.constant dense<0xFF800000> : vector<20xf32>
    %598 = vector.multi_reduction <maximumf>, %597, %cst_196 [1] : vector<20x16xf32> to vector<20xf32>
    %599 = vector.shape_cast %598 : vector<20xf32> to vector<20x1xf32>
    %600 = vector.broadcast %599 : vector<20x1xf32> to vector<20x16xf32>
    %601 = arith.subf %597, %600 : vector<20x16xf32>
    %602 = math.exp %601 : vector<20x16xf32>
    %cst_197 = arith.constant dense<0.000000e+00> : vector<20xf32>
    %603 = vector.multi_reduction <add>, %602, %cst_197 [1] : vector<20x16xf32> to vector<20xf32>
    %604 = vector.shape_cast %603 : vector<20xf32> to vector<20x1xf32>
    %605 = tpu.reciprocal %604 {approx = true} : vector<20x1xf32> -> vector<20x1xf32>
    %606 = vector.broadcast %605 : vector<20x1xf32> to vector<20x16xf32>
    %607 = arith.mulf %602, %606 : vector<20x16xf32>
    %608 = vector.extract_strided_slice %368 {offsets = [0, 2], sizes = [1, 1], strides = [1, 1]} : vector<1x3xf32> to vector<1x1xf32>
    %609 = vector.broadcast %608 : vector<1x1xf32> to vector<20x16xf32>
    %610 = arith.mulf %607, %609 : vector<20x16xf32>
    %611 = arith.addf %595, %610 : vector<20x16xf32>
    %cst_198 = arith.constant dense<0.000000e+00> : vector<20x8xf32>
    %612 = tpu.matmul %611, %561, %cst_198 {dimension_numbers = #tpu.dot_dimension_numbers<[1], [0], [0], [1], [0, 0, 1, 1], [], []>} : vector<20x16xf32>, vector<16x8xf32>, vector<20x8xf32> -> vector<20x8xf32>
    %613 = vector.extract_strided_slice %342 {offsets = [24, 0], sizes = [8, 32], strides = [1, 1]} : vector<32x32xf32> to vector<8x32xf32>
    %cst_199 = arith.constant dense<0.000000e+00> : vector<20x32xf32>
    %614 = tpu.matmul %612, %613, %cst_199 {dimension_numbers = #tpu.dot_dimension_numbers<[1], [0], [0], [1], [0, 0, 1, 1], [], []>} : vector<20x8xf32>, vector<8x32xf32>, vector<20x32xf32> -> vector<20x32xf32>
    %615 = arith.addf %558, %614 : vector<20x32xf32>
    %616 = vector.broadcast %344 : vector<1x32xf32> to vector<20x32xf32>
    %617 = arith.addf %615, %616 : vector<20x32xf32>
    %618 = arith.addf %4, %617 : vector<20x32xf32>
    %619 = vector.extract_strided_slice %6 {offsets = [1, 0], sizes = [1, 32], strides = [1, 1]} : vector<4x32xf32> to vector<1x32xf32>
    %620 = vector.extract_strided_slice %8 {offsets = [1, 0], sizes = [1, 32], strides = [1, 1]} : vector<4x32xf32> to vector<1x32xf32>
    %cst_200 = arith.constant dense<0.000000e+00> : vector<20xf32>
    %621 = vector.multi_reduction <add>, %618, %cst_200 [1] : vector<20x32xf32> to vector<20xf32>
    %622 = vector.shape_cast %621 : vector<20xf32> to vector<20x1xf32>
    %cst_201 = arith.constant 3.200000e+01 : f32
    %623 = vector.broadcast %cst_201 : f32 to vector<20x1xf32>
    %624 = arith.divf %622, %623 : vector<20x1xf32>
    %625 = vector.broadcast %624 : vector<20x1xf32> to vector<20x32xf32>
    %626 = arith.subf %618, %625 : vector<20x32xf32>
    %627 = arith.mulf %626, %626 : vector<20x32xf32>
    %cst_202 = arith.constant dense<0.000000e+00> : vector<20xf32>
    %628 = vector.multi_reduction <add>, %627, %cst_202 [1] : vector<20x32xf32> to vector<20xf32>
    %629 = vector.shape_cast %628 : vector<20xf32> to vector<20x1xf32>
    %cst_203 = arith.constant 3.100000e+01 : f32
    %630 = vector.broadcast %cst_203 : f32 to vector<20x1xf32>
    %631 = arith.divf %629, %630 : vector<20x1xf32>
    %632 = math.sqrt %631 : vector<20x1xf32>
    %cst_204 = arith.constant 9.99999997E-7 : f32
    %633 = vector.broadcast %cst_204 : f32 to vector<20x1xf32>
    %634 = arith.addf %632, %633 : vector<20x1xf32>
    %cst_205 = arith.constant 1.000000e+00 : f32
    %635 = vector.broadcast %cst_205 : f32 to vector<20x1xf32>
    %636 = arith.divf %635, %634 : vector<20x1xf32>
    %637 = vector.broadcast %624 : vector<20x1xf32> to vector<20x32xf32>
    %638 = arith.subf %618, %637 : vector<20x32xf32>
    %639 = vector.broadcast %619 : vector<1x32xf32> to vector<20x32xf32>
    %640 = arith.mulf %639, %638 : vector<20x32xf32>
    %641 = vector.broadcast %636 : vector<20x1xf32> to vector<20x32xf32>
    %642 = arith.mulf %640, %641 : vector<20x32xf32>
    %643 = vector.broadcast %620 : vector<1x32xf32> to vector<20x32xf32>
    %644 = arith.addf %642, %643 : vector<20x32xf32>
    %c0_206 = arith.constant 0 : index
    %c0_207 = arith.constant 0 : index
    %645 = vector.load %arg37[%c0_206, %c0_207] : memref<36x32xf32, #tpu.memory_space<vmem>>, vector<16x32xf32>
    tpu.vector_store %arg37[%c0_206, %c0_207], %326 {strides = array<i32>} : memref<36x32xf32, #tpu.memory_space<vmem>>, vector<16x32xf32>,
    %c16_208 = arith.constant 16 : index
    %c0_209 = arith.constant 0 : index
    %646 = vector.load %arg37[%c16_208, %c0_209] : memref<36x32xf32, #tpu.memory_space<vmem>>, vector<20x32xf32>
    tpu.vector_store %arg37[%c16_208, %c0_209], %644 {strides = array<i32>} : memref<36x32xf32, #tpu.memory_space<vmem>>, vector<20x32xf32>,
    %c0_210 = arith.constant 0 : index
    %c0_211 = arith.constant 0 : index
    %647 = vector.load %arg37[%c0_210, %c0_211] : memref<36x32xf32, #tpu.memory_space<vmem>>, vector<36x32xf32>
    %c0_212 = arith.constant 0 : index
    %c0_213 = arith.constant 0 : index
    %c0_214 = arith.constant 0 : index
    %648 = vector.load %arg25[%c0_212, %c0_213, %c0_214] : memref<1x32x96xf32, #tpu.memory_space<vmem>>, vector<1x32x96xf32>
    %649 = vector.shape_cast %648 : vector<1x32x96xf32> to vector<32x96xf32>
    %cst_215 = arith.constant dense<0.000000e+00> : vector<36x96xf32>
    %650 = tpu.matmul %647, %649, %cst_215 {dimension_numbers = #tpu.dot_dimension_numbers<[1], [0], [0], [1], [0, 0, 1, 1], [], []>} : vector<36x32xf32>, vector<32x96xf32>, vector<36x96xf32> -> vector<36x96xf32>
    %c0_216 = arith.constant 0 : index
    %c0_217 = arith.constant 0 : index
    %c0_218 = arith.constant 0 : index
    %651 = vector.load %arg26[%c0_216, %c0_217, %c0_218] : memref<1x1x96xf32, #tpu.memory_space<vmem>>, vector<1x1x96xf32>
    %652 = vector.shape_cast %651 : vector<1x1x96xf32> to vector<1x96xf32>
    %653 = vector.broadcast %652 : vector<1x96xf32> to vector<36x96xf32>
    %654 = arith.addf %650, %653 : vector<36x96xf32>
    %655 = vector.extract_strided_slice %654 {offsets = [0, 0], sizes = [36, 32], strides = [1, 1]} : vector<36x96xf32> to vector<36x32xf32>
    %656 = vector.extract_strided_slice %654 {offsets = [0, 32], sizes = [36, 32], strides = [1, 1]} : vector<36x96xf32> to vector<36x32xf32>
    %657 = vector.extract_strided_slice %654 {offsets = [0, 64], sizes = [36, 32], strides = [1, 1]} : vector<36x96xf32> to vector<36x32xf32>
    %c0_219 = arith.constant 0 : index
    %c0_220 = arith.constant 0 : index
    %c0_221 = arith.constant 0 : index
    %658 = vector.load %arg6[%c0_219, %c0_220, %c0_221] : memref<1x36x36xf32, #tpu.memory_space<vmem>>, vector<1x36x36xf32>
    %659 = vector.shape_cast %658 : vector<1x36x36xf32> to vector<36x36xf32>
    %c0_222 = arith.constant 0 : index
    %c0_223 = arith.constant 0 : index
    %c0_224 = arith.constant 0 : index
    %660 = vector.load %arg27[%c0_222, %c0_223, %c0_224] : memref<1x32x32xf32, #tpu.memory_space<vmem>>, vector<1x32x32xf32>
    %661 = vector.shape_cast %660 : vector<1x32x32xf32> to vector<32x32xf32>
    %c0_225 = arith.constant 0 : index
    %c0_226 = arith.constant 0 : index
    %c0_227 = arith.constant 0 : index
    %662 = vector.load %arg28[%c0_225, %c0_226, %c0_227] : memref<1x1x32xf32, #tpu.memory_space<vmem>>, vector<1x1x32xf32>
    %663 = vector.shape_cast %662 : vector<1x1x32xf32> to vector<1x32xf32>
    %cst_228 = arith.constant 1.000000e+00 : f32
    %664 = vector.broadcast %cst_228 : f32 to vector<36x36xf32>
    %665 = arith.subf %664, %659 : vector<36x36xf32>
    %cst_229 = arith.constant -1.000000e+09 : f32
    %666 = vector.broadcast %cst_229 : f32 to vector<36x36xf32>
    %667 = arith.mulf %666, %659 : vector<36x36xf32>
    %668 = vector.extract_strided_slice %655 {offsets = [0, 0], sizes = [36, 8], strides = [1, 1]} : vector<36x32xf32> to vector<36x8xf32>
    %669 = vector.extract_strided_slice %656 {offsets = [0, 0], sizes = [36, 8], strides = [1, 1]} : vector<36x32xf32> to vector<36x8xf32>
    %670 = vector.extract_strided_slice %657 {offsets = [0, 0], sizes = [36, 8], strides = [1, 1]} : vector<36x32xf32> to vector<36x8xf32>
    %cst_230 = arith.constant dense<0.000000e+00> : vector<36x36xf32>
    %671 = tpu.matmul %668, %669, %cst_230 {dimension_numbers = #tpu.dot_dimension_numbers<[1], [1], [0], [0], [0, 0, 1, 0], [], []>} : vector<36x8xf32>, vector<36x8xf32>, vector<36x36xf32> -> vector<36x36xf32>
    %cst_231 = arith.constant 0.353553385 : f32
    %672 = vector.broadcast %cst_231 : f32 to vector<36x36xf32>
    %673 = arith.mulf %671, %672 : vector<36x36xf32>
    %674 = arith.mulf %673, %665 : vector<36x36xf32>
    %675 = arith.addf %674, %667 : vector<36x36xf32>
    %cst_232 = arith.constant dense<0xFF800000> : vector<36xf32>
    %676 = vector.multi_reduction <maximumf>, %675, %cst_232 [1] : vector<36x36xf32> to vector<36xf32>
    %677 = vector.shape_cast %676 : vector<36xf32> to vector<36x1xf32>
    %678 = vector.broadcast %677 : vector<36x1xf32> to vector<36x36xf32>
    %679 = arith.subf %675, %678 : vector<36x36xf32>
    %680 = math.exp %679 : vector<36x36xf32>
    %cst_233 = arith.constant dense<0.000000e+00> : vector<36xf32>
    %681 = vector.multi_reduction <add>, %680, %cst_233 [1] : vector<36x36xf32> to vector<36xf32>
    %682 = vector.shape_cast %681 : vector<36xf32> to vector<36x1xf32>
    %683 = tpu.reciprocal %682 {approx = true} : vector<36x1xf32> -> vector<36x1xf32>
    %684 = vector.broadcast %683 : vector<36x1xf32> to vector<36x36xf32>
    %685 = arith.mulf %680, %684 : vector<36x36xf32>
    %cst_234 = arith.constant dense<0.000000e+00> : vector<36x8xf32>
    %686 = tpu.matmul %685, %670, %cst_234 {dimension_numbers = #tpu.dot_dimension_numbers<[1], [0], [0], [1], [0, 0, 1, 1], [], []>} : vector<36x36xf32>, vector<36x8xf32>, vector<36x8xf32> -> vector<36x8xf32>
    %687 = vector.extract_strided_slice %661 {offsets = [0, 0], sizes = [8, 32], strides = [1, 1]} : vector<32x32xf32> to vector<8x32xf32>
    %cst_235 = arith.constant dense<0.000000e+00> : vector<36x32xf32>
    %688 = tpu.matmul %686, %687, %cst_235 {dimension_numbers = #tpu.dot_dimension_numbers<[1], [0], [0], [1], [0, 0, 1, 1], [], []>} : vector<36x8xf32>, vector<8x32xf32>, vector<36x32xf32> -> vector<36x32xf32>
    %689 = vector.extract_strided_slice %655 {offsets = [0, 8], sizes = [36, 8], strides = [1, 1]} : vector<36x32xf32> to vector<36x8xf32>
    %690 = vector.extract_strided_slice %656 {offsets = [0, 8], sizes = [36, 8], strides = [1, 1]} : vector<36x32xf32> to vector<36x8xf32>
    %691 = vector.extract_strided_slice %657 {offsets = [0, 8], sizes = [36, 8], strides = [1, 1]} : vector<36x32xf32> to vector<36x8xf32>
    %cst_236 = arith.constant dense<0.000000e+00> : vector<36x36xf32>
    %692 = tpu.matmul %689, %690, %cst_236 {dimension_numbers = #tpu.dot_dimension_numbers<[1], [1], [0], [0], [0, 0, 1, 0], [], []>} : vector<36x8xf32>, vector<36x8xf32>, vector<36x36xf32> -> vector<36x36xf32>
    %cst_237 = arith.constant 0.353553385 : f32
    %693 = vector.broadcast %cst_237 : f32 to vector<36x36xf32>
    %694 = arith.mulf %692, %693 : vector<36x36xf32>
    %695 = arith.mulf %694, %665 : vector<36x36xf32>
    %696 = arith.addf %695, %667 : vector<36x36xf32>
    %cst_238 = arith.constant dense<0xFF800000> : vector<36xf32>
    %697 = vector.multi_reduction <maximumf>, %696, %cst_238 [1] : vector<36x36xf32> to vector<36xf32>
    %698 = vector.shape_cast %697 : vector<36xf32> to vector<36x1xf32>
    %699 = vector.broadcast %698 : vector<36x1xf32> to vector<36x36xf32>
    %700 = arith.subf %696, %699 : vector<36x36xf32>
    %701 = math.exp %700 : vector<36x36xf32>
    %cst_239 = arith.constant dense<0.000000e+00> : vector<36xf32>
    %702 = vector.multi_reduction <add>, %701, %cst_239 [1] : vector<36x36xf32> to vector<36xf32>
    %703 = vector.shape_cast %702 : vector<36xf32> to vector<36x1xf32>
    %704 = tpu.reciprocal %703 {approx = true} : vector<36x1xf32> -> vector<36x1xf32>
    %705 = vector.broadcast %704 : vector<36x1xf32> to vector<36x36xf32>
    %706 = arith.mulf %701, %705 : vector<36x36xf32>
    %cst_240 = arith.constant dense<0.000000e+00> : vector<36x8xf32>
    %707 = tpu.matmul %706, %691, %cst_240 {dimension_numbers = #tpu.dot_dimension_numbers<[1], [0], [0], [1], [0, 0, 1, 1], [], []>} : vector<36x36xf32>, vector<36x8xf32>, vector<36x8xf32> -> vector<36x8xf32>
    %708 = vector.extract_strided_slice %661 {offsets = [8, 0], sizes = [8, 32], strides = [1, 1]} : vector<32x32xf32> to vector<8x32xf32>
    %cst_241 = arith.constant dense<0.000000e+00> : vector<36x32xf32>
    %709 = tpu.matmul %707, %708, %cst_241 {dimension_numbers = #tpu.dot_dimension_numbers<[1], [0], [0], [1], [0, 0, 1, 1], [], []>} : vector<36x8xf32>, vector<8x32xf32>, vector<36x32xf32> -> vector<36x32xf32>
    %710 = arith.addf %688, %709 : vector<36x32xf32>
    %711 = vector.extract_strided_slice %655 {offsets = [0, 16], sizes = [36, 8], strides = [1, 1]} : vector<36x32xf32> to vector<36x8xf32>
    %712 = vector.extract_strided_slice %656 {offsets = [0, 16], sizes = [36, 8], strides = [1, 1]} : vector<36x32xf32> to vector<36x8xf32>
    %713 = vector.extract_strided_slice %657 {offsets = [0, 16], sizes = [36, 8], strides = [1, 1]} : vector<36x32xf32> to vector<36x8xf32>
    %cst_242 = arith.constant dense<0.000000e+00> : vector<36x36xf32>
    %714 = tpu.matmul %711, %712, %cst_242 {dimension_numbers = #tpu.dot_dimension_numbers<[1], [1], [0], [0], [0, 0, 1, 0], [], []>} : vector<36x8xf32>, vector<36x8xf32>, vector<36x36xf32> -> vector<36x36xf32>
    %cst_243 = arith.constant 0.353553385 : f32
    %715 = vector.broadcast %cst_243 : f32 to vector<36x36xf32>
    %716 = arith.mulf %714, %715 : vector<36x36xf32>
    %717 = arith.mulf %716, %665 : vector<36x36xf32>
    %718 = arith.addf %717, %667 : vector<36x36xf32>
    %cst_244 = arith.constant dense<0xFF800000> : vector<36xf32>
    %719 = vector.multi_reduction <maximumf>, %718, %cst_244 [1] : vector<36x36xf32> to vector<36xf32>
    %720 = vector.shape_cast %719 : vector<36xf32> to vector<36x1xf32>
    %721 = vector.broadcast %720 : vector<36x1xf32> to vector<36x36xf32>
    %722 = arith.subf %718, %721 : vector<36x36xf32>
    %723 = math.exp %722 : vector<36x36xf32>
    %cst_245 = arith.constant dense<0.000000e+00> : vector<36xf32>
    %724 = vector.multi_reduction <add>, %723, %cst_245 [1] : vector<36x36xf32> to vector<36xf32>
    %725 = vector.shape_cast %724 : vector<36xf32> to vector<36x1xf32>
    %726 = tpu.reciprocal %725 {approx = true} : vector<36x1xf32> -> vector<36x1xf32>
    %727 = vector.broadcast %726 : vector<36x1xf32> to vector<36x36xf32>
    %728 = arith.mulf %723, %727 : vector<36x36xf32>
    %cst_246 = arith.constant dense<0.000000e+00> : vector<36x8xf32>
    %729 = tpu.matmul %728, %713, %cst_246 {dimension_numbers = #tpu.dot_dimension_numbers<[1], [0], [0], [1], [0, 0, 1, 1], [], []>} : vector<36x36xf32>, vector<36x8xf32>, vector<36x8xf32> -> vector<36x8xf32>
    %730 = vector.extract_strided_slice %661 {offsets = [16, 0], sizes = [8, 32], strides = [1, 1]} : vector<32x32xf32> to vector<8x32xf32>
    %cst_247 = arith.constant dense<0.000000e+00> : vector<36x32xf32>
    %731 = tpu.matmul %729, %730, %cst_247 {dimension_numbers = #tpu.dot_dimension_numbers<[1], [0], [0], [1], [0, 0, 1, 1], [], []>} : vector<36x8xf32>, vector<8x32xf32>, vector<36x32xf32> -> vector<36x32xf32>
    %732 = arith.addf %710, %731 : vector<36x32xf32>
    %733 = vector.extract_strided_slice %655 {offsets = [0, 24], sizes = [36, 8], strides = [1, 1]} : vector<36x32xf32> to vector<36x8xf32>
    %734 = vector.extract_strided_slice %656 {offsets = [0, 24], sizes = [36, 8], strides = [1, 1]} : vector<36x32xf32> to vector<36x8xf32>
    %735 = vector.extract_strided_slice %657 {offsets = [0, 24], sizes = [36, 8], strides = [1, 1]} : vector<36x32xf32> to vector<36x8xf32>
    %cst_248 = arith.constant dense<0.000000e+00> : vector<36x36xf32>
    %736 = tpu.matmul %733, %734, %cst_248 {dimension_numbers = #tpu.dot_dimension_numbers<[1], [1], [0], [0], [0, 0, 1, 0], [], []>} : vector<36x8xf32>, vector<36x8xf32>, vector<36x36xf32> -> vector<36x36xf32>
    %cst_249 = arith.constant 0.353553385 : f32
    %737 = vector.broadcast %cst_249 : f32 to vector<36x36xf32>
    %738 = arith.mulf %736, %737 : vector<36x36xf32>
    %739 = arith.mulf %738, %665 : vector<36x36xf32>
    %740 = arith.addf %739, %667 : vector<36x36xf32>
    %cst_250 = arith.constant dense<0xFF800000> : vector<36xf32>
    %741 = vector.multi_reduction <maximumf>, %740, %cst_250 [1] : vector<36x36xf32> to vector<36xf32>
    %742 = vector.shape_cast %741 : vector<36xf32> to vector<36x1xf32>
    %743 = vector.broadcast %742 : vector<36x1xf32> to vector<36x36xf32>
    %744 = arith.subf %740, %743 : vector<36x36xf32>
    %745 = math.exp %744 : vector<36x36xf32>
    %cst_251 = arith.constant dense<0.000000e+00> : vector<36xf32>
    %746 = vector.multi_reduction <add>, %745, %cst_251 [1] : vector<36x36xf32> to vector<36xf32>
    %747 = vector.shape_cast %746 : vector<36xf32> to vector<36x1xf32>
    %748 = tpu.reciprocal %747 {approx = true} : vector<36x1xf32> -> vector<36x1xf32>
    %749 = vector.broadcast %748 : vector<36x1xf32> to vector<36x36xf32>
    %750 = arith.mulf %745, %749 : vector<36x36xf32>
    %cst_252 = arith.constant dense<0.000000e+00> : vector<36x8xf32>
    %751 = tpu.matmul %750, %735, %cst_252 {dimension_numbers = #tpu.dot_dimension_numbers<[1], [0], [0], [1], [0, 0, 1, 1], [], []>} : vector<36x36xf32>, vector<36x8xf32>, vector<36x8xf32> -> vector<36x8xf32>
    %752 = vector.extract_strided_slice %661 {offsets = [24, 0], sizes = [8, 32], strides = [1, 1]} : vector<32x32xf32> to vector<8x32xf32>
    %cst_253 = arith.constant dense<0.000000e+00> : vector<36x32xf32>
    %753 = tpu.matmul %751, %752, %cst_253 {dimension_numbers = #tpu.dot_dimension_numbers<[1], [0], [0], [1], [0, 0, 1, 1], [], []>} : vector<36x8xf32>, vector<8x32xf32>, vector<36x32xf32> -> vector<36x32xf32>
    %754 = arith.addf %732, %753 : vector<36x32xf32>
    %755 = vector.broadcast %663 : vector<1x32xf32> to vector<36x32xf32>
    %756 = arith.addf %754, %755 : vector<36x32xf32>
    %757 = arith.addf %647, %756 : vector<36x32xf32>
    %758 = vector.extract_strided_slice %6 {offsets = [2, 0], sizes = [1, 32], strides = [1, 1]} : vector<4x32xf32> to vector<1x32xf32>
    %759 = vector.extract_strided_slice %8 {offsets = [2, 0], sizes = [1, 32], strides = [1, 1]} : vector<4x32xf32> to vector<1x32xf32>
    %cst_254 = arith.constant dense<0.000000e+00> : vector<36xf32>
    %760 = vector.multi_reduction <add>, %757, %cst_254 [1] : vector<36x32xf32> to vector<36xf32>
    %761 = vector.shape_cast %760 : vector<36xf32> to vector<36x1xf32>
    %cst_255 = arith.constant 3.200000e+01 : f32
    %762 = vector.broadcast %cst_255 : f32 to vector<36x1xf32>
    %763 = arith.divf %761, %762 : vector<36x1xf32>
    %764 = vector.broadcast %763 : vector<36x1xf32> to vector<36x32xf32>
    %765 = arith.subf %757, %764 : vector<36x32xf32>
    %766 = arith.mulf %765, %765 : vector<36x32xf32>
    %cst_256 = arith.constant dense<0.000000e+00> : vector<36xf32>
    %767 = vector.multi_reduction <add>, %766, %cst_256 [1] : vector<36x32xf32> to vector<36xf32>
    %768 = vector.shape_cast %767 : vector<36xf32> to vector<36x1xf32>
    %cst_257 = arith.constant 3.100000e+01 : f32
    %769 = vector.broadcast %cst_257 : f32 to vector<36x1xf32>
    %770 = arith.divf %768, %769 : vector<36x1xf32>
    %771 = math.sqrt %770 : vector<36x1xf32>
    %cst_258 = arith.constant 9.99999997E-7 : f32
    %772 = vector.broadcast %cst_258 : f32 to vector<36x1xf32>
    %773 = arith.addf %771, %772 : vector<36x1xf32>
    %cst_259 = arith.constant 1.000000e+00 : f32
    %774 = vector.broadcast %cst_259 : f32 to vector<36x1xf32>
    %775 = arith.divf %774, %773 : vector<36x1xf32>
    %776 = vector.broadcast %763 : vector<36x1xf32> to vector<36x32xf32>
    %777 = arith.subf %757, %776 : vector<36x32xf32>
    %778 = vector.broadcast %758 : vector<1x32xf32> to vector<36x32xf32>
    %779 = arith.mulf %778, %777 : vector<36x32xf32>
    %780 = vector.broadcast %775 : vector<36x1xf32> to vector<36x32xf32>
    %781 = arith.mulf %779, %780 : vector<36x32xf32>
    %782 = vector.broadcast %759 : vector<1x32xf32> to vector<36x32xf32>
    %783 = arith.addf %781, %782 : vector<36x32xf32>
    %c0_260 = arith.constant 0 : index
    %c0_261 = arith.constant 0 : index
    %c0_262 = arith.constant 0 : index
    %784 = vector.load %arg29[%c0_260, %c0_261, %c0_262] : memref<1x32x64xf32, #tpu.memory_space<vmem>>, vector<1x32x64xf32>
    %785 = vector.shape_cast %784 : vector<1x32x64xf32> to vector<32x64xf32>
    %cst_263 = arith.constant dense<0.000000e+00> : vector<36x64xf32>
    %786 = tpu.matmul %783, %785, %cst_263 {dimension_numbers = #tpu.dot_dimension_numbers<[1], [0], [0], [1], [0, 0, 1, 1], [], []>} : vector<36x32xf32>, vector<32x64xf32>, vector<36x64xf32> -> vector<36x64xf32>
    %c0_264 = arith.constant 0 : index
    %c0_265 = arith.constant 0 : index
    %c0_266 = arith.constant 0 : index
    %787 = vector.load %arg30[%c0_264, %c0_265, %c0_266] : memref<1x1x64xf32, #tpu.memory_space<vmem>>, vector<1x1x64xf32>
    %788 = vector.shape_cast %787 : vector<1x1x64xf32> to vector<1x64xf32>
    %789 = vector.broadcast %788 : vector<1x64xf32> to vector<36x64xf32>
    %790 = arith.addf %786, %789 : vector<36x64xf32>
    %cst_267 = arith.constant 0.000000e+00 : f32
    %791 = vector.broadcast %cst_267 : f32 to vector<36x64xf32>
    %792 = arith.maximumf %790, %791 : vector<36x64xf32>
    %c0_268 = arith.constant 0 : index
    %c0_269 = arith.constant 0 : index
    %c0_270 = arith.constant 0 : index
    %793 = vector.load %arg31[%c0_268, %c0_269, %c0_270] : memref<1x64x32xf32, #tpu.memory_space<vmem>>, vector<1x64x32xf32>
    %794 = vector.shape_cast %793 : vector<1x64x32xf32> to vector<64x32xf32>
    %cst_271 = arith.constant dense<0.000000e+00> : vector<36x32xf32>
    %795 = tpu.matmul %792, %794, %cst_271 {dimension_numbers = #tpu.dot_dimension_numbers<[1], [0], [0], [1], [0, 0, 1, 1], [], []>} : vector<36x64xf32>, vector<64x32xf32>, vector<36x32xf32> -> vector<36x32xf32>
    %c0_272 = arith.constant 0 : index
    %c0_273 = arith.constant 0 : index
    %c0_274 = arith.constant 0 : index
    %796 = vector.load %arg32[%c0_272, %c0_273, %c0_274] : memref<1x1x32xf32, #tpu.memory_space<vmem>>, vector<1x1x32xf32>
    %797 = vector.shape_cast %796 : vector<1x1x32xf32> to vector<1x32xf32>
    %798 = vector.broadcast %797 : vector<1x32xf32> to vector<36x32xf32>
    %799 = arith.addf %795, %798 : vector<36x32xf32>
    %800 = arith.addf %783, %799 : vector<36x32xf32>
    %801 = vector.extract_strided_slice %6 {offsets = [3, 0], sizes = [1, 32], strides = [1, 1]} : vector<4x32xf32> to vector<1x32xf32>
    %802 = vector.extract_strided_slice %8 {offsets = [3, 0], sizes = [1, 32], strides = [1, 1]} : vector<4x32xf32> to vector<1x32xf32>
    %cst_275 = arith.constant dense<0.000000e+00> : vector<36xf32>
    %803 = vector.multi_reduction <add>, %800, %cst_275 [1] : vector<36x32xf32> to vector<36xf32>
    %804 = vector.shape_cast %803 : vector<36xf32> to vector<36x1xf32>
    %cst_276 = arith.constant 3.200000e+01 : f32
    %805 = vector.broadcast %cst_276 : f32 to vector<36x1xf32>
    %806 = arith.divf %804, %805 : vector<36x1xf32>
    %807 = vector.broadcast %806 : vector<36x1xf32> to vector<36x32xf32>
    %808 = arith.subf %800, %807 : vector<36x32xf32>
    %809 = arith.mulf %808, %808 : vector<36x32xf32>
    %cst_277 = arith.constant dense<0.000000e+00> : vector<36xf32>
    %810 = vector.multi_reduction <add>, %809, %cst_277 [1] : vector<36x32xf32> to vector<36xf32>
    %811 = vector.shape_cast %810 : vector<36xf32> to vector<36x1xf32>
    %cst_278 = arith.constant 3.100000e+01 : f32
    %812 = vector.broadcast %cst_278 : f32 to vector<36x1xf32>
    %813 = arith.divf %811, %812 : vector<36x1xf32>
    %814 = math.sqrt %813 : vector<36x1xf32>
    %cst_279 = arith.constant 9.99999997E-7 : f32
    %815 = vector.broadcast %cst_279 : f32 to vector<36x1xf32>
    %816 = arith.addf %814, %815 : vector<36x1xf32>
    %cst_280 = arith.constant 1.000000e+00 : f32
    %817 = vector.broadcast %cst_280 : f32 to vector<36x1xf32>
    %818 = arith.divf %817, %816 : vector<36x1xf32>
    %819 = vector.broadcast %806 : vector<36x1xf32> to vector<36x32xf32>
    %820 = arith.subf %800, %819 : vector<36x32xf32>
    %821 = vector.broadcast %801 : vector<1x32xf32> to vector<36x32xf32>
    %822 = arith.mulf %821, %820 : vector<36x32xf32>
    %823 = vector.broadcast %818 : vector<36x1xf32> to vector<36x32xf32>
    %824 = arith.mulf %822, %823 : vector<36x32xf32>
    %825 = vector.broadcast %802 : vector<1x32xf32> to vector<36x32xf32>
    %826 = arith.addf %824, %825 : vector<36x32xf32>
    %c0_281 = arith.constant 0 : index
    %c0_282 = arith.constant 0 : index
    %827 = vector.load %arg37[%c0_281, %c0_282] : memref<36x32xf32, #tpu.memory_space<vmem>>, vector<36x32xf32>
    tpu.vector_store %arg37[%c0_281, %c0_282], %826 {strides = array<i32>} : memref<36x32xf32, #tpu.memory_space<vmem>>, vector<36x32xf32>,
    %c1_i32 = arith.constant 1 : i32
    %828 = arith.cmpi eq, %arg1, %c1_i32 : i32
    %829 = arith.extui %828 : i1 to i32
    %c0_i32_283 = arith.constant 0 : i32
    %830 = arith.cmpi ne, %829, %c0_i32_283 : i32
    scf.if %830 {
      %831 = vector.extract_strided_slice %826 {offsets = [0, 0], sizes = [16, 32], strides = [1, 1]} : vector<36x32xf32> to vector<16x32xf32>
      %c0_284 = arith.constant 0 : index
      %c0_285 = arith.constant 0 : index
      %c0_286 = arith.constant 0 : index
      %832 = vector.load %arg35[%c0_284, %c0_285, %c0_286] : memref<1x16x32xf32, #tpu.memory_space<vmem>>, vector<1x16x32xf32>
      %833 = vector.shape_cast %832 : vector<1x16x32xf32> to vector<16x32xf32>
      %834 = vector.shape_cast %831 : vector<16x32xf32> to vector<1x16x32xf32>
      tpu.vector_store %arg35[%c0_284, %c0_285, %c0_286], %834 {strides = array<i32>} : memref<1x16x32xf32, #tpu.memory_space<vmem>>, vector<1x16x32xf32>,
      %835 = vector.extract_strided_slice %826 {offsets = [16, 0], sizes = [20, 32], strides = [1, 1]} : vector<36x32xf32> to vector<20x32xf32>
      %c0_287 = arith.constant 0 : index
      %c0_288 = arith.constant 0 : index
      %c0_289 = arith.constant 0 : index
      %836 = vector.load %arg36[%c0_287, %c0_288, %c0_289] : memref<1x20x32xf32, #tpu.memory_space<vmem>>, vector<1x20x32xf32>
      %837 = vector.shape_cast %836 : vector<1x20x32xf32> to vector<20x32xf32>
      %838 = vector.shape_cast %835 : vector<20x32xf32> to vector<1x20x32xf32>
      tpu.vector_store %arg36[%c0_287, %c0_288, %c0_289], %838 {strides = array<i32>} : memref<1x20x32xf32, #tpu.memory_space<vmem>>, vector<1x20x32xf32>,
    } else {
    }
    return
  }
  func.func @transform_0(%arg0: i32, %arg1: i32) -> (i32, i32, i32) {
    %c0_i32 = arith.constant 0 : i32
    %c0_i32_0 = arith.constant 0 : i32
    %c0_i32_1 = arith.constant 0 : i32
    return %arg0, %c0_i32, %c0_i32_0 : i32, i32, i32
  }
  func.func @transform_1(%arg0: i32, %arg1: i32) -> (i32, i32, i32) {
    %c0_i32 = arith.constant 0 : i32
    %c0_i32_0 = arith.constant 0 : i32
    %c0_i32_1 = arith.constant 0 : i32
    return %arg0, %c0_i32, %c0_i32_0 : i32, i32, i32
  }
  func.func @transform_2(%arg0: i32, %arg1: i32) -> (i32, i32, i32, i32) {
    %c0_i32 = arith.constant 0 : i32
    %c0_i32_0 = arith.constant 0 : i32
    %c0_i32_1 = arith.constant 0 : i32
    %c0_i32_2 = arith.constant 0 : i32
    return %c0_i32, %arg0, %c0_i32_0, %c0_i32_1 : i32, i32, i32, i32
  }
  func.func @transform_3(%arg0: i32, %arg1: i32) -> (i32, i32, i32, i32) {
    %c0_i32 = arith.constant 0 : i32
    %c0_i32_0 = arith.constant 0 : i32
    %c0_i32_1 = arith.constant 0 : i32
    %c0_i32_2 = arith.constant 0 : i32
    return %c0_i32, %arg0, %c0_i32_0, %c0_i32_1 : i32, i32, i32, i32
  }
  func.func @transform_4(%arg0: i32, %arg1: i32) -> (i32, i32, i32) {
    %c0_i32 = arith.constant 0 : i32
    %c0_i32_0 = arith.constant 0 : i32
    %c0_i32_1 = arith.constant 0 : i32
    return %arg0, %c0_i32, %c0_i32_0 : i32, i32, i32
  }
  func.func @transform_5(%arg0: i32, %arg1: i32) -> (i32, i32, i32) {
    %c0_i32 = arith.constant 0 : i32
    %c0_i32_0 = arith.constant 0 : i32
    %c0_i32_1 = arith.constant 0 : i32
    return %arg1, %c0_i32, %c0_i32_0 : i32, i32, i32
  }
  func.func @transform_6(%arg0: i32, %arg1: i32) -> (i32, i32, i32) {
    %c0_i32 = arith.constant 0 : i32
    %c0_i32_0 = arith.constant 0 : i32
    %c0_i32_1 = arith.constant 0 : i32
    return %arg1, %c0_i32, %c0_i32_0 : i32, i32, i32
  }
  func.func @transform_7(%arg0: i32, %arg1: i32) -> (i32, i32, i32) {
    %c0_i32 = arith.constant 0 : i32
    %c0_i32_0 = arith.constant 0 : i32
    %c0_i32_1 = arith.constant 0 : i32
    return %arg1, %c0_i32, %c0_i32_0 : i32, i32, i32
  }
  func.func @transform_8(%arg0: i32, %arg1: i32) -> (i32, i32, i32) {
    %c0_i32 = arith.constant 0 : i32
    %c0_i32_0 = arith.constant 0 : i32
    %c0_i32_1 = arith.constant 0 : i32
    return %arg1, %c0_i32, %c0_i32_0 : i32, i32, i32
  }
  func.func @transform_9(%arg0: i32, %arg1: i32) -> (i32, i32, i32) {
    %c0_i32 = arith.constant 0 : i32
    %c0_i32_0 = arith.constant 0 : i32
    %c0_i32_1 = arith.constant 0 : i32
    return %arg1, %c0_i32, %c0_i32_0 : i32, i32, i32
  }
  func.func @transform_10(%arg0: i32, %arg1: i32) -> (i32, i32, i32) {
    %c0_i32 = arith.constant 0 : i32
    %c0_i32_0 = arith.constant 0 : i32
    %c0_i32_1 = arith.constant 0 : i32
    return %arg1, %c0_i32, %c0_i32_0 : i32, i32, i32
  }
  func.func @transform_11(%arg0: i32, %arg1: i32) -> (i32, i32, i32) {
    %c0_i32 = arith.constant 0 : i32
    %c0_i32_0 = arith.constant 0 : i32
    %c0_i32_1 = arith.constant 0 : i32
    return %arg1, %c0_i32, %c0_i32_0 : i32, i32, i32
  }
  func.func @transform_12(%arg0: i32, %arg1: i32) -> (i32, i32, i32) {
    %c0_i32 = arith.constant 0 : i32
    %c0_i32_0 = arith.constant 0 : i32
    %c0_i32_1 = arith.constant 0 : i32
    return %arg1, %c0_i32, %c0_i32_0 : i32, i32, i32
  }
  func.func @transform_13(%arg0: i32, %arg1: i32) -> (i32, i32, i32) {
    %c0_i32 = arith.constant 0 : i32
    %c0_i32_0 = arith.constant 0 : i32
    %c0_i32_1 = arith.constant 0 : i32
    return %arg1, %c0_i32, %c0_i32_0 : i32, i32, i32
  }
  func.func @transform_14(%arg0: i32, %arg1: i32) -> (i32, i32, i32) {
    %c0_i32 = arith.constant 0 : i32
    %c0_i32_0 = arith.constant 0 : i32
    %c0_i32_1 = arith.constant 0 : i32
    return %arg1, %c0_i32, %c0_i32_0 : i32, i32, i32
  }
  func.func @transform_15(%arg0: i32, %arg1: i32) -> (i32, i32, i32) {
    %c0_i32 = arith.constant 0 : i32
    %c0_i32_0 = arith.constant 0 : i32
    %c0_i32_1 = arith.constant 0 : i32
    return %arg1, %c0_i32, %c0_i32_0 : i32, i32, i32
  }
  func.func @transform_16(%arg0: i32, %arg1: i32) -> (i32, i32, i32) {
    %c0_i32 = arith.constant 0 : i32
    %c0_i32_0 = arith.constant 0 : i32
    %c0_i32_1 = arith.constant 0 : i32
    return %arg1, %c0_i32, %c0_i32_0 : i32, i32, i32
  }
  func.func @transform_17(%arg0: i32, %arg1: i32) -> (i32, i32, i32) {
    %c0_i32 = arith.constant 0 : i32
    %c0_i32_0 = arith.constant 0 : i32
    %c0_i32_1 = arith.constant 0 : i32
    return %arg1, %c0_i32, %c0_i32_0 : i32, i32, i32
  }
  func.func @transform_18(%arg0: i32, %arg1: i32) -> (i32, i32, i32) {
    %c0_i32 = arith.constant 0 : i32
    %c0_i32_0 = arith.constant 0 : i32
    %c0_i32_1 = arith.constant 0 : i32
    return %arg1, %c0_i32, %c0_i32_0 : i32, i32, i32
  }
  func.func @transform_19(%arg0: i32, %arg1: i32) -> (i32, i32, i32) {
    %c0_i32 = arith.constant 0 : i32
    %c0_i32_0 = arith.constant 0 : i32
    %c0_i32_1 = arith.constant 0 : i32
    return %arg1, %c0_i32, %c0_i32_0 : i32, i32, i32
  }
  func.func @transform_20(%arg0: i32, %arg1: i32) -> (i32, i32, i32) {
    %c0_i32 = arith.constant 0 : i32
    %c0_i32_0 = arith.constant 0 : i32
    %c0_i32_1 = arith.constant 0 : i32
    return %arg1, %c0_i32, %c0_i32_0 : i32, i32, i32
  }
  func.func @transform_21(%arg0: i32, %arg1: i32) -> (i32, i32, i32) {
    %c0_i32 = arith.constant 0 : i32
    %c0_i32_0 = arith.constant 0 : i32
    %c0_i32_1 = arith.constant 0 : i32
    return %arg1, %c0_i32, %c0_i32_0 : i32, i32, i32
  }
  func.func @transform_22(%arg0: i32, %arg1: i32) -> (i32, i32, i32) {
    %c0_i32 = arith.constant 0 : i32
    %c0_i32_0 = arith.constant 0 : i32
    %c0_i32_1 = arith.constant 0 : i32
    return %arg1, %c0_i32, %c0_i32_0 : i32, i32, i32
  }
  func.func @transform_23(%arg0: i32, %arg1: i32) -> (i32, i32, i32) {
    %c0_i32 = arith.constant 0 : i32
    %c0_i32_0 = arith.constant 0 : i32
    %c0_i32_1 = arith.constant 0 : i32
    return %arg1, %c0_i32, %c0_i32_0 : i32, i32, i32
  }
  func.func @transform_24(%arg0: i32, %arg1: i32) -> (i32, i32, i32) {
    %c0_i32 = arith.constant 0 : i32
    %c0_i32_0 = arith.constant 0 : i32
    %c0_i32_1 = arith.constant 0 : i32
    return %arg1, %c0_i32, %c0_i32_0 : i32, i32, i32
  }
  func.func @transform_25(%arg0: i32, %arg1: i32) -> (i32, i32, i32) {
    %c0_i32 = arith.constant 0 : i32
    %c0_i32_0 = arith.constant 0 : i32
    %c0_i32_1 = arith.constant 0 : i32
    return %arg1, %c0_i32, %c0_i32_0 : i32, i32, i32
  }
  func.func @transform_26(%arg0: i32, %arg1: i32) -> (i32, i32, i32) {
    %c0_i32 = arith.constant 0 : i32
    %c0_i32_0 = arith.constant 0 : i32
    %c0_i32_1 = arith.constant 0 : i32
    return %arg1, %c0_i32, %c0_i32_0 : i32, i32, i32
  }
  func.func @transform_27(%arg0: i32, %arg1: i32) -> (i32, i32, i32) {
    %c0_i32 = arith.constant 0 : i32
    %c0_i32_0 = arith.constant 0 : i32
    %c0_i32_1 = arith.constant 0 : i32
    return %arg1, %c0_i32, %c0_i32_0 : i32, i32, i32
  }
  func.func @transform_28(%arg0: i32, %arg1: i32) -> (i32, i32, i32) {
    %c0_i32 = arith.constant 0 : i32
    %c0_i32_0 = arith.constant 0 : i32
    %c0_i32_1 = arith.constant 0 : i32
    return %arg1, %c0_i32, %c0_i32_0 : i32, i32, i32
  }
  func.func @transform_29(%arg0: i32, %arg1: i32) -> (i32, i32, i32) {
    %c0_i32 = arith.constant 0 : i32
    %c0_i32_0 = arith.constant 0 : i32
    %c0_i32_1 = arith.constant 0 : i32
    return %arg1, %c0_i32, %c0_i32_0 : i32, i32, i32
  }
  func.func @transform_30(%arg0: i32, %arg1: i32) -> (i32, i32, i32) {
    %c0_i32 = arith.constant 0 : i32
    %c0_i32_0 = arith.constant 0 : i32
    %c0_i32_1 = arith.constant 0 : i32
    return %arg1, %c0_i32, %c0_i32_0 : i32, i32, i32
  }
  func.func @transform_31(%arg0: i32, %arg1: i32) -> (i32, i32, i32) {
    %c0_i32 = arith.constant 0 : i32
    %c0_i32_0 = arith.constant 0 : i32
    %c0_i32_1 = arith.constant 0 : i32
    return %arg1, %c0_i32, %c0_i32_0 : i32, i32, i32
  }
  func.func @transform_32(%arg0: i32, %arg1: i32) -> (i32, i32, i32) {
    %c0_i32 = arith.constant 0 : i32
    %c0_i32_0 = arith.constant 0 : i32
    %c0_i32_1 = arith.constant 0 : i32
    return %arg1, %c0_i32, %c0_i32_0 : i32, i32, i32
  }
  func.func @transform_33(%arg0: i32, %arg1: i32) -> (i32, i32, i32) {
    %c0_i32 = arith.constant 0 : i32
    %c0_i32_0 = arith.constant 0 : i32
    %c0_i32_1 = arith.constant 0 : i32
    return %arg0, %c0_i32, %c0_i32_0 : i32, i32, i32
  }
  func.func @transform_34(%arg0: i32, %arg1: i32) -> (i32, i32, i32) {
    %c0_i32 = arith.constant 0 : i32
    %c0_i32_0 = arith.constant 0 : i32
    %c0_i32_1 = arith.constant 0 : i32
    return %arg0, %c0_i32, %c0_i32_0 : i32, i32, i32
  }
}

</mosaic_0001>

<llo_original>
// kernel: _lambda_.1
$region0: #{_lambda_.1}
  #allocation0 [shape = 'u32[]', space=smem, size = 0x4, offset = 0x4, fixed_abs, tag = 'smem constant byte address 0x4 - core index']
  #allocation1 [shape = 'u32[144,128]{1,0:T(1,128)}', space=vmem, size = 0x12000, scoped, tag = 'internal scratch']
  #allocation2 [shape = 'f32[36,32]{1,0:T(8,128)}', space=vmem, size = 0x5000, scoped, tag = 'scratch operand']
  %s0 = inlined_call_operand.smem [shape: u32[35], index: -1, kind: input, shape index: {}]
  %s1 = sld [smem:[%s0]]
  %s2 = scalar_lea.smem %s0, 1
  %s3 = sld [smem:[%s2]]
  %s4 = scalar_lea.smem %s0, 2
  %s5 = sld [smem:[%s4]]
  %s6 = scalar_lea.smem %s0, 3
  %s7 = sld [smem:[%s6]]
  %s8 = scalar_lea.smem %s0, 4
  %s9 = sld [smem:[%s8]]
  %s10 = scalar_lea.smem %s0, 5
  %s11 = sld [smem:[%s10]]
  %s12 = scalar_lea.smem %s0, 6
  %s13 = sld [smem:[%s12]]
  %s14 = scalar_lea.smem %s0, 7
  %s15 = sld [smem:[%s14]]
  %s16 = scalar_lea.smem %s0, 8
  %s17 = sld [smem:[%s16]]
  %s18 = scalar_lea.smem %s0, 9
  %s19 = sld [smem:[%s18]]
  %s20 = scalar_lea.smem %s0, 10
  %s21 = sld [smem:[%s20]]
  %s22 = scalar_lea.smem %s0, 11
  %s23 = sld [smem:[%s22]]
  %s24 = scalar_lea.smem %s0, 12
  %s25 = sld [smem:[%s24]]
  %s26 = scalar_lea.smem %s0, 13
  %s27 = sld [smem:[%s26]]
  %s28 = scalar_lea.smem %s0, 14
  %s29 = sld [smem:[%s28]]
  %s30 = scalar_lea.smem %s0, 15
  %s31 = sld [smem:[%s30]]
  %s32 = scalar_lea.smem %s0, 16
  %s33 = sld [smem:[%s32]]
  %s34 = scalar_lea.smem %s0, 17
  %s35 = sld [smem:[%s34]]
  %s36 = scalar_lea.smem %s0, 18
  %s37 = sld [smem:[%s36]]
  %s38 = scalar_lea.smem %s0, 19
  %s39 = sld [smem:[%s38]]
  %s40 = scalar_lea.smem %s0, 20
  %s41 = sld [smem:[%s40]]
  %s42 = scalar_lea.smem %s0, 21
  %s43 = sld [smem:[%s42]]
  %s44 = scalar_lea.smem %s0, 22
  %s45 = sld [smem:[%s44]]
  %s46 = scalar_lea.smem %s0, 23
  %s47 = sld [smem:[%s46]]
  %s48 = scalar_lea.smem %s0, 24
  %s49 = sld [smem:[%s48]]
  %s50 = scalar_lea.smem %s0, 25
  %s51 = sld [smem:[%s50]]
  %s52 = scalar_lea.smem %s0, 26
  %s53 = sld [smem:[%s52]]
  %s54 = scalar_lea.smem %s0, 27
  %s55 = sld [smem:[%s54]]
  %s56 = scalar_lea.smem %s0, 28
  %s57 = sld [smem:[%s56]]
  %s58 = scalar_lea.smem %s0, 29
  %s59 = sld [smem:[%s58]]
  %s60 = scalar_lea.smem %s0, 30
  %s61 = sld [smem:[%s60]]
  %s62 = scalar_lea.smem %s0, 31
  %s63 = sld [smem:[%s62]]
  %s64 = scalar_lea.smem %s0, 32
  %s65 = sld [smem:[%s64]]
  %s66 = scalar_lea.smem %s0, 33
  %s67 = sld [smem:[%s66]]
  %s68 = scalar_lea.smem %s0, 34
  %s69 = sld [smem:[%s68]]
  %70 = xla_tuple %s67, %s69
  %s71 = sld [smem:[#allocation0]]
  $region313: #{_lambda_.1} parent=0
    _
  %s73 = ssub.s32 1, %s71
  %s74 = scalar_select 0, %s73, %s71
  $region1: #{_lambda_.1} parent=0
    #allocation3 [shape = 'u8[49152]{0}', space=vmem, size = 0xc000, scoped, tag = 'input window, operand 2']
    #allocation4 [shape = 'u8[73728]{0}', space=vmem, size = 0x12000, scoped, tag = 'input window, operand 3']
    #allocation5 [shape = 'u8[1024]{0}', space=vmem, size = 0x400, scoped, tag = 'input window, operand 6']
    #allocation6 [shape = 's32[2]{0}', space=sflag, size = 0x8, scoped, tag = 'scoped memory for _lambda_.1']
    #allocation7 [shape = 's32[2]{0}', space=sflag, size = 0x8, scoped, tag = 'scoped memory for _lambda_.1']
    #allocation8 [shape = 'u8[1024]{0}', space=vmem, size = 0x400, scoped, tag = 'input window, operand 8']
    #allocation9 [shape = 's32[2]{0}', space=sflag, size = 0x8, scoped, tag = 'scoped memory for _lambda_.1']
    #allocation10 [shape = 'u8[1024]{0}', space=vmem, size = 0x400, scoped, tag = 'input window, operand 10']
    #allocation11 [shape = 'u8[1024]{0}', space=vmem, size = 0x400, scoped, tag = 'input window, operand 13']
    #allocation12 [shape = 's32[2]{0}', space=sflag, size = 0x8, scoped, tag = 'scoped memory for _lambda_.1']
    #allocation13 [shape = 'u8[1024]{0}', space=vmem, size = 0x400, scoped, tag = 'input window, operand 15']
    #allocation14 [shape = 'u8[1024]{0}', space=vmem, size = 0x400, scoped, tag = 'input window, operand 17']
    #allocation15 [shape = 's32[2]{0}', space=sflag, size = 0x8, scoped, tag = 'scoped memory for _lambda_.1']
    #allocation16 [shape = 'u8[1024]{0}', space=vmem, size = 0x400, scoped, tag = 'input window, operand 19']
    #allocation17 [shape = 'u8[1024]{0}', space=vmem, size = 0x400, scoped, tag = 'input window, operand 22']
    #allocation18 [shape = 's32[2]{0}', space=sflag, size = 0x8, scoped, tag = 'scoped memory for _lambda_.1']
    #allocation19 [shape = 'u8[1024]{0}', space=vmem, size = 0x400, scoped, tag = 'input window, operand 24']
    #allocation20 [shape = 'u8[1024]{0}', space=vmem, size = 0x400, scoped, tag = 'input window, operand 26']
    #allocation21 [shape = 's32[2]{0}', space=sflag, size = 0x8, scoped, tag = 'scoped memory for _lambda_.1']
    #allocation22 [shape = 'u8[1024]{0}', space=vmem, size = 0x400, scoped, tag = 'input window, operand 28']
    #allocation23 [shape = 'u8[1024]{0}', space=vmem, size = 0x400, scoped, tag = 'input window, operand 30']
    #allocation24 [shape = 's32[2]{0}', space=sflag, size = 0x8, scoped, tag = 'scoped memory for _lambda_.1']
    #allocation25 [shape = 'u8[4096]{0}', space=vmem, size = 0x1000, scoped, tag = 'input window, operand 31']
    #allocation26 [shape = 'u8[4096]{0}', space=vmem, size = 0x1000, scoped, tag = 'input window, operand 32']
    #allocation27 [shape = 's32[2]{0}', space=sflag, size = 0x8, scoped, tag = 'scoped memory for _lambda_.1']
    #allocation28 [shape = 'u8[16384]{0}', space=vmem, size = 0x4000, scoped, tag = 'output window, operand 0']
    %75 = vsyncpa [#allocation6], 0
    %s76 = scalar_lea.sflag [#allocation6], 1
    %77 = vsyncpa %s76, 0
    %78 = vsyncpa [#allocation9], 0
    %s79 = scalar_lea.sflag [#allocation9], 1
    %80 = vsyncpa %s79, 0
    %81 = vsyncpa [#allocation12], 0
    %s82 = scalar_lea.sflag [#allocation12], 1
    %83 = vsyncpa %s82, 0
    %84 = vsyncpa [#allocation15], 0
    %s85 = scalar_lea.sflag [#allocation15], 1
    %86 = vsyncpa %s85, 0
    %87 = vsyncpa [#allocation18], 0
    %s88 = scalar_lea.sflag [#allocation18], 1
    %89 = vsyncpa %s88, 0
    %90 = vsyncpa [#allocation21], 0
    %s91 = scalar_lea.sflag [#allocation21], 1
    %92 = vsyncpa %s91, 0
    %93 = vsyncpa [#allocation24], 0
    %s94 = scalar_lea.sflag [#allocation24], 1
    %95 = vsyncpa %s94, 0
    %96 = vsyncpa [#allocation27], 0
    %s97 = scalar_lea.sflag [#allocation27], 1
    %98 = vsyncpa %s97, 0
    %99 = vsyncpa [#allocation7], 0
    %s100 = scalar_lea.sflag [#allocation7], 1
    %101 = vsyncpa %s100, 0
    loop: start=0, step=1, limit=6
    $region2: #{_lambda_.1} parent=1 // loop_pre_header
      _
    $region3: #{_lambda_.1} parent=1 // loop_header
      %s103 = sphi 0, %s107
      %p104 = scmp.ge.s32.totalorder %s103, 6
      %s110 = sphi 0, %s122
      %s111 = sphi 0, %s118
      %s112 = sphi 0, %s110
      %s113 = sphi 0, %s111
      %s114 = sphi 0, %s112
      %s115 = sphi 0, %s113
      %s125 = sphi 0, %s127
      %s128 = sphi 0, %s125
      %s129 = sphi 0, %s128
      %s145 = sphi 0, %s129
      %s151 = sphi 0, %s153
      %s154 = sphi 0, %s151
      %s155 = sphi 0, %s154
      %s171 = sphi 0, %s155
      %s177 = sphi 0, %s179
      %s180 = sphi 0, %s177
      %s181 = sphi 0, %s180
      %s197 = sphi 0, %s181
      %s203 = sphi 0, %s205
      %s206 = sphi 0, %s203
      %s207 = sphi 0, %s206
      %s223 = sphi 0, %s207
      %s229 = sphi 0, %s231
      %s232 = sphi 0, %s229
      %s233 = sphi 0, %s232
      %s249 = sphi 0, %s233
      %s255 = sphi 0, %s257
      %s258 = sphi 0, %s255
      %s259 = sphi 0, %s258
      %s275 = sphi 0, %s259
      %s281 = sphi 0, %s283
      %s284 = sphi 0, %s281
      %s285 = sphi 0, %s284
      %s301 = sphi 0, %s285
      %s307 = sphi 0, %s309
      %s310 = sphi 0, %s307
      %s311 = sphi 0, %s310
      %s327 = sphi 0, %s311
      %s333 = sphi 0, %s335
      %s336 = sphi 0, %s333
      %s337 = sphi 0, %s336
      %s353 = sphi 0, %s337
      %s359 = sphi 0, %s361
      %s362 = sphi 0, %s359
      %s363 = sphi 0, %s362
      %s379 = sphi 0, %s363
      %s385 = sphi 0, %s387
      %s388 = sphi 0, %s385
      %s389 = sphi 0, %s388
      %s405 = sphi 0, %s389
      %s411 = sphi 0, %s413
      %s414 = sphi 0, %s411
      %s415 = sphi 0, %s414
      %s431 = sphi 0, %s415
      %s437 = sphi 0, %s439
      %s440 = sphi 0, %s437
      %s441 = sphi 0, %s440
      %s457 = sphi 0, %s441
      %s463 = sphi 0, %s465
      %s466 = sphi 0, %s463
      %s467 = sphi 0, %s466
      %s483 = sphi 0, %s467
      %s489 = sphi 0, %s491
      %s492 = sphi 0, %s489
      %s493 = sphi 0, %s492
      %s509 = sphi 0, %s493
      %s515 = sphi 0, %s517
      %s518 = sphi 0, %s515
      %s519 = sphi 0, %s518
      %s535 = sphi 0, %s519
      %s541 = sphi 0, %s543
      %s544 = sphi 0, %s541
      %s545 = sphi 0, %s544
      %s561 = sphi 0, %s545
      %s567 = sphi 0, %s569
      %s570 = sphi 0, %s567
      %s571 = sphi 0, %s570
      %s587 = sphi 0, %s571
      %s593 = sphi 0, %s595
      %s596 = sphi 0, %s593
      %s597 = sphi 0, %s596
      %s613 = sphi 0, %s597
      %s619 = sphi 0, %s621
      %s622 = sphi 0, %s619
      %s623 = sphi 0, %s622
      %s639 = sphi 0, %s623
      %s645 = sphi 0, %s647
      %s648 = sphi 0, %s645
      %s649 = sphi 0, %s648
      %s665 = sphi 0, %s649
      %s671 = sphi 0, %s673
      %s674 = sphi 0, %s671
      %s675 = sphi 0, %s674
      %s691 = sphi 0, %s675
      %s697 = sphi 0, %s699
      %s700 = sphi 0, %s697
      %s701 = sphi 0, %s700
      %s717 = sphi 0, %s701
      %s723 = sphi 0, %s725
      %s726 = sphi 0, %s723
      %s727 = sphi 0, %s726
      %s743 = sphi 0, %s727
      %s749 = sphi 0, %s751
      %s752 = sphi 0, %s749
      %s753 = sphi 0, %s752
      %s769 = sphi 0, %s753
      %s775 = sphi 0, %s777
      %s778 = sphi 0, %s775
      %s779 = sphi 0, %s778
      %s795 = sphi 0, %s779
      %s801 = sphi 0, %s803
      %s804 = sphi 0, %s801
      %s805 = sphi 0, %s804
      %s821 = sphi 0, %s805
      %s827 = sphi 0, %s829
      %s830 = sphi 0, %s827
      %s831 = sphi 0, %s830
      %s847 = sphi 0, %s831
      %s853 = sphi 0, %s855
      %s856 = sphi 0, %s853
      %s857 = sphi 0, %s856
      %s873 = sphi 0, %s857
      %s879 = sphi 0, %s881
      %s882 = sphi 0, %s879
      %s883 = sphi 0, %s882
      %s899 = sphi 0, %s883
      %s905 = sphi 0, %s907
      %s908 = sphi 0, %s905
      %s909 = sphi 0, %s908
      %s925 = sphi 0, %s909
      %s931 = sphi 0, %s933
      %s934 = sphi 0, %s931
      %s935 = sphi 0, %s934
      %s951 = sphi 0, %s935
      %s957 = sphi 0, %s959
      %s960 = sphi 0, %s957
      %s961 = sphi 0, %s960
      %s977 = sphi 0, %s961
      %s983 = sphi 0, %s985
      %s986 = sphi 0, %s983
      %s987 = sphi 0, %s986
      %s1003 = sphi 0, %s987
      %s1009 = sphi 0, %s1011
      %s1012 = sphi 0, %s1009
      %s1013 = sphi 0, %s1012
      %s1029 = sphi 0, %s1013
    $region4: #{_lambda_.1} parent=1 // loop_header_branch
      %106 = sbr.rel (%p104) target = $region8
    $region5: #{_lambda_.1} parent=1 // loop_body
      %s108 = ssub.s32 %s103, 1
      %s109 = ssub.s32 %s103, 2
      %s116 = sadd.s32 1, %s111
      %p117 = scmp.ge.s32.totalorder %s116, 2
      %s118 = scalar_select %p117, 0, %s116
      %s119 = sadd.s32 1, %s110
      %s120 = scalar_select %p117, %s119, %s110
      %p121 = scmp.ge.s32.totalorder %s120, 2
      %s122 = scalar_select %p121, 0, %s120
      %s123 = ssub.s32 %s110, %s122
      %p124 = scmp.eq.s32.totalorder %s123, 0
      %s126 = sadd.s32 %s125, 1
      %s127 = scalar_select %p124, %s125, %s126
      %p130 = pneg %p124
      %p131 = scmp.eq.s32.totalorder %s103, 3
      %p132 = por %p130, %p131
      %p133 = scmp.ne.s32.totalorder %s125, %s128
      %p134 = scmp.eq.s32.totalorder %s103, 0
      %p135 = por %p133, %p134
      %p136 = scmp.ne.s32.totalorder %s125, %s128
      %p137 = scmp.eq.s32.totalorder %s108, 3
      %p138 = por %p136, %p137
      %p139 = scmp.ne.s32.totalorder %s128, %s129
      %p140 = scmp.eq.s32.totalorder %s108, 0
      %p141 = por %p139, %p140
      %p142 = scmp.ne.s32.totalorder %s128, %s129
      %p143 = scmp.eq.s32.totalorder %s109, 3
      %p144 = por %p142, %p143
      %p146 = scmp.ne.s32.totalorder %s129, %s145
      %p147 = scmp.eq.s32.totalorder %s109, 0
      %p148 = por %p146, %p147
      %s149 = ssub.s32 %s110, %s122
      %p150 = scmp.eq.s32.totalorder %s149, 0
      %s152 = sadd.s32 %s151, 1
      %s153 = scalar_select %p150, %s151, %s152
      %p156 = pneg %p150
      %p157 = scmp.eq.s32.totalorder %s103, 3
      %p158 = por %p156, %p157
      %p159 = scmp.ne.s32.totalorder %s151, %s154
      %p160 = scmp.eq.s32.totalorder %s103, 0
      %p161 = por %p159, %p160
      %p162 = scmp.ne.s32.totalorder %s151, %s154
      %p163 = scmp.eq.s32.totalorder %s108, 3
      %p164 = por %p162, %p163
      %p165 = scmp.ne.s32.totalorder %s154, %s155
      %p166 = scmp.eq.s32.totalorder %s108, 0
      %p167 = por %p165, %p166
      %p168 = scmp.ne.s32.totalorder %s154, %s155
      %p169 = scmp.eq.s32.totalorder %s109, 3
      %p170 = por %p168, %p169
      %p172 = scmp.ne.s32.totalorder %s155, %s171
      %p173 = scmp.eq.s32.totalorder %s109, 0
      %p174 = por %p172, %p173
      %s175 = ssub.s32 %s110, %s122
      %p176 = scmp.eq.s32.totalorder %s175, 0
      %s178 = sadd.s32 %s177, 1
      %s179 = scalar_select %p176, %s177, %s178
      %p182 = pneg %p176
      %p183 = scmp.eq.s32.totalorder %s103, 3
      %p184 = por %p182, %p183
      %p185 = scmp.ne.s32.totalorder %s177, %s180
      %p186 = scmp.eq.s32.totalorder %s103, 0
      %p187 = por %p185, %p186
      %p188 = scmp.ne.s32.totalorder %s177, %s180
      %p189 = scmp.eq.s32.totalorder %s108, 3
      %p190 = por %p188, %p189
      %p191 = scmp.ne.s32.totalorder %s180, %s181
      %p192 = scmp.eq.s32.totalorder %s108, 0
      %p193 = por %p191, %p192
      %p194 = scmp.ne.s32.totalorder %s180, %s181
      %p195 = scmp.eq.s32.totalorder %s109, 3
      %p196 = por %p194, %p195
      %p198 = scmp.ne.s32.totalorder %s181, %s197
      %p199 = scmp.eq.s32.totalorder %s109, 0
      %p200 = por %p198, %p199
      %s201 = ssub.s32 %s110, %s122
      %p202 = scmp.eq.s32.totalorder %s201, 0
      %s204 = sadd.s32 %s203, 1
      %s205 = scalar_select %p202, %s203, %s204
      %p208 = pneg %p202
      %p209 = scmp.eq.s32.totalorder %s103, 3
      %p210 = por %p208, %p209
      %p211 = scmp.ne.s32.totalorder %s203, %s206
      %p212 = scmp.eq.s32.totalorder %s103, 0
      %p213 = por %p211, %p212
      %p214 = scmp.ne.s32.totalorder %s203, %s206
      %p215 = scmp.eq.s32.totalorder %s108, 3
      %p216 = por %p214, %p215
      %p217 = scmp.ne.s32.totalorder %s206, %s207
      %p218 = scmp.eq.s32.totalorder %s108, 0
      %p219 = por %p217, %p218
      %p220 = scmp.ne.s32.totalorder %s206, %s207
      %p221 = scmp.eq.s32.totalorder %s109, 3
      %p222 = por %p220, %p221
      %p224 = scmp.ne.s32.totalorder %s207, %s223
      %p225 = scmp.eq.s32.totalorder %s109, 0
      %p226 = por %p224, %p225
      %s227 = ssub.s32 %s110, %s122
      %p228 = scmp.eq.s32.totalorder %s227, 0
      %s230 = sadd.s32 %s229, 1
      %s231 = scalar_select %p228, %s229, %s230
      %p234 = pneg %p228
      %p235 = scmp.eq.s32.totalorder %s103, 3
      %p236 = por %p234, %p235
      %p237 = scmp.ne.s32.totalorder %s229, %s232
      %p238 = scmp.eq.s32.totalorder %s103, 0
      %p239 = por %p237, %p238
      %p240 = scmp.ne.s32.totalorder %s229, %s232
      %p241 = scmp.eq.s32.totalorder %s108, 3
      %p242 = por %p240, %p241
      %p243 = scmp.ne.s32.totalorder %s232, %s233
      %p244 = scmp.eq.s32.totalorder %s108, 0
      %p245 = por %p243, %p244
      %p246 = scmp.ne.s32.totalorder %s232, %s233
      %p247 = scmp.eq.s32.totalorder %s109, 3
      %p248 = por %p246, %p247
      %p250 = scmp.ne.s32.totalorder %s233, %s249
      %p251 = scmp.eq.s32.totalorder %s109, 0
      %p252 = por %p250, %p251
      %s253 = ssub.s32 %s111, %s118
      %p254 = scmp.eq.s32.totalorder %s253, 0
      %s256 = sadd.s32 %s255, 1
      %s257 = scalar_select %p254, %s255, %s256
      %p260 = pneg %p254
      %p261 = scmp.eq.s32.totalorder %s103, 3
      %p262 = por %p260, %p261
      %p263 = scmp.ne.s32.totalorder %s255, %s258
      %p264 = scmp.eq.s32.totalorder %s103, 0
      %p265 = por %p263, %p264
      %p266 = scmp.ne.s32.totalorder %s255, %s258
      %p267 = scmp.eq.s32.totalorder %s108, 3
      %p268 = por %p266, %p267
      %p269 = scmp.ne.s32.totalorder %s258, %s259
      %p270 = scmp.eq.s32.totalorder %s108, 0
      %p271 = por %p269, %p270
      %p272 = scmp.ne.s32.totalorder %s258, %s259
      %p273 = scmp.eq.s32.totalorder %s109, 3
      %p274 = por %p272, %p273
      %p276 = scmp.ne.s32.totalorder %s259, %s275
      %p277 = scmp.eq.s32.totalorder %s109, 0
      %p278 = por %p276, %p277
      %s279 = ssub.s32 %s111, %s118
      %p280 = scmp.eq.s32.totalorder %s279, 0
      %s282 = sadd.s32 %s281, 1
      %s283 = scalar_select %p280, %s281, %s282
      %p286 = pneg %p280
      %p287 = scmp.eq.s32.totalorder %s103, 3
      %p288 = por %p286, %p287
      %p289 = scmp.ne.s32.totalorder %s281, %s284
      %p290 = scmp.eq.s32.totalorder %s103, 0
      %p291 = por %p289, %p290
      %p292 = scmp.ne.s32.totalorder %s281, %s284
      %p293 = scmp.eq.s32.totalorder %s108, 3
      %p294 = por %p292, %p293
      %p295 = scmp.ne.s32.totalorder %s284, %s285
      %p296 = scmp.eq.s32.totalorder %s108, 0
      %p297 = por %p295, %p296
      %p298 = scmp.ne.s32.totalorder %s284, %s285
      %p299 = scmp.eq.s32.totalorder %s109, 3
      %p300 = por %p298, %p299
      %p302 = scmp.ne.s32.totalorder %s285, %s301
      %p303 = scmp.eq.s32.totalorder %s109, 0
      %p304 = por %p302, %p303
      %s305 = ssub.s32 %s111, %s118
      %p306 = scmp.eq.s32.totalorder %s305, 0
      %s308 = sadd.s32 %s307, 1
      %s309 = scalar_select %p306, %s307, %s308
      %p312 = pneg %p306
      %p313 = scmp.eq.s32.totalorder %s103, 3
      %p314 = por %p312, %p313
      %p315 = scmp.ne.s32.totalorder %s307, %s310
      %p316 = scmp.eq.s32.totalorder %s103, 0
      %p317 = por %p315, %p316
      %p318 = scmp.ne.s32.totalorder %s307, %s310
      %p319 = scmp.eq.s32.totalorder %s108, 3
      %p320 = por %p318, %p319
      %p321 = scmp.ne.s32.totalorder %s310, %s311
      %p322 = scmp.eq.s32.totalorder %s108, 0
      %p323 = por %p321, %p322
      %p324 = scmp.ne.s32.totalorder %s310, %s311
      %p325 = scmp.eq.s32.totalorder %s109, 3
      %p326 = por %p324, %p325
      %p328 = scmp.ne.s32.totalorder %s311, %s327
      %p329 = scmp.eq.s32.totalorder %s109, 0
      %p330 = por %p328, %p329
      %s331 = ssub.s32 %s111, %s118
      %p332 = scmp.eq.s32.totalorder %s331, 0
      %s334 = sadd.s32 %s333, 1
      %s335 = scalar_select %p332, %s333, %s334
      %p338 = pneg %p332
      %p339 = scmp.eq.s32.totalorder %s103, 3
      %p340 = por %p338, %p339
      %p341 = scmp.ne.s32.totalorder %s333, %s336
      %p342 = scmp.eq.s32.totalorder %s103, 0
      %p343 = por %p341, %p342
      %p344 = scmp.ne.s32.totalorder %s333, %s336
      %p345 = scmp.eq.s32.totalorder %s108, 3
      %p346 = por %p344, %p345
      %p347 = scmp.ne.s32.totalorder %s336, %s337
      %p348 = scmp.eq.s32.totalorder %s108, 0
      %p349 = por %p347, %p348
      %p350 = scmp.ne.s32.totalorder %s336, %s337
      %p351 = scmp.eq.s32.totalorder %s109, 3
      %p352 = por %p350, %p351
      %p354 = scmp.ne.s32.totalorder %s337, %s353
      %p355 = scmp.eq.s32.totalorder %s109, 0
      %p356 = por %p354, %p355
      %s357 = ssub.s32 %s111, %s118
      %p358 = scmp.eq.s32.totalorder %s357, 0
      %s360 = sadd.s32 %s359, 1
      %s361 = scalar_select %p358, %s359, %s360
      %p364 = pneg %p358
      %p365 = scmp.eq.s32.totalorder %s103, 3
      %p366 = por %p364, %p365
      %p367 = scmp.ne.s32.totalorder %s359, %s362
      %p368 = scmp.eq.s32.totalorder %s103, 0
      %p369 = por %p367, %p368
      %p370 = scmp.ne.s32.totalorder %s359, %s362
      %p371 = scmp.eq.s32.totalorder %s108, 3
      %p372 = por %p370, %p371
      %p373 = scmp.ne.s32.totalorder %s362, %s363
      %p374 = scmp.eq.s32.totalorder %s108, 0
      %p375 = por %p373, %p374
      %p376 = scmp.ne.s32.totalorder %s362, %s363
      %p377 = scmp.eq.s32.totalorder %s109, 3
      %p378 = por %p376, %p377
      %p380 = scmp.ne.s32.totalorder %s363, %s379
      %p381 = scmp.eq.s32.totalorder %s109, 0
      %p382 = por %p380, %p381
      %s383 = ssub.s32 %s111, %s118
      %p384 = scmp.eq.s32.totalorder %s383, 0
      %s386 = sadd.s32 %s385, 1
      %s387 = scalar_select %p384, %s385, %s386
      %p390 = pneg %p384
      %p391 = scmp.eq.s32.totalorder %s103, 3
      %p392 = por %p390, %p391
      %p393 = scmp.ne.s32.totalorder %s385, %s388
      %p394 = scmp.eq.s32.totalorder %s103, 0
      %p395 = por %p393, %p394
      %p396 = scmp.ne.s32.totalorder %s385, %s388
      %p397 = scmp.eq.s32.totalorder %s108, 3
      %p398 = por %p396, %p397
      %p399 = scmp.ne.s32.totalorder %s388, %s389
      %p400 = scmp.eq.s32.totalorder %s108, 0
      %p401 = por %p399, %p400
      %p402 = scmp.ne.s32.totalorder %s388, %s389
      %p403 = scmp.eq.s32.totalorder %s109, 3
      %p404 = por %p402, %p403
      %p406 = scmp.ne.s32.totalorder %s389, %s405
      %p407 = scmp.eq.s32.totalorder %s109, 0
      %p408 = por %p406, %p407
      %s409 = ssub.s32 %s111, %s118
      %p410 = scmp.eq.s32.totalorder %s409, 0
      %s412 = sadd.s32 %s411, 1
      %s413 = scalar_select %p410, %s411, %s412
      %p416 = pneg %p410
      %p417 = scmp.eq.s32.totalorder %s103, 3
      %p418 = por %p416, %p417
      %p419 = scmp.ne.s32.totalorder %s411, %s414
      %p420 = scmp.eq.s32.totalorder %s103, 0
      %p421 = por %p419, %p420
      %p422 = scmp.ne.s32.totalorder %s411, %s414
      %p423 = scmp.eq.s32.totalorder %s108, 3
      %p424 = por %p422, %p423
      %p425 = scmp.ne.s32.totalorder %s414, %s415
      %p426 = scmp.eq.s32.totalorder %s108, 0
      %p427 = por %p425, %p426
      %p428 = scmp.ne.s32.totalorder %s414, %s415
      %p429 = scmp.eq.s32.totalorder %s109, 3
      %p430 = por %p428, %p429
      %p432 = scmp.ne.s32.totalorder %s415, %s431
      %p433 = scmp.eq.s32.totalorder %s109, 0
      %p434 = por %p432, %p433
      %s435 = ssub.s32 %s111, %s118
      %p436 = scmp.eq.s32.totalorder %s435, 0
      %s438 = sadd.s32 %s437, 1
      %s439 = scalar_select %p436, %s437, %s438
      %p442 = pneg %p436
      %p443 = scmp.eq.s32.totalorder %s103, 3
      %p444 = por %p442, %p443
      %p445 = scmp.ne.s32.totalorder %s437, %s440
      %p446 = scmp.eq.s32.totalorder %s103, 0
      %p447 = por %p445, %p446
      %p448 = scmp.ne.s32.totalorder %s437, %s440
      %p449 = scmp.eq.s32.totalorder %s108, 3
      %p450 = por %p448, %p449
      %p451 = scmp.ne.s32.totalorder %s440, %s441
      %p452 = scmp.eq.s32.totalorder %s108, 0
      %p453 = por %p451, %p452
      %p454 = scmp.ne.s32.totalorder %s440, %s441
      %p455 = scmp.eq.s32.totalorder %s109, 3
      %p456 = por %p454, %p455
      %p458 = scmp.ne.s32.totalorder %s441, %s457
      %p459 = scmp.eq.s32.totalorder %s109, 0
      %p460 = por %p458, %p459
      %s461 = ssub.s32 %s111, %s118
      %p462 = scmp.eq.s32.totalorder %s461, 0
      %s464 = sadd.s32 %s463, 1
      %s465 = scalar_select %p462, %s463, %s464
      %p468 = pneg %p462
      %p469 = scmp.eq.s32.totalorder %s103, 3
      %p470 = por %p468, %p469
      %p471 = scmp.ne.s32.totalorder %s463, %s466
      %p472 = scmp.eq.s32.totalorder %s103, 0
      %p473 = por %p471, %p472
      %p474 = scmp.ne.s32.totalorder %s463, %s466
      %p475 = scmp.eq.s32.totalorder %s108, 3
      %p476 = por %p474, %p475
      %p477 = scmp.ne.s32.totalorder %s466, %s467
      %p478 = scmp.eq.s32.totalorder %s108, 0
      %p479 = por %p477, %p478
      %p480 = scmp.ne.s32.totalorder %s466, %s467
      %p481 = scmp.eq.s32.totalorder %s109, 3
      %p482 = por %p480, %p481
      %p484 = scmp.ne.s32.totalorder %s467, %s483
      %p485 = scmp.eq.s32.totalorder %s109, 0
      %p486 = por %p484, %p485
      %s487 = ssub.s32 %s111, %s118
      %p488 = scmp.eq.s32.totalorder %s487, 0
      %s490 = sadd.s32 %s489, 1
      %s491 = scalar_select %p488, %s489, %s490
      %p494 = pneg %p488
      %p495 = scmp.eq.s32.totalorder %s103, 3
      %p496 = por %p494, %p495
      %p497 = scmp.ne.s32.totalorder %s489, %s492
      %p498 = scmp.eq.s32.totalorder %s103, 0
      %p499 = por %p497, %p498
      %p500 = scmp.ne.s32.totalorder %s489, %s492
      %p501 = scmp.eq.s32.totalorder %s108, 3
      %p502 = por %p500, %p501
      %p503 = scmp.ne.s32.totalorder %s492, %s493
      %p504 = scmp.eq.s32.totalorder %s108, 0
      %p505 = por %p503, %p504
      %p506 = scmp.ne.s32.totalorder %s492, %s493
      %p507 = scmp.eq.s32.totalorder %s109, 3
      %p508 = por %p506, %p507
      %p510 = scmp.ne.s32.totalorder %s493, %s509
      %p511 = scmp.eq.s32.totalorder %s109, 0
      %p512 = por %p510, %p511
      %s513 = ssub.s32 %s111, %s118
      %p514 = scmp.eq.s32.totalorder %s513, 0
      %s516 = sadd.s32 %s515, 1
      %s517 = scalar_select %p514, %s515, %s516
      %p520 = pneg %p514
      %p521 = scmp.eq.s32.totalorder %s103, 3
      %p522 = por %p520, %p521
      %p523 = scmp.ne.s32.totalorder %s515, %s518
      %p524 = scmp.eq.s32.totalorder %s103, 0
      %p525 = por %p523, %p524
      %p526 = scmp.ne.s32.totalorder %s515, %s518
      %p527 = scmp.eq.s32.totalorder %s108, 3
      %p528 = por %p526, %p527
      %p529 = scmp.ne.s32.totalorder %s518, %s519
      %p530 = scmp.eq.s32.totalorder %s108, 0
      %p531 = por %p529, %p530
      %p532 = scmp.ne.s32.totalorder %s518, %s519
      %p533 = scmp.eq.s32.totalorder %s109, 3
      %p534 = por %p532, %p533
      %p536 = scmp.ne.s32.totalorder %s519, %s535
      %p537 = scmp.eq.s32.totalorder %s109, 0
      %p538 = por %p536, %p537
      %s539 = ssub.s32 %s111, %s118
      %p540 = scmp.eq.s32.totalorder %s539, 0
      %s542 = sadd.s32 %s541, 1
      %s543 = scalar_select %p540, %s541, %s542
      %p546 = pneg %p540
      %p547 = scmp.eq.s32.totalorder %s103, 3
      %p548 = por %p546, %p547
      %p549 = scmp.ne.s32.totalorder %s541, %s544
      %p550 = scmp.eq.s32.totalorder %s103, 0
      %p551 = por %p549, %p550
      %p552 = scmp.ne.s32.totalorder %s541, %s544
      %p553 = scmp.eq.s32.totalorder %s108, 3
      %p554 = por %p552, %p553
      %p555 = scmp.ne.s32.totalorder %s544, %s545
      %p556 = scmp.eq.s32.totalorder %s108, 0
      %p557 = por %p555, %p556
      %p558 = scmp.ne.s32.totalorder %s544, %s545
      %p559 = scmp.eq.s32.totalorder %s109, 3
      %p560 = por %p558, %p559
      %p562 = scmp.ne.s32.totalorder %s545, %s561
      %p563 = scmp.eq.s32.totalorder %s109, 0
      %p564 = por %p562, %p563
      %s565 = ssub.s32 %s111, %s118
      %p566 = scmp.eq.s32.totalorder %s565, 0
      %s568 = sadd.s32 %s567, 1
      %s569 = scalar_select %p566, %s567, %s568
      %p572 = pneg %p566
      %p573 = scmp.eq.s32.totalorder %s103, 3
      %p574 = por %p572, %p573
      %p575 = scmp.ne.s32.totalorder %s567, %s570
      %p576 = scmp.eq.s32.totalorder %s103, 0
      %p577 = por %p575, %p576
      %p578 = scmp.ne.s32.totalorder %s567, %s570
      %p579 = scmp.eq.s32.totalorder %s108, 3
      %p580 = por %p578, %p579
      %p581 = scmp.ne.s32.totalorder %s570, %s571
      %p582 = scmp.eq.s32.totalorder %s108, 0
      %p583 = por %p581, %p582
      %p584 = scmp.ne.s32.totalorder %s570, %s571
      %p585 = scmp.eq.s32.totalorder %s109, 3
      %p586 = por %p584, %p585
      %p588 = scmp.ne.s32.totalorder %s571, %s587
      %p589 = scmp.eq.s32.totalorder %s109, 0
      %p590 = por %p588, %p589
      %s591 = ssub.s32 %s111, %s118
      %p592 = scmp.eq.s32.totalorder %s591, 0
      %s594 = sadd.s32 %s593, 1
      %s595 = scalar_select %p592, %s593, %s594
      %p598 = pneg %p592
      %p599 = scmp.eq.s32.totalorder %s103, 3
      %p600 = por %p598, %p599
      %p601 = scmp.ne.s32.totalorder %s593, %s596
      %p602 = scmp.eq.s32.totalorder %s103, 0
      %p603 = por %p601, %p602
      %p604 = scmp.ne.s32.totalorder %s593, %s596
      %p605 = scmp.eq.s32.totalorder %s108, 3
      %p606 = por %p604, %p605
      %p607 = scmp.ne.s32.totalorder %s596, %s597
      %p608 = scmp.eq.s32.totalorder %s108, 0
      %p609 = por %p607, %p608
      %p610 = scmp.ne.s32.totalorder %s596, %s597
      %p611 = scmp.eq.s32.totalorder %s109, 3
      %p612 = por %p610, %p611
      %p614 = scmp.ne.s32.totalorder %s597, %s613
      %p615 = scmp.eq.s32.totalorder %s109, 0
      %p616 = por %p614, %p615
      %s617 = ssub.s32 %s111, %s118
      %p618 = scmp.eq.s32.totalorder %s617, 0
      %s620 = sadd.s32 %s619, 1
      %s621 = scalar_select %p618, %s619, %s620
      %p624 = pneg %p618
      %p625 = scmp.eq.s32.totalorder %s103, 3
      %p626 = por %p624, %p625
      %p627 = scmp.ne.s32.totalorder %s619, %s622
      %p628 = scmp.eq.s32.totalorder %s103, 0
      %p629 = por %p627, %p628
      %p630 = scmp.ne.s32.totalorder %s619, %s622
      %p631 = scmp.eq.s32.totalorder %s108, 3
      %p632 = por %p630, %p631
      %p633 = scmp.ne.s32.totalorder %s622, %s623
      %p634 = scmp.eq.s32.totalorder %s108, 0
      %p635 = por %p633, %p634
      %p636 = scmp.ne.s32.totalorder %s622, %s623
      %p637 = scmp.eq.s32.totalorder %s109, 3
      %p638 = por %p636, %p637
      %p640 = scmp.ne.s32.totalorder %s623, %s639
      %p641 = scmp.eq.s32.totalorder %s109, 0
      %p642 = por %p640, %p641
      %s643 = ssub.s32 %s111, %s118
      %p644 = scmp.eq.s32.totalorder %s643, 0
      %s646 = sadd.s32 %s645, 1
      %s647 = scalar_select %p644, %s645, %s646
      %p650 = pneg %p644
      %p651 = scmp.eq.s32.totalorder %s103, 3
      %p652 = por %p650, %p651
      %p653 = scmp.ne.s32.totalorder %s645, %s648
      %p654 = scmp.eq.s32.totalorder %s103, 0
      %p655 = por %p653, %p654
      %p656 = scmp.ne.s32.totalorder %s645, %s648
      %p657 = scmp.eq.s32.totalorder %s108, 3
      %p658 = por %p656, %p657
      %p659 = scmp.ne.s32.totalorder %s648, %s649
      %p660 = scmp.eq.s32.totalorder %s108, 0
      %p661 = por %p659, %p660
      %p662 = scmp.ne.s32.totalorder %s648, %s649
      %p663 = scmp.eq.s32.totalorder %s109, 3
      %p664 = por %p662, %p663
      %p666 = scmp.ne.s32.totalorder %s649, %s665
      %p667 = scmp.eq.s32.totalorder %s109, 0
      %p668 = por %p666, %p667
      %s669 = ssub.s32 %s111, %s118
      %p670 = scmp.eq.s32.totalorder %s669, 0
      %s672 = sadd.s32 %s671, 1
      %s673 = scalar_select %p670, %s671, %s672
      %p676 = pneg %p670
      %p677 = scmp.eq.s32.totalorder %s103, 3
      %p678 = por %p676, %p677
      %p679 = scmp.ne.s32.totalorder %s671, %s674
      %p680 = scmp.eq.s32.totalorder %s103, 0
      %p681 = por %p679, %p680
      %p682 = scmp.ne.s32.totalorder %s671, %s674
      %p683 = scmp.eq.s32.totalorder %s108, 3
      %p684 = por %p682, %p683
      %p685 = scmp.ne.s32.totalorder %s674, %s675
      %p686 = scmp.eq.s32.totalorder %s108, 0
      %p687 = por %p685, %p686
      %p688 = scmp.ne.s32.totalorder %s674, %s675
      %p689 = scmp.eq.s32.totalorder %s109, 3
      %p690 = por %p688, %p689
      %p692 = scmp.ne.s32.totalorder %s675, %s691
      %p693 = scmp.eq.s32.totalorder %s109, 0
      %p694 = por %p692, %p693
      %s695 = ssub.s32 %s111, %s118
      %p696 = scmp.eq.s32.totalorder %s695, 0
      %s698 = sadd.s32 %s697, 1
      %s699 = scalar_select %p696, %s697, %s698
      %p702 = pneg %p696
      %p703 = scmp.eq.s32.totalorder %s103, 3
      %p704 = por %p702, %p703
      %p705 = scmp.ne.s32.totalorder %s697, %s700
      %p706 = scmp.eq.s32.totalorder %s103, 0
      %p707 = por %p705, %p706
      %p708 = scmp.ne.s32.totalorder %s697, %s700
      %p709 = scmp.eq.s32.totalorder %s108, 3
      %p710 = por %p708, %p709
      %p711 = scmp.ne.s32.totalorder %s700, %s701
      %p712 = scmp.eq.s32.totalorder %s108, 0
      %p713 = por %p711, %p712
      %p714 = scmp.ne.s32.totalorder %s700, %s701
      %p715 = scmp.eq.s32.totalorder %s109, 3
      %p716 = por %p714, %p715
      %p718 = scmp.ne.s32.totalorder %s701, %s717
      %p719 = scmp.eq.s32.totalorder %s109, 0
      %p720 = por %p718, %p719
      %s721 = ssub.s32 %s111, %s118
      %p722 = scmp.eq.s32.totalorder %s721, 0
      %s724 = sadd.s32 %s723, 1
      %s725 = scalar_select %p722, %s723, %s724
      %p728 = pneg %p722
      %p729 = scmp.eq.s32.totalorder %s103, 3
      %p730 = por %p728, %p729
      %p731 = scmp.ne.s32.totalorder %s723, %s726
      %p732 = scmp.eq.s32.totalorder %s103, 0
      %p733 = por %p731, %p732
      %p734 = scmp.ne.s32.totalorder %s723, %s726
      %p735 = scmp.eq.s32.totalorder %s108, 3
      %p736 = por %p734, %p735
      %p737 = scmp.ne.s32.totalorder %s726, %s727
      %p738 = scmp.eq.s32.totalorder %s108, 0
      %p739 = por %p737, %p738
      %p740 = scmp.ne.s32.totalorder %s726, %s727
      %p741 = scmp.eq.s32.totalorder %s109, 3
      %p742 = por %p740, %p741
      %p744 = scmp.ne.s32.totalorder %s727, %s743
      %p745 = scmp.eq.s32.totalorder %s109, 0
      %p746 = por %p744, %p745
      %s747 = ssub.s32 %s111, %s118
      %p748 = scmp.eq.s32.totalorder %s747, 0
      %s750 = sadd.s32 %s749, 1
      %s751 = scalar_select %p748, %s749, %s750
      %p754 = pneg %p748
      %p755 = scmp.eq.s32.totalorder %s103, 3
      %p756 = por %p754, %p755
      %p757 = scmp.ne.s32.totalorder %s749, %s752
      %p758 = scmp.eq.s32.totalorder %s103, 0
      %p759 = por %p757, %p758
      %p760 = scmp.ne.s32.totalorder %s749, %s752
      %p761 = scmp.eq.s32.totalorder %s108, 3
      %p762 = por %p760, %p761
      %p763 = scmp.ne.s32.totalorder %s752, %s753
      %p764 = scmp.eq.s32.totalorder %s108, 0
      %p765 = por %p763, %p764
      %p766 = scmp.ne.s32.totalorder %s752, %s753
      %p767 = scmp.eq.s32.totalorder %s109, 3
      %p768 = por %p766, %p767
      %p770 = scmp.ne.s32.totalorder %s753, %s769
      %p771 = scmp.eq.s32.totalorder %s109, 0
      %p772 = por %p770, %p771
      %s773 = ssub.s32 %s111, %s118
      %p774 = scmp.eq.s32.totalorder %s773, 0
      %s776 = sadd.s32 %s775, 1
      %s777 = scalar_select %p774, %s775, %s776
      %p780 = pneg %p774
      %p781 = scmp.eq.s32.totalorder %s103, 3
      %p782 = por %p780, %p781
      %p783 = scmp.ne.s32.totalorder %s775, %s778
      %p784 = scmp.eq.s32.totalorder %s103, 0
      %p785 = por %p783, %p784
      %p786 = scmp.ne.s32.totalorder %s775, %s778
      %p787 = scmp.eq.s32.totalorder %s108, 3
      %p788 = por %p786, %p787
      %p789 = scmp.ne.s32.totalorder %s778, %s779
      %p790 = scmp.eq.s32.totalorder %s108, 0
      %p791 = por %p789, %p790
      %p792 = scmp.ne.s32.totalorder %s778, %s779
      %p793 = scmp.eq.s32.totalorder %s109, 3
      %p794 = por %p792, %p793
      %p796 = scmp.ne.s32.totalorder %s779, %s795
      %p797 = scmp.eq.s32.totalorder %s109, 0
      %p798 = por %p796, %p797
      %s799 = ssub.s32 %s111, %s118
      %p800 = scmp.eq.s32.totalorder %s799, 0
      %s802 = sadd.s32 %s801, 1
      %s803 = scalar_select %p800, %s801, %s802
      %p806 = pneg %p800
      %p807 = scmp.eq.s32.totalorder %s103, 3
      %p808 = por %p806, %p807
      %p809 = scmp.ne.s32.totalorder %s801, %s804
      %p810 = scmp.eq.s32.totalorder %s103, 0
      %p811 = por %p809, %p810
      %p812 = scmp.ne.s32.totalorder %s801, %s804
      %p813 = scmp.eq.s32.totalorder %s108, 3
      %p814 = por %p812, %p813
      %p815 = scmp.ne.s32.totalorder %s804, %s805
      %p816 = scmp.eq.s32.totalorder %s108, 0
      %p817 = por %p815, %p816
      %p818 = scmp.ne.s32.totalorder %s804, %s805
      %p819 = scmp.eq.s32.totalorder %s109, 3
      %p820 = por %p818, %p819
      %p822 = scmp.ne.s32.totalorder %s805, %s821
      %p823 = scmp.eq.s32.totalorder %s109, 0
      %p824 = por %p822, %p823
      %s825 = ssub.s32 %s111, %s118
      %p826 = scmp.eq.s32.totalorder %s825, 0
      %s828 = sadd.s32 %s827, 1
      %s829 = scalar_select %p826, %s827, %s828
      %p832 = pneg %p826
      %p833 = scmp.eq.s32.totalorder %s103, 3
      %p834 = por %p832, %p833
      %p835 = scmp.ne.s32.totalorder %s827, %s830
      %p836 = scmp.eq.s32.totalorder %s103, 0
      %p837 = por %p835, %p836
      %p838 = scmp.ne.s32.totalorder %s827, %s830
      %p839 = scmp.eq.s32.totalorder %s108, 3
      %p840 = por %p838, %p839
      %p841 = scmp.ne.s32.totalorder %s830, %s831
      %p842 = scmp.eq.s32.totalorder %s108, 0
      %p843 = por %p841, %p842
      %p844 = scmp.ne.s32.totalorder %s830, %s831
      %p845 = scmp.eq.s32.totalorder %s109, 3
      %p846 = por %p844, %p845
      %p848 = scmp.ne.s32.totalorder %s831, %s847
      %p849 = scmp.eq.s32.totalorder %s109, 0
      %p850 = por %p848, %p849
      %s851 = ssub.s32 %s111, %s118
      %p852 = scmp.eq.s32.totalorder %s851, 0
      %s854 = sadd.s32 %s853, 1
      %s855 = scalar_select %p852, %s853, %s854
      %p858 = pneg %p852
      %p859 = scmp.eq.s32.totalorder %s103, 3
      %p860 = por %p858, %p859
      %p861 = scmp.ne.s32.totalorder %s853, %s856
      %p862 = scmp.eq.s32.totalorder %s103, 0
      %p863 = por %p861, %p862
      %p864 = scmp.ne.s32.totalorder %s853, %s856
      %p865 = scmp.eq.s32.totalorder %s108, 3
      %p866 = por %p864, %p865
      %p867 = scmp.ne.s32.totalorder %s856, %s857
      %p868 = scmp.eq.s32.totalorder %s108, 0
      %p869 = por %p867, %p868
      %p870 = scmp.ne.s32.totalorder %s856, %s857
      %p871 = scmp.eq.s32.totalorder %s109, 3
      %p872 = por %p870, %p871
      %p874 = scmp.ne.s32.totalorder %s857, %s873
      %p875 = scmp.eq.s32.totalorder %s109, 0
      %p876 = por %p874, %p875
      %s877 = ssub.s32 %s111, %s118
      %p878 = scmp.eq.s32.totalorder %s877, 0
      %s880 = sadd.s32 %s879, 1
      %s881 = scalar_select %p878, %s879, %s880
      %p884 = pneg %p878
      %p885 = scmp.eq.s32.totalorder %s103, 3
      %p886 = por %p884, %p885
      %p887 = scmp.ne.s32.totalorder %s879, %s882
      %p888 = scmp.eq.s32.totalorder %s103, 0
      %p889 = por %p887, %p888
      %p890 = scmp.ne.s32.totalorder %s879, %s882
      %p891 = scmp.eq.s32.totalorder %s108, 3
      %p892 = por %p890, %p891
      %p893 = scmp.ne.s32.totalorder %s882, %s883
      %p894 = scmp.eq.s32.totalorder %s108, 0
      %p895 = por %p893, %p894
      %p896 = scmp.ne.s32.totalorder %s882, %s883
      %p897 = scmp.eq.s32.totalorder %s109, 3
      %p898 = por %p896, %p897
      %p900 = scmp.ne.s32.totalorder %s883, %s899
      %p901 = scmp.eq.s32.totalorder %s109, 0
      %p902 = por %p900, %p901
      %s903 = ssub.s32 %s111, %s118
      %p904 = scmp.eq.s32.totalorder %s903, 0
      %s906 = sadd.s32 %s905, 1
      %s907 = scalar_select %p904, %s905, %s906
      %p910 = pneg %p904
      %p911 = scmp.eq.s32.totalorder %s103, 3
      %p912 = por %p910, %p911
      %p913 = scmp.ne.s32.totalorder %s905, %s908
      %p914 = scmp.eq.s32.totalorder %s103, 0
      %p915 = por %p913, %p914
      %p916 = scmp.ne.s32.totalorder %s905, %s908
      %p917 = scmp.eq.s32.totalorder %s108, 3
      %p918 = por %p916, %p917
      %p919 = scmp.ne.s32.totalorder %s908, %s909
      %p920 = scmp.eq.s32.totalorder %s108, 0
      %p921 = por %p919, %p920
      %p922 = scmp.ne.s32.totalorder %s908, %s909
      %p923 = scmp.eq.s32.totalorder %s109, 3
      %p924 = por %p922, %p923
      %p926 = scmp.ne.s32.totalorder %s909, %s925
      %p927 = scmp.eq.s32.totalorder %s109, 0
      %p928 = por %p926, %p927
      %s929 = ssub.s32 %s111, %s118
      %p930 = scmp.eq.s32.totalorder %s929, 0
      %s932 = sadd.s32 %s931, 1
      %s933 = scalar_select %p930, %s931, %s932
      %p936 = pneg %p930
      %p937 = scmp.eq.s32.totalorder %s103, 3
      %p938 = por %p936, %p937
      %p939 = scmp.ne.s32.totalorder %s931, %s934
      %p940 = scmp.eq.s32.totalorder %s103, 0
      %p941 = por %p939, %p940
      %p942 = scmp.ne.s32.totalorder %s931, %s934
      %p943 = scmp.eq.s32.totalorder %s108, 3
      %p944 = por %p942, %p943
      %p945 = scmp.ne.s32.totalorder %s934, %s935
      %p946 = scmp.eq.s32.totalorder %s108, 0
      %p947 = por %p945, %p946
      %p948 = scmp.ne.s32.totalorder %s934, %s935
      %p949 = scmp.eq.s32.totalorder %s109, 3
      %p950 = por %p948, %p949
      %p952 = scmp.ne.s32.totalorder %s935, %s951
      %p953 = scmp.eq.s32.totalorder %s109, 0
      %p954 = por %p952, %p953
      %s955 = ssub.s32 %s111, %s118
      %p956 = scmp.eq.s32.totalorder %s955, 0
      %s958 = sadd.s32 %s957, 1
      %s959 = scalar_select %p956, %s957, %s958
      %p962 = pneg %p956
      %p963 = scmp.eq.s32.totalorder %s103, 3
      %p964 = por %p962, %p963
      %p965 = scmp.ne.s32.totalorder %s957, %s960
      %p966 = scmp.eq.s32.totalorder %s103, 0
      %p967 = por %p965, %p966
      %p968 = scmp.ne.s32.totalorder %s957, %s960
      %p969 = scmp.eq.s32.totalorder %s108, 3
      %p970 = por %p968, %p969
      %p971 = scmp.ne.s32.totalorder %s960, %s961
      %p972 = scmp.eq.s32.totalorder %s108, 0
      %p973 = por %p971, %p972
      %p974 = scmp.ne.s32.totalorder %s960, %s961
      %p975 = scmp.eq.s32.totalorder %s109, 3
      %p976 = por %p974, %p975
      %p978 = scmp.ne.s32.totalorder %s961, %s977
      %p979 = scmp.eq.s32.totalorder %s109, 0
      %p980 = por %p978, %p979
      %s981 = ssub.s32 %s110, %s122
      %p982 = scmp.eq.s32.totalorder %s981, 0
      %s984 = sadd.s32 %s983, 1
      %s985 = scalar_select %p982, %s983, %s984
      %p988 = pneg %p982
      %p989 = scmp.eq.s32.totalorder %s103, 3
      %p990 = por %p988, %p989
      %p991 = scmp.ne.s32.totalorder %s983, %s986
      %p992 = scmp.eq.s32.totalorder %s103, 0
      %p993 = por %p991, %p992
      %p994 = scmp.ne.s32.totalorder %s983, %s986
      %p995 = scmp.eq.s32.totalorder %s108, 3
      %p996 = por %p994, %p995
      %p997 = scmp.ne.s32.totalorder %s986, %s987
      %p998 = scmp.eq.s32.totalorder %s108, 0
      %p999 = por %p997, %p998
      %p1000 = scmp.ne.s32.totalorder %s986, %s987
      %p1001 = scmp.eq.s32.totalorder %s109, 3
      %p1002 = por %p1000, %p1001
      %p1004 = scmp.ne.s32.totalorder %s987, %s1003
      %p1005 = scmp.eq.s32.totalorder %s109, 0
      %p1006 = por %p1004, %p1005
      %s1007 = ssub.s32 %s110, %s122
      %p1008 = scmp.eq.s32.totalorder %s1007, 0
      %s1010 = sadd.s32 %s1009, 1
      %s1011 = scalar_select %p1008, %s1009, %s1010
      %p1014 = pneg %p1008
      %p1015 = scmp.eq.s32.totalorder %s103, 3
      %p1016 = por %p1014, %p1015
      %p1017 = scmp.ne.s32.totalorder %s1009, %s1012
      %p1018 = scmp.eq.s32.totalorder %s103, 0
      %p1019 = por %p1017, %p1018
      %p1020 = scmp.ne.s32.totalorder %s1009, %s1012
      %p1021 = scmp.eq.s32.totalorder %s108, 3
      %p1022 = por %p1020, %p1021
      %p1023 = scmp.ne.s32.totalorder %s1012, %s1013
      %p1024 = scmp.eq.s32.totalorder %s108, 0
      %p1025 = por %p1023, %p1024
      %p1026 = scmp.ne.s32.totalorder %s1012, %s1013
      %p1027 = scmp.eq.s32.totalorder %s109, 3
      %p1028 = por %p1026, %p1027
      %p1030 = scmp.ne.s32.totalorder %s1013, %s1029
      %p1031 = scmp.eq.s32.totalorder %s109, 0
      %p1032 = por %p1030, %p1031
      %p1033 = scmp.le.s32.totalorder 1, %s103
      %p1034 = scmp.lt.s32.totalorder %s103, 5
      %p1035 = pnand %p1033, %p1034
      %p1036 = pneg %p1035
      // Predicated region
      $region9: #{_lambda_.1} parent=5 // pred_check
        _
      $region10: #{_lambda_.1} parent=5 // pred_check_branch
        %1038 = sbr.rel (%p1035) target = $region12
      $region11: #{_lambda_.1} parent=5 // pred_region
        %s1039 = ssub.s32 %s103, 1
      $region12: #{_lambda_.1} parent=5 // pred_fallthru
        _
      %p1040 = scmp.lt.s32.totalorder %s103, 4
      // Predicated region
      $region13: #{_lambda_.1} parent=5 // pred_check
        %p1041 = pneg %p1040
      $region14: #{_lambda_.1} parent=5 // pred_check_branch
        %1043 = sbr.rel (%p1041) target = $region16
      $region15: #{_lambda_.1} parent=5 // pred_region
        // Predicated region
        $region17: #{_lambda_.1} parent=15 // pred_check
          %p1044 = pneg %p135
        $region18: #{_lambda_.1} parent=15 // pred_check_branch
          %1046 = sbr.rel (%p1044) target = $region20
        $region19: #{_lambda_.1} parent=15 // pred_region
          %p1047 = scmp.lt.s32.totalorder %s110, 1
          %s1048 = scalar_select %p1047, %s110, 1
          %s1049 = smul.addr %s1048, 2
          %s1050 = smul.addr %s1049, 8
          %s1051 = scalar_lea.vmem %s1, %s1050
        $region20: #{_lambda_.1} parent=15 // pred_fallthru
          _
        // Predicated region
        $region21: #{_lambda_.1} parent=15 // pred_check
          %p1052 = pneg %p161
        $region22: #{_lambda_.1} parent=15 // pred_check_branch
          %1054 = sbr.rel (%p1052) target = $region24
        $region23: #{_lambda_.1} parent=15 // pred_region
          %p1055 = scmp.lt.s32.totalorder %s110, 1
          %s1056 = scalar_select %p1055, %s110, 1
          %s1057 = smul.addr %s1056, 3
          %s1058 = smul.addr %s1057, 8
          %s1059 = scalar_lea.vmem %s3, %s1058
        $region24: #{_lambda_.1} parent=15 // pred_fallthru
          _
        // Predicated region
        $region25: #{_lambda_.1} parent=15 // pred_check
          %p1060 = pneg %p187
        $region26: #{_lambda_.1} parent=15 // pred_check_branch
          %1062 = sbr.rel (%p1060) target = $region28
        $region27: #{_lambda_.1} parent=15 // pred_region
          %s1063 = sand.u32 %s177, 1
          %s1064 = sand.u32 %s177, 1
          %s1065 = smul.addr %s1064, 48
          %s1066 = scalar_lea.vmem [#allocation3], %s1065
          %s1067 = smul.addr %s110, 2
          %s1068 = smul.addr %s1067, 8
          %s1069 = scalar_lea.vmem %s5, %s1068
          // Predicated region
          $region29: #{_lambda_.1} parent=27 // pred_check
            _
          $region30: #{_lambda_.1} parent=27 // pred_check_branch
            %1071 = sbr.rel (0) target = $region32
          $region31: #{_lambda_.1} parent=27 // pred_region
            // Predicated region
            $region33: #{_lambda_.1} parent=31 // pred_check
              _
            $region34: #{_lambda_.1} parent=31 // pred_check_branch
              %1073 = sbr.rel (0) target = $region36
            $region35: #{_lambda_.1} parent=31 // pred_region
              // Predicated region
              $region48: #{_lambda_.1} parent=35 // pred_check
                _
              $region49: #{_lambda_.1} parent=35 // pred_check_branch
                %1099 = sbr.rel (0) target = $region51
              $region50: #{_lambda_.1} parent=35 // pred_region
                loop: start=0, step=1, limit=1
                $region52: #{_lambda_.1} parent=50 // loop_pre_header
                  _
                $region53: #{_lambda_.1} parent=50 // loop_header
                  %s1101 = sphi 0, %s1105
                  %p1102 = scmp.ge.s32.totalorder %s1101, 1
                  %s1106 = sphi %s1069, %s1069
                  %s1107 = sphi %s1066, %s1066
                $region54: #{_lambda_.1} parent=50 // loop_header_branch
                  %1104 = sbr.rel (%p1102) target = $region58
                $region55: #{_lambda_.1} parent=50 // loop_body
                  %v1108 = vld [vmem:[%s1106] sm:$0xff]
                  %1109 = vst [vmem:[%s1107] sm:$0xff] %v1108
                  %v1110 = vld [vmem:[%s1106 + $0x8] sm:$0xff]
                  %1111 = vst [vmem:[%s1107 + $0x8] sm:$0xff] %v1110
                  %v1112 = vld [vmem:[%s1106 + $0x20] sm:$0xff]
                  %1113 = vst [vmem:[%s1107 + $0x10] sm:$0xff] %v1112
                  %v1114 = vld [vmem:[%s1106 + $0x28] sm:$0xff]
                  %1115 = vst [vmem:[%s1107 + $0x18] sm:$0xff] %v1114
                  %v1116 = vld [vmem:[%s1106 + $0x40] sm:$0xff]
                  %1117 = vst [vmem:[%s1107 + $0x20] sm:$0xff] %v1116
                  %v1118 = vld [vmem:[%s1106 + $0x48] sm:$0xff]
                  %1119 = vst [vmem:[%s1107 + $0x28] sm:$0xff] %v1118
                $region56: #{_lambda_.1} parent=50 // loop_footer
                  %s1105 = sadd.s32 1, %s1101
                $region57: #{_lambda_.1} parent=50 // loop_footer_branch
                  %1100 = sbr.rel target = $region53
                $region58: #{_lambda_.1} parent=50 // loop_exit
                  _
              $region51: #{_lambda_.1} parent=35 // pred_fallthru
                _
              // Predicated region
              $region59: #{_lambda_.1} parent=35 // pred_check
                _
              $region60: #{_lambda_.1} parent=35 // pred_check_branch
                %1121 = sbr.rel target = $region62
              $region61: #{_lambda_.1} parent=35 // pred_region
                _
              $region62: #{_lambda_.1} parent=35 // pred_fallthru
                _
            $region36: #{_lambda_.1} parent=31 // pred_fallthru
              _
            // Predicated region
            $region37: #{_lambda_.1} parent=31 // pred_check
              _
            $region38: #{_lambda_.1} parent=31 // pred_check_branch
              %1075 = sbr.rel target = $region40
            $region39: #{_lambda_.1} parent=31 // pred_region
              %s1077 = ssub.s32 256, 1
              loop: start=0, step=1, limit=1
              $region41: #{_lambda_.1} parent=39 // loop_pre_header
                _
              $region42: #{_lambda_.1} parent=39 // loop_header
                %s1079 = sphi 0, %s1083
                %p1080 = scmp.ge.s32.totalorder %s1079, 1
                %s1084 = sphi %s1069, %s1069
                %s1085 = sphi %s1066, %s1066
              $region43: #{_lambda_.1} parent=39 // loop_header_branch
                %1082 = sbr.rel (%p1080) target = $region47
              $region44: #{_lambda_.1} parent=39 // loop_body
                %v1086 = vld [vmem:[%s1084] sm:%s1077]
                %1087 = vst [vmem:[%s1085] sm:%s1077] %v1086
                %v1088 = vld [vmem:[%s1084 + $0x8] sm:%s1077]
                %1089 = vst [vmem:[%s1085 + $0x8] sm:%s1077] %v1088
                %v1090 = vld [vmem:[%s1084 + $0x20] sm:%s1077]
                %1091 = vst [vmem:[%s1085 + $0x10] sm:%s1077] %v1090
                %v1092 = vld [vmem:[%s1084 + $0x28] sm:%s1077]
                %1093 = vst [vmem:[%s1085 + $0x18] sm:%s1077] %v1092
                %v1094 = vld [vmem:[%s1084 + $0x40] sm:%s1077]
                %1095 = vst [vmem:[%s1085 + $0x20] sm:%s1077] %v1094
                %v1096 = vld [vmem:[%s1084 + $0x48] sm:%s1077]
                %1097 = vst [vmem:[%s1085 + $0x28] sm:%s1077] %v1096
              $region45: #{_lambda_.1} parent=39 // loop_footer
                %s1083 = sadd.s32 1, %s1079
              $region46: #{_lambda_.1} parent=39 // loop_footer_branch
                %1078 = sbr.rel target = $region42
              $region47: #{_lambda_.1} parent=39 // loop_exit
                _
            $region40: #{_lambda_.1} parent=31 // pred_fallthru
              _
          $region32: #{_lambda_.1} parent=27 // pred_fallthru
            _
          %1122 = vnop
        $region28: #{_lambda_.1} parent=15 // pred_fallthru
          _
        // Predicated region
        $region63: #{_lambda_.1} parent=15 // pred_check
          %p1123 = pneg %p213
        $region64: #{_lambda_.1} parent=15 // pred_check_branch
          %1125 = sbr.rel (%p1123) target = $region66
        $region65: #{_lambda_.1} parent=15 // pred_region
          %s1126 = sand.u32 %s203, 1
          %s1127 = sand.u32 %s203, 1
          %s1128 = smul.addr %s1127, 72
          %s1129 = scalar_lea.vmem [#allocation4], %s1128
          %s1130 = smul.addr %s110, 3
          %s1131 = smul.addr %s1130, 8
          %s1132 = scalar_lea.vmem %s7, %s1131
          // Predicated region
          $region67: #{_lambda_.1} parent=65 // pred_check
            _
          $region68: #{_lambda_.1} parent=65 // pred_check_branch
            %1134 = sbr.rel (0) target = $region70
          $region69: #{_lambda_.1} parent=65 // pred_region
            // Predicated region
            $region71: #{_lambda_.1} parent=69 // pred_check
              _
            $region72: #{_lambda_.1} parent=69 // pred_check_branch
              %1136 = sbr.rel (0) target = $region74
            $region73: #{_lambda_.1} parent=69 // pred_region
              // Predicated region
              $region86: #{_lambda_.1} parent=73 // pred_check
                _
              $region87: #{_lambda_.1} parent=73 // pred_check_branch
                %1168 = sbr.rel (0) target = $region89
              $region88: #{_lambda_.1} parent=73 // pred_region
                loop: start=0, step=1, limit=1
                $region90: #{_lambda_.1} parent=88 // loop_pre_header
                  _
                $region91: #{_lambda_.1} parent=88 // loop_header
                  %s1170 = sphi 0, %s1174
                  %p1171 = scmp.ge.s32.totalorder %s1170, 1
                  %s1175 = sphi %s1132, %s1132
                  %s1176 = sphi %s1129, %s1129
                $region92: #{_lambda_.1} parent=88 // loop_header_branch
                  %1173 = sbr.rel (%p1171) target = $region96
                $region93: #{_lambda_.1} parent=88 // loop_body
                  %v1177 = vld [vmem:[%s1175] sm:$0xff]
                  %1178 = vst [vmem:[%s1176] sm:$0xff] %v1177
                  %v1179 = vld [vmem:[%s1175 + $0x8] sm:$0xff]
                  %1180 = vst [vmem:[%s1176 + $0x8] sm:$0xff] %v1179
                  %v1181 = vld [vmem:[%s1175 + $0x10] sm:$0xff]
                  %1182 = vst [vmem:[%s1176 + $0x10] sm:$0xff] %v1181
                  %v1183 = vld [vmem:[%s1175 + $0x30] sm:$0xff]
                  %1184 = vst [vmem:[%s1176 + $0x18] sm:$0xff] %v1183
                  %v1185 = vld [vmem:[%s1175 + $0x38] sm:$0xff]
                  %1186 = vst [vmem:[%s1176 + $0x20] sm:$0xff] %v1185
                  %v1187 = vld [vmem:[%s1175 + $0x40] sm:$0xff]
                  %1188 = vst [vmem:[%s1176 + $0x28] sm:$0xff] %v1187
                  %v1189 = vld [vmem:[%s1175 + $0x60] sm:$0xff]
                  %1190 = vst [vmem:[%s1176 + $0x30] sm:$0xff] %v1189
                  %v1191 = vld [vmem:[%s1175 + $0x68] sm:$0xff]
                  %1192 = vst [vmem:[%s1176 + $0x38] sm:$0xff] %v1191
                  %v1193 = vld [vmem:[%s1175 + $0x70] sm:$0xff]
                  %1194 = vst [vmem:[%s1176 + $0x40] sm:$0xff] %v1193
                $region94: #{_lambda_.1} parent=88 // loop_footer
                  %s1174 = sadd.s32 1, %s1170
                $region95: #{_lambda_.1} parent=88 // loop_footer_branch
                  %1169 = sbr.rel target = $region91
                $region96: #{_lambda_.1} parent=88 // loop_exit
                  _
              $region89: #{_lambda_.1} parent=73 // pred_fallthru
                _
              // Predicated region
              $region97: #{_lambda_.1} parent=73 // pred_check
                _
              $region98: #{_lambda_.1} parent=73 // pred_check_branch
                %1196 = sbr.rel target = $region100
              $region99: #{_lambda_.1} parent=73 // pred_region
                _
              $region100: #{_lambda_.1} parent=73 // pred_fallthru
                _
            $region74: #{_lambda_.1} parent=69 // pred_fallthru
              _
            // Predicated region
            $region75: #{_lambda_.1} parent=69 // pred_check
              _
            $region76: #{_lambda_.1} parent=69 // pred_check_branch
              %1138 = sbr.rel target = $region78
            $region77: #{_lambda_.1} parent=69 // pred_region
              %s1140 = ssub.s32 256, 1
              loop: start=0, step=1, limit=1
              $region79: #{_lambda_.1} parent=77 // loop_pre_header
                _
              $region80: #{_lambda_.1} parent=77 // loop_header
                %s1142 = sphi 0, %s1146
                %p1143 = scmp.ge.s32.totalorder %s1142, 1
                %s1147 = sphi %s1132, %s1132
                %s1148 = sphi %s1129, %s1129
              $region81: #{_lambda_.1} parent=77 // loop_header_branch
                %1145 = sbr.rel (%p1143) target = $region85
              $region82: #{_lambda_.1} parent=77 // loop_body
                %v1149 = vld [vmem:[%s1147] sm:%s1140]
                %1150 = vst [vmem:[%s1148] sm:%s1140] %v1149
                %v1151 = vld [vmem:[%s1147 + $0x8] sm:%s1140]
                %1152 = vst [vmem:[%s1148 + $0x8] sm:%s1140] %v1151
                %v1153 = vld [vmem:[%s1147 + $0x10] sm:%s1140]
                %1154 = vst [vmem:[%s1148 + $0x10] sm:%s1140] %v1153
                %v1155 = vld [vmem:[%s1147 + $0x30] sm:%s1140]
                %1156 = vst [vmem:[%s1148 + $0x18] sm:%s1140] %v1155
                %v1157 = vld [vmem:[%s1147 + $0x38] sm:%s1140]
                %1158 = vst [vmem:[%s1148 + $0x20] sm:%s1140] %v1157
                %v1159 = vld [vmem:[%s1147 + $0x40] sm:%s1140]
                %1160 = vst [vmem:[%s1148 + $0x28] sm:%s1140] %v1159
                %v1161 = vld [vmem:[%s1147 + $0x60] sm:%s1140]
                %1162 = vst [vmem:[%s1148 + $0x30] sm:%s1140] %v1161
                %v1163 = vld [vmem:[%s1147 + $0x68] sm:%s1140]
                %1164 = vst [vmem:[%s1148 + $0x38] sm:%s1140] %v1163
                %v1165 = vld [vmem:[%s1147 + $0x70] sm:%s1140]
                %1166 = vst [vmem:[%s1148 + $0x40] sm:%s1140] %v1165
              $region83: #{_lambda_.1} parent=77 // loop_footer
                %s1146 = sadd.s32 1, %s1142
              $region84: #{_lambda_.1} parent=77 // loop_footer_branch
                %1141 = sbr.rel target = $region80
              $region85: #{_lambda_.1} parent=77 // loop_exit
                _
            $region78: #{_lambda_.1} parent=69 // pred_fallthru
              _
          $region70: #{_lambda_.1} parent=65 // pred_fallthru
            _
          %1197 = vnop
        $region66: #{_lambda_.1} parent=15 // pred_fallthru
          _
        // Predicated region
        $region101: #{_lambda_.1} parent=15 // pred_check
          %p1198 = pneg %p239
        $region102: #{_lambda_.1} parent=15 // pred_check_branch
          %1200 = sbr.rel (%p1198) target = $region104
        $region103: #{_lambda_.1} parent=15 // pred_region
          %p1201 = scmp.lt.s32.totalorder %s110, 1
          %s1202 = scalar_select %p1201, %s110, 1
          %s1203 = smul.addr %s1202, 5
          %s1204 = smul.addr %s1203, 8
          %s1205 = scalar_lea.vmem %s9, %s1204
        $region104: #{_lambda_.1} parent=15 // pred_fallthru
          _
        // Predicated region
        $region105: #{_lambda_.1} parent=15 // pred_check
          %p1206 = pneg %p265
        $region106: #{_lambda_.1} parent=15 // pred_check_branch
          %1208 = sbr.rel (%p1206) target = $region108
        $region107: #{_lambda_.1} parent=15 // pred_region
          %p1209 = scmp.lt.s32.totalorder %s111, 1
          %s1210 = scalar_select %p1209, %s111, 1
          %s1211 = smul.addr %s1210, 4
          %s1212 = smul.addr %s1211, 8
          %s1213 = scalar_lea.vmem %s11, %s1212
        $region108: #{_lambda_.1} parent=15 // pred_fallthru
          _
        // Predicated region
        $region109: #{_lambda_.1} parent=15 // pred_check
          %p1214 = pneg %p291
        $region110: #{_lambda_.1} parent=15 // pred_check_branch
          %1216 = sbr.rel (%p1214) target = $region112
        $region111: #{_lambda_.1} parent=15 // pred_region
          %s1217 = sand.u32 %s281, 1
          %s1218 = scalar_lea.sflag [#allocation6], %s1217
          %s1219 = sand.u32 %s281, 1
          %s1220 = scalar_lea.vmem [#allocation5], %s1219
          %s1222 = ssub.s32 16, 16
          %1223 = vsyncadd %s1218, %s1222
          %s1224 = smul.addr %s111, 16
          %s1225 = scalar_lea.hbm %s13, %s1224
          %s1227 = sshll.u32 %s1220, 4
          %s1228 = int_to_ptr.vmem [resolvable:$true] %s1227
          %1230 = dma.hbm_to_vmem [thread:$0]  %s1225, 16, %s1228, %s1218
        $region112: #{_lambda_.1} parent=15 // pred_fallthru
          _
        // Predicated region
        $region113: #{_lambda_.1} parent=15 // pred_check
          %p1231 = pneg %p317
        $region114: #{_lambda_.1} parent=15 // pred_check_branch
          %1233 = sbr.rel (%p1231) target = $region116
        $region115: #{_lambda_.1} parent=15 // pred_region
          %p1234 = scmp.lt.s32.totalorder %s111, 1
          %s1235 = scalar_select %p1234, %s111, 1
          %s1236 = smul.addr %s1235, 4
          %s1237 = smul.addr %s1236, 8
          %s1238 = scalar_lea.vmem %s15, %s1237
        $region116: #{_lambda_.1} parent=15 // pred_fallthru
          _
        // Predicated region
        $region117: #{_lambda_.1} parent=15 // pred_check
          %p1239 = pneg %p343
        $region118: #{_lambda_.1} parent=15 // pred_check_branch
          %1241 = sbr.rel (%p1239) target = $region120
        $region119: #{_lambda_.1} parent=15 // pred_region
          %s1242 = sand.u32 %s103, 1
          %s1243 = scalar_lea.sflag [#allocation9], %s1242
          %s1244 = sand.u32 %s333, 1
          %s1245 = scalar_lea.vmem [#allocation8], %s1244
          %s1247 = ssub.s32 16, 16
          %1248 = vsyncadd %s1243, %s1247
          %s1249 = smul.addr %s111, 16
          %s1250 = scalar_lea.hbm %s17, %s1249
          %s1252 = sshll.u32 %s1245, 4
          %s1253 = int_to_ptr.vmem [resolvable:$true] %s1252
          %1255 = dma.hbm_to_vmem [thread:$0]  %s1250, 16, %s1253, %s1243
        $region120: #{_lambda_.1} parent=15 // pred_fallthru
          _
        // Predicated region
        $region121: #{_lambda_.1} parent=15 // pred_check
          %p1256 = pneg %p369
        $region122: #{_lambda_.1} parent=15 // pred_check_branch
          %1258 = sbr.rel (%p1256) target = $region124
        $region123: #{_lambda_.1} parent=15 // pred_region
          %p1259 = scmp.lt.s32.totalorder %s111, 1
          %s1260 = scalar_select %p1259, %s111, 1
          %s1261 = smul.addr %s1260, 4
          %s1262 = smul.addr %s1261, 8
          %s1263 = scalar_lea.vmem %s19, %s1262
        $region124: #{_lambda_.1} parent=15 // pred_fallthru
          _
        // Predicated region
        $region125: #{_lambda_.1} parent=15 // pred_check
          %p1264 = pneg %p395
        $region126: #{_lambda_.1} parent=15 // pred_check_branch
          %1266 = sbr.rel (%p1264) target = $region128
        $region127: #{_lambda_.1} parent=15 // pred_region
          %s1267 = sand.u32 %s103, 1
          %s1268 = scalar_lea.sflag [#allocation9], %s1267
          %s1269 = sand.u32 %s385, 1
          %s1270 = scalar_lea.vmem [#allocation10], %s1269
          %s1272 = ssub.s32 16, 16
          %1273 = vsyncadd %s1268, %s1272
          %s1274 = smul.addr %s111, 16
          %s1275 = scalar_lea.hbm %s21, %s1274
          %s1277 = sshll.u32 %s1270, 4
          %s1278 = int_to_ptr.vmem [resolvable:$true] %s1277
          %1280 = dma.hbm_to_vmem [thread:$0]  %s1275, 16, %s1278, %s1268
        $region128: #{_lambda_.1} parent=15 // pred_fallthru
          _
        // Predicated region
        $region129: #{_lambda_.1} parent=15 // pred_check
          %p1281 = pneg %p421
        $region130: #{_lambda_.1} parent=15 // pred_check_branch
          %1283 = sbr.rel (%p1281) target = $region132
        $region131: #{_lambda_.1} parent=15 // pred_region
          %p1284 = scmp.lt.s32.totalorder %s111, 1
          %s1285 = scalar_select %p1284, %s111, 1
          %s1286 = smul.addr %s1285, 4
          %s1287 = smul.addr %s1286, 8
          %s1288 = scalar_lea.vmem %s23, %s1287
        $region132: #{_lambda_.1} parent=15 // pred_fallthru
          _
        // Predicated region
        $region133: #{_lambda_.1} parent=15 // pred_check
          %p1289 = pneg %p447
        $region134: #{_lambda_.1} parent=15 // pred_check_branch
          %1291 = sbr.rel (%p1289) target = $region136
        $region135: #{_lambda_.1} parent=15 // pred_region
          %p1292 = scmp.lt.s32.totalorder %s111, 1
          %s1293 = scalar_select %p1292, %s111, 1
          %s1294 = smul.addr %s1293, 2
          %s1295 = smul.addr %s1294, 8
          %s1296 = scalar_lea.vmem %s25, %s1295
        $region136: #{_lambda_.1} parent=15 // pred_fallthru
          _
        // Predicated region
        $region137: #{_lambda_.1} parent=15 // pred_check
          %p1297 = pneg %p473
        $region138: #{_lambda_.1} parent=15 // pred_check_branch
          %1299 = sbr.rel (%p1297) target = $region140
        $region139: #{_lambda_.1} parent=15 // pred_region
          %s1300 = sand.u32 %s103, 1
          %s1301 = scalar_lea.sflag [#allocation12], %s1300
          %s1302 = sand.u32 %s463, 1
          %s1303 = scalar_lea.vmem [#allocation11], %s1302
          %s1305 = ssub.s32 16, 16
          %1306 = vsyncadd %s1301, %s1305
          %s1307 = smul.addr %s111, 16
          %s1308 = scalar_lea.hbm %s27, %s1307
          %s1310 = sshll.u32 %s1303, 4
          %s1311 = int_to_ptr.vmem [resolvable:$true] %s1310
          %1313 = dma.hbm_to_vmem [thread:$0]  %s1308, 16, %s1311, %s1301
        $region140: #{_lambda_.1} parent=15 // pred_fallthru
          _
        // Predicated region
        $region141: #{_lambda_.1} parent=15 // pred_check
          %p1314 = pneg %p499
        $region142: #{_lambda_.1} parent=15 // pred_check_branch
          %1316 = sbr.rel (%p1314) target = $region144
        $region143: #{_lambda_.1} parent=15 // pred_region
          %p1317 = scmp.lt.s32.totalorder %s111, 1
          %s1318 = scalar_select %p1317, %s111, 1
          %s1319 = smul.addr %s1318, 4
          %s1320 = smul.addr %s1319, 8
          %s1321 = scalar_lea.vmem %s29, %s1320
        $region144: #{_lambda_.1} parent=15 // pred_fallthru
          _
        // Predicated region
        $region145: #{_lambda_.1} parent=15 // pred_check
          %p1322 = pneg %p525
        $region146: #{_lambda_.1} parent=15 // pred_check_branch
          %1324 = sbr.rel (%p1322) target = $region148
        $region147: #{_lambda_.1} parent=15 // pred_region
          %s1325 = sand.u32 %s103, 1
          %s1326 = scalar_lea.sflag [#allocation12], %s1325
          %s1327 = sand.u32 %s515, 1
          %s1328 = scalar_lea.vmem [#allocation13], %s1327
          %s1330 = ssub.s32 16, 16
          %1331 = vsyncadd %s1326, %s1330
          %s1332 = smul.addr %s111, 16
          %s1333 = scalar_lea.hbm %s31, %s1332
          %s1335 = sshll.u32 %s1328, 4
          %s1336 = int_to_ptr.vmem [resolvable:$true] %s1335
          %1338 = dma.hbm_to_vmem [thread:$0]  %s1333, 16, %s1336, %s1326
        $region148: #{_lambda_.1} parent=15 // pred_fallthru
          _
        // Predicated region
        $region149: #{_lambda_.1} parent=15 // pred_check
          %p1339 = pneg %p551
        $region150: #{_lambda_.1} parent=15 // pred_check_branch
          %1341 = sbr.rel (%p1339) target = $region152
        $region151: #{_lambda_.1} parent=15 // pred_region
          %p1342 = scmp.lt.s32.totalorder %s111, 1
          %s1343 = scalar_select %p1342, %s111, 1
          %s1344 = smul.addr %s1343, 4
          %s1345 = smul.addr %s1344, 8
          %s1346 = scalar_lea.vmem %s33, %s1345
        $region152: #{_lambda_.1} parent=15 // pred_fallthru
          _
        // Predicated region
        $region153: #{_lambda_.1} parent=15 // pred_check
          %p1347 = pneg %p577
        $region154: #{_lambda_.1} parent=15 // pred_check_branch
          %1349 = sbr.rel (%p1347) target = $region156
        $region155: #{_lambda_.1} parent=15 // pred_region
          %s1350 = sand.u32 %s103, 1
          %s1351 = scalar_lea.sflag [#allocation15], %s1350
          %s1352 = sand.u32 %s567, 1
          %s1353 = scalar_lea.vmem [#allocation14], %s1352
          %s1355 = ssub.s32 16, 16
          %1356 = vsyncadd %s1351, %s1355
          %s1357 = smul.addr %s111, 16
          %s1358 = scalar_lea.hbm %s35, %s1357
          %s1360 = sshll.u32 %s1353, 4
          %s1361 = int_to_ptr.vmem [resolvable:$true] %s1360
          %1363 = dma.hbm_to_vmem [thread:$0]  %s1358, 16, %s1361, %s1351
        $region156: #{_lambda_.1} parent=15 // pred_fallthru
          _
        // Predicated region
        $region157: #{_lambda_.1} parent=15 // pred_check
          %p1364 = pneg %p603
        $region158: #{_lambda_.1} parent=15 // pred_check_branch
          %1366 = sbr.rel (%p1364) target = $region160
        $region159: #{_lambda_.1} parent=15 // pred_region
          %p1367 = scmp.lt.s32.totalorder %s111, 1
          %s1368 = scalar_select %p1367, %s111, 1
          %s1369 = smul.addr %s1368, 4
          %s1370 = smul.addr %s1369, 8
          %s1371 = scalar_lea.vmem %s37, %s1370
        $region160: #{_lambda_.1} parent=15 // pred_fallthru
          _
        // Predicated region
        $region161: #{_lambda_.1} parent=15 // pred_check
          %p1372 = pneg %p629
        $region162: #{_lambda_.1} parent=15 // pred_check_branch
          %1374 = sbr.rel (%p1372) target = $region164
        $region163: #{_lambda_.1} parent=15 // pred_region
          %s1375 = sand.u32 %s103, 1
          %s1376 = scalar_lea.sflag [#allocation15], %s1375
          %s1377 = sand.u32 %s619, 1
          %s1378 = scalar_lea.vmem [#allocation16], %s1377
          %s1380 = ssub.s32 16, 16
          %1381 = vsyncadd %s1376, %s1380
          %s1382 = smul.addr %s111, 16
          %s1383 = scalar_lea.hbm %s39, %s1382
          %s1385 = sshll.u32 %s1378, 4
          %s1386 = int_to_ptr.vmem [resolvable:$true] %s1385
          %1388 = dma.hbm_to_vmem [thread:$0]  %s1383, 16, %s1386, %s1376
        $region164: #{_lambda_.1} parent=15 // pred_fallthru
          _
        // Predicated region
        $region165: #{_lambda_.1} parent=15 // pred_check
          %p1389 = pneg %p655
        $region166: #{_lambda_.1} parent=15 // pred_check_branch
          %1391 = sbr.rel (%p1389) target = $region168
        $region167: #{_lambda_.1} parent=15 // pred_region
          %p1392 = scmp.lt.s32.totalorder %s111, 1
          %s1393 = scalar_select %p1392, %s111, 1
          %s1394 = smul.addr %s1393, 4
          %s1395 = smul.addr %s1394, 8
          %s1396 = scalar_lea.vmem %s41, %s1395
        $region168: #{_lambda_.1} parent=15 // pred_fallthru
          _
        // Predicated region
        $region169: #{_lambda_.1} parent=15 // pred_check
          %p1397 = pneg %p681
        $region170: #{_lambda_.1} parent=15 // pred_check_branch
          %1399 = sbr.rel (%p1397) target = $region172
        $region171: #{_lambda_.1} parent=15 // pred_region
          %p1400 = scmp.lt.s32.totalorder %s111, 1
          %s1401 = scalar_select %p1400, %s111, 1
          %s1402 = smul.addr %s1401, 2
          %s1403 = smul.addr %s1402, 8
          %s1404 = scalar_lea.vmem %s43, %s1403
        $region172: #{_lambda_.1} parent=15 // pred_fallthru
          _
        // Predicated region
        $region173: #{_lambda_.1} parent=15 // pred_check
          %p1405 = pneg %p707
        $region174: #{_lambda_.1} parent=15 // pred_check_branch
          %1407 = sbr.rel (%p1405) target = $region176
        $region175: #{_lambda_.1} parent=15 // pred_region
          %s1408 = sand.u32 %s103, 1
          %s1409 = scalar_lea.sflag [#allocation18], %s1408
          %s1410 = sand.u32 %s697, 1
          %s1411 = scalar_lea.vmem [#allocation17], %s1410
          %s1413 = ssub.s32 16, 16
          %1414 = vsyncadd %s1409, %s1413
          %s1415 = smul.addr %s111, 16
          %s1416 = scalar_lea.hbm %s45, %s1415
          %s1418 = sshll.u32 %s1411, 4
          %s1419 = int_to_ptr.vmem [resolvable:$true] %s1418
          %1421 = dma.hbm_to_vmem [thread:$0]  %s1416, 16, %s1419, %s1409
        $region176: #{_lambda_.1} parent=15 // pred_fallthru
          _
        // Predicated region
        $region177: #{_lambda_.1} parent=15 // pred_check
          %p1422 = pneg %p733
        $region178: #{_lambda_.1} parent=15 // pred_check_branch
          %1424 = sbr.rel (%p1422) target = $region180
        $region179: #{_lambda_.1} parent=15 // pred_region
          %p1425 = scmp.lt.s32.totalorder %s111, 1
          %s1426 = scalar_select %p1425, %s111, 1
          %s1427 = smul.addr %s1426, 4
          %s1428 = smul.addr %s1427, 8
          %s1429 = scalar_lea.vmem %s47, %s1428
        $region180: #{_lambda_.1} parent=15 // pred_fallthru
          _
        // Predicated region
        $region181: #{_lambda_.1} parent=15 // pred_check
          %p1430 = pneg %p759
        $region182: #{_lambda_.1} parent=15 // pred_check_branch
          %1432 = sbr.rel (%p1430) target = $region184
        $region183: #{_lambda_.1} parent=15 // pred_region
          %s1433 = sand.u32 %s103, 1
          %s1434 = scalar_lea.sflag [#allocation18], %s1433
          %s1435 = sand.u32 %s749, 1
          %s1436 = scalar_lea.vmem [#allocation19], %s1435
          %s1438 = ssub.s32 16, 16
          %1439 = vsyncadd %s1434, %s1438
          %s1440 = smul.addr %s111, 16
          %s1441 = scalar_lea.hbm %s49, %s1440
          %s1443 = sshll.u32 %s1436, 4
          %s1444 = int_to_ptr.vmem [resolvable:$true] %s1443
          %1446 = dma.hbm_to_vmem [thread:$0]  %s1441, 16, %s1444, %s1434
        $region184: #{_lambda_.1} parent=15 // pred_fallthru
          _
        // Predicated region
        $region185: #{_lambda_.1} parent=15 // pred_check
          %p1447 = pneg %p785
        $region186: #{_lambda_.1} parent=15 // pred_check_branch
          %1449 = sbr.rel (%p1447) target = $region188
        $region187: #{_lambda_.1} parent=15 // pred_region
          %p1450 = scmp.lt.s32.totalorder %s111, 1
          %s1451 = scalar_select %p1450, %s111, 1
          %s1452 = smul.addr %s1451, 4
          %s1453 = smul.addr %s1452, 8
          %s1454 = scalar_lea.vmem %s51, %s1453
        $region188: #{_lambda_.1} parent=15 // pred_fallthru
          _
        // Predicated region
        $region189: #{_lambda_.1} parent=15 // pred_check
          %p1455 = pneg %p811
        $region190: #{_lambda_.1} parent=15 // pred_check_branch
          %1457 = sbr.rel (%p1455) target = $region192
        $region191: #{_lambda_.1} parent=15 // pred_region
          %s1458 = sand.u32 %s103, 1
          %s1459 = scalar_lea.sflag [#allocation21], %s1458
          %s1460 = sand.u32 %s801, 1
          %s1461 = scalar_lea.vmem [#allocation20], %s1460
          %s1463 = ssub.s32 16, 16
          %1464 = vsyncadd %s1459, %s1463
          %s1465 = smul.addr %s111, 16
          %s1466 = scalar_lea.hbm %s53, %s1465
          %s1468 = sshll.u32 %s1461, 4
          %s1469 = int_to_ptr.vmem [resolvable:$true] %s1468
          %1471 = dma.hbm_to_vmem [thread:$0]  %s1466, 16, %s1469, %s1459
        $region192: #{_lambda_.1} parent=15 // pred_fallthru
          _
        // Predicated region
        $region193: #{_lambda_.1} parent=15 // pred_check
          %p1472 = pneg %p837
        $region194: #{_lambda_.1} parent=15 // pred_check_branch
          %1474 = sbr.rel (%p1472) target = $region196
        $region195: #{_lambda_.1} parent=15 // pred_region
          %p1475 = scmp.lt.s32.totalorder %s111, 1
          %s1476 = scalar_select %p1475, %s111, 1
          %s1477 = smul.addr %s1476, 4
          %s1478 = smul.addr %s1477, 8
          %s1479 = scalar_lea.vmem %s55, %s1478
        $region196: #{_lambda_.1} parent=15 // pred_fallthru
          _
        // Predicated region
        $region197: #{_lambda_.1} parent=15 // pred_check
          %p1480 = pneg %p863
        $region198: #{_lambda_.1} parent=15 // pred_check_branch
          %1482 = sbr.rel (%p1480) target = $region200
        $region199: #{_lambda_.1} parent=15 // pred_region
          %s1483 = sand.u32 %s103, 1
          %s1484 = scalar_lea.sflag [#allocation21], %s1483
          %s1485 = sand.u32 %s853, 1
          %s1486 = scalar_lea.vmem [#allocation22], %s1485
          %s1488 = ssub.s32 16, 16
          %1489 = vsyncadd %s1484, %s1488
          %s1490 = smul.addr %s111, 16
          %s1491 = scalar_lea.hbm %s57, %s1490
          %s1493 = sshll.u32 %s1486, 4
          %s1494 = int_to_ptr.vmem [resolvable:$true] %s1493
          %1496 = dma.hbm_to_vmem [thread:$0]  %s1491, 16, %s1494, %s1484
        $region200: #{_lambda_.1} parent=15 // pred_fallthru
          _
        // Predicated region
        $region201: #{_lambda_.1} parent=15 // pred_check
          %p1497 = pneg %p889
        $region202: #{_lambda_.1} parent=15 // pred_check_branch
          %1499 = sbr.rel (%p1497) target = $region204
        $region203: #{_lambda_.1} parent=15 // pred_region
          %p1500 = scmp.lt.s32.totalorder %s111, 1
          %s1501 = scalar_select %p1500, %s111, 1
          %s1502 = smul.addr %s1501, 8
          %s1503 = smul.addr %s1502, 8
          %s1504 = scalar_lea.vmem %s59, %s1503
        $region204: #{_lambda_.1} parent=15 // pred_fallthru
          _
        // Predicated region
        $region205: #{_lambda_.1} parent=15 // pred_check
          %p1505 = pneg %p915
        $region206: #{_lambda_.1} parent=15 // pred_check_branch
          %1507 = sbr.rel (%p1505) target = $region208
        $region207: #{_lambda_.1} parent=15 // pred_region
          %s1508 = sand.u32 %s103, 1
          %s1509 = scalar_lea.sflag [#allocation24], %s1508
          %s1510 = sand.u32 %s905, 1
          %s1511 = scalar_lea.vmem [#allocation23], %s1510
          %s1513 = ssub.s32 16, 16
          %1514 = vsyncadd %s1509, %s1513
          %s1515 = smul.addr %s111, 16
          %s1516 = scalar_lea.hbm %s61, %s1515
          %s1518 = sshll.u32 %s1511, 4
          %s1519 = int_to_ptr.vmem [resolvable:$true] %s1518
          %1521 = dma.hbm_to_vmem [thread:$0]  %s1516, 16, %s1519, %s1509
        $region208: #{_lambda_.1} parent=15 // pred_fallthru
          _
        // Predicated region
        $region209: #{_lambda_.1} parent=15 // pred_check
          %p1522 = pneg %p941
        $region210: #{_lambda_.1} parent=15 // pred_check_branch
          %1524 = sbr.rel (%p1522) target = $region212
        $region211: #{_lambda_.1} parent=15 // pred_region
          %s1525 = sand.u32 %s103, 1
          %s1526 = scalar_lea.sflag [#allocation24], %s1525
          %s1527 = sand.u32 %s931, 1
          %s1528 = smul.addr %s1527, 4
          %s1529 = scalar_lea.vmem [#allocation25], %s1528
          %s1531 = ssub.s32 64, 64
          %1532 = vsyncadd %s1526, %s1531
          %s1533 = smul.addr %s111, 64
          %s1534 = scalar_lea.hbm %s63, %s1533
          %s1536 = sshll.u32 %s1529, 4
          %s1537 = int_to_ptr.vmem [resolvable:$true] %s1536
          %1539 = dma.hbm_to_vmem [thread:$0]  %s1534, 64, %s1537, %s1526
        $region212: #{_lambda_.1} parent=15 // pred_fallthru
          _
        // Predicated region
        $region213: #{_lambda_.1} parent=15 // pred_check
          %p1540 = pneg %p967
        $region214: #{_lambda_.1} parent=15 // pred_check_branch
          %1542 = sbr.rel (%p1540) target = $region216
        $region215: #{_lambda_.1} parent=15 // pred_region
          %s1543 = sand.u32 %s957, 1
          %s1544 = scalar_lea.sflag [#allocation27], %s1543
          %s1545 = sand.u32 %s957, 1
          %s1546 = smul.addr %s1545, 4
          %s1547 = scalar_lea.vmem [#allocation26], %s1546
          %s1549 = ssub.s32 64, 64
          %1550 = vsyncadd %s1544, %s1549
          %s1551 = smul.addr %s111, 64
          %s1552 = scalar_lea.hbm %s65, %s1551
          %s1554 = sshll.u32 %s1547, 4
          %s1555 = int_to_ptr.vmem [resolvable:$true] %s1554
          %1557 = dma.hbm_to_vmem [thread:$0]  %s1552, 64, %s1555, %s1544
        $region216: #{_lambda_.1} parent=15 // pred_fallthru
          _
      $region16: #{_lambda_.1} parent=5 // pred_fallthru
        _
      %p1558 = scmp.le.s32.totalorder 1, %s103
      %p1559 = scmp.lt.s32.totalorder %s103, 5
      %p1560 = pnand %p1558, %p1559
      %p1561 = pneg %p1560
      // Predicated region
      $region217: #{_lambda_.1} parent=5 // pred_check
        _
      $region218: #{_lambda_.1} parent=5 // pred_check_branch
        %1563 = sbr.rel (%p1560) target = $region220
      $region219: #{_lambda_.1} parent=5 // pred_region
        %s1564 = ssub.s32 %s103, 1
        %s1565 = sand.u32 %s180, 1
        %s1566 = sand.u32 %s180, 1
        %s1567 = smul.addr %s1566, 48
        %s1568 = scalar_lea.vmem [#allocation3], %s1567
        // Predicated region
        $region221: #{_lambda_.1} parent=219 // pred_check
          %p1569 = pneg %p193
        $region222: #{_lambda_.1} parent=219 // pred_check_branch
          %1571 = sbr.rel (%p1569) target = $region224
        $region223: #{_lambda_.1} parent=219 // pred_region
          _
        $region224: #{_lambda_.1} parent=219 // pred_fallthru
          _
        %s1572 = sand.u32 %s206, 1
        %s1573 = sand.u32 %s206, 1
        %s1574 = smul.addr %s1573, 72
        %s1575 = scalar_lea.vmem [#allocation4], %s1574
        // Predicated region
        $region225: #{_lambda_.1} parent=219 // pred_check
          %p1576 = pneg %p219
        $region226: #{_lambda_.1} parent=219 // pred_check_branch
          %1578 = sbr.rel (%p1576) target = $region228
        $region227: #{_lambda_.1} parent=219 // pred_region
          _
        $region228: #{_lambda_.1} parent=219 // pred_fallthru
          _
        %s1579 = sand.u32 %s284, 1
        %s1580 = scalar_lea.sflag [#allocation6], %s1579
        %s1581 = sand.u32 %s284, 1
        %s1582 = scalar_lea.vmem [#allocation5], %s1581
        // Predicated region
        $region229: #{_lambda_.1} parent=219 // pred_check
          %p1583 = pneg %p297
        $region230: #{_lambda_.1} parent=219 // pred_check_branch
          %1585 = sbr.rel (%p1583) target = $region232
        $region231: #{_lambda_.1} parent=219 // pred_region
          %1586 = dma.done %s1580, 16
        $region232: #{_lambda_.1} parent=219 // pred_fallthru
          _
        %s1587 = sand.u32 %s108, 1
        %s1588 = scalar_lea.sflag [#allocation9], %s1587
        %s1589 = sand.u32 %s336, 1
        %s1590 = scalar_lea.vmem [#allocation8], %s1589
        // Predicated region
        $region233: #{_lambda_.1} parent=219 // pred_check
          %p1591 = pneg %p349
        $region234: #{_lambda_.1} parent=219 // pred_check_branch
          %1593 = sbr.rel (%p1591) target = $region236
        $region235: #{_lambda_.1} parent=219 // pred_region
          %1594 = dma.done %s1588, 16
        $region236: #{_lambda_.1} parent=219 // pred_fallthru
          _
        %s1595 = sand.u32 %s108, 1
        %s1596 = scalar_lea.sflag [#allocation9], %s1595
        %s1597 = sand.u32 %s388, 1
        %s1598 = scalar_lea.vmem [#allocation10], %s1597
        // Predicated region
        $region237: #{_lambda_.1} parent=219 // pred_check
          %p1599 = pneg %p401
        $region238: #{_lambda_.1} parent=219 // pred_check_branch
          %1601 = sbr.rel (%p1599) target = $region240
        $region239: #{_lambda_.1} parent=219 // pred_region
          %1602 = dma.done %s1596, 16
        $region240: #{_lambda_.1} parent=219 // pred_fallthru
          _
        %s1603 = sand.u32 %s108, 1
        %s1604 = scalar_lea.sflag [#allocation12], %s1603
        %s1605 = sand.u32 %s466, 1
        %s1606 = scalar_lea.vmem [#allocation11], %s1605
        // Predicated region
        $region241: #{_lambda_.1} parent=219 // pred_check
          %p1607 = pneg %p479
        $region242: #{_lambda_.1} parent=219 // pred_check_branch
          %1609 = sbr.rel (%p1607) target = $region244
        $region243: #{_lambda_.1} parent=219 // pred_region
          %1610 = dma.done %s1604, 16
        $region244: #{_lambda_.1} parent=219 // pred_fallthru
          _
        %s1611 = sand.u32 %s108, 1
        %s1612 = scalar_lea.sflag [#allocation12], %s1611
        %s1613 = sand.u32 %s518, 1
        %s1614 = scalar_lea.vmem [#allocation13], %s1613
        // Predicated region
        $region245: #{_lambda_.1} parent=219 // pred_check
          %p1615 = pneg %p531
        $region246: #{_lambda_.1} parent=219 // pred_check_branch
          %1617 = sbr.rel (%p1615) target = $region248
        $region247: #{_lambda_.1} parent=219 // pred_region
          %1618 = dma.done %s1612, 16
        $region248: #{_lambda_.1} parent=219 // pred_fallthru
          _
        %s1619 = sand.u32 %s108, 1
        %s1620 = scalar_lea.sflag [#allocation15], %s1619
        %s1621 = sand.u32 %s570, 1
        %s1622 = scalar_lea.vmem [#allocation14], %s1621
        // Predicated region
        $region249: #{_lambda_.1} parent=219 // pred_check
          %p1623 = pneg %p583
        $region250: #{_lambda_.1} parent=219 // pred_check_branch
          %1625 = sbr.rel (%p1623) target = $region252
        $region251: #{_lambda_.1} parent=219 // pred_region
          %1626 = dma.done %s1620, 16
        $region252: #{_lambda_.1} parent=219 // pred_fallthru
          _
        %s1627 = sand.u32 %s108, 1
        %s1628 = scalar_lea.sflag [#allocation15], %s1627
        %s1629 = sand.u32 %s622, 1
        %s1630 = scalar_lea.vmem [#allocation16], %s1629
        // Predicated region
        $region253: #{_lambda_.1} parent=219 // pred_check
          %p1631 = pneg %p635
        $region254: #{_lambda_.1} parent=219 // pred_check_branch
          %1633 = sbr.rel (%p1631) target = $region256
        $region255: #{_lambda_.1} parent=219 // pred_region
          %1634 = dma.done %s1628, 16
        $region256: #{_lambda_.1} parent=219 // pred_fallthru
          _
        %s1635 = sand.u32 %s108, 1
        %s1636 = scalar_lea.sflag [#allocation18], %s1635
        %s1637 = sand.u32 %s700, 1
        %s1638 = scalar_lea.vmem [#allocation17], %s1637
        // Predicated region
        $region257: #{_lambda_.1} parent=219 // pred_check
          %p1639 = pneg %p713
        $region258: #{_lambda_.1} parent=219 // pred_check_branch
          %1641 = sbr.rel (%p1639) target = $region260
        $region259: #{_lambda_.1} parent=219 // pred_region
          %1642 = dma.done %s1636, 16
        $region260: #{_lambda_.1} parent=219 // pred_fallthru
          _
        %s1643 = sand.u32 %s108, 1
        %s1644 = scalar_lea.sflag [#allocation18], %s1643
        %s1645 = sand.u32 %s752, 1
        %s1646 = scalar_lea.vmem [#allocation19], %s1645
        // Predicated region
        $region261: #{_lambda_.1} parent=219 // pred_check
          %p1647 = pneg %p765
        $region262: #{_lambda_.1} parent=219 // pred_check_branch
          %1649 = sbr.rel (%p1647) target = $region264
        $region263: #{_lambda_.1} parent=219 // pred_region
          %1650 = dma.done %s1644, 16
        $region264: #{_lambda_.1} parent=219 // pred_fallthru
          _
        %s1651 = sand.u32 %s108, 1
        %s1652 = scalar_lea.sflag [#allocation21], %s1651
        %s1653 = sand.u32 %s804, 1
        %s1654 = scalar_lea.vmem [#allocation20], %s1653
        // Predicated region
        $region265: #{_lambda_.1} parent=219 // pred_check
          %p1655 = pneg %p817
        $region266: #{_lambda_.1} parent=219 // pred_check_branch
          %1657 = sbr.rel (%p1655) target = $region268
        $region267: #{_lambda_.1} parent=219 // pred_region
          %1658 = dma.done %s1652, 16
        $region268: #{_lambda_.1} parent=219 // pred_fallthru
          _
        %s1659 = sand.u32 %s108, 1
        %s1660 = scalar_lea.sflag [#allocation21], %s1659
        %s1661 = sand.u32 %s856, 1
        %s1662 = scalar_lea.vmem [#allocation22], %s1661
        // Predicated region
        $region269: #{_lambda_.1} parent=219 // pred_check
          %p1663 = pneg %p869
        $region270: #{_lambda_.1} parent=219 // pred_check_branch
          %1665 = sbr.rel (%p1663) target = $region272
        $region271: #{_lambda_.1} parent=219 // pred_region
          %1666 = dma.done %s1660, 16
        $region272: #{_lambda_.1} parent=219 // pred_fallthru
          _
        %s1667 = sand.u32 %s108, 1
        %s1668 = scalar_lea.sflag [#allocation24], %s1667
        %s1669 = sand.u32 %s908, 1
        %s1670 = scalar_lea.vmem [#allocation23], %s1669
        // Predicated region
        $region273: #{_lambda_.1} parent=219 // pred_check
          %p1671 = pneg %p921
        $region274: #{_lambda_.1} parent=219 // pred_check_branch
          %1673 = sbr.rel (%p1671) target = $region276
        $region275: #{_lambda_.1} parent=219 // pred_region
          %1674 = dma.done %s1668, 16
        $region276: #{_lambda_.1} parent=219 // pred_fallthru
          _
        %s1675 = sand.u32 %s108, 1
        %s1676 = scalar_lea.sflag [#allocation24], %s1675
        %s1677 = sand.u32 %s934, 1
        %s1678 = smul.addr %s1677, 4
        %s1679 = scalar_lea.vmem [#allocation25], %s1678
        // Predicated region
        $region277: #{_lambda_.1} parent=219 // pred_check
          %p1680 = pneg %p947
        $region278: #{_lambda_.1} parent=219 // pred_check_branch
          %1682 = sbr.rel (%p1680) target = $region280
        $region279: #{_lambda_.1} parent=219 // pred_region
          %1683 = dma.done %s1676, 64
        $region280: #{_lambda_.1} parent=219 // pred_fallthru
          _
        %s1684 = sand.u32 %s960, 1
        %s1685 = scalar_lea.sflag [#allocation27], %s1684
        %s1686 = sand.u32 %s960, 1
        %s1687 = smul.addr %s1686, 4
        %s1688 = scalar_lea.vmem [#allocation26], %s1687
        // Predicated region
        $region281: #{_lambda_.1} parent=219 // pred_check
          %p1689 = pneg %p973
        $region282: #{_lambda_.1} parent=219 // pred_check_branch
          %1691 = sbr.rel (%p1689) target = $region284
        $region283: #{_lambda_.1} parent=219 // pred_region
          %1692 = dma.done %s1685, 64
        $region284: #{_lambda_.1} parent=219 // pred_fallthru
          _
        %p1693 = scmp.lt.s32.totalorder %s112, 1
        %s1694 = scalar_select %p1693, %s112, 1
        %s1695 = smul.addr %s1694, 2
        %s1696 = smul.addr %s1695, 8
        %s1697 = scalar_lea.vmem %s1, %s1696
        %p1698 = pneg %p141
        %p1699 = pneg %p138
        %p1700 = scmp.lt.s32.totalorder %s112, 1
        %s1701 = scalar_select %p1700, %s112, 1
        %s1702 = smul.addr %s1701, 3
        %s1703 = smul.addr %s1702, 8
        %s1704 = scalar_lea.vmem %s3, %s1703
        %p1705 = pneg %p167
        %p1706 = pneg %p164
        %s1707 = sand.u32 %s180, 1
        %s1708 = sand.u32 %s180, 1
        %s1709 = smul.addr %s1708, 48
        %s1710 = scalar_lea.vmem [#allocation3], %s1709
        %p1711 = pneg %p193
        %p1712 = pneg %p190
        %s1713 = sand.u32 %s206, 1
        %s1714 = sand.u32 %s206, 1
        %s1715 = smul.addr %s1714, 72
        %s1716 = scalar_lea.vmem [#allocation4], %s1715
        %p1717 = pneg %p219
        %p1718 = pneg %p216
        %p1719 = scmp.lt.s32.totalorder %s112, 1
        %s1720 = scalar_select %p1719, %s112, 1
        %s1721 = smul.addr %s1720, 5
        %s1722 = smul.addr %s1721, 8
        %s1723 = scalar_lea.vmem %s9, %s1722
        %p1724 = pneg %p245
        %p1725 = pneg %p242
        %p1726 = scmp.lt.s32.totalorder %s113, 1
        %s1727 = scalar_select %p1726, %s113, 1
        %s1728 = smul.addr %s1727, 4
        %s1729 = smul.addr %s1728, 8
        %s1730 = scalar_lea.vmem %s11, %s1729
        %p1731 = pneg %p271
        %p1732 = pneg %p268
        %s1733 = sand.u32 %s284, 1
        %s1734 = scalar_lea.sflag [#allocation6], %s1733
        %s1735 = sand.u32 %s284, 1
        %s1736 = scalar_lea.vmem [#allocation5], %s1735
        %p1737 = pneg %p297
        %p1738 = pneg %p294
        %p1739 = scmp.lt.s32.totalorder %s113, 1
        %s1740 = scalar_select %p1739, %s113, 1
        %s1741 = smul.addr %s1740, 4
        %s1742 = smul.addr %s1741, 8
        %s1743 = scalar_lea.vmem %s15, %s1742
        %p1744 = pneg %p323
        %p1745 = pneg %p320
        %s1746 = sand.u32 %s108, 1
        %s1747 = scalar_lea.sflag [#allocation9], %s1746
        %s1748 = sand.u32 %s336, 1
        %s1749 = scalar_lea.vmem [#allocation8], %s1748
        %p1750 = pneg %p349
        %p1751 = pneg %p346
        %p1752 = scmp.lt.s32.totalorder %s113, 1
        %s1753 = scalar_select %p1752, %s113, 1
        %s1754 = smul.addr %s1753, 4
        %s1755 = smul.addr %s1754, 8
        %s1756 = scalar_lea.vmem %s19, %s1755
        %p1757 = pneg %p375
        %p1758 = pneg %p372
        %s1759 = sand.u32 %s108, 1
        %s1760 = scalar_lea.sflag [#allocation9], %s1759
        %s1761 = sand.u32 %s388, 1
        %s1762 = scalar_lea.vmem [#allocation10], %s1761
        %p1763 = pneg %p401
        %p1764 = pneg %p398
        %p1765 = scmp.lt.s32.totalorder %s113, 1
        %s1766 = scalar_select %p1765, %s113, 1
        %s1767 = smul.addr %s1766, 4
        %s1768 = smul.addr %s1767, 8
        %s1769 = scalar_lea.vmem %s23, %s1768
        %p1770 = pneg %p427
        %p1771 = pneg %p424
        %p1772 = scmp.lt.s32.totalorder %s113, 1
        %s1773 = scalar_select %p1772, %s113, 1
        %s1774 = smul.addr %s1773, 2
        %s1775 = smul.addr %s1774, 8
        %s1776 = scalar_lea.vmem %s25, %s1775
        %p1777 = pneg %p453
        %p1778 = pneg %p450
        %s1779 = sand.u32 %s108, 1
        %s1780 = scalar_lea.sflag [#allocation12], %s1779
        %s1781 = sand.u32 %s466, 1
        %s1782 = scalar_lea.vmem [#allocation11], %s1781
        %p1783 = pneg %p479
        %p1784 = pneg %p476
        %p1785 = scmp.lt.s32.totalorder %s113, 1
        %s1786 = scalar_select %p1785, %s113, 1
        %s1787 = smul.addr %s1786, 4
        %s1788 = smul.addr %s1787, 8
        %s1789 = scalar_lea.vmem %s29, %s1788
        %p1790 = pneg %p505
        %p1791 = pneg %p502
        %s1792 = sand.u32 %s108, 1
        %s1793 = scalar_lea.sflag [#allocation12], %s1792
        %s1794 = sand.u32 %s518, 1
        %s1795 = scalar_lea.vmem [#allocation13], %s1794
        %p1796 = pneg %p531
        %p1797 = pneg %p528
        %p1798 = scmp.lt.s32.totalorder %s113, 1
        %s1799 = scalar_select %p1798, %s113, 1
        %s1800 = smul.addr %s1799, 4
        %s1801 = smul.addr %s1800, 8
        %s1802 = scalar_lea.vmem %s33, %s1801
        %p1803 = pneg %p557
        %p1804 = pneg %p554
        %s1805 = sand.u32 %s108, 1
        %s1806 = scalar_lea.sflag [#allocation15], %s1805
        %s1807 = sand.u32 %s570, 1
        %s1808 = scalar_lea.vmem [#allocation14], %s1807
        %p1809 = pneg %p583
        %p1810 = pneg %p580
        %p1811 = scmp.lt.s32.totalorder %s113, 1
        %s1812 = scalar_select %p1811, %s113, 1
        %s1813 = smul.addr %s1812, 4
        %s1814 = smul.addr %s1813, 8
        %s1815 = scalar_lea.vmem %s37, %s1814
        %p1816 = pneg %p609
        %p1817 = pneg %p606
        %s1818 = sand.u32 %s108, 1
        %s1819 = scalar_lea.sflag [#allocation15], %s1818
        %s1820 = sand.u32 %s622, 1
        %s1821 = scalar_lea.vmem [#allocation16], %s1820
        %p1822 = pneg %p635
        %p1823 = pneg %p632
        %p1824 = scmp.lt.s32.totalorder %s113, 1
        %s1825 = scalar_select %p1824, %s113, 1
        %s1826 = smul.addr %s1825, 4
        %s1827 = smul.addr %s1826, 8
        %s1828 = scalar_lea.vmem %s41, %s1827
        %p1829 = pneg %p661
        %p1830 = pneg %p658
        %p1831 = scmp.lt.s32.totalorder %s113, 1
        %s1832 = scalar_select %p1831, %s113, 1
        %s1833 = smul.addr %s1832, 2
        %s1834 = smul.addr %s1833, 8
        %s1835 = scalar_lea.vmem %s43, %s1834
        %p1836 = pneg %p687
        %p1837 = pneg %p684
        %s1838 = sand.u32 %s108, 1
        %s1839 = scalar_lea.sflag [#allocation18], %s1838
        %s1840 = sand.u32 %s700, 1
        %s1841 = scalar_lea.vmem [#allocation17], %s1840
        %p1842 = pneg %p713
        %p1843 = pneg %p710
        %p1844 = scmp.lt.s32.totalorder %s113, 1
        %s1845 = scalar_select %p1844, %s113, 1
        %s1846 = smul.addr %s1845, 4
        %s1847 = smul.addr %s1846, 8
        %s1848 = scalar_lea.vmem %s47, %s1847
        %p1849 = pneg %p739
        %p1850 = pneg %p736
        %s1851 = sand.u32 %s108, 1
        %s1852 = scalar_lea.sflag [#allocation18], %s1851
        %s1853 = sand.u32 %s752, 1
        %s1854 = scalar_lea.vmem [#allocation19], %s1853
        %p1855 = pneg %p765
        %p1856 = pneg %p762
        %p1857 = scmp.lt.s32.totalorder %s113, 1
        %s1858 = scalar_select %p1857, %s113, 1
        %s1859 = smul.addr %s1858, 4
        %s1860 = smul.addr %s1859, 8
        %s1861 = scalar_lea.vmem %s51, %s1860
        %p1862 = pneg %p791
        %p1863 = pneg %p788
        %s1864 = sand.u32 %s108, 1
        %s1865 = scalar_lea.sflag [#allocation21], %s1864
        %s1866 = sand.u32 %s804, 1
        %s1867 = scalar_lea.vmem [#allocation20], %s1866
        %p1868 = pneg %p817
        %p1869 = pneg %p814
        %p1870 = scmp.lt.s32.totalorder %s113, 1
        %s1871 = scalar_select %p1870, %s113, 1
        %s1872 = smul.addr %s1871, 4
        %s1873 = smul.addr %s1872, 8
        %s1874 = scalar_lea.vmem %s55, %s1873
        %p1875 = pneg %p843
        %p1876 = pneg %p840
        %s1877 = sand.u32 %s108, 1
        %s1878 = scalar_lea.sflag [#allocation21], %s1877
        %s1879 = sand.u32 %s856, 1
        %s1880 = scalar_lea.vmem [#allocation22], %s1879
        %p1881 = pneg %p869
        %p1882 = pneg %p866
        %p1883 = scmp.lt.s32.totalorder %s113, 1
        %s1884 = scalar_select %p1883, %s113, 1
        %s1885 = smul.addr %s1884, 8
        %s1886 = smul.addr %s1885, 8
        %s1887 = scalar_lea.vmem %s59, %s1886
        %p1888 = pneg %p895
        %p1889 = pneg %p892
        %s1890 = sand.u32 %s108, 1
        %s1891 = scalar_lea.sflag [#allocation24], %s1890
        %s1892 = sand.u32 %s908, 1
        %s1893 = scalar_lea.vmem [#allocation23], %s1892
        %p1894 = pneg %p921
        %p1895 = pneg %p918
        %s1896 = sand.u32 %s108, 1
        %s1897 = scalar_lea.sflag [#allocation24], %s1896
        %s1898 = sand.u32 %s934, 1
        %s1899 = smul.addr %s1898, 4
        %s1900 = scalar_lea.vmem [#allocation25], %s1899
        %p1901 = pneg %p947
        %p1902 = pneg %p944
        %s1903 = sand.u32 %s960, 1
        %s1904 = scalar_lea.sflag [#allocation27], %s1903
        %s1905 = sand.u32 %s960, 1
        %s1906 = smul.addr %s1905, 4
        %s1907 = scalar_lea.vmem [#allocation26], %s1906
        %p1908 = pneg %p973
        %p1909 = pneg %p970
        %p1910 = pneg %p999
        %p1911 = pneg %p996
        %s1912 = sand.u32 %s986, 1
        %s1913 = scalar_lea.sflag [#allocation7], %s1912
        %s1914 = sand.u32 %s986, 1
        %s1915 = smul.addr %s1914, 16
        %s1916 = scalar_lea.vmem [#allocation28], %s1915
        %p1917 = pneg %p1025
        %p1918 = pneg %p1022
        %p1919 = scmp.lt.s32.totalorder %s112, 1
        %s1920 = scalar_select %p1919, %s112, 1
        %s1921 = smul.addr %s1920, 3
        %s1922 = smul.addr %s1921, 8
        %s1923 = scalar_lea.vmem %s69, %s1922
        %p1924 = scmp.lt.s32.totalorder %s112, 1
        %s1925 = scalar_select %p1924, %s112, 1
        %s1926 = smul.addr %s1925, 2
        %s1927 = smul.addr %s1926, 8
        %s1928 = scalar_lea.vmem %s1, %s1927
        %p1929 = scmp.lt.s32.totalorder %s112, 1
        %s1930 = scalar_select %p1929, %s112, 1
        %s1931 = smul.addr %s1930, 3
        %s1932 = smul.addr %s1931, 8
        %s1933 = scalar_lea.vmem %s3, %s1932
        %p1934 = scmp.lt.s32.totalorder %s112, 1
        %s1935 = scalar_select %p1934, %s112, 1
        %s1936 = smul.addr %s1935, 5
        %s1937 = smul.addr %s1936, 8
        %s1938 = scalar_lea.vmem %s9, %s1937
        %p1939 = scmp.lt.s32.totalorder %s113, 1
        %s1940 = scalar_select %p1939, %s113, 1
        %s1941 = smul.addr %s1940, 4
        %s1942 = smul.addr %s1941, 8
        %s1943 = scalar_lea.vmem %s11, %s1942
        %p1944 = scmp.lt.s32.totalorder %s113, 1
        %s1945 = scalar_select %p1944, %s113, 1
        %s1946 = smul.addr %s1945, 4
        %s1947 = smul.addr %s1946, 8
        %s1948 = scalar_lea.vmem %s15, %s1947
        %p1949 = scmp.lt.s32.totalorder %s113, 1
        %s1950 = scalar_select %p1949, %s113, 1
        %s1951 = smul.addr %s1950, 4
        %s1952 = smul.addr %s1951, 8
        %s1953 = scalar_lea.vmem %s19, %s1952
        %p1954 = scmp.lt.s32.totalorder %s113, 1
        %s1955 = scalar_select %p1954, %s113, 1
        %s1956 = smul.addr %s1955, 4
        %s1957 = smul.addr %s1956, 8
        %s1958 = scalar_lea.vmem %s23, %s1957
        %p1959 = scmp.lt.s32.totalorder %s113, 1
        %s1960 = scalar_select %p1959, %s113, 1
        %s1961 = smul.addr %s1960, 2
        %s1962 = smul.addr %s1961, 8
        %s1963 = scalar_lea.vmem %s25, %s1962
        %p1964 = scmp.lt.s32.totalorder %s113, 1
        %s1965 = scalar_select %p1964, %s113, 1
        %s1966 = smul.addr %s1965, 4
        %s1967 = smul.addr %s1966, 8
        %s1968 = scalar_lea.vmem %s29, %s1967
        %p1969 = scmp.lt.s32.totalorder %s113, 1
        %s1970 = scalar_select %p1969, %s113, 1
        %s1971 = smul.addr %s1970, 4
        %s1972 = smul.addr %s1971, 8
        %s1973 = scalar_lea.vmem %s33, %s1972
        %p1974 = scmp.lt.s32.totalorder %s113, 1
        %s1975 = scalar_select %p1974, %s113, 1
        %s1976 = smul.addr %s1975, 4
        %s1977 = smul.addr %s1976, 8
        %s1978 = scalar_lea.vmem %s37, %s1977
        %p1979 = scmp.lt.s32.totalorder %s113, 1
        %s1980 = scalar_select %p1979, %s113, 1
        %s1981 = smul.addr %s1980, 4
        %s1982 = smul.addr %s1981, 8
        %s1983 = scalar_lea.vmem %s41, %s1982
        %p1984 = scmp.lt.s32.totalorder %s113, 1
        %s1985 = scalar_select %p1984, %s113, 1
        %s1986 = smul.addr %s1985, 2
        %s1987 = smul.addr %s1986, 8
        %s1988 = scalar_lea.vmem %s43, %s1987
        %p1989 = scmp.lt.s32.totalorder %s113, 1
        %s1990 = scalar_select %p1989, %s113, 1
        %s1991 = smul.addr %s1990, 4
        %s1992 = smul.addr %s1991, 8
        %s1993 = scalar_lea.vmem %s47, %s1992
        %p1994 = scmp.lt.s32.totalorder %s113, 1
        %s1995 = scalar_select %p1994, %s113, 1
        %s1996 = smul.addr %s1995, 4
        %s1997 = smul.addr %s1996, 8
        %s1998 = scalar_lea.vmem %s51, %s1997
        %p1999 = scmp.lt.s32.totalorder %s113, 1
        %s2000 = scalar_select %p1999, %s113, 1
        %s2001 = smul.addr %s2000, 4
        %s2002 = smul.addr %s2001, 8
        %s2003 = scalar_lea.vmem %s55, %s2002
        %p2004 = scmp.lt.s32.totalorder %s113, 1
        %s2005 = scalar_select %p2004, %s113, 1
        %s2006 = smul.addr %s2005, 8
        %s2007 = smul.addr %s2006, 8
        %s2008 = scalar_lea.vmem %s59, %s2007
        %p2009 = scmp.lt.s32.totalorder %s112, 1
        %s2010 = scalar_select %p2009, %s112, 1
        %s2011 = smul.addr %s2010, 3
        %s2012 = smul.addr %s2011, 8
        %s2013 = scalar_lea.vmem %s69, %s2012
        %p2014 = scmp.eq.s32.totalorder %s113, 0
        // Predicated region
        $region285: #{_lambda_.1} parent=219 // pred_check
          %p2015 = pneg %p2014
        $region286: #{_lambda_.1} parent=219 // pred_check_branch
          %2017 = sbr.rel (%p2015) target = $region288
        $region287: #{_lambda_.1} parent=219 // pred_region
          %v2018 = vld [vmem:[%s1928] sm:$0xff]
          %v2019 = vld [vmem:[%s1928 + $0x8] sm:$0xff]
          %vm2020 = vcmask 261120
          %2021 = vst.msk [vmem:[#allocation2] sm:$0xff] %vm2020, %v2018
          %2022 = vst.msk [vmem:[#allocation2 + $0x8] sm:$0xff] %vm2020, %v2019
          %v2023 = vld [vmem:[%s1933] sm:$0xff]
          %v2024 = vld [vmem:[%s1933 + $0x8] sm:$0xff]
          %v2025 = vld [vmem:[%s1933 + $0x10] sm:$0xf]
          %2026 = vst.msk [vmem:[#allocation2 + $0x10] sm:$0xff] %vm2020, %v2023
          %2027 = vst.msk [vmem:[#allocation2 + $0x18] sm:$0xff] %vm2020, %v2024
          %vm2028 = vcmask 257024
          %2029 = vst.msk [vmem:[#allocation2 + $0x20] sm:$0xf] %vm2028, %v2025
        $region288: #{_lambda_.1} parent=219 // pred_fallthru
          _
        %v2030 = vld [vmem:[#allocation2] sm:$0xff]
        %v2031 = vld [vmem:[#allocation2 + $0x8] sm:$0xff]
        %v2032 = vld [vmem:[#allocation2 + $0x10] sm:$0xff]
        %v2033 = vld [vmem:[#allocation2 + $0x18] sm:$0xff]
        %v2034 = vld [vmem:[#allocation2 + $0x20] sm:$0xf]
        %v2035 = vld [vmem:[%s1679] sm:$0xf]
        %v2036 = vld [vmem:[%s1688] sm:$0xf]
        %v2037 = vld [vmem:[%s1568] sm:$0xff]
        %v2038 = vld [vmem:[%s1568 + $0x8] sm:$0xff]
        %s2039 = scalar_lea.vmem %s1568, 16 [#allocation3]
        %v2040 = vld [vmem:[%s2039] sm:$0xff]
        %v2041 = vld [vmem:[%s2039 + $0x8] sm:$0xff]
        %s2042 = scalar_lea.vmem %s1568, 32 [#allocation3]
        %v2043 = vld [vmem:[%s2042] sm:$0xff]
        %v2044 = vld [vmem:[%s2042 + $0x8] sm:$0xff]
        %v2045 = vld [vmem:[%s1943] sm:$0xff]
        %v2046 = vld [vmem:[%s1943 + $0x8] sm:$0xff]
        %v2047 = vld [vmem:[%s1943 + $0x10] sm:$0xff]
        %v2048 = vld [vmem:[%s1943 + $0x18] sm:$0xff]
        %v2049 = vld [vmem:[%s1582] sm:$0x1]
        %v2050 = vld [vmem:[%s1948] sm:$0xff]
        %v2051 = vld [vmem:[%s1948 + $0x8] sm:$0xff]
        %v2052 = vld [vmem:[%s1948 + $0x10] sm:$0xff]
        %v2053 = vld [vmem:[%s1948 + $0x18] sm:$0xff]
        %v2054 = vld [vmem:[%s1590] sm:$0x1]
        %v2055 = vld [vmem:[%s1953] sm:$0xff]
        %v2056 = vld [vmem:[%s1953 + $0x8] sm:$0xff]
        %v2057 = vld [vmem:[%s1953 + $0x10] sm:$0xff]
        %v2058 = vld [vmem:[%s1953 + $0x18] sm:$0xff]
        %v2059 = vld [vmem:[%s1598] sm:$0x1]
        %v2060 = vld [vmem:[%s1958] sm:$0xff]
        %v2061 = vld [vmem:[%s1958 + $0x8] sm:$0xff]
        %v2062 = vld [vmem:[%s1958 + $0x10] sm:$0xff]
        %v2063 = vld [vmem:[%s1958 + $0x18] sm:$0xff]
        %v2064 = vld [vmem:[%s1963] sm:$0xff]
        %v2065 = vld [vmem:[%s1963 + $0x8] sm:$0xff]
        %v2066 = vld [vmem:[%s1606] sm:$0x1]
        %vm2067 = vcmask 261120
        %v2068 = vsel %vm2067, %v2032, 0.0
        %v2069 = vsel %vm2067, %v2033, 0.0
        %v2070 = vadd.f32 %v2068, %v2069
        %vm2071 = vcmask 257024
        %v2072 = vsel %vm2071, %v2034, 0.0
        %v2073 = vadd.f32 %v2070, %v2072
        %v2074 = vrot.slane %v2073, 4
        %v2075 = vadd.f32 %v2073, %v2074
        %v2076 = vrot.slane %v2075, 2
        %v2077 = vadd.f32 %v2075, %v2076
        %v2078 = vrot.slane %v2077, 1
        %v2079 = vadd.f32 %v2077, %v2078
        %v2080 = vrcp.pop 20.0
        %v2081 = vmul.f32 %v2079, %v2080
        %v2083 = vsel %vm2067, %v2081, 0
        %2085 = vmatprep.subr.mxu0 0.0
        %2086 = vmatpush1.msra.mxu0 0.0
        %2087 = vmatprep.subr.mxu0 0.0
        %2088 = vmatpush1.msra.mxu0 0.0
        %2089 = vmatprep.subr.mxu0 0.0
        %2090 = vmatpush1.msra.mxu0 0.0
        %2091 = vmatprep.subr.mxu0 0.0
        %2092 = vmatpush1.msra.mxu0 0.0
        %2093 = vmatprep.subr.mxu0 0.0
        %2094 = vmatpush1.msra.mxu0 0.0
        %2095 = vmatprep.subr.mxu0 0.0
        %2096 = vmatpush1.msra.mxu0 0.0
        %2097 = vmatprep.subr.mxu0 0.0
        %2098 = vmatpush1.msra.mxu0 0.0
        %2099 = vmatprep.subr.mxu0 0.0
        %2100 = vmatpush1.msra.mxu0 0.0
        %2101 = vmatprep.subr.mxu0 0.0
        %2102 = vmatpush1.msra.mxu0 0.0
        %2103 = vmatprep.subr.mxu0 0.0
        %2104 = vmatpush1.msra.mxu0 0.0
        %2105 = vmatprep.subr.mxu0 0.0
        %2106 = vmatpush1.msra.mxu0 0.0
        %2107 = vmatprep.subr.mxu0 0.0
        %2108 = vmatpush1.msra.mxu0 0.0
        %2109 = vmatprep.subr.mxu0 0.0
        %2110 = vmatpush1.msra.mxu0 %v2063
        %2111 = vmatprep.subr.mxu0 0.0
        %2112 = vmatpush1.msra.mxu0 %v2062
        %2113 = vmatprep.subr.mxu0 0.0
        %2114 = vmatpush1.msra.mxu0 %v2061
        %2115 = vmatprep.subr.mxu0 0.0
        %2116 = vmatpush1.msra.mxu0 %v2060
        %2117 = vmatprep.subr.mxu0 0.0
        %2118 = vmatpush2.msra.mxu0 0.0
        %2119 = vmatprep.subr.mxu0 0.0
        %2120 = vmatpush2.msra.mxu0 0.0
        %2121 = vmatprep.subr.mxu0 0.0
        %2122 = vmatpush2.msra.mxu0 0.0
        %2123 = vmatprep.subr.mxu0 0.0
        %2124 = vmatpush2.msra.mxu0 0.0
        %2125 = vmatprep.subr.mxu0 0.0
        %2126 = vmatpush2.msra.mxu0 0.0
        %2127 = vmatprep.subr.mxu0 0.0
        %2128 = vmatpush2.msra.mxu0 0.0
        %2129 = vmatprep.subr.mxu0 0.0
        %2130 = vmatpush2.msra.mxu0 0.0
        %2131 = vmatprep.subr.mxu0 0.0
        %2132 = vmatpush2.msra.mxu0 0.0
        %2133 = vmatprep.subr.mxu0 0.0
        %2134 = vmatpush2.msra.mxu0 0.0
        %2135 = vmatprep.subr.mxu0 0.0
        %2136 = vmatpush2.msra.mxu0 0.0
        %2137 = vmatprep.subr.mxu0 0.0
        %2138 = vmatpush2.msra.mxu0 0.0
        %2139 = vmatprep.subr.mxu0 0.0
        %2140 = vmatpush2.msra.mxu0 0.0
        %2141 = vmatprep.subr.mxu0 0.0
        %2142 = vmatpush2.msra.mxu0 0.0
        %2143 = vmatprep.subr.mxu0 0.0
        %2144 = vmatpush2.msra.mxu0 0.0
        %2145 = vmatprep.subr.mxu0 0.0
        %2146 = vmatpush2.msra.mxu0 0.0
        %2147 = vmatprep.subr.mxu0 0.0
        %2148 = vmatpush2.msra.mxu0 0.0
        %2149 = vmatprep.mubr.f32.mxu0 0.0
        %2150 = vmatmul.mubr.f32.gmra.mxu0 %v2083
        %v2151 = vpop.f32.mrf.mxu0
        %v2152 = vadd.f32 0.0, %v2151
        %v2153 = vpop.f32.mrf.mxu0
        %2154 = vdwg.mxu0
        %v2155 = vmax.f32 %v2152, 0.0
        %vm2156 = vcmask 130048
        %v2158 = vsel %vm2156, %v2155, 0
        %2160 = vmatprep.subr.mxu0 0.0
        %2161 = vmatpush1.msra.mxu0 0.0
        %2162 = vmatprep.subr.mxu0 0.0
        %2163 = vmatpush1.msra.mxu0 0.0
        %2164 = vmatprep.subr.mxu0 0.0
        %2165 = vmatpush1.msra.mxu0 0.0
        %2166 = vmatprep.subr.mxu0 0.0
        %2167 = vmatpush1.msra.mxu0 0.0
        %2168 = vmatprep.subr.mxu0 0.0
        %2169 = vmatpush1.msra.mxu0 0.0
        %2170 = vmatprep.subr.mxu0 0.0
        %2171 = vmatpush1.msra.mxu0 0.0
        %2172 = vmatprep.subr.mxu0 0.0
        %2173 = vmatpush1.msra.mxu0 0.0
        %2174 = vmatprep.subr.mxu0 0.0
        %2175 = vmatpush1.msra.mxu0 0.0
        %2176 = vmatprep.subr.mxu0 0.0
        %2177 = vmatpush1.msra.mxu0 0.0
        %2178 = vmatprep.subr.mxu0 0.0
        %2179 = vmatpush1.msra.mxu0 0.0
        %2180 = vmatprep.subr.mxu0 0.0
        %2181 = vmatpush1.msra.mxu0 0.0
        %2182 = vmatprep.subr.mxu0 0.0
        %2183 = vmatpush1.msra.mxu0 0.0
        %2184 = vmatprep.subr.mxu0 0.0
        %2185 = vmatpush1.msra.mxu0 0.0
        %2186 = vmatprep.subr.mxu0 0.0
        %2187 = vmatpush1.msra.mxu0 0.0
        %2188 = vmatprep.subr.mxu0 0.0
        %2189 = vmatpush1.msra.mxu0 %v2065
        %2190 = vmatprep.subr.mxu0 0.0
        %2191 = vmatpush1.msra.mxu0 %v2064
        %2192 = vmatprep.subr.mxu0 0.0
        %2193 = vmatpush2.msra.mxu0 0.0
        %2194 = vmatprep.subr.mxu0 0.0
        %2195 = vmatpush2.msra.mxu0 0.0
        %2196 = vmatprep.subr.mxu0 0.0
        %2197 = vmatpush2.msra.mxu0 0.0
        %2198 = vmatprep.subr.mxu0 0.0
        %2199 = vmatpush2.msra.mxu0 0.0
        %2200 = vmatprep.subr.mxu0 0.0
        %2201 = vmatpush2.msra.mxu0 0.0
        %2202 = vmatprep.subr.mxu0 0.0
        %2203 = vmatpush2.msra.mxu0 0.0
        %2204 = vmatprep.subr.mxu0 0.0
        %2205 = vmatpush2.msra.mxu0 0.0
        %2206 = vmatprep.subr.mxu0 0.0
        %2207 = vmatpush2.msra.mxu0 0.0
        %2208 = vmatprep.subr.mxu0 0.0
        %2209 = vmatpush2.msra.mxu0 0.0
        %2210 = vmatprep.subr.mxu0 0.0
        %2211 = vmatpush2.msra.mxu0 0.0
        %2212 = vmatprep.subr.mxu0 0.0
        %2213 = vmatpush2.msra.mxu0 0.0
        %2214 = vmatprep.subr.mxu0 0.0
        %2215 = vmatpush2.msra.mxu0 0.0
        %2216 = vmatprep.subr.mxu0 0.0
        %2217 = vmatpush2.msra.mxu0 0.0
        %2218 = vmatprep.subr.mxu0 0.0
        %2219 = vmatpush2.msra.mxu0 0.0
        %2220 = vmatprep.subr.mxu0 0.0
        %2221 = vmatpush2.msra.mxu0 0.0
        %2222 = vmatprep.subr.mxu0 0.0
        %2223 = vmatpush2.msra.mxu0 0.0
        %2224 = vmatprep.mubr.f32.mxu0 0.0
        %2225 = vmatmul.mubr.f32.gmra.mxu0 %v2158
        %v2226 = vpop.f32.mrf.mxu0
        %v2227 = vadd.f32 %v2066, %v2226
        %v2228 = vpop.f32.mrf.mxu0
        %2229 = vdwg.mxu0
        %vm2230 = vcmask 16384
        %v2231 = vsel %vm2230, %v2227, -inf
        %2232 = vmax.xlane.f32.xlu0 %v2231
        %v2233 = vpop.xlane.xlu0 %2232
        %v2234 = vsub.f32 %v2227, %v2233
        %v2235 = vmul.f32 %v2234, 1.442695
        %v2236 = vpow.pop %v2235
        %v2237 = vsel %vm2230, %v2236, 0.0
        %2238 = vadd.xlane.f32.xlu0 %v2237
        %v2239 = vpop.xlane.xlu0 %2238
        %v2240 = vrcp.pop %v2239
        %v2241 = vmul.f32 %v2236, %v2240
        %v2243 = vlaneseq
        %v2244 = vshrl.u32 %v2243, 7
        %v2245 = vsub.s32 0, %v2244
        %v2246 = vrot.slane %v2049, %v2245
        %v2249 = vsel %vm2067, %v2030, 0
        %v2252 = vsel %vm2067, %v2031, 0
        %2254 = vmatprep.subr.mxu0 0.0
        %2255 = vmatpush1.msra.mxu0 0.0
        %2256 = vmatprep.subr.mxu0 0.0
        %2257 = vmatpush1.msra.mxu0 0.0
        %2258 = vmatprep.subr.mxu0 0.0
        %2259 = vmatpush1.msra.mxu0 0.0
        %2260 = vmatprep.subr.mxu0 0.0
        %2261 = vmatpush1.msra.mxu0 0.0
        %2262 = vmatprep.subr.mxu0 0.0
        %2263 = vmatpush1.msra.mxu0 0.0
        %2264 = vmatprep.subr.mxu0 0.0
        %2265 = vmatpush1.msra.mxu0 0.0
        %2266 = vmatprep.subr.mxu0 0.0
        %2267 = vmatpush1.msra.mxu0 0.0
        %2268 = vmatprep.subr.mxu0 0.0
        %2269 = vmatpush1.msra.mxu0 0.0
        %2270 = vmatprep.subr.mxu0 0.0
        %2271 = vmatpush1.msra.mxu0 0.0
        %2272 = vmatprep.subr.mxu0 0.0
        %2273 = vmatpush1.msra.mxu0 0.0
        %2274 = vmatprep.subr.mxu0 0.0
        %2275 = vmatpush1.msra.mxu0 0.0
        %2276 = vmatprep.subr.mxu0 0.0
        %2277 = vmatpush1.msra.mxu0 0.0
        %2278 = vmatprep.subr.mxu0 0.0
        %2279 = vmatpush1.msra.mxu0 %v2048
        %2280 = vmatprep.subr.mxu0 0.0
        %2281 = vmatpush1.msra.mxu0 %v2047
        %2282 = vmatprep.subr.mxu0 0.0
        %2283 = vmatpush1.msra.mxu0 %v2046
        %2284 = vmatprep.subr.mxu0 0.0
        %2285 = vmatpush1.msra.mxu0 %v2045
        %2286 = vmatprep.subr.mxu0 0.0
        %2287 = vmatpush2.msra.mxu0 0.0
        %2288 = vmatprep.subr.mxu0 0.0
        %2289 = vmatpush2.msra.mxu0 0.0
        %2290 = vmatprep.subr.mxu0 0.0
        %2291 = vmatpush2.msra.mxu0 0.0
        %2292 = vmatprep.subr.mxu0 0.0
        %2293 = vmatpush2.msra.mxu0 0.0
        %2294 = vmatprep.subr.mxu0 0.0
        %2295 = vmatpush2.msra.mxu0 0.0
        %2296 = vmatprep.subr.mxu0 0.0
        %2297 = vmatpush2.msra.mxu0 0.0
        %2298 = vmatprep.subr.mxu0 0.0
        %2299 = vmatpush2.msra.mxu0 0.0
        %2300 = vmatprep.subr.mxu0 0.0
        %2301 = vmatpush2.msra.mxu0 0.0
        %2302 = vmatprep.subr.mxu0 0.0
        %2303 = vmatpush2.msra.mxu0 0.0
        %2304 = vmatprep.subr.mxu0 0.0
        %2305 = vmatpush2.msra.mxu0 0.0
        %2306 = vmatprep.subr.mxu0 0.0
        %2307 = vmatpush2.msra.mxu0 0.0
        %2308 = vmatprep.subr.mxu0 0.0
        %2309 = vmatpush2.msra.mxu0 0.0
        %2310 = vmatprep.subr.mxu0 0.0
        %2311 = vmatpush2.msra.mxu0 0.0
        %2312 = vmatprep.subr.mxu0 0.0
        %2313 = vmatpush2.msra.mxu0 0.0
        %2314 = vmatprep.subr.mxu0 0.0
        %2315 = vmatpush2.msra.mxu0 0.0
        %2316 = vmatprep.subr.mxu0 0.0
        %2317 = vmatpush2.msra.mxu0 0.0
        %2318 = vmatprep.mubr.f32.mxu0 0.0
        %2319 = vmatmul.mubr.f32.gmra.mxu0 %v2249
        %v2320 = vpop.f32.mrf.mxu0
        %v2321 = vadd.f32 %v2246, %v2320
        %v2322 = vpop.f32.mrf.mxu0
        %2323 = vmatprep.mubr.f32.mxu0 0.0
        %2324 = vmatmul.mubr.f32.gmra.mxu0 %v2252
        %v2325 = vpop.f32.mrf.mxu0
        %v2326 = vadd.f32 %v2246, %v2325
        %v2327 = vpop.f32.mrf.mxu0
        %2328 = vdwg.mxu0
        %v2330 = vlaneseq
        %v2331 = vshrl.u32 %v2330, 7
        %v2332 = vsub.s32 0, %v2331
        %v2333 = vrot.slane %v2054, %v2332
        %v2336 = vsel %vm2067, %v2032, 0
        %v2339 = vsel %vm2067, %v2033, 0
        %v2342 = vsel %vm2067, %v2034, 0
        %2344 = vmatprep.subr.mxu0 0.0
        %2345 = vmatpush1.msra.mxu0 0.0
        %2346 = vmatprep.subr.mxu0 0.0
        %2347 = vmatpush1.msra.mxu0 0.0
        %2348 = vmatprep.subr.mxu0 0.0
        %2349 = vmatpush1.msra.mxu0 0.0
        %2350 = vmatprep.subr.mxu0 0.0
        %2351 = vmatpush1.msra.mxu0 0.0
        %2352 = vmatprep.subr.mxu0 0.0
        %2353 = vmatpush1.msra.mxu0 0.0
        %2354 = vmatprep.subr.mxu0 0.0
        %2355 = vmatpush1.msra.mxu0 0.0
        %2356 = vmatprep.subr.mxu0 0.0
        %2357 = vmatpush1.msra.mxu0 0.0
        %2358 = vmatprep.subr.mxu0 0.0
        %2359 = vmatpush1.msra.mxu0 0.0
        %2360 = vmatprep.subr.mxu0 0.0
        %2361 = vmatpush1.msra.mxu0 0.0
        %2362 = vmatprep.subr.mxu0 0.0
        %2363 = vmatpush1.msra.mxu0 0.0
        %2364 = vmatprep.subr.mxu0 0.0
        %2365 = vmatpush1.msra.mxu0 0.0
        %2366 = vmatprep.subr.mxu0 0.0
        %2367 = vmatpush1.msra.mxu0 0.0
        %2368 = vmatprep.subr.mxu0 0.0
        %2369 = vmatpush1.msra.mxu0 %v2053
        %2370 = vmatprep.subr.mxu0 0.0
        %2371 = vmatpush1.msra.mxu0 %v2052
        %2372 = vmatprep.subr.mxu0 0.0
        %2373 = vmatpush1.msra.mxu0 %v2051
        %2374 = vmatprep.subr.mxu0 0.0
        %2375 = vmatpush1.msra.mxu0 %v2050
        %2376 = vmatprep.subr.mxu0 0.0
        %2377 = vmatpush2.msra.mxu0 0.0
        %2378 = vmatprep.subr.mxu0 0.0
        %2379 = vmatpush2.msra.mxu0 0.0
        %2380 = vmatprep.subr.mxu0 0.0
        %2381 = vmatpush2.msra.mxu0 0.0
        %2382 = vmatprep.subr.mxu0 0.0
        %2383 = vmatpush2.msra.mxu0 0.0
        %2384 = vmatprep.subr.mxu0 0.0
        %2385 = vmatpush2.msra.mxu0 0.0
        %2386 = vmatprep.subr.mxu0 0.0
        %2387 = vmatpush2.msra.mxu0 0.0
        %2388 = vmatprep.subr.mxu0 0.0
        %2389 = vmatpush2.msra.mxu0 0.0
        %2390 = vmatprep.subr.mxu0 0.0
        %2391 = vmatpush2.msra.mxu0 0.0
        %2392 = vmatprep.subr.mxu0 0.0
        %2393 = vmatpush2.msra.mxu0 0.0
        %2394 = vmatprep.subr.mxu0 0.0
        %2395 = vmatpush2.msra.mxu0 0.0
        %2396 = vmatprep.subr.mxu0 0.0
        %2397 = vmatpush2.msra.mxu0 0.0
        %2398 = vmatprep.subr.mxu0 0.0
        %2399 = vmatpush2.msra.mxu0 0.0
        %2400 = vmatprep.subr.mxu0 0.0
        %2401 = vmatpush2.msra.mxu0 0.0
        %2402 = vmatprep.subr.mxu0 0.0
        %2403 = vmatpush2.msra.mxu0 0.0
        %2404 = vmatprep.subr.mxu0 0.0
        %2405 = vmatpush2.msra.mxu0 0.0
        %2406 = vmatprep.subr.mxu0 0.0
        %2407 = vmatpush2.msra.mxu0 0.0
        %2408 = vmatprep.mubr.f32.mxu0 0.0
        %2409 = vmatmul.mubr.f32.gmra.mxu0 %v2336
        %v2410 = vpop.f32.mrf.mxu0
        %v2411 = vadd.f32 %v2333, %v2410
        %v2412 = vpop.f32.mrf.mxu0
        %2413 = vmatprep.mubr.f32.mxu0 0.0
        %2414 = vmatmul.mubr.f32.gmra.mxu0 %v2339
        %v2415 = vpop.f32.mrf.mxu0
        %v2416 = vadd.f32 %v2333, %v2415
        %v2417 = vpop.f32.mrf.mxu0
        %2418 = vmatprep.mubr.f32.mxu0 0.0
        %2419 = vmatmul.mubr.f32.gmra.mxu0 %v2342
        %v2420 = vpop.f32.mrf.mxu0
        %v2421 = vadd.f32 %v2333, %v2420
        %v2422 = vpop.f32.mrf.mxu0
        %2423 = vdwg.mxu0
        %v2424 = vsub.f32 1.0, %v2037
        %v2425 = vsub.f32 1.0, %v2038
        %v2426 = vsub.f32 1.0, %v2040
        %v2427 = vsub.f32 1.0, %v2041
        %v2428 = vsub.f32 1.0, %v2043
        %v2429 = vsub.f32 1.0, %v2044
        %v2430 = vmul.f32 %v2037, -1e+09
        %v2431 = vmul.f32 %v2038, -1e+09
        %v2432 = vmul.f32 %v2040, -1e+09
        %v2433 = vmul.f32 %v2041, -1e+09
        %v2434 = vmul.f32 %v2043, -1e+09
        %v2435 = vmul.f32 %v2044, -1e+09
        %vm2436 = vcmask 64512
        %v2438 = vsel %vm2436, %v2321, 0
        %v2441 = vsel %vm2436, %v2326, 0
        %v2444 = vsel %vm2436, %v2411, 0
        %v2447 = vsel %vm2436, %v2416, 0
        %v2450 = vsel %vm2436, %v2421, 0
        %2452 = vmatprep.subr.mxu0 0.0
        %2453 = vmatpush1.xpose.msra.mxu0 0.0
        %2454 = vmatprep.subr.mxu0 0.0
        %2455 = vmatpush1.xpose.msra.mxu0 0.0
        %2456 = vmatprep.subr.mxu0 0.0
        %2457 = vmatpush1.xpose.msra.mxu0 0.0
        %2458 = vmatprep.subr.mxu0 0.0
        %2459 = vmatpush1.xpose.msra.mxu0 0.0
        %2460 = vmatprep.subr.mxu0 0.0
        %2461 = vmatpush1.xpose.msra.mxu0 0.0
        %2462 = vmatprep.subr.mxu0 0.0
        %2463 = vmatpush1.xpose.msra.mxu0 0.0
        %2464 = vmatprep.subr.mxu0 0.0
        %2465 = vmatpush1.xpose.msra.mxu0 0.0
        %2466 = vmatprep.subr.mxu0 0.0
        %2467 = vmatpush1.xpose.msra.mxu0 0.0
        %2468 = vmatprep.subr.mxu0 0.0
        %2469 = vmatpush1.xpose.msra.mxu0 0.0
        %2470 = vmatprep.subr.mxu0 0.0
        %2471 = vmatpush1.xpose.msra.mxu0 0.0
        %2472 = vmatprep.subr.mxu0 0.0
        %2473 = vmatpush1.xpose.msra.mxu0 0.0
        %2474 = vmatprep.subr.mxu0 0.0
        %2475 = vmatpush1.xpose.msra.mxu0 0.0
        %2476 = vmatprep.subr.mxu0 0.0
        %2477 = vmatpush1.xpose.msra.mxu0 0.0
        %2478 = vmatprep.subr.mxu0 0.0
        %2479 = vmatpush1.xpose.msra.mxu0 %v2450
        %2480 = vmatprep.subr.mxu0 0.0
        %2481 = vmatpush1.xpose.msra.mxu0 %v2447
        %2482 = vmatprep.subr.mxu0 0.0
        %2483 = vmatpush1.xpose.msra.mxu0 %v2444
        %2484 = vmatprep.subr.mxu0 0.0
        %2485 = vmatpush2.xpose.msra.mxu0 0.0
        %2486 = vmatprep.subr.mxu0 0.0
        %2487 = vmatpush2.xpose.msra.mxu0 0.0
        %2488 = vmatprep.subr.mxu0 0.0
        %2489 = vmatpush2.xpose.msra.mxu0 0.0
        %2490 = vmatprep.subr.mxu0 0.0
        %2491 = vmatpush2.xpose.msra.mxu0 0.0
        %2492 = vmatprep.subr.mxu0 0.0
        %2493 = vmatpush2.xpose.msra.mxu0 0.0
        %2494 = vmatprep.subr.mxu0 0.0
        %2495 = vmatpush2.xpose.msra.mxu0 0.0
        %2496 = vmatprep.subr.mxu0 0.0
        %2497 = vmatpush2.xpose.msra.mxu0 0.0
        %2498 = vmatprep.subr.mxu0 0.0
        %2499 = vmatpush2.xpose.msra.mxu0 0.0
        %2500 = vmatprep.subr.mxu0 0.0
        %2501 = vmatpush2.xpose.msra.mxu0 0.0
        %2502 = vmatprep.subr.mxu0 0.0
        %2503 = vmatpush2.xpose.msra.mxu0 0.0
        %2504 = vmatprep.subr.mxu0 0.0
        %2505 = vmatpush2.xpose.msra.mxu0 0.0
        %2506 = vmatprep.subr.mxu0 0.0
        %2507 = vmatpush2.xpose.msra.mxu0 0.0
        %2508 = vmatprep.subr.mxu0 0.0
        %2509 = vmatpush2.xpose.msra.mxu0 0.0
        %2510 = vmatprep.subr.mxu0 0.0
        %2511 = vmatpush2.xpose.msra.mxu0 0.0
        %2512 = vmatprep.subr.mxu0 0.0
        %2513 = vmatpush2.xpose.msra.mxu0 0.0
        %2514 = vmatprep.subr.mxu0 0.0
        %2515 = vmatpush2.xpose.msra.mxu0 0.0
        %2516 = vmatprep.mubr.f32.mxu0 0.0
        %2517 = vmatmul.mubr.f32.gmra.mxu0 %v2438
        %v2518 = vpop.f32.mrf.mxu0
        %v2519 = vadd.f32 0.0, %v2518
        %v2520 = vpop.f32.mrf.mxu0
        %2521 = vmatprep.mubr.f32.mxu0 0.0
        %2522 = vmatmul.mubr.f32.gmra.mxu0 %v2441
        %v2523 = vpop.f32.mrf.mxu0
        %v2524 = vadd.f32 0.0, %v2523
        %v2525 = vpop.f32.mrf.mxu0
        %2526 = vdwg.mxu0
        %v2527 = vmul.f32 %v2519, 0.35355338
        %v2528 = vmul.f32 %v2524, 0.35355338
        %v2529 = vmul.f32 %v2527, %v2424
        %v2530 = vmul.f32 %v2528, %v2425
        %v2531 = vadd.f32 %v2529, %v2430
        %v2532 = vadd.f32 %v2530, %v2431
        %vm2533 = vcmask 162816
        %v2534 = vsel %vm2533, %v2531, -inf
        %2535 = vmax.xlane.f32.xlu0 %v2534
        %v2536 = vpop.xlane.xlu0 %2535
        %v2537 = vsel %vm2533, %v2532, -inf
        %2538 = vmax.xlane.f32.xlu0 %v2537
        %v2539 = vpop.xlane.xlu0 %2538
        %v2540 = vsub.f32 %v2531, %v2536
        %v2541 = vsub.f32 %v2532, %v2539
        %v2542 = vmul.f32 %v2540, 1.442695
        %v2543 = vpow.pop %v2542
        %v2544 = vmul.f32 %v2541, 1.442695
        %v2545 = vpow.pop %v2544
        %v2546 = vsel %vm2533, %v2543, 0.0
        %2547 = vadd.xlane.f32.xlu0 %v2546
        %v2548 = vpop.xlane.xlu0 %2547
        %v2549 = vsel %vm2533, %v2545, 0.0
        %2550 = vadd.xlane.f32.xlu0 %v2549
        %v2551 = vpop.xlane.xlu0 %2550
        %v2552 = vrcp.pop %v2548
        %v2553 = vrcp.pop %v2551
        %v2554 = vmul.f32 %v2543, %v2552
        %v2555 = vmul.f32 %v2545, %v2553
        %s2557 = vtos %v2241
        %v2558 = vstv %s2557
        %v2560 = vmul.f32 %v2554, %v2558
        %v2561 = vmul.f32 %v2555, %v2558
        %v2562 = vmul.f32 %v2527, %v2426
        %v2563 = vmul.f32 %v2528, %v2427
        %v2564 = vadd.f32 %v2562, %v2432
        %v2565 = vadd.f32 %v2563, %v2433
        %v2566 = vsel %vm2533, %v2564, -inf
        %2567 = vmax.xlane.f32.xlu0 %v2566
        %v2568 = vpop.xlane.xlu0 %2567
        %v2569 = vsel %vm2533, %v2565, -inf
        %2570 = vmax.xlane.f32.xlu0 %v2569
        %v2571 = vpop.xlane.xlu0 %2570
        %v2572 = vsub.f32 %v2564, %v2568
        %v2573 = vsub.f32 %v2565, %v2571
        %v2574 = vmul.f32 %v2572, 1.442695
        %v2575 = vpow.pop %v2574
        %v2576 = vmul.f32 %v2573, 1.442695
        %v2577 = vpow.pop %v2576
        %v2578 = vsel %vm2533, %v2575, 0.0
        %2579 = vadd.xlane.f32.xlu0 %v2578
        %v2580 = vpop.xlane.xlu0 %2579
        %v2581 = vsel %vm2533, %v2577, 0.0
        %2582 = vadd.xlane.f32.xlu0 %v2581
        %v2583 = vpop.xlane.xlu0 %2582
        %v2584 = vrcp.pop %v2580
        %v2585 = vrcp.pop %v2583
        %v2586 = vmul.f32 %v2575, %v2584
        %v2587 = vmul.f32 %v2577, %v2585
        %2588 = vrot.lane.b32.xlu0 %v2241, 127
        %v2589 = vpop.permute.xlu0 %2588
        %s2590 = vtos %v2589
        %v2591 = vstv %s2590
        %v2593 = vmul.f32 %v2586, %v2591
        %v2594 = vmul.f32 %v2587, %v2591
        %v2595 = vadd.f32 %v2560, %v2593
        %v2596 = vadd.f32 %v2561, %v2594
        %v2597 = vmul.f32 %v2527, %v2428
        %v2598 = vmul.f32 %v2528, %v2429
        %v2599 = vadd.f32 %v2597, %v2434
        %v2600 = vadd.f32 %v2598, %v2435
        %v2601 = vsel %vm2533, %v2599, -inf
        %2602 = vmax.xlane.f32.xlu0 %v2601
        %v2603 = vpop.xlane.xlu0 %2602
        %v2604 = vsel %vm2533, %v2600, -inf
        %2605 = vmax.xlane.f32.xlu0 %v2604
        %v2606 = vpop.xlane.xlu0 %2605
        %v2607 = vsub.f32 %v2599, %v2603
        %v2608 = vsub.f32 %v2600, %v2606
        %v2609 = vmul.f32 %v2607, 1.442695
        %v2610 = vpow.pop %v2609
        %v2611 = vmul.f32 %v2608, 1.442695
        %v2612 = vpow.pop %v2611
        %v2613 = vsel %vm2533, %v2610, 0.0
        %2614 = vadd.xlane.f32.xlu0 %v2613
        %v2615 = vpop.xlane.xlu0 %2614
        %v2616 = vsel %vm2533, %v2612, 0.0
        %2617 = vadd.xlane.f32.xlu0 %v2616
        %v2618 = vpop.xlane.xlu0 %2617
        %v2619 = vrcp.pop %v2615
        %v2620 = vrcp.pop %v2618
        %v2621 = vmul.f32 %v2610, %v2619
        %v2622 = vmul.f32 %v2612, %v2620
        %2623 = vrot.lane.b32.xlu0 %v2241, 126
        %v2624 = vpop.permute.xlu0 %2623
        %s2625 = vtos %v2624
        %v2626 = vstv %s2625
        %v2628 = vmul.f32 %v2621, %v2626
        %v2629 = vmul.f32 %v2622, %v2626
        %v2630 = vadd.f32 %v2595, %v2628
        %v2631 = vadd.f32 %v2596, %v2629
        %2632 = vrot.lane.b32.xlu0 %v2411, 96
        %v2633 = vpop.permute.xlu0 %2632
        %2634 = vrot.lane.b32.xlu0 %v2416, 96
        %v2635 = vpop.permute.xlu0 %2634
        %2636 = vrot.lane.b32.xlu0 %v2421, 96
        %v2637 = vpop.permute.xlu0 %2636
        %v2641 = vsel %vm2533, %v2630, 0
        %v2644 = vsel %vm2533, %v2631, 0
        %vm2646 = vcmask 1043456
        %v2647 = vsel %vm2646, %v2637, 0
        %2649 = vmatprep.subr.mxu0 0.0
        %2650 = vmatpush1.msra.mxu0 0.0
        %2651 = vmatprep.subr.mxu0 0.0
        %2652 = vmatpush1.msra.mxu0 0.0
        %2653 = vmatprep.subr.mxu0 0.0
        %2654 = vmatpush1.msra.mxu0 0.0
        %2655 = vmatprep.subr.mxu0 0.0
        %2656 = vmatpush1.msra.mxu0 0.0
        %2657 = vmatprep.subr.mxu0 0.0
        %2658 = vmatpush1.msra.mxu0 0.0
        %2659 = vmatprep.subr.mxu0 0.0
        %2660 = vmatpush1.msra.mxu0 0.0
        %2661 = vmatprep.subr.mxu0 0.0
        %2662 = vmatpush1.msra.mxu0 0.0
        %2663 = vmatprep.subr.mxu0 0.0
        %2664 = vmatpush1.msra.mxu0 0.0
        %2665 = vmatprep.subr.mxu0 0.0
        %2666 = vmatpush1.msra.mxu0 0.0
        %2667 = vmatprep.subr.mxu0 0.0
        %2668 = vmatpush1.msra.mxu0 0.0
        %2669 = vmatprep.subr.mxu0 0.0
        %2670 = vmatpush1.msra.mxu0 0.0
        %2671 = vmatprep.subr.mxu0 0.0
        %2672 = vmatpush1.msra.mxu0 0.0
        %2673 = vmatprep.subr.mxu0 0.0
        %2674 = vmatpush1.msra.mxu0 0.0
        %2675 = vmatprep.subr.mxu0 0.0
        %2676 = vmatpush1.msra.mxu0 %v2647
        %2677 = vmatprep.subr.mxu0 0.0
        %2678 = vmatpush1.msra.mxu0 %v2635
        %2679 = vmatprep.subr.mxu0 0.0
        %2680 = vmatpush1.msra.mxu0 %v2633
        %2681 = vmatprep.subr.mxu0 0.0
        %2682 = vmatpush2.msra.mxu0 0.0
        %2683 = vmatprep.subr.mxu0 0.0
        %2684 = vmatpush2.msra.mxu0 0.0
        %2685 = vmatprep.subr.mxu0 0.0
        %2686 = vmatpush2.msra.mxu0 0.0
        %2687 = vmatprep.subr.mxu0 0.0
        %2688 = vmatpush2.msra.mxu0 0.0
        %2689 = vmatprep.subr.mxu0 0.0
        %2690 = vmatpush2.msra.mxu0 0.0
        %2691 = vmatprep.subr.mxu0 0.0
        %2692 = vmatpush2.msra.mxu0 0.0
        %2693 = vmatprep.subr.mxu0 0.0
        %2694 = vmatpush2.msra.mxu0 0.0
        %2695 = vmatprep.subr.mxu0 0.0
        %2696 = vmatpush2.msra.mxu0 0.0
        %2697 = vmatprep.subr.mxu0 0.0
        %2698 = vmatpush2.msra.mxu0 0.0
        %2699 = vmatprep.subr.mxu0 0.0
        %2700 = vmatpush2.msra.mxu0 0.0
        %2701 = vmatprep.subr.mxu0 0.0
        %2702 = vmatpush2.msra.mxu0 0.0
        %2703 = vmatprep.subr.mxu0 0.0
        %2704 = vmatpush2.msra.mxu0 0.0
        %2705 = vmatprep.subr.mxu0 0.0
        %2706 = vmatpush2.msra.mxu0 0.0
        %2707 = vmatprep.subr.mxu0 0.0
        %2708 = vmatpush2.msra.mxu0 0.0
        %2709 = vmatprep.subr.mxu0 0.0
        %2710 = vmatpush2.msra.mxu0 0.0
        %2711 = vmatprep.subr.mxu0 0.0
        %2712 = vmatpush2.msra.mxu0 0.0
        %2713 = vmatprep.mubr.f32.mxu0 0.0
        %2714 = vmatmul.mubr.f32.gmra.mxu0 %v2641
        %v2715 = vpop.f32.mrf.mxu0
        %v2716 = vadd.f32 0.0, %v2715
        %v2717 = vpop.f32.mrf.mxu0
        %2718 = vmatprep.mubr.f32.mxu0 0.0
        %2719 = vmatmul.mubr.f32.gmra.mxu0 %v2644
        %v2720 = vpop.f32.mrf.mxu0
        %v2721 = vadd.f32 0.0, %v2720
        %v2722 = vpop.f32.mrf.mxu0
        %2723 = vdwg.mxu0
        %2724 = vrot.lane.b32.xlu0 %v2321, 120
        %v2725 = vpop.permute.xlu0 %2724
        %2726 = vrot.lane.b32.xlu0 %v2326, 120
        %v2727 = vpop.permute.xlu0 %2726
        %2728 = vrot.lane.b32.xlu0 %v2411, 120
        %v2729 = vpop.permute.xlu0 %2728
        %2730 = vrot.lane.b32.xlu0 %v2416, 120
        %v2731 = vpop.permute.xlu0 %2730
        %2732 = vrot.lane.b32.xlu0 %v2421, 120
        %v2733 = vpop.permute.xlu0 %2732
        %v2734 = vsel %vm2436, %v2725, 0
        %v2736 = vsel %vm2436, %v2727, 0
        %v2738 = vsel %vm2436, %v2729, 0
        %v2740 = vsel %vm2436, %v2731, 0
        %v2742 = vsel %vm2436, %v2733, 0
        %2744 = vmatprep.subr.mxu0 0.0
        %2745 = vmatpush1.xpose.msra.mxu0 0.0
        %2746 = vmatprep.subr.mxu0 0.0
        %2747 = vmatpush1.xpose.msra.mxu0 0.0
        %2748 = vmatprep.subr.mxu0 0.0
        %2749 = vmatpush1.xpose.msra.mxu0 0.0
        %2750 = vmatprep.subr.mxu0 0.0
        %2751 = vmatpush1.xpose.msra.mxu0 0.0
        %2752 = vmatprep.subr.mxu0 0.0
        %2753 = vmatpush1.xpose.msra.mxu0 0.0
        %2754 = vmatprep.subr.mxu0 0.0
        %2755 = vmatpush1.xpose.msra.mxu0 0.0
        %2756 = vmatprep.subr.mxu0 0.0
        %2757 = vmatpush1.xpose.msra.mxu0 0.0
        %2758 = vmatprep.subr.mxu0 0.0
        %2759 = vmatpush1.xpose.msra.mxu0 0.0
        %2760 = vmatprep.subr.mxu0 0.0
        %2761 = vmatpush1.xpose.msra.mxu0 0.0
        %2762 = vmatprep.subr.mxu0 0.0
        %2763 = vmatpush1.xpose.msra.mxu0 0.0
        %2764 = vmatprep.subr.mxu0 0.0
        %2765 = vmatpush1.xpose.msra.mxu0 0.0
        %2766 = vmatprep.subr.mxu0 0.0
        %2767 = vmatpush1.xpose.msra.mxu0 0.0
        %2768 = vmatprep.subr.mxu0 0.0
        %2769 = vmatpush1.xpose.msra.mxu0 0.0
        %2770 = vmatprep.subr.mxu0 0.0
        %2771 = vmatpush1.xpose.msra.mxu0 %v2742
        %2772 = vmatprep.subr.mxu0 0.0
        %2773 = vmatpush1.xpose.msra.mxu0 %v2740
        %2774 = vmatprep.subr.mxu0 0.0
        %2775 = vmatpush1.xpose.msra.mxu0 %v2738
        %2776 = vmatprep.subr.mxu0 0.0
        %2777 = vmatpush2.xpose.msra.mxu0 0.0
        %2778 = vmatprep.subr.mxu0 0.0
        %2779 = vmatpush2.xpose.msra.mxu0 0.0
        %2780 = vmatprep.subr.mxu0 0.0
        %2781 = vmatpush2.xpose.msra.mxu0 0.0
        %2782 = vmatprep.subr.mxu0 0.0
        %2783 = vmatpush2.xpose.msra.mxu0 0.0
        %2784 = vmatprep.subr.mxu0 0.0
        %2785 = vmatpush2.xpose.msra.mxu0 0.0
        %2786 = vmatprep.subr.mxu0 0.0
        %2787 = vmatpush2.xpose.msra.mxu0 0.0
        %2788 = vmatprep.subr.mxu0 0.0
        %2789 = vmatpush2.xpose.msra.mxu0 0.0
        %2790 = vmatprep.subr.mxu0 0.0
        %2791 = vmatpush2.xpose.msra.mxu0 0.0
        %2792 = vmatprep.subr.mxu0 0.0
        %2793 = vmatpush2.xpose.msra.mxu0 0.0
        %2794 = vmatprep.subr.mxu0 0.0
        %2795 = vmatpush2.xpose.msra.mxu0 0.0
        %2796 = vmatprep.subr.mxu0 0.0
        %2797 = vmatpush2.xpose.msra.mxu0 0.0
        %2798 = vmatprep.subr.mxu0 0.0
        %2799 = vmatpush2.xpose.msra.mxu0 0.0
        %2800 = vmatprep.subr.mxu0 0.0
        %2801 = vmatpush2.xpose.msra.mxu0 0.0
        %2802 = vmatprep.subr.mxu0 0.0
        %2803 = vmatpush2.xpose.msra.mxu0 0.0
        %2804 = vmatprep.subr.mxu0 0.0
        %2805 = vmatpush2.xpose.msra.mxu0 0.0
        %2806 = vmatprep.subr.mxu0 0.0
        %2807 = vmatpush2.xpose.msra.mxu0 0.0
        %2808 = vmatprep.mubr.f32.mxu0 0.0
        %2809 = vmatmul.mubr.f32.gmra.mxu0 %v2734
        %v2810 = vpop.f32.mrf.mxu0
        %v2811 = vadd.f32 0.0, %v2810
        %v2812 = vpop.f32.mrf.mxu0
        %2813 = vmatprep.mubr.f32.mxu0 0.0
        %2814 = vmatmul.mubr.f32.gmra.mxu0 %v2736
        %v2815 = vpop.f32.mrf.mxu0
        %v2816 = vadd.f32 0.0, %v2815
        %v2817 = vpop.f32.mrf.mxu0
        %2818 = vdwg.mxu0
        %v2819 = vmul.f32 %v2811, 0.35355338
        %v2820 = vmul.f32 %v2816, 0.35355338
        %v2821 = vmul.f32 %v2819, %v2424
        %v2822 = vmul.f32 %v2820, %v2425
        %v2823 = vadd.f32 %v2821, %v2430
        %v2824 = vadd.f32 %v2822, %v2431
        %v2825 = vsel %vm2533, %v2823, -inf
        %2826 = vmax.xlane.f32.xlu0 %v2825
        %v2827 = vpop.xlane.xlu0 %2826
        %v2828 = vsel %vm2533, %v2824, -inf
        %2829 = vmax.xlane.f32.xlu0 %v2828
        %v2830 = vpop.xlane.xlu0 %2829
        %v2831 = vsub.f32 %v2823, %v2827
        %v2832 = vsub.f32 %v2824, %v2830
        %v2833 = vmul.f32 %v2831, 1.442695
        %v2834 = vpow.pop %v2833
        %v2835 = vmul.f32 %v2832, 1.442695
        %v2836 = vpow.pop %v2835
        %v2837 = vsel %vm2533, %v2834, 0.0
        %2838 = vadd.xlane.f32.xlu0 %v2837
        %v2839 = vpop.xlane.xlu0 %2838
        %v2840 = vsel %vm2533, %v2836, 0.0
        %2841 = vadd.xlane.f32.xlu0 %v2840
        %v2842 = vpop.xlane.xlu0 %2841
        %v2843 = vrcp.pop %v2839
        %v2844 = vrcp.pop %v2842
        %v2845 = vmul.f32 %v2834, %v2843
        %v2846 = vmul.f32 %v2836, %v2844
        %v2847 = vmul.f32 %v2845, %v2558
        %v2848 = vmul.f32 %v2846, %v2558
        %v2849 = vmul.f32 %v2819, %v2426
        %v2850 = vmul.f32 %v2820, %v2427
        %v2851 = vadd.f32 %v2849, %v2432
        %v2852 = vadd.f32 %v2850, %v2433
        %v2853 = vsel %vm2533, %v2851, -inf
        %2854 = vmax.xlane.f32.xlu0 %v2853
        %v2855 = vpop.xlane.xlu0 %2854
        %v2856 = vsel %vm2533, %v2852, -inf
        %2857 = vmax.xlane.f32.xlu0 %v2856
        %v2858 = vpop.xlane.xlu0 %2857
        %v2859 = vsub.f32 %v2851, %v2855
        %v2860 = vsub.f32 %v2852, %v2858
        %v2861 = vmul.f32 %v2859, 1.442695
        %v2862 = vpow.pop %v2861
        %v2863 = vmul.f32 %v2860, 1.442695
        %v2864 = vpow.pop %v2863
        %v2865 = vsel %vm2533, %v2862, 0.0
        %2866 = vadd.xlane.f32.xlu0 %v2865
        %v2867 = vpop.xlane.xlu0 %2866
        %v2868 = vsel %vm2533, %v2864, 0.0
        %2869 = vadd.xlane.f32.xlu0 %v2868
        %v2870 = vpop.xlane.xlu0 %2869
        %v2871 = vrcp.pop %v2867
        %v2872 = vrcp.pop %v2870
        %v2873 = vmul.f32 %v2862, %v2871
        %v2874 = vmul.f32 %v2864, %v2872
        %v2875 = vmul.f32 %v2873, %v2591
        %v2876 = vmul.f32 %v2874, %v2591
        %v2877 = vadd.f32 %v2847, %v2875
        %v2878 = vadd.f32 %v2848, %v2876
        %v2879 = vmul.f32 %v2819, %v2428
        %v2880 = vmul.f32 %v2820, %v2429
        %v2881 = vadd.f32 %v2879, %v2434
        %v2882 = vadd.f32 %v2880, %v2435
        %v2883 = vsel %vm2533, %v2881, -inf
        %2884 = vmax.xlane.f32.xlu0 %v2883
        %v2885 = vpop.xlane.xlu0 %2884
        %v2886 = vsel %vm2533, %v2882, -inf
        %2887 = vmax.xlane.f32.xlu0 %v2886
        %v2888 = vpop.xlane.xlu0 %2887
        %v2889 = vsub.f32 %v2881, %v2885
        %v2890 = vsub.f32 %v2882, %v2888
        %v2891 = vmul.f32 %v2889, 1.442695
        %v2892 = vpow.pop %v2891
        %v2893 = vmul.f32 %v2890, 1.442695
        %v2894 = vpow.pop %v2893
        %v2895 = vsel %vm2533, %v2892, 0.0
        %2896 = vadd.xlane.f32.xlu0 %v2895
        %v2897 = vpop.xlane.xlu0 %2896
        %v2898 = vsel %vm2533, %v2894, 0.0
        %2899 = vadd.xlane.f32.xlu0 %v2898
        %v2900 = vpop.xlane.xlu0 %2899
        %v2901 = vrcp.pop %v2897
        %v2902 = vrcp.pop %v2900
        %v2903 = vmul.f32 %v2892, %v2901
        %v2904 = vmul.f32 %v2894, %v2902
        %v2905 = vmul.f32 %v2903, %v2626
        %v2906 = vmul.f32 %v2904, %v2626
        %v2907 = vadd.f32 %v2877, %v2905
        %v2908 = vadd.f32 %v2878, %v2906
        %2909 = vrot.lane.b32.xlu0 %v2411, 88
        %v2910 = vpop.permute.xlu0 %2909
        %2911 = vrot.lane.b32.xlu0 %v2416, 88
        %v2912 = vpop.permute.xlu0 %2911
        %2913 = vrot.lane.b32.xlu0 %v2421, 88
        %v2914 = vpop.permute.xlu0 %2913
        %v2918 = vsel %vm2533, %v2907, 0
        %v2921 = vsel %vm2533, %v2908, 0
        %v2923 = vsel %vm2646, %v2914, 0
        %2925 = vmatprep.subr.mxu0 0.0
        %2926 = vmatpush1.msra.mxu0 0.0
        %2927 = vmatprep.subr.mxu0 0.0
        %2928 = vmatpush1.msra.mxu0 0.0
        %2929 = vmatprep.subr.mxu0 0.0
        %2930 = vmatpush1.msra.mxu0 0.0
        %2931 = vmatprep.subr.mxu0 0.0
        %2932 = vmatpush1.msra.mxu0 0.0
        %2933 = vmatprep.subr.mxu0 0.0
        %2934 = vmatpush1.msra.mxu0 0.0
        %2935 = vmatprep.subr.mxu0 0.0
        %2936 = vmatpush1.msra.mxu0 0.0
        %2937 = vmatprep.subr.mxu0 0.0
        %2938 = vmatpush1.msra.mxu0 0.0
        %2939 = vmatprep.subr.mxu0 0.0
        %2940 = vmatpush1.msra.mxu0 0.0
        %2941 = vmatprep.subr.mxu0 0.0
        %2942 = vmatpush1.msra.mxu0 0.0
        %2943 = vmatprep.subr.mxu0 0.0
        %2944 = vmatpush1.msra.mxu0 0.0
        %2945 = vmatprep.subr.mxu0 0.0
        %2946 = vmatpush1.msra.mxu0 0.0
        %2947 = vmatprep.subr.mxu0 0.0
        %2948 = vmatpush1.msra.mxu0 0.0
        %2949 = vmatprep.subr.mxu0 0.0
        %2950 = vmatpush1.msra.mxu0 0.0
        %2951 = vmatprep.subr.mxu0 0.0
        %2952 = vmatpush1.msra.mxu0 %v2923
        %2953 = vmatprep.subr.mxu0 0.0
        %2954 = vmatpush1.msra.mxu0 %v2912
        %2955 = vmatprep.subr.mxu0 0.0
        %2956 = vmatpush1.msra.mxu0 %v2910
        %2957 = vmatprep.subr.mxu0 0.0
        %2958 = vmatpush2.msra.mxu0 0.0
        %2959 = vmatprep.subr.mxu0 0.0
        %2960 = vmatpush2.msra.mxu0 0.0
        %2961 = vmatprep.subr.mxu0 0.0
        %2962 = vmatpush2.msra.mxu0 0.0
        %2963 = vmatprep.subr.mxu0 0.0
        %2964 = vmatpush2.msra.mxu0 0.0
        %2965 = vmatprep.subr.mxu0 0.0
        %2966 = vmatpush2.msra.mxu0 0.0
        %2967 = vmatprep.subr.mxu0 0.0
        %2968 = vmatpush2.msra.mxu0 0.0
        %2969 = vmatprep.subr.mxu0 0.0
        %2970 = vmatpush2.msra.mxu0 0.0
        %2971 = vmatprep.subr.mxu0 0.0
        %2972 = vmatpush2.msra.mxu0 0.0
        %2973 = vmatprep.subr.mxu0 0.0
        %2974 = vmatpush2.msra.mxu0 0.0
        %2975 = vmatprep.subr.mxu0 0.0
        %2976 = vmatpush2.msra.mxu0 0.0
        %2977 = vmatprep.subr.mxu0 0.0
        %2978 = vmatpush2.msra.mxu0 0.0
        %2979 = vmatprep.subr.mxu0 0.0
        %2980 = vmatpush2.msra.mxu0 0.0
        %2981 = vmatprep.subr.mxu0 0.0
        %2982 = vmatpush2.msra.mxu0 0.0
        %2983 = vmatprep.subr.mxu0 0.0
        %2984 = vmatpush2.msra.mxu0 0.0
        %2985 = vmatprep.subr.mxu0 0.0
        %2986 = vmatpush2.msra.mxu0 0.0
        %2987 = vmatprep.subr.mxu0 0.0
        %2988 = vmatpush2.msra.mxu0 0.0
        %2989 = vmatprep.mubr.f32.mxu0 0.0
        %2990 = vmatmul.mubr.f32.gmra.mxu0 %v2918
        %v2991 = vpop.f32.mrf.mxu0
        %v2992 = vadd.f32 0.0, %v2991
        %v2993 = vpop.f32.mrf.mxu0
        %2994 = vmatprep.mubr.f32.mxu0 0.0
        %2995 = vmatmul.mubr.f32.gmra.mxu0 %v2921
        %v2996 = vpop.f32.mrf.mxu0
        %v2997 = vadd.f32 0.0, %v2996
        %v2998 = vpop.f32.mrf.mxu0
        %2999 = vdwg.mxu0
        %v3001 = vsel %vm2436, %v2992, 0
        %v3004 = vsel %vm2436, %v2997, 0
        %3006 = vmatprep.subr.mxu0 0.0
        %3007 = vmatpush1.msra.mxu0 0.0
        %3008 = vmatprep.subr.mxu0 0.0
        %3009 = vmatpush1.msra.mxu0 0.0
        %3010 = vmatprep.subr.mxu0 0.0
        %3011 = vmatpush1.msra.mxu0 0.0
        %3012 = vmatprep.subr.mxu0 0.0
        %3013 = vmatpush1.msra.mxu0 0.0
        %3014 = vmatprep.subr.mxu0 0.0
        %3015 = vmatpush1.msra.mxu0 0.0
        %3016 = vmatprep.subr.mxu0 0.0
        %3017 = vmatpush1.msra.mxu0 0.0
        %3018 = vmatprep.subr.mxu0 0.0
        %3019 = vmatpush1.msra.mxu0 0.0
        %3020 = vmatprep.subr.mxu0 0.0
        %3021 = vmatpush1.msra.mxu0 0.0
        %3022 = vmatprep.subr.mxu0 0.0
        %3023 = vmatpush1.msra.mxu0 0.0
        %3024 = vmatprep.subr.mxu0 0.0
        %3025 = vmatpush1.msra.mxu0 0.0
        %3026 = vmatprep.subr.mxu0 0.0
        %3027 = vmatpush1.msra.mxu0 0.0
        %3028 = vmatprep.subr.mxu0 0.0
        %3029 = vmatpush1.msra.mxu0 0.0
        %3030 = vmatprep.subr.mxu0 0.0
        %3031 = vmatpush1.msra.mxu0 0.0
        %3032 = vmatprep.subr.mxu0 0.0
        %3033 = vmatpush1.msra.mxu0 0.0
        %3034 = vmatprep.subr.mxu0 0.0
        %3035 = vmatpush1.msra.mxu0 0.0
        %3036 = vmatprep.subr.mxu0 0.0
        %3037 = vmatpush1.msra.mxu0 %v2056
        %3038 = vmatprep.subr.mxu0 0.0
        %3039 = vmatpush2.msra.mxu0 0.0
        %3040 = vmatprep.subr.mxu0 0.0
        %3041 = vmatpush2.msra.mxu0 0.0
        %3042 = vmatprep.subr.mxu0 0.0
        %3043 = vmatpush2.msra.mxu0 0.0
        %3044 = vmatprep.subr.mxu0 0.0
        %3045 = vmatpush2.msra.mxu0 0.0
        %3046 = vmatprep.subr.mxu0 0.0
        %3047 = vmatpush2.msra.mxu0 0.0
        %3048 = vmatprep.subr.mxu0 0.0
        %3049 = vmatpush2.msra.mxu0 0.0
        %3050 = vmatprep.subr.mxu0 0.0
        %3051 = vmatpush2.msra.mxu0 0.0
        %3052 = vmatprep.subr.mxu0 0.0
        %3053 = vmatpush2.msra.mxu0 0.0
        %3054 = vmatprep.subr.mxu0 0.0
        %3055 = vmatpush2.msra.mxu0 0.0
        %3056 = vmatprep.subr.mxu0 0.0
        %3057 = vmatpush2.msra.mxu0 0.0
        %3058 = vmatprep.subr.mxu0 0.0
        %3059 = vmatpush2.msra.mxu0 0.0
        %3060 = vmatprep.subr.mxu0 0.0
        %3061 = vmatpush2.msra.mxu0 0.0
        %3062 = vmatprep.subr.mxu0 0.0
        %3063 = vmatpush2.msra.mxu0 0.0
        %3064 = vmatprep.subr.mxu0 0.0
        %3065 = vmatpush2.msra.mxu0 0.0
        %3066 = vmatprep.subr.mxu0 0.0
        %3067 = vmatpush2.msra.mxu0 0.0
        %3068 = vmatprep.subr.mxu0 0.0
        %3069 = vmatpush2.msra.mxu0 0.0
        %3070 = vmatprep.mubr.f32.mxu0 0.0
        %3071 = vmatmul.mubr.f32.gmra.mxu0 %v3001
        %v3072 = vpop.f32.mrf.mxu0
        %v3073 = vadd.f32 0.0, %v3072
        %v3074 = vpop.f32.mrf.mxu0
        %3075 = vmatprep.mubr.f32.mxu0 0.0
        %3076 = vmatmul.mubr.f32.gmra.mxu0 %v3004
        %v3077 = vpop.f32.mrf.mxu0
        %v3078 = vadd.f32 0.0, %v3077
        %v3079 = vpop.f32.mrf.mxu0
        %3080 = vdwg.mxu0
        %v3082 = vsel %vm2436, %v2716, 0
        %v3085 = vsel %vm2436, %v2721, 0
        %3087 = vmatprep.subr.mxu0 0.0
        %3088 = vmatpush1.msra.mxu0 0.0
        %3089 = vmatprep.subr.mxu0 0.0
        %3090 = vmatpush1.msra.mxu0 0.0
        %3091 = vmatprep.subr.mxu0 0.0
        %3092 = vmatpush1.msra.mxu0 0.0
        %3093 = vmatprep.subr.mxu0 0.0
        %3094 = vmatpush1.msra.mxu0 0.0
        %3095 = vmatprep.subr.mxu0 0.0
        %3096 = vmatpush1.msra.mxu0 0.0
        %3097 = vmatprep.subr.mxu0 0.0
        %3098 = vmatpush1.msra.mxu0 0.0
        %3099 = vmatprep.subr.mxu0 0.0
        %3100 = vmatpush1.msra.mxu0 0.0
        %3101 = vmatprep.subr.mxu0 0.0
        %3102 = vmatpush1.msra.mxu0 0.0
        %3103 = vmatprep.subr.mxu0 0.0
        %3104 = vmatpush1.msra.mxu0 0.0
        %3105 = vmatprep.subr.mxu0 0.0
        %3106 = vmatpush1.msra.mxu0 0.0
        %3107 = vmatprep.subr.mxu0 0.0
        %3108 = vmatpush1.msra.mxu0 0.0
        %3109 = vmatprep.subr.mxu0 0.0
        %3110 = vmatpush1.msra.mxu0 0.0
        %3111 = vmatprep.subr.mxu0 0.0
        %3112 = vmatpush1.msra.mxu0 0.0
        %3113 = vmatprep.subr.mxu0 0.0
        %3114 = vmatpush1.msra.mxu0 0.0
        %3115 = vmatprep.subr.mxu0 0.0
        %3116 = vmatpush1.msra.mxu0 0.0
        %3117 = vmatprep.subr.mxu0 0.0
        %3118 = vmatpush1.msra.mxu0 %v2055
        %3119 = vmatprep.subr.mxu0 0.0
        %3120 = vmatpush2.msra.mxu0 0.0
        %3121 = vmatprep.subr.mxu0 0.0
        %3122 = vmatpush2.msra.mxu0 0.0
        %3123 = vmatprep.subr.mxu0 0.0
        %3124 = vmatpush2.msra.mxu0 0.0
        %3125 = vmatprep.subr.mxu0 0.0
        %3126 = vmatpush2.msra.mxu0 0.0
        %3127 = vmatprep.subr.mxu0 0.0
        %3128 = vmatpush2.msra.mxu0 0.0
        %3129 = vmatprep.subr.mxu0 0.0
        %3130 = vmatpush2.msra.mxu0 0.0
        %3131 = vmatprep.subr.mxu0 0.0
        %3132 = vmatpush2.msra.mxu0 0.0
        %3133 = vmatprep.subr.mxu0 0.0
        %3134 = vmatpush2.msra.mxu0 0.0
        %3135 = vmatprep.subr.mxu0 0.0
        %3136 = vmatpush2.msra.mxu0 0.0
        %3137 = vmatprep.subr.mxu0 0.0
        %3138 = vmatpush2.msra.mxu0 0.0
        %3139 = vmatprep.subr.mxu0 0.0
        %3140 = vmatpush2.msra.mxu0 0.0
        %3141 = vmatprep.subr.mxu0 0.0
        %3142 = vmatpush2.msra.mxu0 0.0
        %3143 = vmatprep.subr.mxu0 0.0
        %3144 = vmatpush2.msra.mxu0 0.0
        %3145 = vmatprep.subr.mxu0 0.0
        %3146 = vmatpush2.msra.mxu0 0.0
        %3147 = vmatprep.subr.mxu0 0.0
        %3148 = vmatpush2.msra.mxu0 0.0
        %3149 = vmatprep.subr.mxu0 0.0
        %3150 = vmatpush2.msra.mxu0 0.0
        %3151 = vmatprep.mubr.f32.mxu0 0.0
        %3152 = vmatmul.mubr.f32.gmra.mxu0 %v3082
        %v3153 = vpop.f32.mrf.mxu0
        %v3154 = vadd.f32 %v3073, %v3153
        %v3155 = vpop.f32.mrf.mxu0
        %3156 = vmatprep.mubr.f32.mxu0 0.0
        %3157 = vmatmul.mubr.f32.gmra.mxu0 %v3085
        %v3158 = vpop.f32.mrf.mxu0
        %v3159 = vadd.f32 %v3078, %v3158
        %v3160 = vpop.f32.mrf.mxu0
        %3161 = vdwg.mxu0
        %3162 = vrot.lane.b32.xlu0 %v2321, 112
        %v3163 = vpop.permute.xlu0 %3162
        %3164 = vrot.lane.b32.xlu0 %v2326, 112
        %v3165 = vpop.permute.xlu0 %3164
        %3166 = vrot.lane.b32.xlu0 %v2411, 112
        %v3167 = vpop.permute.xlu0 %3166
        %3168 = vrot.lane.b32.xlu0 %v2416, 112
        %v3169 = vpop.permute.xlu0 %3168
        %3170 = vrot.lane.b32.xlu0 %v2421, 112
        %v3171 = vpop.permute.xlu0 %3170
        %v3172 = vsel %vm2436, %v3163, 0
        %v3174 = vsel %vm2436, %v3165, 0
        %v3176 = vsel %vm2436, %v3167, 0
        %v3178 = vsel %vm2436, %v3169, 0
        %v3180 = vsel %vm2436, %v3171, 0
        %3182 = vmatprep.subr.mxu0 0.0
        %3183 = vmatpush1.xpose.msra.mxu0 0.0
        %3184 = vmatprep.subr.mxu0 0.0
        %3185 = vmatpush1.xpose.msra.mxu0 0.0
        %3186 = vmatprep.subr.mxu0 0.0
        %3187 = vmatpush1.xpose.msra.mxu0 0.0
        %3188 = vmatprep.subr.mxu0 0.0
        %3189 = vmatpush1.xpose.msra.mxu0 0.0
        %3190 = vmatprep.subr.mxu0 0.0
        %3191 = vmatpush1.xpose.msra.mxu0 0.0
        %3192 = vmatprep.subr.mxu0 0.0
        %3193 = vmatpush1.xpose.msra.mxu0 0.0
        %3194 = vmatprep.subr.mxu0 0.0
        %3195 = vmatpush1.xpose.msra.mxu0 0.0
        %3196 = vmatprep.subr.mxu0 0.0
        %3197 = vmatpush1.xpose.msra.mxu0 0.0
        %3198 = vmatprep.subr.mxu0 0.0
        %3199 = vmatpush1.xpose.msra.mxu0 0.0
        %3200 = vmatprep.subr.mxu0 0.0
        %3201 = vmatpush1.xpose.msra.mxu0 0.0
        %3202 = vmatprep.subr.mxu0 0.0
        %3203 = vmatpush1.xpose.msra.mxu0 0.0
        %3204 = vmatprep.subr.mxu0 0.0
        %3205 = vmatpush1.xpose.msra.mxu0 0.0
        %3206 = vmatprep.subr.mxu0 0.0
        %3207 = vmatpush1.xpose.msra.mxu0 0.0
        %3208 = vmatprep.subr.mxu0 0.0
        %3209 = vmatpush1.xpose.msra.mxu0 %v3180
        %3210 = vmatprep.subr.mxu0 0.0
        %3211 = vmatpush1.xpose.msra.mxu0 %v3178
        %3212 = vmatprep.subr.mxu0 0.0
        %3213 = vmatpush1.xpose.msra.mxu0 %v3176
        %3214 = vmatprep.subr.mxu0 0.0
        %3215 = vmatpush2.xpose.msra.mxu0 0.0
        %3216 = vmatprep.subr.mxu0 0.0
        %3217 = vmatpush2.xpose.msra.mxu0 0.0
        %3218 = vmatprep.subr.mxu0 0.0
        %3219 = vmatpush2.xpose.msra.mxu0 0.0
        %3220 = vmatprep.subr.mxu0 0.0
        %3221 = vmatpush2.xpose.msra.mxu0 0.0
        %3222 = vmatprep.subr.mxu0 0.0
        %3223 = vmatpush2.xpose.msra.mxu0 0.0
        %3224 = vmatprep.subr.mxu0 0.0
        %3225 = vmatpush2.xpose.msra.mxu0 0.0
        %3226 = vmatprep.subr.mxu0 0.0
        %3227 = vmatpush2.xpose.msra.mxu0 0.0
        %3228 = vmatprep.subr.mxu0 0.0
        %3229 = vmatpush2.xpose.msra.mxu0 0.0
        %3230 = vmatprep.subr.mxu0 0.0
        %3231 = vmatpush2.xpose.msra.mxu0 0.0
        %3232 = vmatprep.subr.mxu0 0.0
        %3233 = vmatpush2.xpose.msra.mxu0 0.0
        %3234 = vmatprep.subr.mxu0 0.0
        %3235 = vmatpush2.xpose.msra.mxu0 0.0
        %3236 = vmatprep.subr.mxu0 0.0
        %3237 = vmatpush2.xpose.msra.mxu0 0.0
        %3238 = vmatprep.subr.mxu0 0.0
        %3239 = vmatpush2.xpose.msra.mxu0 0.0
        %3240 = vmatprep.subr.mxu0 0.0
        %3241 = vmatpush2.xpose.msra.mxu0 0.0
        %3242 = vmatprep.subr.mxu0 0.0
        %3243 = vmatpush2.xpose.msra.mxu0 0.0
        %3244 = vmatprep.subr.mxu0 0.0
        %3245 = vmatpush2.xpose.msra.mxu0 0.0
        %3246 = vmatprep.mubr.f32.mxu0 0.0
        %3247 = vmatmul.mubr.f32.gmra.mxu0 %v3172
        %v3248 = vpop.f32.mrf.mxu0
        %v3249 = vadd.f32 0.0, %v3248
        %v3250 = vpop.f32.mrf.mxu0
        %3251 = vmatprep.mubr.f32.mxu0 0.0
        %3252 = vmatmul.mubr.f32.gmra.mxu0 %v3174
        %v3253 = vpop.f32.mrf.mxu0
        %v3254 = vadd.f32 0.0, %v3253
        %v3255 = vpop.f32.mrf.mxu0
        %3256 = vdwg.mxu0
        %v3257 = vmul.f32 %v3249, 0.35355338
        %v3258 = vmul.f32 %v3254, 0.35355338
        %v3259 = vmul.f32 %v3257, %v2424
        %v3260 = vmul.f32 %v3258, %v2425
        %v3261 = vadd.f32 %v3259, %v2430
        %v3262 = vadd.f32 %v3260, %v2431
        %v3263 = vsel %vm2533, %v3261, -inf
        %3264 = vmax.xlane.f32.xlu0 %v3263
        %v3265 = vpop.xlane.xlu0 %3264
        %v3266 = vsel %vm2533, %v3262, -inf
        %3267 = vmax.xlane.f32.xlu0 %v3266
        %v3268 = vpop.xlane.xlu0 %3267
        %v3269 = vsub.f32 %v3261, %v3265
        %v3270 = vsub.f32 %v3262, %v3268
        %v3271 = vmul.f32 %v3269, 1.442695
        %v3272 = vpow.pop %v3271
        %v3273 = vmul.f32 %v3270, 1.442695
        %v3274 = vpow.pop %v3273
        %v3275 = vsel %vm2533, %v3272, 0.0
        %3276 = vadd.xlane.f32.xlu0 %v3275
        %v3277 = vpop.xlane.xlu0 %3276
        %v3278 = vsel %vm2533, %v3274, 0.0
        %3279 = vadd.xlane.f32.xlu0 %v3278
        %v3280 = vpop.xlane.xlu0 %3279
        %v3281 = vrcp.pop %v3277
        %v3282 = vrcp.pop %v3280
        %v3283 = vmul.f32 %v3272, %v3281
        %v3284 = vmul.f32 %v3274, %v3282
        %v3285 = vmul.f32 %v3283, %v2558
        %v3286 = vmul.f32 %v3284, %v2558
        %v3287 = vmul.f32 %v3257, %v2426
        %v3288 = vmul.f32 %v3258, %v2427
        %v3289 = vadd.f32 %v3287, %v2432
        %v3290 = vadd.f32 %v3288, %v2433
        %v3291 = vsel %vm2533, %v3289, -inf
        %3292 = vmax.xlane.f32.xlu0 %v3291
        %v3293 = vpop.xlane.xlu0 %3292
        %v3294 = vsel %vm2533, %v3290, -inf
        %3295 = vmax.xlane.f32.xlu0 %v3294
        %v3296 = vpop.xlane.xlu0 %3295
        %v3297 = vsub.f32 %v3289, %v3293
        %v3298 = vsub.f32 %v3290, %v3296
        %v3299 = vmul.f32 %v3297, 1.442695
        %v3300 = vpow.pop %v3299
        %v3301 = vmul.f32 %v3298, 1.442695
        %v3302 = vpow.pop %v3301
        %v3303 = vsel %vm2533, %v3300, 0.0
        %3304 = vadd.xlane.f32.xlu0 %v3303
        %v3305 = vpop.xlane.xlu0 %3304
        %v3306 = vsel %vm2533, %v3302, 0.0
        %3307 = vadd.xlane.f32.xlu0 %v3306
        %v3308 = vpop.xlane.xlu0 %3307
        %v3309 = vrcp.pop %v3305
        %v3310 = vrcp.pop %v3308
        %v3311 = vmul.f32 %v3300, %v3309
        %v3312 = vmul.f32 %v3302, %v3310
        %v3313 = vmul.f32 %v3311, %v2591
        %v3314 = vmul.f32 %v3312, %v2591
        %v3315 = vadd.f32 %v3285, %v3313
        %v3316 = vadd.f32 %v3286, %v3314
        %v3317 = vmul.f32 %v3257, %v2428
        %v3318 = vmul.f32 %v3258, %v2429
        %v3319 = vadd.f32 %v3317, %v2434
        %v3320 = vadd.f32 %v3318, %v2435
        %v3321 = vsel %vm2533, %v3319, -inf
        %3322 = vmax.xlane.f32.xlu0 %v3321
        %v3323 = vpop.xlane.xlu0 %3322
        %v3324 = vsel %vm2533, %v3320, -inf
        %3325 = vmax.xlane.f32.xlu0 %v3324
        %v3326 = vpop.xlane.xlu0 %3325
        %v3327 = vsub.f32 %v3319, %v3323
        %v3328 = vsub.f32 %v3320, %v3326
        %v3329 = vmul.f32 %v3327, 1.442695
        %v3330 = vpow.pop %v3329
        %v3331 = vmul.f32 %v3328, 1.442695
        %v3332 = vpow.pop %v3331
        %v3333 = vsel %vm2533, %v3330, 0.0
        %3334 = vadd.xlane.f32.xlu0 %v3333
        %v3335 = vpop.xlane.xlu0 %3334
        %v3336 = vsel %vm2533, %v3332, 0.0
        %3337 = vadd.xlane.f32.xlu0 %v3336
        %v3338 = vpop.xlane.xlu0 %3337
        %v3339 = vrcp.pop %v3335
        %v3340 = vrcp.pop %v3338
        %v3341 = vmul.f32 %v3330, %v3339
        %v3342 = vmul.f32 %v3332, %v3340
        %v3343 = vmul.f32 %v3341, %v2626
        %v3344 = vmul.f32 %v3342, %v2626
        %v3345 = vadd.f32 %v3315, %v3343
        %v3346 = vadd.f32 %v3316, %v3344
        %3347 = vrot.lane.b32.xlu0 %v2411, 80
        %v3348 = vpop.permute.xlu0 %3347
        %3349 = vrot.lane.b32.xlu0 %v2416, 80
        %v3350 = vpop.permute.xlu0 %3349
        %3351 = vrot.lane.b32.xlu0 %v2421, 80
        %v3352 = vpop.permute.xlu0 %3351
        %v3356 = vsel %vm2533, %v3345, 0
        %v3359 = vsel %vm2533, %v3346, 0
        %v3361 = vsel %vm2646, %v3352, 0
        %3363 = vmatprep.subr.mxu0 0.0
        %3364 = vmatpush1.msra.mxu0 0.0
        %3365 = vmatprep.subr.mxu0 0.0
        %3366 = vmatpush1.msra.mxu0 0.0
        %3367 = vmatprep.subr.mxu0 0.0
        %3368 = vmatpush1.msra.mxu0 0.0
        %3369 = vmatprep.subr.mxu0 0.0
        %3370 = vmatpush1.msra.mxu0 0.0
        %3371 = vmatprep.subr.mxu0 0.0
        %3372 = vmatpush1.msra.mxu0 0.0
        %3373 = vmatprep.subr.mxu0 0.0
        %3374 = vmatpush1.msra.mxu0 0.0
        %3375 = vmatprep.subr.mxu0 0.0
        %3376 = vmatpush1.msra.mxu0 0.0
        %3377 = vmatprep.subr.mxu0 0.0
        %3378 = vmatpush1.msra.mxu0 0.0
        %3379 = vmatprep.subr.mxu0 0.0
        %3380 = vmatpush1.msra.mxu0 0.0
        %3381 = vmatprep.subr.mxu0 0.0
        %3382 = vmatpush1.msra.mxu0 0.0
        %3383 = vmatprep.subr.mxu0 0.0
        %3384 = vmatpush1.msra.mxu0 0.0
        %3385 = vmatprep.subr.mxu0 0.0
        %3386 = vmatpush1.msra.mxu0 0.0
        %3387 = vmatprep.subr.mxu0 0.0
        %3388 = vmatpush1.msra.mxu0 0.0
        %3389 = vmatprep.subr.mxu0 0.0
        %3390 = vmatpush1.msra.mxu0 %v3361
        %3391 = vmatprep.subr.mxu0 0.0
        %3392 = vmatpush1.msra.mxu0 %v3350
        %3393 = vmatprep.subr.mxu0 0.0
        %3394 = vmatpush1.msra.mxu0 %v3348
        %3395 = vmatprep.subr.mxu0 0.0
        %3396 = vmatpush2.msra.mxu0 0.0
        %3397 = vmatprep.subr.mxu0 0.0
        %3398 = vmatpush2.msra.mxu0 0.0
        %3399 = vmatprep.subr.mxu0 0.0
        %3400 = vmatpush2.msra.mxu0 0.0
        %3401 = vmatprep.subr.mxu0 0.0
        %3402 = vmatpush2.msra.mxu0 0.0
        %3403 = vmatprep.subr.mxu0 0.0
        %3404 = vmatpush2.msra.mxu0 0.0
        %3405 = vmatprep.subr.mxu0 0.0
        %3406 = vmatpush2.msra.mxu0 0.0
        %3407 = vmatprep.subr.mxu0 0.0
        %3408 = vmatpush2.msra.mxu0 0.0
        %3409 = vmatprep.subr.mxu0 0.0
        %3410 = vmatpush2.msra.mxu0 0.0
        %3411 = vmatprep.subr.mxu0 0.0
        %3412 = vmatpush2.msra.mxu0 0.0
        %3413 = vmatprep.subr.mxu0 0.0
        %3414 = vmatpush2.msra.mxu0 0.0
        %3415 = vmatprep.subr.mxu0 0.0
        %3416 = vmatpush2.msra.mxu0 0.0
        %3417 = vmatprep.subr.mxu0 0.0
        %3418 = vmatpush2.msra.mxu0 0.0
        %3419 = vmatprep.subr.mxu0 0.0
        %3420 = vmatpush2.msra.mxu0 0.0
        %3421 = vmatprep.subr.mxu0 0.0
        %3422 = vmatpush2.msra.mxu0 0.0
        %3423 = vmatprep.subr.mxu0 0.0
        %3424 = vmatpush2.msra.mxu0 0.0
        %3425 = vmatprep.subr.mxu0 0.0
        %3426 = vmatpush2.msra.mxu0 0.0
        %3427 = vmatprep.mubr.f32.mxu0 0.0
        %3428 = vmatmul.mubr.f32.gmra.mxu0 %v3356
        %v3429 = vpop.f32.mrf.mxu0
        %v3430 = vadd.f32 0.0, %v3429
        %v3431 = vpop.f32.mrf.mxu0
        %3432 = vmatprep.mubr.f32.mxu0 0.0
        %3433 = vmatmul.mubr.f32.gmra.mxu0 %v3359
        %v3434 = vpop.f32.mrf.mxu0
        %v3435 = vadd.f32 0.0, %v3434
        %v3436 = vpop.f32.mrf.mxu0
        %3437 = vdwg.mxu0
        %v3439 = vsel %vm2436, %v3430, 0
        %v3442 = vsel %vm2436, %v3435, 0
        %3444 = vmatprep.subr.mxu0 0.0
        %3445 = vmatpush1.msra.mxu0 0.0
        %3446 = vmatprep.subr.mxu0 0.0
        %3447 = vmatpush1.msra.mxu0 0.0
        %3448 = vmatprep.subr.mxu0 0.0
        %3449 = vmatpush1.msra.mxu0 0.0
        %3450 = vmatprep.subr.mxu0 0.0
        %3451 = vmatpush1.msra.mxu0 0.0
        %3452 = vmatprep.subr.mxu0 0.0
        %3453 = vmatpush1.msra.mxu0 0.0
        %3454 = vmatprep.subr.mxu0 0.0
        %3455 = vmatpush1.msra.mxu0 0.0
        %3456 = vmatprep.subr.mxu0 0.0
        %3457 = vmatpush1.msra.mxu0 0.0
        %3458 = vmatprep.subr.mxu0 0.0
        %3459 = vmatpush1.msra.mxu0 0.0
        %3460 = vmatprep.subr.mxu0 0.0
        %3461 = vmatpush1.msra.mxu0 0.0
        %3462 = vmatprep.subr.mxu0 0.0
        %3463 = vmatpush1.msra.mxu0 0.0
        %3464 = vmatprep.subr.mxu0 0.0
        %3465 = vmatpush1.msra.mxu0 0.0
        %3466 = vmatprep.subr.mxu0 0.0
        %3467 = vmatpush1.msra.mxu0 0.0
        %3468 = vmatprep.subr.mxu0 0.0
        %3469 = vmatpush1.msra.mxu0 0.0
        %3470 = vmatprep.subr.mxu0 0.0
        %3471 = vmatpush1.msra.mxu0 0.0
        %3472 = vmatprep.subr.mxu0 0.0
        %3473 = vmatpush1.msra.mxu0 0.0
        %3474 = vmatprep.subr.mxu0 0.0
        %3475 = vmatpush1.msra.mxu0 %v2057
        %3476 = vmatprep.subr.mxu0 0.0
        %3477 = vmatpush2.msra.mxu0 0.0
        %3478 = vmatprep.subr.mxu0 0.0
        %3479 = vmatpush2.msra.mxu0 0.0
        %3480 = vmatprep.subr.mxu0 0.0
        %3481 = vmatpush2.msra.mxu0 0.0
        %3482 = vmatprep.subr.mxu0 0.0
        %3483 = vmatpush2.msra.mxu0 0.0
        %3484 = vmatprep.subr.mxu0 0.0
        %3485 = vmatpush2.msra.mxu0 0.0
        %3486 = vmatprep.subr.mxu0 0.0
        %3487 = vmatpush2.msra.mxu0 0.0
        %3488 = vmatprep.subr.mxu0 0.0
        %3489 = vmatpush2.msra.mxu0 0.0
        %3490 = vmatprep.subr.mxu0 0.0
        %3491 = vmatpush2.msra.mxu0 0.0
        %3492 = vmatprep.subr.mxu0 0.0
        %3493 = vmatpush2.msra.mxu0 0.0
        %3494 = vmatprep.subr.mxu0 0.0
        %3495 = vmatpush2.msra.mxu0 0.0
        %3496 = vmatprep.subr.mxu0 0.0
        %3497 = vmatpush2.msra.mxu0 0.0
        %3498 = vmatprep.subr.mxu0 0.0
        %3499 = vmatpush2.msra.mxu0 0.0
        %3500 = vmatprep.subr.mxu0 0.0
        %3501 = vmatpush2.msra.mxu0 0.0
        %3502 = vmatprep.subr.mxu0 0.0
        %3503 = vmatpush2.msra.mxu0 0.0
        %3504 = vmatprep.subr.mxu0 0.0
        %3505 = vmatpush2.msra.mxu0 0.0
        %3506 = vmatprep.subr.mxu0 0.0
        %3507 = vmatpush2.msra.mxu0 0.0
        %3508 = vmatprep.mubr.f32.mxu0 0.0
        %3509 = vmatmul.mubr.f32.gmra.mxu0 %v3439
        %v3510 = vpop.f32.mrf.mxu0
        %v3511 = vadd.f32 0.0, %v3510
        %v3512 = vpop.f32.mrf.mxu0
        %3513 = vmatprep.mubr.f32.mxu0 0.0
        %3514 = vmatmul.mubr.f32.gmra.mxu0 %v3442
        %v3515 = vpop.f32.mrf.mxu0
        %v3516 = vadd.f32 0.0, %v3515
        %v3517 = vpop.f32.mrf.mxu0
        %3518 = vdwg.mxu0
        %v3519 = vadd.f32 %v3154, %v3511
        %v3520 = vadd.f32 %v3159, %v3516
        %3521 = vrot.lane.b32.xlu0 %v2321, 104
        %v3522 = vpop.permute.xlu0 %3521
        %3523 = vrot.lane.b32.xlu0 %v2326, 104
        %v3524 = vpop.permute.xlu0 %3523
        %3525 = vrot.lane.b32.xlu0 %v2411, 104
        %v3526 = vpop.permute.xlu0 %3525
        %3527 = vrot.lane.b32.xlu0 %v2416, 104
        %v3528 = vpop.permute.xlu0 %3527
        %3529 = vrot.lane.b32.xlu0 %v2421, 104
        %v3530 = vpop.permute.xlu0 %3529
        %v3531 = vsel %vm2436, %v3522, 0
        %v3533 = vsel %vm2436, %v3524, 0
        %v3535 = vsel %vm2436, %v3526, 0
        %v3537 = vsel %vm2436, %v3528, 0
        %v3539 = vsel %vm2436, %v3530, 0
        %3541 = vmatprep.subr.mxu0 0.0
        %3542 = vmatpush1.xpose.msra.mxu0 0.0
        %3543 = vmatprep.subr.mxu0 0.0
        %3544 = vmatpush1.xpose.msra.mxu0 0.0
        %3545 = vmatprep.subr.mxu0 0.0
        %3546 = vmatpush1.xpose.msra.mxu0 0.0
        %3547 = vmatprep.subr.mxu0 0.0
        %3548 = vmatpush1.xpose.msra.mxu0 0.0
        %3549 = vmatprep.subr.mxu0 0.0
        %3550 = vmatpush1.xpose.msra.mxu0 0.0
        %3551 = vmatprep.subr.mxu0 0.0
        %3552 = vmatpush1.xpose.msra.mxu0 0.0
        %3553 = vmatprep.subr.mxu0 0.0
        %3554 = vmatpush1.xpose.msra.mxu0 0.0
        %3555 = vmatprep.subr.mxu0 0.0
        %3556 = vmatpush1.xpose.msra.mxu0 0.0
        %3557 = vmatprep.subr.mxu0 0.0
        %3558 = vmatpush1.xpose.msra.mxu0 0.0
        %3559 = vmatprep.subr.mxu0 0.0
        %3560 = vmatpush1.xpose.msra.mxu0 0.0
        %3561 = vmatprep.subr.mxu0 0.0
        %3562 = vmatpush1.xpose.msra.mxu0 0.0
        %3563 = vmatprep.subr.mxu0 0.0
        %3564 = vmatpush1.xpose.msra.mxu0 0.0
        %3565 = vmatprep.subr.mxu0 0.0
        %3566 = vmatpush1.xpose.msra.mxu0 0.0
        %3567 = vmatprep.subr.mxu0 0.0
        %3568 = vmatpush1.xpose.msra.mxu0 %v3539
        %3569 = vmatprep.subr.mxu0 0.0
        %3570 = vmatpush1.xpose.msra.mxu0 %v3537
        %3571 = vmatprep.subr.mxu0 0.0
        %3572 = vmatpush1.xpose.msra.mxu0 %v3535
        %3573 = vmatprep.subr.mxu0 0.0
        %3574 = vmatpush2.xpose.msra.mxu0 0.0
        %3575 = vmatprep.subr.mxu0 0.0
        %3576 = vmatpush2.xpose.msra.mxu0 0.0
        %3577 = vmatprep.subr.mxu0 0.0
        %3578 = vmatpush2.xpose.msra.mxu0 0.0
        %3579 = vmatprep.subr.mxu0 0.0
        %3580 = vmatpush2.xpose.msra.mxu0 0.0
        %3581 = vmatprep.subr.mxu0 0.0
        %3582 = vmatpush2.xpose.msra.mxu0 0.0
        %3583 = vmatprep.subr.mxu0 0.0
        %3584 = vmatpush2.xpose.msra.mxu0 0.0
        %3585 = vmatprep.subr.mxu0 0.0
        %3586 = vmatpush2.xpose.msra.mxu0 0.0
        %3587 = vmatprep.subr.mxu0 0.0
        %3588 = vmatpush2.xpose.msra.mxu0 0.0
        %3589 = vmatprep.subr.mxu0 0.0
        %3590 = vmatpush2.xpose.msra.mxu0 0.0
        %3591 = vmatprep.subr.mxu0 0.0
        %3592 = vmatpush2.xpose.msra.mxu0 0.0
        %3593 = vmatprep.subr.mxu0 0.0
        %3594 = vmatpush2.xpose.msra.mxu0 0.0
        %3595 = vmatprep.subr.mxu0 0.0
        %3596 = vmatpush2.xpose.msra.mxu0 0.0
        %3597 = vmatprep.subr.mxu0 0.0
        %3598 = vmatpush2.xpose.msra.mxu0 0.0
        %3599 = vmatprep.subr.mxu0 0.0
        %3600 = vmatpush2.xpose.msra.mxu0 0.0
        %3601 = vmatprep.subr.mxu0 0.0
        %3602 = vmatpush2.xpose.msra.mxu0 0.0
        %3603 = vmatprep.subr.mxu0 0.0
        %3604 = vmatpush2.xpose.msra.mxu0 0.0
        %3605 = vmatprep.mubr.f32.mxu0 0.0
        %3606 = vmatmul.mubr.f32.gmra.mxu0 %v3531
        %v3607 = vpop.f32.mrf.mxu0
        %v3608 = vadd.f32 0.0, %v3607
        %v3609 = vpop.f32.mrf.mxu0
        %3610 = vmatprep.mubr.f32.mxu0 0.0
        %3611 = vmatmul.mubr.f32.gmra.mxu0 %v3533
        %v3612 = vpop.f32.mrf.mxu0
        %v3613 = vadd.f32 0.0, %v3612
        %v3614 = vpop.f32.mrf.mxu0
        %3615 = vdwg.mxu0
        %v3616 = vmul.f32 %v3608, 0.35355338
        %v3617 = vmul.f32 %v3613, 0.35355338
        %v3618 = vmul.f32 %v3616, %v2424
        %v3619 = vmul.f32 %v3617, %v2425
        %v3620 = vadd.f32 %v3618, %v2430
        %v3621 = vadd.f32 %v3619, %v2431
        %v3622 = vsel %vm2533, %v3620, -inf
        %3623 = vmax.xlane.f32.xlu0 %v3622
        %v3624 = vpop.xlane.xlu0 %3623
        %v3625 = vsel %vm2533, %v3621, -inf
        %3626 = vmax.xlane.f32.xlu0 %v3625
        %v3627 = vpop.xlane.xlu0 %3626
        %v3628 = vsub.f32 %v3620, %v3624
        %v3629 = vsub.f32 %v3621, %v3627
        %v3630 = vmul.f32 %v3628, 1.442695
        %v3631 = vpow.pop %v3630
        %v3632 = vmul.f32 %v3629, 1.442695
        %v3633 = vpow.pop %v3632
        %v3634 = vsel %vm2533, %v3631, 0.0
        %3635 = vadd.xlane.f32.xlu0 %v3634
        %v3636 = vpop.xlane.xlu0 %3635
        %v3637 = vsel %vm2533, %v3633, 0.0
        %3638 = vadd.xlane.f32.xlu0 %v3637
        %v3639 = vpop.xlane.xlu0 %3638
        %v3640 = vrcp.pop %v3636
        %v3641 = vrcp.pop %v3639
        %v3642 = vmul.f32 %v3631, %v3640
        %v3643 = vmul.f32 %v3633, %v3641
        %v3644 = vmul.f32 %v3642, %v2558
        %v3645 = vmul.f32 %v3643, %v2558
        %v3646 = vmul.f32 %v3616, %v2426
        %v3647 = vmul.f32 %v3617, %v2427
        %v3648 = vadd.f32 %v3646, %v2432
        %v3649 = vadd.f32 %v3647, %v2433
        %v3650 = vsel %vm2533, %v3648, -inf
        %3651 = vmax.xlane.f32.xlu0 %v3650
        %v3652 = vpop.xlane.xlu0 %3651
        %v3653 = vsel %vm2533, %v3649, -inf
        %3654 = vmax.xlane.f32.xlu0 %v3653
        %v3655 = vpop.xlane.xlu0 %3654
        %v3656 = vsub.f32 %v3648, %v3652
        %v3657 = vsub.f32 %v3649, %v3655
        %v3658 = vmul.f32 %v3656, 1.442695
        %v3659 = vpow.pop %v3658
        %v3660 = vmul.f32 %v3657, 1.442695
        %v3661 = vpow.pop %v3660
        %v3662 = vsel %vm2533, %v3659, 0.0
        %3663 = vadd.xlane.f32.xlu0 %v3662
        %v3664 = vpop.xlane.xlu0 %3663
        %v3665 = vsel %vm2533, %v3661, 0.0
        %3666 = vadd.xlane.f32.xlu0 %v3665
        %v3667 = vpop.xlane.xlu0 %3666
        %v3668 = vrcp.pop %v3664
        %v3669 = vrcp.pop %v3667
        %v3670 = vmul.f32 %v3659, %v3668
        %v3671 = vmul.f32 %v3661, %v3669
        %v3672 = vmul.f32 %v3670, %v2591
        %v3673 = vmul.f32 %v3671, %v2591
        %v3674 = vadd.f32 %v3644, %v3672
        %v3675 = vadd.f32 %v3645, %v3673
        %v3676 = vmul.f32 %v3616, %v2428
        %v3677 = vmul.f32 %v3617, %v2429
        %v3678 = vadd.f32 %v3676, %v2434
        %v3679 = vadd.f32 %v3677, %v2435
        %v3680 = vsel %vm2533, %v3678, -inf
        %3681 = vmax.xlane.f32.xlu0 %v3680
        %v3682 = vpop.xlane.xlu0 %3681
        %v3683 = vsel %vm2533, %v3679, -inf
        %3684 = vmax.xlane.f32.xlu0 %v3683
        %v3685 = vpop.xlane.xlu0 %3684
        %v3686 = vsub.f32 %v3678, %v3682
        %v3687 = vsub.f32 %v3679, %v3685
        %v3688 = vmul.f32 %v3686, 1.442695
        %v3689 = vpow.pop %v3688
        %v3690 = vmul.f32 %v3687, 1.442695
        %v3691 = vpow.pop %v3690
        %v3692 = vsel %vm2533, %v3689, 0.0
        %3693 = vadd.xlane.f32.xlu0 %v3692
        %v3694 = vpop.xlane.xlu0 %3693
        %v3695 = vsel %vm2533, %v3691, 0.0
        %3696 = vadd.xlane.f32.xlu0 %v3695
        %v3697 = vpop.xlane.xlu0 %3696
        %v3698 = vrcp.pop %v3694
        %v3699 = vrcp.pop %v3697
        %v3700 = vmul.f32 %v3689, %v3698
        %v3701 = vmul.f32 %v3691, %v3699
        %v3702 = vmul.f32 %v3700, %v2626
        %v3703 = vmul.f32 %v3701, %v2626
        %v3704 = vadd.f32 %v3674, %v3702
        %v3705 = vadd.f32 %v3675, %v3703
        %3706 = vrot.lane.b32.xlu0 %v2411, 72
        %v3707 = vpop.permute.xlu0 %3706
        %3708 = vrot.lane.b32.xlu0 %v2416, 72
        %v3709 = vpop.permute.xlu0 %3708
        %3710 = vrot.lane.b32.xlu0 %v2421, 72
        %v3711 = vpop.permute.xlu0 %3710
        %v3715 = vsel %vm2533, %v3704, 0
        %v3718 = vsel %vm2533, %v3705, 0
        %v3720 = vsel %vm2646, %v3711, 0
        %3722 = vmatprep.subr.mxu0 0.0
        %3723 = vmatpush1.msra.mxu0 0.0
        %3724 = vmatprep.subr.mxu0 0.0
        %3725 = vmatpush1.msra.mxu0 0.0
        %3726 = vmatprep.subr.mxu0 0.0
        %3727 = vmatpush1.msra.mxu0 0.0
        %3728 = vmatprep.subr.mxu0 0.0
        %3729 = vmatpush1.msra.mxu0 0.0
        %3730 = vmatprep.subr.mxu0 0.0
        %3731 = vmatpush1.msra.mxu0 0.0
        %3732 = vmatprep.subr.mxu0 0.0
        %3733 = vmatpush1.msra.mxu0 0.0
        %3734 = vmatprep.subr.mxu0 0.0
        %3735 = vmatpush1.msra.mxu0 0.0
        %3736 = vmatprep.subr.mxu0 0.0
        %3737 = vmatpush1.msra.mxu0 0.0
        %3738 = vmatprep.subr.mxu0 0.0
        %3739 = vmatpush1.msra.mxu0 0.0
        %3740 = vmatprep.subr.mxu0 0.0
        %3741 = vmatpush1.msra.mxu0 0.0
        %3742 = vmatprep.subr.mxu0 0.0
        %3743 = vmatpush1.msra.mxu0 0.0
        %3744 = vmatprep.subr.mxu0 0.0
        %3745 = vmatpush1.msra.mxu0 0.0
        %3746 = vmatprep.subr.mxu0 0.0
        %3747 = vmatpush1.msra.mxu0 0.0
        %3748 = vmatprep.subr.mxu0 0.0
        %3749 = vmatpush1.msra.mxu0 %v3720
        %3750 = vmatprep.subr.mxu0 0.0
        %3751 = vmatpush1.msra.mxu0 %v3709
        %3752 = vmatprep.subr.mxu0 0.0
        %3753 = vmatpush1.msra.mxu0 %v3707
        %3754 = vmatprep.subr.mxu0 0.0
        %3755 = vmatpush2.msra.mxu0 0.0
        %3756 = vmatprep.subr.mxu0 0.0
        %3757 = vmatpush2.msra.mxu0 0.0
        %3758 = vmatprep.subr.mxu0 0.0
        %3759 = vmatpush2.msra.mxu0 0.0
        %3760 = vmatprep.subr.mxu0 0.0
        %3761 = vmatpush2.msra.mxu0 0.0
        %3762 = vmatprep.subr.mxu0 0.0
        %3763 = vmatpush2.msra.mxu0 0.0
        %3764 = vmatprep.subr.mxu0 0.0
        %3765 = vmatpush2.msra.mxu0 0.0
        %3766 = vmatprep.subr.mxu0 0.0
        %3767 = vmatpush2.msra.mxu0 0.0
        %3768 = vmatprep.subr.mxu0 0.0
        %3769 = vmatpush2.msra.mxu0 0.0
        %3770 = vmatprep.subr.mxu0 0.0
        %3771 = vmatpush2.msra.mxu0 0.0
        %3772 = vmatprep.subr.mxu0 0.0
        %3773 = vmatpush2.msra.mxu0 0.0
        %3774 = vmatprep.subr.mxu0 0.0
        %3775 = vmatpush2.msra.mxu0 0.0
        %3776 = vmatprep.subr.mxu0 0.0
        %3777 = vmatpush2.msra.mxu0 0.0
        %3778 = vmatprep.subr.mxu0 0.0
        %3779 = vmatpush2.msra.mxu0 0.0
        %3780 = vmatprep.subr.mxu0 0.0
        %3781 = vmatpush2.msra.mxu0 0.0
        %3782 = vmatprep.subr.mxu0 0.0
        %3783 = vmatpush2.msra.mxu0 0.0
        %3784 = vmatprep.subr.mxu0 0.0
        %3785 = vmatpush2.msra.mxu0 0.0
        %3786 = vmatprep.mubr.f32.mxu0 0.0
        %3787 = vmatmul.mubr.f32.gmra.mxu0 %v3715
        %v3788 = vpop.f32.mrf.mxu0
        %v3789 = vadd.f32 0.0, %v3788
        %v3790 = vpop.f32.mrf.mxu0
        %3791 = vmatprep.mubr.f32.mxu0 0.0
        %3792 = vmatmul.mubr.f32.gmra.mxu0 %v3718
        %v3793 = vpop.f32.mrf.mxu0
        %v3794 = vadd.f32 0.0, %v3793
        %v3795 = vpop.f32.mrf.mxu0
        %3796 = vdwg.mxu0
        %v3798 = vsel %vm2436, %v3789, 0
        %v3801 = vsel %vm2436, %v3794, 0
        %3803 = vmatprep.subr.mxu0 0.0
        %3804 = vmatpush1.msra.mxu0 0.0
        %3805 = vmatprep.subr.mxu0 0.0
        %3806 = vmatpush1.msra.mxu0 0.0
        %3807 = vmatprep.subr.mxu0 0.0
        %3808 = vmatpush1.msra.mxu0 0.0
        %3809 = vmatprep.subr.mxu0 0.0
        %3810 = vmatpush1.msra.mxu0 0.0
        %3811 = vmatprep.subr.mxu0 0.0
        %3812 = vmatpush1.msra.mxu0 0.0
        %3813 = vmatprep.subr.mxu0 0.0
        %3814 = vmatpush1.msra.mxu0 0.0
        %3815 = vmatprep.subr.mxu0 0.0
        %3816 = vmatpush1.msra.mxu0 0.0
        %3817 = vmatprep.subr.mxu0 0.0
        %3818 = vmatpush1.msra.mxu0 0.0
        %3819 = vmatprep.subr.mxu0 0.0
        %3820 = vmatpush1.msra.mxu0 0.0
        %3821 = vmatprep.subr.mxu0 0.0
        %3822 = vmatpush1.msra.mxu0 0.0
        %3823 = vmatprep.subr.mxu0 0.0
        %3824 = vmatpush1.msra.mxu0 0.0
        %3825 = vmatprep.subr.mxu0 0.0
        %3826 = vmatpush1.msra.mxu0 0.0
        %3827 = vmatprep.subr.mxu0 0.0
        %3828 = vmatpush1.msra.mxu0 0.0
        %3829 = vmatprep.subr.mxu0 0.0
        %3830 = vmatpush1.msra.mxu0 0.0
        %3831 = vmatprep.subr.mxu0 0.0
        %3832 = vmatpush1.msra.mxu0 0.0
        %3833 = vmatprep.subr.mxu0 0.0
        %3834 = vmatpush1.msra.mxu0 %v2058
        %3835 = vmatprep.subr.mxu0 0.0
        %3836 = vmatpush2.msra.mxu0 0.0
        %3837 = vmatprep.subr.mxu0 0.0
        %3838 = vmatpush2.msra.mxu0 0.0
        %3839 = vmatprep.subr.mxu0 0.0
        %3840 = vmatpush2.msra.mxu0 0.0
        %3841 = vmatprep.subr.mxu0 0.0
        %3842 = vmatpush2.msra.mxu0 0.0
        %3843 = vmatprep.subr.mxu0 0.0
        %3844 = vmatpush2.msra.mxu0 0.0
        %3845 = vmatprep.subr.mxu0 0.0
        %3846 = vmatpush2.msra.mxu0 0.0
        %3847 = vmatprep.subr.mxu0 0.0
        %3848 = vmatpush2.msra.mxu0 0.0
        %3849 = vmatprep.subr.mxu0 0.0
        %3850 = vmatpush2.msra.mxu0 0.0
        %3851 = vmatprep.subr.mxu0 0.0
        %3852 = vmatpush2.msra.mxu0 0.0
        %3853 = vmatprep.subr.mxu0 0.0
        %3854 = vmatpush2.msra.mxu0 0.0
        %3855 = vmatprep.subr.mxu0 0.0
        %3856 = vmatpush2.msra.mxu0 0.0
        %3857 = vmatprep.subr.mxu0 0.0
        %3858 = vmatpush2.msra.mxu0 0.0
        %3859 = vmatprep.subr.mxu0 0.0
        %3860 = vmatpush2.msra.mxu0 0.0
        %3861 = vmatprep.subr.mxu0 0.0
        %3862 = vmatpush2.msra.mxu0 0.0
        %3863 = vmatprep.subr.mxu0 0.0
        %3864 = vmatpush2.msra.mxu0 0.0
        %3865 = vmatprep.subr.mxu0 0.0
        %3866 = vmatpush2.msra.mxu0 0.0
        %3867 = vmatprep.mubr.f32.mxu0 0.0
        %3868 = vmatmul.mubr.f32.gmra.mxu0 %v3798
        %v3869 = vpop.f32.mrf.mxu0
        %v3870 = vadd.f32 0.0, %v3869
        %v3871 = vpop.f32.mrf.mxu0
        %3872 = vmatprep.mubr.f32.mxu0 0.0
        %3873 = vmatmul.mubr.f32.gmra.mxu0 %v3801
        %v3874 = vpop.f32.mrf.mxu0
        %v3875 = vadd.f32 0.0, %v3874
        %v3876 = vpop.f32.mrf.mxu0
        %3877 = vdwg.mxu0
        %v3878 = vadd.f32 %v3519, %v3870
        %v3879 = vadd.f32 %v3520, %v3875
        %v3881 = vlaneseq
        %v3882 = vshrl.u32 %v3881, 7
        %v3883 = vsub.s32 0, %v3882
        %v3884 = vrot.slane %v2059, %v3883
        %v3886 = vadd.f32 %v3878, %v3884
        %v3887 = vadd.f32 %v3879, %v3884
        %v3888 = vadd.f32 %v2030, %v3886
        %v3889 = vadd.f32 %v2031, %v3887
        %v3890 = vsel %vm2067, %v3888, 0.0
        %3891 = vadd.xlane.f32.xlu0 %v3890
        %v3892 = vpop.xlane.xlu0 %3891
        %v3893 = vsel %vm2067, %v3889, 0.0
        %3894 = vadd.xlane.f32.xlu0 %v3893
        %v3895 = vpop.xlane.xlu0 %3894
        %v3896 = vrcp.pop 32.0
        %v3897 = vmul.f32 %v3892, %v3896
        %v3898 = vmul.f32 %v3895, %v3896
        %v3899 = vsub.f32 %v3888, %v3897
        %v3900 = vsub.f32 %v3889, %v3898
        %v3901 = vmul.f32 %v3899, %v3899
        %v3902 = vmul.f32 %v3900, %v3900
        %v3903 = vsel %vm2067, %v3901, 0.0
        %3904 = vadd.xlane.f32.xlu0 %v3903
        %v3905 = vpop.xlane.xlu0 %3904
        %v3906 = vsel %vm2067, %v3902, 0.0
        %3907 = vadd.xlane.f32.xlu0 %v3906
        %v3908 = vpop.xlane.xlu0 %3907
        %v3909 = vrcp.pop 31.0
        %v3910 = vmul.f32 %v3905, %v3909
        %v3911 = vmul.f32 %v3908, %v3909
        %v3912 = vrsqrt.pop %v3910
        %v3913 = vmul.f32 %v3910, %v3912
        %vm3914 = vcmp.eq.f32.partialorder %v3910, inf
        %v3915 = vsel %vm3914, %v3910, %v3913
        %vm3916 = vcmp.eq.f32.partialorder %v3910, 0.0
        %v3917 = vand.u32 %v3910, 2147483648
        %v3918 = vsel %vm3916, %v3917, %v3915
        %v3919 = vrsqrt.pop %v3911
        %v3920 = vmul.f32 %v3911, %v3919
        %vm3921 = vcmp.eq.f32.partialorder %v3911, inf
        %v3922 = vsel %vm3921, %v3911, %v3920
        %vm3923 = vcmp.eq.f32.partialorder %v3911, 0.0
        %v3924 = vand.u32 %v3911, 2147483648
        %v3925 = vsel %vm3923, %v3924, %v3922
        %v3926 = vadd.f32 %v3918, 1e-06
        %v3927 = vadd.f32 %v3925, 1e-06
        %v3928 = vrcp.pop %v3926
        %v3929 = vmul.f32 1.0, %v3928
        %v3930 = vrcp.pop %v3927
        %v3931 = vmul.f32 1.0, %v3930
        %v3932 = vlaneseq
        %v3933 = vshrl.u32 %v3932, 7
        %v3934 = vsub.s32 0, %v3933
        %v3935 = vrot.slane %v2035, %v3934
        %v3936 = vmul.f32 %v3935, %v3899
        %v3937 = vmul.f32 %v3935, %v3900
        %v3938 = vmul.f32 %v3936, %v3929
        %v3939 = vmul.f32 %v3937, %v3931
        %v3940 = vlaneseq
        %v3941 = vshrl.u32 %v3940, 7
        %v3942 = vsub.s32 0, %v3941
        %v3943 = vrot.slane %v2036, %v3942
        %v3944 = vadd.f32 %v3938, %v3943
        %v3945 = vadd.f32 %v3939, %v3943
        %v3946 = vld [vmem:[%s1575] sm:$0xff]
        %v3947 = vld [vmem:[%s1575 + $0x8] sm:$0xff]
        %v3948 = vld [vmem:[%s1575 + $0x10] sm:$0xf]
        %s3949 = scalar_lea.vmem %s1575, 24 [#allocation4]
        %v3950 = vld [vmem:[%s3949] sm:$0xff]
        %v3951 = vld [vmem:[%s3949 + $0x8] sm:$0xff]
        %v3952 = vld [vmem:[%s3949 + $0x10] sm:$0xf]
        %s3953 = scalar_lea.vmem %s1575, 48 [#allocation4]
        %v3954 = vld [vmem:[%s3953] sm:$0xff]
        %v3955 = vld [vmem:[%s3953 + $0x8] sm:$0xff]
        %v3956 = vld [vmem:[%s3953 + $0x10] sm:$0xf]
        %v3957 = vld [vmem:[%s1968] sm:$0xff]
        %v3958 = vld [vmem:[%s1968 + $0x8] sm:$0xff]
        %v3959 = vld [vmem:[%s1968 + $0x10] sm:$0xff]
        %v3960 = vld [vmem:[%s1968 + $0x18] sm:$0xff]
        %v3961 = vld [vmem:[%s1614] sm:$0x1]
        %v3962 = vld [vmem:[%s1973] sm:$0xff]
        %v3963 = vld [vmem:[%s1973 + $0x8] sm:$0xff]
        %v3964 = vld [vmem:[%s1973 + $0x10] sm:$0xff]
        %v3965 = vld [vmem:[%s1973 + $0x18] sm:$0xff]
        %v3966 = vld [vmem:[%s1622] sm:$0x1]
        %v3967 = vld [vmem:[%s1978] sm:$0xff]
        %v3968 = vld [vmem:[%s1978 + $0x8] sm:$0xff]
        %v3969 = vld [vmem:[%s1978 + $0x10] sm:$0xff]
        %v3970 = vld [vmem:[%s1978 + $0x18] sm:$0xff]
        %v3971 = vld [vmem:[%s1630] sm:$0x1]
        %v3972 = vld [vmem:[%s1983] sm:$0xff]
        %v3973 = vld [vmem:[%s1983 + $0x8] sm:$0xff]
        %v3974 = vld [vmem:[%s1983 + $0x10] sm:$0xff]
        %v3975 = vld [vmem:[%s1983 + $0x18] sm:$0xff]
        %v3976 = vld [vmem:[%s1988] sm:$0xff]
        %v3977 = vld [vmem:[%s1988 + $0x8] sm:$0xff]
        %v3978 = vld [vmem:[%s1638] sm:$0x1]
        %v3979 = vsel %vm2067, %v3944, 0.0
        %v3980 = vsel %vm2067, %v3945, 0.0
        %v3981 = vadd.f32 %v3979, %v3980
        %v3982 = vrot.slane %v3981, 4
        %v3983 = vadd.f32 %v3981, %v3982
        %v3984 = vrot.slane %v3983, 2
        %v3985 = vadd.f32 %v3983, %v3984
        %v3986 = vrot.slane %v3985, 1
        %v3987 = vadd.f32 %v3985, %v3986
        %v3988 = vrcp.pop 16.0
        %v3989 = vmul.f32 %v3987, %v3988
        %v3991 = vsel %vm2067, %v3989, 0
        %3993 = vmatprep.subr.mxu0 0.0
        %3994 = vmatpush1.msra.mxu0 0.0
        %3995 = vmatprep.subr.mxu0 0.0
        %3996 = vmatpush1.msra.mxu0 0.0
        %3997 = vmatprep.subr.mxu0 0.0
        %3998 = vmatpush1.msra.mxu0 0.0
        %3999 = vmatprep.subr.mxu0 0.0
        %4000 = vmatpush1.msra.mxu0 0.0
        %4001 = vmatprep.subr.mxu0 0.0
        %4002 = vmatpush1.msra.mxu0 0.0
        %4003 = vmatprep.subr.mxu0 0.0
        %4004 = vmatpush1.msra.mxu0 0.0
        %4005 = vmatprep.subr.mxu0 0.0
        %4006 = vmatpush1.msra.mxu0 0.0
        %4007 = vmatprep.subr.mxu0 0.0
        %4008 = vmatpush1.msra.mxu0 0.0
        %4009 = vmatprep.subr.mxu0 0.0
        %4010 = vmatpush1.msra.mxu0 0.0
        %4011 = vmatprep.subr.mxu0 0.0
        %4012 = vmatpush1.msra.mxu0 0.0
        %4013 = vmatprep.subr.mxu0 0.0
        %4014 = vmatpush1.msra.mxu0 0.0
        %4015 = vmatprep.subr.mxu0 0.0
        %4016 = vmatpush1.msra.mxu0 0.0
        %4017 = vmatprep.subr.mxu0 0.0
        %4018 = vmatpush1.msra.mxu0 %v3975
        %4019 = vmatprep.subr.mxu0 0.0
        %4020 = vmatpush1.msra.mxu0 %v3974
        %4021 = vmatprep.subr.mxu0 0.0
        %4022 = vmatpush1.msra.mxu0 %v3973
        %4023 = vmatprep.subr.mxu0 0.0
        %4024 = vmatpush1.msra.mxu0 %v3972
        %4025 = vmatprep.subr.mxu0 0.0
        %4026 = vmatpush2.msra.mxu0 0.0
        %4027 = vmatprep.subr.mxu0 0.0
        %4028 = vmatpush2.msra.mxu0 0.0
        %4029 = vmatprep.subr.mxu0 0.0
        %4030 = vmatpush2.msra.mxu0 0.0
        %4031 = vmatprep.subr.mxu0 0.0
        %4032 = vmatpush2.msra.mxu0 0.0
        %4033 = vmatprep.subr.mxu0 0.0
        %4034 = vmatpush2.msra.mxu0 0.0
        %4035 = vmatprep.subr.mxu0 0.0
        %4036 = vmatpush2.msra.mxu0 0.0
        %4037 = vmatprep.subr.mxu0 0.0
        %4038 = vmatpush2.msra.mxu0 0.0
        %4039 = vmatprep.subr.mxu0 0.0
        %4040 = vmatpush2.msra.mxu0 0.0
        %4041 = vmatprep.subr.mxu0 0.0
        %4042 = vmatpush2.msra.mxu0 0.0
        %4043 = vmatprep.subr.mxu0 0.0
        %4044 = vmatpush2.msra.mxu0 0.0
        %4045 = vmatprep.subr.mxu0 0.0
        %4046 = vmatpush2.msra.mxu0 0.0
        %4047 = vmatprep.subr.mxu0 0.0
        %4048 = vmatpush2.msra.mxu0 0.0
        %4049 = vmatprep.subr.mxu0 0.0
        %4050 = vmatpush2.msra.mxu0 0.0
        %4051 = vmatprep.subr.mxu0 0.0
        %4052 = vmatpush2.msra.mxu0 0.0
        %4053 = vmatprep.subr.mxu0 0.0
        %4054 = vmatpush2.msra.mxu0 0.0
        %4055 = vmatprep.subr.mxu0 0.0
        %4056 = vmatpush2.msra.mxu0 0.0
        %4057 = vmatprep.mubr.f32.mxu0 0.0
        %4058 = vmatmul.mubr.f32.gmra.mxu0 %v3991
        %v4059 = vpop.f32.mrf.mxu0
        %v4060 = vadd.f32 0.0, %v4059
        %v4061 = vpop.f32.mrf.mxu0
        %4062 = vdwg.mxu0
        %v4063 = vmax.f32 %v4060, 0.0
        %v4065 = vsel %vm2156, %v4063, 0
        %4067 = vmatprep.subr.mxu0 0.0
        %4068 = vmatpush1.msra.mxu0 0.0
        %4069 = vmatprep.subr.mxu0 0.0
        %4070 = vmatpush1.msra.mxu0 0.0
        %4071 = vmatprep.subr.mxu0 0.0
        %4072 = vmatpush1.msra.mxu0 0.0
        %4073 = vmatprep.subr.mxu0 0.0
        %4074 = vmatpush1.msra.mxu0 0.0
        %4075 = vmatprep.subr.mxu0 0.0
        %4076 = vmatpush1.msra.mxu0 0.0
        %4077 = vmatprep.subr.mxu0 0.0
        %4078 = vmatpush1.msra.mxu0 0.0
        %4079 = vmatprep.subr.mxu0 0.0
        %4080 = vmatpush1.msra.mxu0 0.0
        %4081 = vmatprep.subr.mxu0 0.0
        %4082 = vmatpush1.msra.mxu0 0.0
        %4083 = vmatprep.subr.mxu0 0.0
        %4084 = vmatpush1.msra.mxu0 0.0
        %4085 = vmatprep.subr.mxu0 0.0
        %4086 = vmatpush1.msra.mxu0 0.0
        %4087 = vmatprep.subr.mxu0 0.0
        %4088 = vmatpush1.msra.mxu0 0.0
        %4089 = vmatprep.subr.mxu0 0.0
        %4090 = vmatpush1.msra.mxu0 0.0
        %4091 = vmatprep.subr.mxu0 0.0
        %4092 = vmatpush1.msra.mxu0 0.0
        %4093 = vmatprep.subr.mxu0 0.0
        %4094 = vmatpush1.msra.mxu0 0.0
        %4095 = vmatprep.subr.mxu0 0.0
        %4096 = vmatpush1.msra.mxu0 %v3977
        %4097 = vmatprep.subr.mxu0 0.0
        %4098 = vmatpush1.msra.mxu0 %v3976
        %4099 = vmatprep.subr.mxu0 0.0
        %4100 = vmatpush2.msra.mxu0 0.0
        %4101 = vmatprep.subr.mxu0 0.0
        %4102 = vmatpush2.msra.mxu0 0.0
        %4103 = vmatprep.subr.mxu0 0.0
        %4104 = vmatpush2.msra.mxu0 0.0
        %4105 = vmatprep.subr.mxu0 0.0
        %4106 = vmatpush2.msra.mxu0 0.0
        %4107 = vmatprep.subr.mxu0 0.0
        %4108 = vmatpush2.msra.mxu0 0.0
        %4109 = vmatprep.subr.mxu0 0.0
        %4110 = vmatpush2.msra.mxu0 0.0
        %4111 = vmatprep.subr.mxu0 0.0
        %4112 = vmatpush2.msra.mxu0 0.0
        %4113 = vmatprep.subr.mxu0 0.0
        %4114 = vmatpush2.msra.mxu0 0.0
        %4115 = vmatprep.subr.mxu0 0.0
        %4116 = vmatpush2.msra.mxu0 0.0
        %4117 = vmatprep.subr.mxu0 0.0
        %4118 = vmatpush2.msra.mxu0 0.0
        %4119 = vmatprep.subr.mxu0 0.0
        %4120 = vmatpush2.msra.mxu0 0.0
        %4121 = vmatprep.subr.mxu0 0.0
        %4122 = vmatpush2.msra.mxu0 0.0
        %4123 = vmatprep.subr.mxu0 0.0
        %4124 = vmatpush2.msra.mxu0 0.0
        %4125 = vmatprep.subr.mxu0 0.0
        %4126 = vmatpush2.msra.mxu0 0.0
        %4127 = vmatprep.subr.mxu0 0.0
        %4128 = vmatpush2.msra.mxu0 0.0
        %4129 = vmatprep.subr.mxu0 0.0
        %4130 = vmatpush2.msra.mxu0 0.0
        %4131 = vmatprep.mubr.f32.mxu0 0.0
        %4132 = vmatmul.mubr.f32.gmra.mxu0 %v4065
        %v4133 = vpop.f32.mrf.mxu0
        %v4134 = vadd.f32 %v3978, %v4133
        %v4135 = vpop.f32.mrf.mxu0
        %4136 = vdwg.mxu0
        %v4137 = vsel %vm2230, %v4134, -inf
        %4138 = vmax.xlane.f32.xlu0 %v4137
        %v4139 = vpop.xlane.xlu0 %4138
        %v4140 = vsub.f32 %v4134, %v4139
        %v4141 = vmul.f32 %v4140, 1.442695
        %v4142 = vpow.pop %v4141
        %v4143 = vsel %vm2230, %v4142, 0.0
        %4144 = vadd.xlane.f32.xlu0 %v4143
        %v4145 = vpop.xlane.xlu0 %4144
        %v4146 = vrcp.pop %v4145
        %v4147 = vmul.f32 %v4142, %v4146
        %v4149 = vlaneseq
        %v4150 = vshrl.u32 %v4149, 7
        %v4151 = vsub.s32 0, %v4150
        %v4152 = vrot.slane %v3961, %v4151
        %4154 = vmatprep.subr.mxu0 0.0
        %4155 = vmatpush1.msra.mxu0 0.0
        %4156 = vmatprep.subr.mxu0 0.0
        %4157 = vmatpush1.msra.mxu0 0.0
        %4158 = vmatprep.subr.mxu0 0.0
        %4159 = vmatpush1.msra.mxu0 0.0
        %4160 = vmatprep.subr.mxu0 0.0
        %4161 = vmatpush1.msra.mxu0 0.0
        %4162 = vmatprep.subr.mxu0 0.0
        %4163 = vmatpush1.msra.mxu0 0.0
        %4164 = vmatprep.subr.mxu0 0.0
        %4165 = vmatpush1.msra.mxu0 0.0
        %4166 = vmatprep.subr.mxu0 0.0
        %4167 = vmatpush1.msra.mxu0 0.0
        %4168 = vmatprep.subr.mxu0 0.0
        %4169 = vmatpush1.msra.mxu0 0.0
        %4170 = vmatprep.subr.mxu0 0.0
        %4171 = vmatpush1.msra.mxu0 0.0
        %4172 = vmatprep.subr.mxu0 0.0
        %4173 = vmatpush1.msra.mxu0 0.0
        %4174 = vmatprep.subr.mxu0 0.0
        %4175 = vmatpush1.msra.mxu0 0.0
        %4176 = vmatprep.subr.mxu0 0.0
        %4177 = vmatpush1.msra.mxu0 0.0
        %4178 = vmatprep.subr.mxu0 0.0
        %4179 = vmatpush1.msra.mxu0 %v3960
        %4180 = vmatprep.subr.mxu0 0.0
        %4181 = vmatpush1.msra.mxu0 %v3959
        %4182 = vmatprep.subr.mxu0 0.0
        %4183 = vmatpush1.msra.mxu0 %v3958
        %4184 = vmatprep.subr.mxu0 0.0
        %4185 = vmatpush1.msra.mxu0 %v3957
        %4186 = vmatprep.subr.mxu0 0.0
        %4187 = vmatpush2.msra.mxu0 0.0
        %4188 = vmatprep.subr.mxu0 0.0
        %4189 = vmatpush2.msra.mxu0 0.0
        %4190 = vmatprep.subr.mxu0 0.0
        %4191 = vmatpush2.msra.mxu0 0.0
        %4192 = vmatprep.subr.mxu0 0.0
        %4193 = vmatpush2.msra.mxu0 0.0
        %4194 = vmatprep.subr.mxu0 0.0
        %4195 = vmatpush2.msra.mxu0 0.0
        %4196 = vmatprep.subr.mxu0 0.0
        %4197 = vmatpush2.msra.mxu0 0.0
        %4198 = vmatprep.subr.mxu0 0.0
        %4199 = vmatpush2.msra.mxu0 0.0
        %4200 = vmatprep.subr.mxu0 0.0
        %4201 = vmatpush2.msra.mxu0 0.0
        %4202 = vmatprep.subr.mxu0 0.0
        %4203 = vmatpush2.msra.mxu0 0.0
        %4204 = vmatprep.subr.mxu0 0.0
        %4205 = vmatpush2.msra.mxu0 0.0
        %4206 = vmatprep.subr.mxu0 0.0
        %4207 = vmatpush2.msra.mxu0 0.0
        %4208 = vmatprep.subr.mxu0 0.0
        %4209 = vmatpush2.msra.mxu0 0.0
        %4210 = vmatprep.subr.mxu0 0.0
        %4211 = vmatpush2.msra.mxu0 0.0
        %4212 = vmatprep.subr.mxu0 0.0
        %4213 = vmatpush2.msra.mxu0 0.0
        %4214 = vmatprep.subr.mxu0 0.0
        %4215 = vmatpush2.msra.mxu0 0.0
        %4216 = vmatprep.subr.mxu0 0.0
        %4217 = vmatpush2.msra.mxu0 0.0
        %4218 = vmatprep.mubr.f32.mxu0 0.0
        %4219 = vmatmul.mubr.f32.gmra.mxu0 %v2336
        %v4220 = vpop.f32.mrf.mxu0
        %v4221 = vadd.f32 %v4152, %v4220
        %v4222 = vpop.f32.mrf.mxu0
        %4223 = vmatprep.mubr.f32.mxu0 0.0
        %4224 = vmatmul.mubr.f32.gmra.mxu0 %v2339
        %v4225 = vpop.f32.mrf.mxu0
        %v4226 = vadd.f32 %v4152, %v4225
        %v4227 = vpop.f32.mrf.mxu0
        %4228 = vmatprep.mubr.f32.mxu0 0.0
        %4229 = vmatmul.mubr.f32.gmra.mxu0 %v2342
        %v4230 = vpop.f32.mrf.mxu0
        %v4231 = vadd.f32 %v4152, %v4230
        %v4232 = vpop.f32.mrf.mxu0
        %4233 = vdwg.mxu0
        %v4235 = vlaneseq
        %v4236 = vshrl.u32 %v4235, 7
        %v4237 = vsub.s32 0, %v4236
        %v4238 = vrot.slane %v3966, %v4237
        %v4241 = vsel %vm2067, %v3944, 0
        %v4244 = vsel %vm2067, %v3945, 0
        %4246 = vmatprep.subr.mxu0 0.0
        %4247 = vmatpush1.msra.mxu0 0.0
        %4248 = vmatprep.subr.mxu0 0.0
        %4249 = vmatpush1.msra.mxu0 0.0
        %4250 = vmatprep.subr.mxu0 0.0
        %4251 = vmatpush1.msra.mxu0 0.0
        %4252 = vmatprep.subr.mxu0 0.0
        %4253 = vmatpush1.msra.mxu0 0.0
        %4254 = vmatprep.subr.mxu0 0.0
        %4255 = vmatpush1.msra.mxu0 0.0
        %4256 = vmatprep.subr.mxu0 0.0
        %4257 = vmatpush1.msra.mxu0 0.0
        %4258 = vmatprep.subr.mxu0 0.0
        %4259 = vmatpush1.msra.mxu0 0.0
        %4260 = vmatprep.subr.mxu0 0.0
        %4261 = vmatpush1.msra.mxu0 0.0
        %4262 = vmatprep.subr.mxu0 0.0
        %4263 = vmatpush1.msra.mxu0 0.0
        %4264 = vmatprep.subr.mxu0 0.0
        %4265 = vmatpush1.msra.mxu0 0.0
        %4266 = vmatprep.subr.mxu0 0.0
        %4267 = vmatpush1.msra.mxu0 0.0
        %4268 = vmatprep.subr.mxu0 0.0
        %4269 = vmatpush1.msra.mxu0 0.0
        %4270 = vmatprep.subr.mxu0 0.0
        %4271 = vmatpush1.msra.mxu0 %v3965
        %4272 = vmatprep.subr.mxu0 0.0
        %4273 = vmatpush1.msra.mxu0 %v3964
        %4274 = vmatprep.subr.mxu0 0.0
        %4275 = vmatpush1.msra.mxu0 %v3963
        %4276 = vmatprep.subr.mxu0 0.0
        %4277 = vmatpush1.msra.mxu0 %v3962
        %4278 = vmatprep.subr.mxu0 0.0
        %4279 = vmatpush2.msra.mxu0 0.0
        %4280 = vmatprep.subr.mxu0 0.0
        %4281 = vmatpush2.msra.mxu0 0.0
        %4282 = vmatprep.subr.mxu0 0.0
        %4283 = vmatpush2.msra.mxu0 0.0
        %4284 = vmatprep.subr.mxu0 0.0
        %4285 = vmatpush2.msra.mxu0 0.0
        %4286 = vmatprep.subr.mxu0 0.0
        %4287 = vmatpush2.msra.mxu0 0.0
        %4288 = vmatprep.subr.mxu0 0.0
        %4289 = vmatpush2.msra.mxu0 0.0
        %4290 = vmatprep.subr.mxu0 0.0
        %4291 = vmatpush2.msra.mxu0 0.0
        %4292 = vmatprep.subr.mxu0 0.0
        %4293 = vmatpush2.msra.mxu0 0.0
        %4294 = vmatprep.subr.mxu0 0.0
        %4295 = vmatpush2.msra.mxu0 0.0
        %4296 = vmatprep.subr.mxu0 0.0
        %4297 = vmatpush2.msra.mxu0 0.0
        %4298 = vmatprep.subr.mxu0 0.0
        %4299 = vmatpush2.msra.mxu0 0.0
        %4300 = vmatprep.subr.mxu0 0.0
        %4301 = vmatpush2.msra.mxu0 0.0
        %4302 = vmatprep.subr.mxu0 0.0
        %4303 = vmatpush2.msra.mxu0 0.0
        %4304 = vmatprep.subr.mxu0 0.0
        %4305 = vmatpush2.msra.mxu0 0.0
        %4306 = vmatprep.subr.mxu0 0.0
        %4307 = vmatpush2.msra.mxu0 0.0
        %4308 = vmatprep.subr.mxu0 0.0
        %4309 = vmatpush2.msra.mxu0 0.0
        %4310 = vmatprep.mubr.f32.mxu0 0.0
        %4311 = vmatmul.mubr.f32.gmra.mxu0 %v4241
        %v4312 = vpop.f32.mrf.mxu0
        %v4313 = vadd.f32 %v4238, %v4312
        %v4314 = vpop.f32.mrf.mxu0
        %4315 = vmatprep.mubr.f32.mxu0 0.0
        %4316 = vmatmul.mubr.f32.gmra.mxu0 %v4244
        %v4317 = vpop.f32.mrf.mxu0
        %v4318 = vadd.f32 %v4238, %v4317
        %v4319 = vpop.f32.mrf.mxu0
        %4320 = vdwg.mxu0
        %v4321 = vsub.f32 1.0, %v3946
        %v4322 = vsub.f32 1.0, %v3947
        %v4323 = vsub.f32 1.0, %v3948
        %v4324 = vsub.f32 1.0, %v3950
        %v4325 = vsub.f32 1.0, %v3951
        %v4326 = vsub.f32 1.0, %v3952
        %v4327 = vsub.f32 1.0, %v3954
        %v4328 = vsub.f32 1.0, %v3955
        %v4329 = vsub.f32 1.0, %v3956
        %v4330 = vmul.f32 %v3946, -1e+09
        %v4331 = vmul.f32 %v3947, -1e+09
        %v4332 = vmul.f32 %v3948, -1e+09
        %v4333 = vmul.f32 %v3950, -1e+09
        %v4334 = vmul.f32 %v3951, -1e+09
        %v4335 = vmul.f32 %v3952, -1e+09
        %v4336 = vmul.f32 %v3954, -1e+09
        %v4337 = vmul.f32 %v3955, -1e+09
        %v4338 = vmul.f32 %v3956, -1e+09
        %v4340 = vsel %vm2436, %v4221, 0
        %v4343 = vsel %vm2436, %v4226, 0
        %v4346 = vsel %vm2436, %v4231, 0
        %v4349 = vsel %vm2436, %v4313, 0
        %v4352 = vsel %vm2436, %v4318, 0
        %4354 = vmatprep.subr.mxu0 0.0
        %4355 = vmatpush1.xpose.msra.mxu0 0.0
        %4356 = vmatprep.subr.mxu0 0.0
        %4357 = vmatpush1.xpose.msra.mxu0 0.0
        %4358 = vmatprep.subr.mxu0 0.0
        %4359 = vmatpush1.xpose.msra.mxu0 0.0
        %4360 = vmatprep.subr.mxu0 0.0
        %4361 = vmatpush1.xpose.msra.mxu0 0.0
        %4362 = vmatprep.subr.mxu0 0.0
        %4363 = vmatpush1.xpose.msra.mxu0 0.0
        %4364 = vmatprep.subr.mxu0 0.0
        %4365 = vmatpush1.xpose.msra.mxu0 0.0
        %4366 = vmatprep.subr.mxu0 0.0
        %4367 = vmatpush1.xpose.msra.mxu0 0.0
        %4368 = vmatprep.subr.mxu0 0.0
        %4369 = vmatpush1.xpose.msra.mxu0 0.0
        %4370 = vmatprep.subr.mxu0 0.0
        %4371 = vmatpush1.xpose.msra.mxu0 0.0
        %4372 = vmatprep.subr.mxu0 0.0
        %4373 = vmatpush1.xpose.msra.mxu0 0.0
        %4374 = vmatprep.subr.mxu0 0.0
        %4375 = vmatpush1.xpose.msra.mxu0 0.0
        %4376 = vmatprep.subr.mxu0 0.0
        %4377 = vmatpush1.xpose.msra.mxu0 0.0
        %4378 = vmatprep.subr.mxu0 0.0
        %4379 = vmatpush1.xpose.msra.mxu0 0.0
        %4380 = vmatprep.subr.mxu0 0.0
        %4381 = vmatpush1.xpose.msra.mxu0 0.0
        %4382 = vmatprep.subr.mxu0 0.0
        %4383 = vmatpush1.xpose.msra.mxu0 %v4352
        %4384 = vmatprep.subr.mxu0 0.0
        %4385 = vmatpush1.xpose.msra.mxu0 %v4349
        %4386 = vmatprep.subr.mxu0 0.0
        %4387 = vmatpush2.xpose.msra.mxu0 0.0
        %4388 = vmatprep.subr.mxu0 0.0
        %4389 = vmatpush2.xpose.msra.mxu0 0.0
        %4390 = vmatprep.subr.mxu0 0.0
        %4391 = vmatpush2.xpose.msra.mxu0 0.0
        %4392 = vmatprep.subr.mxu0 0.0
        %4393 = vmatpush2.xpose.msra.mxu0 0.0
        %4394 = vmatprep.subr.mxu0 0.0
        %4395 = vmatpush2.xpose.msra.mxu0 0.0
        %4396 = vmatprep.subr.mxu0 0.0
        %4397 = vmatpush2.xpose.msra.mxu0 0.0
        %4398 = vmatprep.subr.mxu0 0.0
        %4399 = vmatpush2.xpose.msra.mxu0 0.0
        %4400 = vmatprep.subr.mxu0 0.0
        %4401 = vmatpush2.xpose.msra.mxu0 0.0
        %4402 = vmatprep.subr.mxu0 0.0
        %4403 = vmatpush2.xpose.msra.mxu0 0.0
        %4404 = vmatprep.subr.mxu0 0.0
        %4405 = vmatpush2.xpose.msra.mxu0 0.0
        %4406 = vmatprep.subr.mxu0 0.0
        %4407 = vmatpush2.xpose.msra.mxu0 0.0
        %4408 = vmatprep.subr.mxu0 0.0
        %4409 = vmatpush2.xpose.msra.mxu0 0.0
        %4410 = vmatprep.subr.mxu0 0.0
        %4411 = vmatpush2.xpose.msra.mxu0 0.0
        %4412 = vmatprep.subr.mxu0 0.0
        %4413 = vmatpush2.xpose.msra.mxu0 0.0
        %4414 = vmatprep.subr.mxu0 0.0
        %4415 = vmatpush2.xpose.msra.mxu0 0.0
        %4416 = vmatprep.subr.mxu0 0.0
        %4417 = vmatpush2.xpose.msra.mxu0 0.0
        %4418 = vmatprep.mubr.f32.mxu0 0.0
        %4419 = vmatmul.mubr.f32.gmra.mxu0 %v4340
        %v4420 = vpop.f32.mrf.mxu0
        %v4421 = vadd.f32 0.0, %v4420
        %v4422 = vpop.f32.mrf.mxu0
        %4423 = vmatprep.mubr.f32.mxu0 0.0
        %4424 = vmatmul.mubr.f32.gmra.mxu0 %v4343
        %v4425 = vpop.f32.mrf.mxu0
        %v4426 = vadd.f32 0.0, %v4425
        %v4427 = vpop.f32.mrf.mxu0
        %4428 = vmatprep.mubr.f32.mxu0 0.0
        %4429 = vmatmul.mubr.f32.gmra.mxu0 %v4346
        %v4430 = vpop.f32.mrf.mxu0
        %v4431 = vadd.f32 0.0, %v4430
        %v4432 = vpop.f32.mrf.mxu0
        %4433 = vdwg.mxu0
        %v4434 = vmul.f32 %v4421, 0.35355338
        %v4435 = vmul.f32 %v4426, 0.35355338
        %v4436 = vmul.f32 %v4431, 0.35355338
        %v4437 = vmul.f32 %v4434, %v4321
        %v4438 = vmul.f32 %v4435, %v4322
        %v4439 = vmul.f32 %v4436, %v4323
        %v4440 = vadd.f32 %v4437, %v4330
        %v4441 = vadd.f32 %v4438, %v4331
        %v4442 = vadd.f32 %v4439, %v4332
        %v4443 = vsel %vm2156, %v4440, -inf
        %4444 = vmax.xlane.f32.xlu0 %v4443
        %v4445 = vpop.xlane.xlu0 %4444
        %v4446 = vsel %vm2156, %v4441, -inf
        %4447 = vmax.xlane.f32.xlu0 %v4446
        %v4448 = vpop.xlane.xlu0 %4447
        %vm4449 = vcmask 125952
        %v4450 = vsel %vm4449, %v4442, -inf
        %4451 = vmax.xlane.f32.xlu0 %v4450
        %v4452 = vpop.xlane.xlu0 %4451
        %v4453 = vsub.f32 %v4440, %v4445
        %v4454 = vsub.f32 %v4441, %v4448
        %v4455 = vsub.f32 %v4442, %v4452
        %v4456 = vmul.f32 %v4453, 1.442695
        %v4457 = vpow.pop %v4456
        %v4458 = vmul.f32 %v4454, 1.442695
        %v4459 = vpow.pop %v4458
        %v4460 = vmul.f32 %v4455, 1.442695
        %v4461 = vpow.pop %v4460
        %v4462 = vsel %vm2156, %v4457, 0.0
        %4463 = vadd.xlane.f32.xlu0 %v4462
        %v4464 = vpop.xlane.xlu0 %4463
        %v4465 = vsel %vm2156, %v4459, 0.0
        %4466 = vadd.xlane.f32.xlu0 %v4465
        %v4467 = vpop.xlane.xlu0 %4466
        %v4468 = vsel %vm4449, %v4461, 0.0
        %4469 = vadd.xlane.f32.xlu0 %v4468
        %v4470 = vpop.xlane.xlu0 %4469
        %v4471 = vrcp.pop %v4464
        %v4472 = vrcp.pop %v4467
        %v4473 = vrcp.pop %v4470
        %v4474 = vmul.f32 %v4457, %v4471
        %v4475 = vmul.f32 %v4459, %v4472
        %v4476 = vmul.f32 %v4461, %v4473
        %s4478 = vtos %v4147
        %v4479 = vstv %s4478
        %v4481 = vmul.f32 %v4474, %v4479
        %v4482 = vmul.f32 %v4475, %v4479
        %v4483 = vmul.f32 %v4476, %v4479
        %v4484 = vmul.f32 %v4434, %v4324
        %v4485 = vmul.f32 %v4435, %v4325
        %v4486 = vmul.f32 %v4436, %v4326
        %v4487 = vadd.f32 %v4484, %v4333
        %v4488 = vadd.f32 %v4485, %v4334
        %v4489 = vadd.f32 %v4486, %v4335
        %v4490 = vsel %vm2156, %v4487, -inf
        %4491 = vmax.xlane.f32.xlu0 %v4490
        %v4492 = vpop.xlane.xlu0 %4491
        %v4493 = vsel %vm2156, %v4488, -inf
        %4494 = vmax.xlane.f32.xlu0 %v4493
        %v4495 = vpop.xlane.xlu0 %4494
        %v4496 = vsel %vm4449, %v4489, -inf
        %4497 = vmax.xlane.f32.xlu0 %v4496
        %v4498 = vpop.xlane.xlu0 %4497
        %v4499 = vsub.f32 %v4487, %v4492
        %v4500 = vsub.f32 %v4488, %v4495
        %v4501 = vsub.f32 %v4489, %v4498
        %v4502 = vmul.f32 %v4499, 1.442695
        %v4503 = vpow.pop %v4502
        %v4504 = vmul.f32 %v4500, 1.442695
        %v4505 = vpow.pop %v4504
        %v4506 = vmul.f32 %v4501, 1.442695
        %v4507 = vpow.pop %v4506
        %v4508 = vsel %vm2156, %v4503, 0.0
        %4509 = vadd.xlane.f32.xlu0 %v4508
        %v4510 = vpop.xlane.xlu0 %4509
        %v4511 = vsel %vm2156, %v4505, 0.0
        %4512 = vadd.xlane.f32.xlu0 %v4511
        %v4513 = vpop.xlane.xlu0 %4512
        %v4514 = vsel %vm4449, %v4507, 0.0
        %4515 = vadd.xlane.f32.xlu0 %v4514
        %v4516 = vpop.xlane.xlu0 %4515
        %v4517 = vrcp.pop %v4510
        %v4518 = vrcp.pop %v4513
        %v4519 = vrcp.pop %v4516
        %v4520 = vmul.f32 %v4503, %v4517
        %v4521 = vmul.f32 %v4505, %v4518
        %v4522 = vmul.f32 %v4507, %v4519
        %4523 = vrot.lane.b32.xlu0 %v4147, 127
        %v4524 = vpop.permute.xlu0 %4523
        %s4525 = vtos %v4524
        %v4526 = vstv %s4525
        %v4528 = vmul.f32 %v4520, %v4526
        %v4529 = vmul.f32 %v4521, %v4526
        %v4530 = vmul.f32 %v4522, %v4526
        %v4531 = vadd.f32 %v4481, %v4528
        %v4532 = vadd.f32 %v4482, %v4529
        %v4533 = vadd.f32 %v4483, %v4530
        %v4534 = vmul.f32 %v4434, %v4327
        %v4535 = vmul.f32 %v4435, %v4328
        %v4536 = vmul.f32 %v4436, %v4329
        %v4537 = vadd.f32 %v4534, %v4336
        %v4538 = vadd.f32 %v4535, %v4337
        %v4539 = vadd.f32 %v4536, %v4338
        %v4540 = vsel %vm2156, %v4537, -inf
        %4541 = vmax.xlane.f32.xlu0 %v4540
        %v4542 = vpop.xlane.xlu0 %4541
        %v4543 = vsel %vm2156, %v4538, -inf
        %4544 = vmax.xlane.f32.xlu0 %v4543
        %v4545 = vpop.xlane.xlu0 %4544
        %v4546 = vsel %vm4449, %v4539, -inf
        %4547 = vmax.xlane.f32.xlu0 %v4546
        %v4548 = vpop.xlane.xlu0 %4547
        %v4549 = vsub.f32 %v4537, %v4542
        %v4550 = vsub.f32 %v4538, %v4545
        %v4551 = vsub.f32 %v4539, %v4548
        %v4552 = vmul.f32 %v4549, 1.442695
        %v4553 = vpow.pop %v4552
        %v4554 = vmul.f32 %v4550, 1.442695
        %v4555 = vpow.pop %v4554
        %v4556 = vmul.f32 %v4551, 1.442695
        %v4557 = vpow.pop %v4556
        %v4558 = vsel %vm2156, %v4553, 0.0
        %4559 = vadd.xlane.f32.xlu0 %v4558
        %v4560 = vpop.xlane.xlu0 %4559
        %v4561 = vsel %vm2156, %v4555, 0.0
        %4562 = vadd.xlane.f32.xlu0 %v4561
        %v4563 = vpop.xlane.xlu0 %4562
        %v4564 = vsel %vm4449, %v4557, 0.0
        %4565 = vadd.xlane.f32.xlu0 %v4564
        %v4566 = vpop.xlane.xlu0 %4565
        %v4567 = vrcp.pop %v4560
        %v4568 = vrcp.pop %v4563
        %v4569 = vrcp.pop %v4566
        %v4570 = vmul.f32 %v4553, %v4567
        %v4571 = vmul.f32 %v4555, %v4568
        %v4572 = vmul.f32 %v4557, %v4569
        %4573 = vrot.lane.b32.xlu0 %v4147, 126
        %v4574 = vpop.permute.xlu0 %4573
        %s4575 = vtos %v4574
        %v4576 = vstv %s4575
        %v4578 = vmul.f32 %v4570, %v4576
        %v4579 = vmul.f32 %v4571, %v4576
        %v4580 = vmul.f32 %v4572, %v4576
        %v4581 = vadd.f32 %v4531, %v4578
        %v4582 = vadd.f32 %v4532, %v4579
        %v4583 = vadd.f32 %v4533, %v4580
        %4584 = vrot.lane.b32.xlu0 %v4313, 96
        %v4585 = vpop.permute.xlu0 %4584
        %4586 = vrot.lane.b32.xlu0 %v4318, 96
        %v4587 = vpop.permute.xlu0 %4586
        %v4591 = vsel %vm2156, %v4581, 0
        %v4594 = vsel %vm2156, %v4582, 0
        %v4597 = vsel %vm2156, %v4583, 0
        %4599 = vmatprep.subr.mxu0 0.0
        %4600 = vmatpush1.msra.mxu0 0.0
        %4601 = vmatprep.subr.mxu0 0.0
        %4602 = vmatpush1.msra.mxu0 0.0
        %4603 = vmatprep.subr.mxu0 0.0
        %4604 = vmatpush1.msra.mxu0 0.0
        %4605 = vmatprep.subr.mxu0 0.0
        %4606 = vmatpush1.msra.mxu0 0.0
        %4607 = vmatprep.subr.mxu0 0.0
        %4608 = vmatpush1.msra.mxu0 0.0
        %4609 = vmatprep.subr.mxu0 0.0
        %4610 = vmatpush1.msra.mxu0 0.0
        %4611 = vmatprep.subr.mxu0 0.0
        %4612 = vmatpush1.msra.mxu0 0.0
        %4613 = vmatprep.subr.mxu0 0.0
        %4614 = vmatpush1.msra.mxu0 0.0
        %4615 = vmatprep.subr.mxu0 0.0
        %4616 = vmatpush1.msra.mxu0 0.0
        %4617 = vmatprep.subr.mxu0 0.0
        %4618 = vmatpush1.msra.mxu0 0.0
        %4619 = vmatprep.subr.mxu0 0.0
        %4620 = vmatpush1.msra.mxu0 0.0
        %4621 = vmatprep.subr.mxu0 0.0
        %4622 = vmatpush1.msra.mxu0 0.0
        %4623 = vmatprep.subr.mxu0 0.0
        %4624 = vmatpush1.msra.mxu0 0.0
        %4625 = vmatprep.subr.mxu0 0.0
        %4626 = vmatpush1.msra.mxu0 0.0
        %4627 = vmatprep.subr.mxu0 0.0
        %4628 = vmatpush1.msra.mxu0 %v4587
        %4629 = vmatprep.subr.mxu0 0.0
        %4630 = vmatpush1.msra.mxu0 %v4585
        %4631 = vmatprep.subr.mxu0 0.0
        %4632 = vmatpush2.msra.mxu0 0.0
        %4633 = vmatprep.subr.mxu0 0.0
        %4634 = vmatpush2.msra.mxu0 0.0
        %4635 = vmatprep.subr.mxu0 0.0
        %4636 = vmatpush2.msra.mxu0 0.0
        %4637 = vmatprep.subr.mxu0 0.0
        %4638 = vmatpush2.msra.mxu0 0.0
        %4639 = vmatprep.subr.mxu0 0.0
        %4640 = vmatpush2.msra.mxu0 0.0
        %4641 = vmatprep.subr.mxu0 0.0
        %4642 = vmatpush2.msra.mxu0 0.0
        %4643 = vmatprep.subr.mxu0 0.0
        %4644 = vmatpush2.msra.mxu0 0.0
        %4645 = vmatprep.subr.mxu0 0.0
        %4646 = vmatpush2.msra.mxu0 0.0
        %4647 = vmatprep.subr.mxu0 0.0
        %4648 = vmatpush2.msra.mxu0 0.0
        %4649 = vmatprep.subr.mxu0 0.0
        %4650 = vmatpush2.msra.mxu0 0.0
        %4651 = vmatprep.subr.mxu0 0.0
        %4652 = vmatpush2.msra.mxu0 0.0
        %4653 = vmatprep.subr.mxu0 0.0
        %4654 = vmatpush2.msra.mxu0 0.0
        %4655 = vmatprep.subr.mxu0 0.0
        %4656 = vmatpush2.msra.mxu0 0.0
        %4657 = vmatprep.subr.mxu0 0.0
        %4658 = vmatpush2.msra.mxu0 0.0
        %4659 = vmatprep.subr.mxu0 0.0
        %4660 = vmatpush2.msra.mxu0 0.0
        %4661 = vmatprep.subr.mxu0 0.0
        %4662 = vmatpush2.msra.mxu0 0.0
        %4663 = vmatprep.mubr.f32.mxu0 0.0
        %4664 = vmatmul.mubr.f32.gmra.mxu0 %v4591
        %v4665 = vpop.f32.mrf.mxu0
        %v4666 = vadd.f32 0.0, %v4665
        %v4667 = vpop.f32.mrf.mxu0
        %4668 = vmatprep.mubr.f32.mxu0 0.0
        %4669 = vmatmul.mubr.f32.gmra.mxu0 %v4594
        %v4670 = vpop.f32.mrf.mxu0
        %v4671 = vadd.f32 0.0, %v4670
        %v4672 = vpop.f32.mrf.mxu0
        %4673 = vmatprep.mubr.f32.mxu0 0.0
        %4674 = vmatmul.mubr.f32.gmra.mxu0 %v4597
        %v4675 = vpop.f32.mrf.mxu0
        %v4676 = vadd.f32 0.0, %v4675
        %v4677 = vpop.f32.mrf.mxu0
        %4678 = vdwg.mxu0
        %4679 = vrot.lane.b32.xlu0 %v4221, 120
        %v4680 = vpop.permute.xlu0 %4679
        %4681 = vrot.lane.b32.xlu0 %v4226, 120
        %v4682 = vpop.permute.xlu0 %4681
        %4683 = vrot.lane.b32.xlu0 %v4231, 120
        %v4684 = vpop.permute.xlu0 %4683
        %4685 = vrot.lane.b32.xlu0 %v4313, 120
        %v4686 = vpop.permute.xlu0 %4685
        %4687 = vrot.lane.b32.xlu0 %v4318, 120
        %v4688 = vpop.permute.xlu0 %4687
        %v4689 = vsel %vm2436, %v4680, 0
        %v4691 = vsel %vm2436, %v4682, 0
        %v4693 = vsel %vm2436, %v4684, 0
        %v4695 = vsel %vm2436, %v4686, 0
        %v4697 = vsel %vm2436, %v4688, 0
        %4699 = vmatprep.subr.mxu0 0.0
        %4700 = vmatpush1.xpose.msra.mxu0 0.0
        %4701 = vmatprep.subr.mxu0 0.0
        %4702 = vmatpush1.xpose.msra.mxu0 0.0
        %4703 = vmatprep.subr.mxu0 0.0
        %4704 = vmatpush1.xpose.msra.mxu0 0.0
        %4705 = vmatprep.subr.mxu0 0.0
        %4706 = vmatpush1.xpose.msra.mxu0 0.0
        %4707 = vmatprep.subr.mxu0 0.0
        %4708 = vmatpush1.xpose.msra.mxu0 0.0
        %4709 = vmatprep.subr.mxu0 0.0
        %4710 = vmatpush1.xpose.msra.mxu0 0.0
        %4711 = vmatprep.subr.mxu0 0.0
        %4712 = vmatpush1.xpose.msra.mxu0 0.0
        %4713 = vmatprep.subr.mxu0 0.0
        %4714 = vmatpush1.xpose.msra.mxu0 0.0
        %4715 = vmatprep.subr.mxu0 0.0
        %4716 = vmatpush1.xpose.msra.mxu0 0.0
        %4717 = vmatprep.subr.mxu0 0.0
        %4718 = vmatpush1.xpose.msra.mxu0 0.0
        %4719 = vmatprep.subr.mxu0 0.0
        %4720 = vmatpush1.xpose.msra.mxu0 0.0
        %4721 = vmatprep.subr.mxu0 0.0
        %4722 = vmatpush1.xpose.msra.mxu0 0.0
        %4723 = vmatprep.subr.mxu0 0.0
        %4724 = vmatpush1.xpose.msra.mxu0 0.0
        %4725 = vmatprep.subr.mxu0 0.0
        %4726 = vmatpush1.xpose.msra.mxu0 0.0
        %4727 = vmatprep.subr.mxu0 0.0
        %4728 = vmatpush1.xpose.msra.mxu0 %v4697
        %4729 = vmatprep.subr.mxu0 0.0
        %4730 = vmatpush1.xpose.msra.mxu0 %v4695
        %4731 = vmatprep.subr.mxu0 0.0
        %4732 = vmatpush2.xpose.msra.mxu0 0.0
        %4733 = vmatprep.subr.mxu0 0.0
        %4734 = vmatpush2.xpose.msra.mxu0 0.0
        %4735 = vmatprep.subr.mxu0 0.0
        %4736 = vmatpush2.xpose.msra.mxu0 0.0
        %4737 = vmatprep.subr.mxu0 0.0
        %4738 = vmatpush2.xpose.msra.mxu0 0.0
        %4739 = vmatprep.subr.mxu0 0.0
        %4740 = vmatpush2.xpose.msra.mxu0 0.0
        %4741 = vmatprep.subr.mxu0 0.0
        %4742 = vmatpush2.xpose.msra.mxu0 0.0
        %4743 = vmatprep.subr.mxu0 0.0
        %4744 = vmatpush2.xpose.msra.mxu0 0.0
        %4745 = vmatprep.subr.mxu0 0.0
        %4746 = vmatpush2.xpose.msra.mxu0 0.0
        %4747 = vmatprep.subr.mxu0 0.0
        %4748 = vmatpush2.xpose.msra.mxu0 0.0
        %4749 = vmatprep.subr.mxu0 0.0
        %4750 = vmatpush2.xpose.msra.mxu0 0.0
        %4751 = vmatprep.subr.mxu0 0.0
        %4752 = vmatpush2.xpose.msra.mxu0 0.0
        %4753 = vmatprep.subr.mxu0 0.0
        %4754 = vmatpush2.xpose.msra.mxu0 0.0
        %4755 = vmatprep.subr.mxu0 0.0
        %4756 = vmatpush2.xpose.msra.mxu0 0.0
        %4757 = vmatprep.subr.mxu0 0.0
        %4758 = vmatpush2.xpose.msra.mxu0 0.0
        %4759 = vmatprep.subr.mxu0 0.0
        %4760 = vmatpush2.xpose.msra.mxu0 0.0
        %4761 = vmatprep.subr.mxu0 0.0
        %4762 = vmatpush2.xpose.msra.mxu0 0.0
        %4763 = vmatprep.mubr.f32.mxu0 0.0
        %4764 = vmatmul.mubr.f32.gmra.mxu0 %v4689
        %v4765 = vpop.f32.mrf.mxu0
        %v4766 = vadd.f32 0.0, %v4765
        %v4767 = vpop.f32.mrf.mxu0
        %4768 = vmatprep.mubr.f32.mxu0 0.0
        %4769 = vmatmul.mubr.f32.gmra.mxu0 %v4691
        %v4770 = vpop.f32.mrf.mxu0
        %v4771 = vadd.f32 0.0, %v4770
        %v4772 = vpop.f32.mrf.mxu0
        %4773 = vmatprep.mubr.f32.mxu0 0.0
        %4774 = vmatmul.mubr.f32.gmra.mxu0 %v4693
        %v4775 = vpop.f32.mrf.mxu0
        %v4776 = vadd.f32 0.0, %v4775
        %v4777 = vpop.f32.mrf.mxu0
        %4778 = vdwg.mxu0
        %v4779 = vmul.f32 %v4766, 0.35355338
        %v4780 = vmul.f32 %v4771, 0.35355338
        %v4781 = vmul.f32 %v4776, 0.35355338
        %v4782 = vmul.f32 %v4779, %v4321
        %v4783 = vmul.f32 %v4780, %v4322
        %v4784 = vmul.f32 %v4781, %v4323
        %v4785 = vadd.f32 %v4782, %v4330
        %v4786 = vadd.f32 %v4783, %v4331
        %v4787 = vadd.f32 %v4784, %v4332
        %v4788 = vsel %vm2156, %v4785, -inf
        %4789 = vmax.xlane.f32.xlu0 %v4788
        %v4790 = vpop.xlane.xlu0 %4789
        %v4791 = vsel %vm2156, %v4786, -inf
        %4792 = vmax.xlane.f32.xlu0 %v4791
        %v4793 = vpop.xlane.xlu0 %4792
        %v4794 = vsel %vm4449, %v4787, -inf
        %4795 = vmax.xlane.f32.xlu0 %v4794
        %v4796 = vpop.xlane.xlu0 %4795
        %v4797 = vsub.f32 %v4785, %v4790
        %v4798 = vsub.f32 %v4786, %v4793
        %v4799 = vsub.f32 %v4787, %v4796
        %v4800 = vmul.f32 %v4797, 1.442695
        %v4801 = vpow.pop %v4800
        %v4802 = vmul.f32 %v4798, 1.442695
        %v4803 = vpow.pop %v4802
        %v4804 = vmul.f32 %v4799, 1.442695
        %v4805 = vpow.pop %v4804
        %v4806 = vsel %vm2156, %v4801, 0.0
        %4807 = vadd.xlane.f32.xlu0 %v4806
        %v4808 = vpop.xlane.xlu0 %4807
        %v4809 = vsel %vm2156, %v4803, 0.0
        %4810 = vadd.xlane.f32.xlu0 %v4809
        %v4811 = vpop.xlane.xlu0 %4810
        %v4812 = vsel %vm4449, %v4805, 0.0
        %4813 = vadd.xlane.f32.xlu0 %v4812
        %v4814 = vpop.xlane.xlu0 %4813
        %v4815 = vrcp.pop %v4808
        %v4816 = vrcp.pop %v4811
        %v4817 = vrcp.pop %v4814
        %v4818 = vmul.f32 %v4801, %v4815
        %v4819 = vmul.f32 %v4803, %v4816
        %v4820 = vmul.f32 %v4805, %v4817
        %v4821 = vmul.f32 %v4818, %v4479
        %v4822 = vmul.f32 %v4819, %v4479
        %v4823 = vmul.f32 %v4820, %v4479
        %v4824 = vmul.f32 %v4779, %v4324
        %v4825 = vmul.f32 %v4780, %v4325
        %v4826 = vmul.f32 %v4781, %v4326
        %v4827 = vadd.f32 %v4824, %v4333
        %v4828 = vadd.f32 %v4825, %v4334
        %v4829 = vadd.f32 %v4826, %v4335
        %v4830 = vsel %vm2156, %v4827, -inf
        %4831 = vmax.xlane.f32.xlu0 %v4830
        %v4832 = vpop.xlane.xlu0 %4831
        %v4833 = vsel %vm2156, %v4828, -inf
        %4834 = vmax.xlane.f32.xlu0 %v4833
        %v4835 = vpop.xlane.xlu0 %4834
        %v4836 = vsel %vm4449, %v4829, -inf
        %4837 = vmax.xlane.f32.xlu0 %v4836
        %v4838 = vpop.xlane.xlu0 %4837
        %v4839 = vsub.f32 %v4827, %v4832
        %v4840 = vsub.f32 %v4828, %v4835
        %v4841 = vsub.f32 %v4829, %v4838
        %v4842 = vmul.f32 %v4839, 1.442695
        %v4843 = vpow.pop %v4842
        %v4844 = vmul.f32 %v4840, 1.442695
        %v4845 = vpow.pop %v4844
        %v4846 = vmul.f32 %v4841, 1.442695
        %v4847 = vpow.pop %v4846
        %v4848 = vsel %vm2156, %v4843, 0.0
        %4849 = vadd.xlane.f32.xlu0 %v4848
        %v4850 = vpop.xlane.xlu0 %4849
        %v4851 = vsel %vm2156, %v4845, 0.0
        %4852 = vadd.xlane.f32.xlu0 %v4851
        %v4853 = vpop.xlane.xlu0 %4852
        %v4854 = vsel %vm4449, %v4847, 0.0
        %4855 = vadd.xlane.f32.xlu0 %v4854
        %v4856 = vpop.xlane.xlu0 %4855
        %v4857 = vrcp.pop %v4850
        %v4858 = vrcp.pop %v4853
        %v4859 = vrcp.pop %v4856
        %v4860 = vmul.f32 %v4843, %v4857
        %v4861 = vmul.f32 %v4845, %v4858
        %v4862 = vmul.f32 %v4847, %v4859
        %v4863 = vmul.f32 %v4860, %v4526
        %v4864 = vmul.f32 %v4861, %v4526
        %v4865 = vmul.f32 %v4862, %v4526
        %v4866 = vadd.f32 %v4821, %v4863
        %v4867 = vadd.f32 %v4822, %v4864
        %v4868 = vadd.f32 %v4823, %v4865
        %v4869 = vmul.f32 %v4779, %v4327
        %v4870 = vmul.f32 %v4780, %v4328
        %v4871 = vmul.f32 %v4781, %v4329
        %v4872 = vadd.f32 %v4869, %v4336
        %v4873 = vadd.f32 %v4870, %v4337
        %v4874 = vadd.f32 %v4871, %v4338
        %v4875 = vsel %vm2156, %v4872, -inf
        %4876 = vmax.xlane.f32.xlu0 %v4875
        %v4877 = vpop.xlane.xlu0 %4876
        %v4878 = vsel %vm2156, %v4873, -inf
        %4879 = vmax.xlane.f32.xlu0 %v4878
        %v4880 = vpop.xlane.xlu0 %4879
        %v4881 = vsel %vm4449, %v4874, -inf
        %4882 = vmax.xlane.f32.xlu0 %v4881
        %v4883 = vpop.xlane.xlu0 %4882
        %v4884 = vsub.f32 %v4872, %v4877
        %v4885 = vsub.f32 %v4873, %v4880
        %v4886 = vsub.f32 %v4874, %v4883
        %v4887 = vmul.f32 %v4884, 1.442695
        %v4888 = vpow.pop %v4887
        %v4889 = vmul.f32 %v4885, 1.442695
        %v4890 = vpow.pop %v4889
        %v4891 = vmul.f32 %v4886, 1.442695
        %v4892 = vpow.pop %v4891
        %v4893 = vsel %vm2156, %v4888, 0.0
        %4894 = vadd.xlane.f32.xlu0 %v4893
        %v4895 = vpop.xlane.xlu0 %4894
        %v4896 = vsel %vm2156, %v4890, 0.0
        %4897 = vadd.xlane.f32.xlu0 %v4896
        %v4898 = vpop.xlane.xlu0 %4897
        %v4899 = vsel %vm4449, %v4892, 0.0
        %4900 = vadd.xlane.f32.xlu0 %v4899
        %v4901 = vpop.xlane.xlu0 %4900
        %v4902 = vrcp.pop %v4895
        %v4903 = vrcp.pop %v4898
        %v4904 = vrcp.pop %v4901
        %v4905 = vmul.f32 %v4888, %v4902
        %v4906 = vmul.f32 %v4890, %v4903
        %v4907 = vmul.f32 %v4892, %v4904
        %v4908 = vmul.f32 %v4905, %v4576
        %v4909 = vmul.f32 %v4906, %v4576
        %v4910 = vmul.f32 %v4907, %v4576
        %v4911 = vadd.f32 %v4866, %v4908
        %v4912 = vadd.f32 %v4867, %v4909
        %v4913 = vadd.f32 %v4868, %v4910
        %4914 = vrot.lane.b32.xlu0 %v4313, 88
        %v4915 = vpop.permute.xlu0 %4914
        %4916 = vrot.lane.b32.xlu0 %v4318, 88
        %v4917 = vpop.permute.xlu0 %4916
        %v4921 = vsel %vm2156, %v4911, 0
        %v4924 = vsel %vm2156, %v4912, 0
        %v4927 = vsel %vm2156, %v4913, 0
        %4929 = vmatprep.subr.mxu0 0.0
        %4930 = vmatpush1.msra.mxu0 0.0
        %4931 = vmatprep.subr.mxu0 0.0
        %4932 = vmatpush1.msra.mxu0 0.0
        %4933 = vmatprep.subr.mxu0 0.0
        %4934 = vmatpush1.msra.mxu0 0.0
        %4935 = vmatprep.subr.mxu0 0.0
        %4936 = vmatpush1.msra.mxu0 0.0
        %4937 = vmatprep.subr.mxu0 0.0
        %4938 = vmatpush1.msra.mxu0 0.0
        %4939 = vmatprep.subr.mxu0 0.0
        %4940 = vmatpush1.msra.mxu0 0.0
        %4941 = vmatprep.subr.mxu0 0.0
        %4942 = vmatpush1.msra.mxu0 0.0
        %4943 = vmatprep.subr.mxu0 0.0
        %4944 = vmatpush1.msra.mxu0 0.0
        %4945 = vmatprep.subr.mxu0 0.0
        %4946 = vmatpush1.msra.mxu0 0.0
        %4947 = vmatprep.subr.mxu0 0.0
        %4948 = vmatpush1.msra.mxu0 0.0
        %4949 = vmatprep.subr.mxu0 0.0
        %4950 = vmatpush1.msra.mxu0 0.0
        %4951 = vmatprep.subr.mxu0 0.0
        %4952 = vmatpush1.msra.mxu0 0.0
        %4953 = vmatprep.subr.mxu0 0.0
        %4954 = vmatpush1.msra.mxu0 0.0
        %4955 = vmatprep.subr.mxu0 0.0
        %4956 = vmatpush1.msra.mxu0 0.0
        %4957 = vmatprep.subr.mxu0 0.0
        %4958 = vmatpush1.msra.mxu0 %v4917
        %4959 = vmatprep.subr.mxu0 0.0
        %4960 = vmatpush1.msra.mxu0 %v4915
        %4961 = vmatprep.subr.mxu0 0.0
        %4962 = vmatpush2.msra.mxu0 0.0
        %4963 = vmatprep.subr.mxu0 0.0
        %4964 = vmatpush2.msra.mxu0 0.0
        %4965 = vmatprep.subr.mxu0 0.0
        %4966 = vmatpush2.msra.mxu0 0.0
        %4967 = vmatprep.subr.mxu0 0.0
        %4968 = vmatpush2.msra.mxu0 0.0
        %4969 = vmatprep.subr.mxu0 0.0
        %4970 = vmatpush2.msra.mxu0 0.0
        %4971 = vmatprep.subr.mxu0 0.0
        %4972 = vmatpush2.msra.mxu0 0.0
        %4973 = vmatprep.subr.mxu0 0.0
        %4974 = vmatpush2.msra.mxu0 0.0
        %4975 = vmatprep.subr.mxu0 0.0
        %4976 = vmatpush2.msra.mxu0 0.0
        %4977 = vmatprep.subr.mxu0 0.0
        %4978 = vmatpush2.msra.mxu0 0.0
        %4979 = vmatprep.subr.mxu0 0.0
        %4980 = vmatpush2.msra.mxu0 0.0
        %4981 = vmatprep.subr.mxu0 0.0
        %4982 = vmatpush2.msra.mxu0 0.0
        %4983 = vmatprep.subr.mxu0 0.0
        %4984 = vmatpush2.msra.mxu0 0.0
        %4985 = vmatprep.subr.mxu0 0.0
        %4986 = vmatpush2.msra.mxu0 0.0
        %4987 = vmatprep.subr.mxu0 0.0
        %4988 = vmatpush2.msra.mxu0 0.0
        %4989 = vmatprep.subr.mxu0 0.0
        %4990 = vmatpush2.msra.mxu0 0.0
        %4991 = vmatprep.subr.mxu0 0.0
        %4992 = vmatpush2.msra.mxu0 0.0
        %4993 = vmatprep.mubr.f32.mxu0 0.0
        %4994 = vmatmul.mubr.f32.gmra.mxu0 %v4921
        %v4995 = vpop.f32.mrf.mxu0
        %v4996 = vadd.f32 0.0, %v4995
        %v4997 = vpop.f32.mrf.mxu0
        %4998 = vmatprep.mubr.f32.mxu0 0.0
        %4999 = vmatmul.mubr.f32.gmra.mxu0 %v4924
        %v5000 = vpop.f32.mrf.mxu0
        %v5001 = vadd.f32 0.0, %v5000
        %v5002 = vpop.f32.mrf.mxu0
        %5003 = vmatprep.mubr.f32.mxu0 0.0
        %5004 = vmatmul.mubr.f32.gmra.mxu0 %v4927
        %v5005 = vpop.f32.mrf.mxu0
        %v5006 = vadd.f32 0.0, %v5005
        %v5007 = vpop.f32.mrf.mxu0
        %5008 = vdwg.mxu0
        %v5010 = vsel %vm2436, %v4996, 0
        %v5013 = vsel %vm2436, %v5001, 0
        %v5016 = vsel %vm2436, %v5006, 0
        %5018 = vmatprep.subr.mxu0 0.0
        %5019 = vmatpush1.msra.mxu0 0.0
        %5020 = vmatprep.subr.mxu0 0.0
        %5021 = vmatpush1.msra.mxu0 0.0
        %5022 = vmatprep.subr.mxu0 0.0
        %5023 = vmatpush1.msra.mxu0 0.0
        %5024 = vmatprep.subr.mxu0 0.0
        %5025 = vmatpush1.msra.mxu0 0.0
        %5026 = vmatprep.subr.mxu0 0.0
        %5027 = vmatpush1.msra.mxu0 0.0
        %5028 = vmatprep.subr.mxu0 0.0
        %5029 = vmatpush1.msra.mxu0 0.0
        %5030 = vmatprep.subr.mxu0 0.0
        %5031 = vmatpush1.msra.mxu0 0.0
        %5032 = vmatprep.subr.mxu0 0.0
        %5033 = vmatpush1.msra.mxu0 0.0
        %5034 = vmatprep.subr.mxu0 0.0
        %5035 = vmatpush1.msra.mxu0 0.0
        %5036 = vmatprep.subr.mxu0 0.0
        %5037 = vmatpush1.msra.mxu0 0.0
        %5038 = vmatprep.subr.mxu0 0.0
        %5039 = vmatpush1.msra.mxu0 0.0
        %5040 = vmatprep.subr.mxu0 0.0
        %5041 = vmatpush1.msra.mxu0 0.0
        %5042 = vmatprep.subr.mxu0 0.0
        %5043 = vmatpush1.msra.mxu0 0.0
        %5044 = vmatprep.subr.mxu0 0.0
        %5045 = vmatpush1.msra.mxu0 0.0
        %5046 = vmatprep.subr.mxu0 0.0
        %5047 = vmatpush1.msra.mxu0 0.0
        %5048 = vmatprep.subr.mxu0 0.0
        %5049 = vmatpush1.msra.mxu0 %v3968
        %5050 = vmatprep.subr.mxu0 0.0
        %5051 = vmatpush2.msra.mxu0 0.0
        %5052 = vmatprep.subr.mxu0 0.0
        %5053 = vmatpush2.msra.mxu0 0.0
        %5054 = vmatprep.subr.mxu0 0.0
        %5055 = vmatpush2.msra.mxu0 0.0
        %5056 = vmatprep.subr.mxu0 0.0
        %5057 = vmatpush2.msra.mxu0 0.0
        %5058 = vmatprep.subr.mxu0 0.0
        %5059 = vmatpush2.msra.mxu0 0.0
        %5060 = vmatprep.subr.mxu0 0.0
        %5061 = vmatpush2.msra.mxu0 0.0
        %5062 = vmatprep.subr.mxu0 0.0
        %5063 = vmatpush2.msra.mxu0 0.0
        %5064 = vmatprep.subr.mxu0 0.0
        %5065 = vmatpush2.msra.mxu0 0.0
        %5066 = vmatprep.subr.mxu0 0.0
        %5067 = vmatpush2.msra.mxu0 0.0
        %5068 = vmatprep.subr.mxu0 0.0
        %5069 = vmatpush2.msra.mxu0 0.0
        %5070 = vmatprep.subr.mxu0 0.0
        %5071 = vmatpush2.msra.mxu0 0.0
        %5072 = vmatprep.subr.mxu0 0.0
        %5073 = vmatpush2.msra.mxu0 0.0
        %5074 = vmatprep.subr.mxu0 0.0
        %5075 = vmatpush2.msra.mxu0 0.0
        %5076 = vmatprep.subr.mxu0 0.0
        %5077 = vmatpush2.msra.mxu0 0.0
        %5078 = vmatprep.subr.mxu0 0.0
        %5079 = vmatpush2.msra.mxu0 0.0
        %5080 = vmatprep.subr.mxu0 0.0
        %5081 = vmatpush2.msra.mxu0 0.0
        %5082 = vmatprep.mubr.f32.mxu0 0.0
        %5083 = vmatmul.mubr.f32.gmra.mxu0 %v5010
        %v5084 = vpop.f32.mrf.mxu0
        %v5085 = vadd.f32 0.0, %v5084
        %v5086 = vpop.f32.mrf.mxu0
        %5087 = vmatprep.mubr.f32.mxu0 0.0
        %5088 = vmatmul.mubr.f32.gmra.mxu0 %v5013
        %v5089 = vpop.f32.mrf.mxu0
        %v5090 = vadd.f32 0.0, %v5089
        %v5091 = vpop.f32.mrf.mxu0
        %5092 = vmatprep.mubr.f32.mxu0 0.0
        %5093 = vmatmul.mubr.f32.gmra.mxu0 %v5016
        %v5094 = vpop.f32.mrf.mxu0
        %v5095 = vadd.f32 0.0, %v5094
        %v5096 = vpop.f32.mrf.mxu0
        %5097 = vdwg.mxu0
        %v5099 = vsel %vm2436, %v4666, 0
        %v5102 = vsel %vm2436, %v4671, 0
        %v5105 = vsel %vm2436, %v4676, 0
        %5107 = vmatprep.subr.mxu0 0.0
        %5108 = vmatpush1.msra.mxu0 0.0
        %5109 = vmatprep.subr.mxu0 0.0
        %5110 = vmatpush1.msra.mxu0 0.0
        %5111 = vmatprep.subr.mxu0 0.0
        %5112 = vmatpush1.msra.mxu0 0.0
        %5113 = vmatprep.subr.mxu0 0.0
        %5114 = vmatpush1.msra.mxu0 0.0
        %5115 = vmatprep.subr.mxu0 0.0
        %5116 = vmatpush1.msra.mxu0 0.0
        %5117 = vmatprep.subr.mxu0 0.0
        %5118 = vmatpush1.msra.mxu0 0.0
        %5119 = vmatprep.subr.mxu0 0.0
        %5120 = vmatpush1.msra.mxu0 0.0
        %5121 = vmatprep.subr.mxu0 0.0
        %5122 = vmatpush1.msra.mxu0 0.0
        %5123 = vmatprep.subr.mxu0 0.0
        %5124 = vmatpush1.msra.mxu0 0.0
        %5125 = vmatprep.subr.mxu0 0.0
        %5126 = vmatpush1.msra.mxu0 0.0
        %5127 = vmatprep.subr.mxu0 0.0
        %5128 = vmatpush1.msra.mxu0 0.0
        %5129 = vmatprep.subr.mxu0 0.0
        %5130 = vmatpush1.msra.mxu0 0.0
        %5131 = vmatprep.subr.mxu0 0.0
        %5132 = vmatpush1.msra.mxu0 0.0
        %5133 = vmatprep.subr.mxu0 0.0
        %5134 = vmatpush1.msra.mxu0 0.0
        %5135 = vmatprep.subr.mxu0 0.0
        %5136 = vmatpush1.msra.mxu0 0.0
        %5137 = vmatprep.subr.mxu0 0.0
        %5138 = vmatpush1.msra.mxu0 %v3967
        %5139 = vmatprep.subr.mxu0 0.0
        %5140 = vmatpush2.msra.mxu0 0.0
        %5141 = vmatprep.subr.mxu0 0.0
        %5142 = vmatpush2.msra.mxu0 0.0
        %5143 = vmatprep.subr.mxu0 0.0
        %5144 = vmatpush2.msra.mxu0 0.0
        %5145 = vmatprep.subr.mxu0 0.0
        %5146 = vmatpush2.msra.mxu0 0.0
        %5147 = vmatprep.subr.mxu0 0.0
        %5148 = vmatpush2.msra.mxu0 0.0
        %5149 = vmatprep.subr.mxu0 0.0
        %5150 = vmatpush2.msra.mxu0 0.0
        %5151 = vmatprep.subr.mxu0 0.0
        %5152 = vmatpush2.msra.mxu0 0.0
        %5153 = vmatprep.subr.mxu0 0.0
        %5154 = vmatpush2.msra.mxu0 0.0
        %5155 = vmatprep.subr.mxu0 0.0
        %5156 = vmatpush2.msra.mxu0 0.0
        %5157 = vmatprep.subr.mxu0 0.0
        %5158 = vmatpush2.msra.mxu0 0.0
        %5159 = vmatprep.subr.mxu0 0.0
        %5160 = vmatpush2.msra.mxu0 0.0
        %5161 = vmatprep.subr.mxu0 0.0
        %5162 = vmatpush2.msra.mxu0 0.0
        %5163 = vmatprep.subr.mxu0 0.0
        %5164 = vmatpush2.msra.mxu0 0.0
        %5165 = vmatprep.subr.mxu0 0.0
        %5166 = vmatpush2.msra.mxu0 0.0
        %5167 = vmatprep.subr.mxu0 0.0
        %5168 = vmatpush2.msra.mxu0 0.0
        %5169 = vmatprep.subr.mxu0 0.0
        %5170 = vmatpush2.msra.mxu0 0.0
        %5171 = vmatprep.mubr.f32.mxu0 0.0
        %5172 = vmatmul.mubr.f32.gmra.mxu0 %v5099
        %v5173 = vpop.f32.mrf.mxu0
        %v5174 = vadd.f32 %v5085, %v5173
        %v5175 = vpop.f32.mrf.mxu0
        %5176 = vmatprep.mubr.f32.mxu0 0.0
        %5177 = vmatmul.mubr.f32.gmra.mxu0 %v5102
        %v5178 = vpop.f32.mrf.mxu0
        %v5179 = vadd.f32 %v5090, %v5178
        %v5180 = vpop.f32.mrf.mxu0
        %5181 = vmatprep.mubr.f32.mxu0 0.0
        %5182 = vmatmul.mubr.f32.gmra.mxu0 %v5105
        %v5183 = vpop.f32.mrf.mxu0
        %v5184 = vadd.f32 %v5095, %v5183
        %v5185 = vpop.f32.mrf.mxu0
        %5186 = vdwg.mxu0
        %5187 = vrot.lane.b32.xlu0 %v4221, 112
        %v5188 = vpop.permute.xlu0 %5187
        %5189 = vrot.lane.b32.xlu0 %v4226, 112
        %v5190 = vpop.permute.xlu0 %5189
        %5191 = vrot.lane.b32.xlu0 %v4231, 112
        %v5192 = vpop.permute.xlu0 %5191
        %5193 = vrot.lane.b32.xlu0 %v4313, 112
        %v5194 = vpop.permute.xlu0 %5193
        %5195 = vrot.lane.b32.xlu0 %v4318, 112
        %v5196 = vpop.permute.xlu0 %5195
        %v5197 = vsel %vm2436, %v5188, 0
        %v5199 = vsel %vm2436, %v5190, 0
        %v5201 = vsel %vm2436, %v5192, 0
        %v5203 = vsel %vm2436, %v5194, 0
        %v5205 = vsel %vm2436, %v5196, 0
        %5207 = vmatprep.subr.mxu0 0.0
        %5208 = vmatpush1.xpose.msra.mxu0 0.0
        %5209 = vmatprep.subr.mxu0 0.0
        %5210 = vmatpush1.xpose.msra.mxu0 0.0
        %5211 = vmatprep.subr.mxu0 0.0
        %5212 = vmatpush1.xpose.msra.mxu0 0.0
        %5213 = vmatprep.subr.mxu0 0.0
        %5214 = vmatpush1.xpose.msra.mxu0 0.0
        %5215 = vmatprep.subr.mxu0 0.0
        %5216 = vmatpush1.xpose.msra.mxu0 0.0
        %5217 = vmatprep.subr.mxu0 0.0
        %5218 = vmatpush1.xpose.msra.mxu0 0.0
        %5219 = vmatprep.subr.mxu0 0.0
        %5220 = vmatpush1.xpose.msra.mxu0 0.0
        %5221 = vmatprep.subr.mxu0 0.0
        %5222 = vmatpush1.xpose.msra.mxu0 0.0
        %5223 = vmatprep.subr.mxu0 0.0
        %5224 = vmatpush1.xpose.msra.mxu0 0.0
        %5225 = vmatprep.subr.mxu0 0.0
        %5226 = vmatpush1.xpose.msra.mxu0 0.0
        %5227 = vmatprep.subr.mxu0 0.0
        %5228 = vmatpush1.xpose.msra.mxu0 0.0
        %5229 = vmatprep.subr.mxu0 0.0
        %5230 = vmatpush1.xpose.msra.mxu0 0.0
        %5231 = vmatprep.subr.mxu0 0.0
        %5232 = vmatpush1.xpose.msra.mxu0 0.0
        %5233 = vmatprep.subr.mxu0 0.0
        %5234 = vmatpush1.xpose.msra.mxu0 0.0
        %5235 = vmatprep.subr.mxu0 0.0
        %5236 = vmatpush1.xpose.msra.mxu0 %v5205
        %5237 = vmatprep.subr.mxu0 0.0
        %5238 = vmatpush1.xpose.msra.mxu0 %v5203
        %5239 = vmatprep.subr.mxu0 0.0
        %5240 = vmatpush2.xpose.msra.mxu0 0.0
        %5241 = vmatprep.subr.mxu0 0.0
        %5242 = vmatpush2.xpose.msra.mxu0 0.0
        %5243 = vmatprep.subr.mxu0 0.0
        %5244 = vmatpush2.xpose.msra.mxu0 0.0
        %5245 = vmatprep.subr.mxu0 0.0
        %5246 = vmatpush2.xpose.msra.mxu0 0.0
        %5247 = vmatprep.subr.mxu0 0.0
        %5248 = vmatpush2.xpose.msra.mxu0 0.0
        %5249 = vmatprep.subr.mxu0 0.0
        %5250 = vmatpush2.xpose.msra.mxu0 0.0
        %5251 = vmatprep.subr.mxu0 0.0
        %5252 = vmatpush2.xpose.msra.mxu0 0.0
        %5253 = vmatprep.subr.mxu0 0.0
        %5254 = vmatpush2.xpose.msra.mxu0 0.0
        %5255 = vmatprep.subr.mxu0 0.0
        %5256 = vmatpush2.xpose.msra.mxu0 0.0
        %5257 = vmatprep.subr.mxu0 0.0
        %5258 = vmatpush2.xpose.msra.mxu0 0.0
        %5259 = vmatprep.subr.mxu0 0.0
        %5260 = vmatpush2.xpose.msra.mxu0 0.0
        %5261 = vmatprep.subr.mxu0 0.0
        %5262 = vmatpush2.xpose.msra.mxu0 0.0
        %5263 = vmatprep.subr.mxu0 0.0
        %5264 = vmatpush2.xpose.msra.mxu0 0.0
        %5265 = vmatprep.subr.mxu0 0.0
        %5266 = vmatpush2.xpose.msra.mxu0 0.0
        %5267 = vmatprep.subr.mxu0 0.0
        %5268 = vmatpush2.xpose.msra.mxu0 0.0
        %5269 = vmatprep.subr.mxu0 0.0
        %5270 = vmatpush2.xpose.msra.mxu0 0.0
        %5271 = vmatprep.mubr.f32.mxu0 0.0
        %5272 = vmatmul.mubr.f32.gmra.mxu0 %v5197
        %v5273 = vpop.f32.mrf.mxu0
        %v5274 = vadd.f32 0.0, %v5273
        %v5275 = vpop.f32.mrf.mxu0
        %5276 = vmatprep.mubr.f32.mxu0 0.0
        %5277 = vmatmul.mubr.f32.gmra.mxu0 %v5199
        %v5278 = vpop.f32.mrf.mxu0
        %v5279 = vadd.f32 0.0, %v5278
        %v5280 = vpop.f32.mrf.mxu0
        %5281 = vmatprep.mubr.f32.mxu0 0.0
        %5282 = vmatmul.mubr.f32.gmra.mxu0 %v5201
        %v5283 = vpop.f32.mrf.mxu0
        %v5284 = vadd.f32 0.0, %v5283
        %v5285 = vpop.f32.mrf.mxu0
        %5286 = vdwg.mxu0
        %v5287 = vmul.f32 %v5274, 0.35355338
        %v5288 = vmul.f32 %v5279, 0.35355338
        %v5289 = vmul.f32 %v5284, 0.35355338
        %v5290 = vmul.f32 %v5287, %v4321
        %v5291 = vmul.f32 %v5288, %v4322
        %v5292 = vmul.f32 %v5289, %v4323
        %v5293 = vadd.f32 %v5290, %v4330
        %v5294 = vadd.f32 %v5291, %v4331
        %v5295 = vadd.f32 %v5292, %v4332
        %v5296 = vsel %vm2156, %v5293, -inf
        %5297 = vmax.xlane.f32.xlu0 %v5296
        %v5298 = vpop.xlane.xlu0 %5297
        %v5299 = vsel %vm2156, %v5294, -inf
        %5300 = vmax.xlane.f32.xlu0 %v5299
        %v5301 = vpop.xlane.xlu0 %5300
        %v5302 = vsel %vm4449, %v5295, -inf
        %5303 = vmax.xlane.f32.xlu0 %v5302
        %v5304 = vpop.xlane.xlu0 %5303
        %v5305 = vsub.f32 %v5293, %v5298
        %v5306 = vsub.f32 %v5294, %v5301
        %v5307 = vsub.f32 %v5295, %v5304
        %v5308 = vmul.f32 %v5305, 1.442695
        %v5309 = vpow.pop %v5308
        %v5310 = vmul.f32 %v5306, 1.442695
        %v5311 = vpow.pop %v5310
        %v5312 = vmul.f32 %v5307, 1.442695
        %v5313 = vpow.pop %v5312
        %v5314 = vsel %vm2156, %v5309, 0.0
        %5315 = vadd.xlane.f32.xlu0 %v5314
        %v5316 = vpop.xlane.xlu0 %5315
        %v5317 = vsel %vm2156, %v5311, 0.0
        %5318 = vadd.xlane.f32.xlu0 %v5317
        %v5319 = vpop.xlane.xlu0 %5318
        %v5320 = vsel %vm4449, %v5313, 0.0
        %5321 = vadd.xlane.f32.xlu0 %v5320
        %v5322 = vpop.xlane.xlu0 %5321
        %v5323 = vrcp.pop %v5316
        %v5324 = vrcp.pop %v5319
        %v5325 = vrcp.pop %v5322
        %v5326 = vmul.f32 %v5309, %v5323
        %v5327 = vmul.f32 %v5311, %v5324
        %v5328 = vmul.f32 %v5313, %v5325
        %v5329 = vmul.f32 %v5326, %v4479
        %v5330 = vmul.f32 %v5327, %v4479
        %v5331 = vmul.f32 %v5328, %v4479
        %v5332 = vmul.f32 %v5287, %v4324
        %v5333 = vmul.f32 %v5288, %v4325
        %v5334 = vmul.f32 %v5289, %v4326
        %v5335 = vadd.f32 %v5332, %v4333
        %v5336 = vadd.f32 %v5333, %v4334
        %v5337 = vadd.f32 %v5334, %v4335
        %v5338 = vsel %vm2156, %v5335, -inf
        %5339 = vmax.xlane.f32.xlu0 %v5338
        %v5340 = vpop.xlane.xlu0 %5339
        %v5341 = vsel %vm2156, %v5336, -inf
        %5342 = vmax.xlane.f32.xlu0 %v5341
        %v5343 = vpop.xlane.xlu0 %5342
        %v5344 = vsel %vm4449, %v5337, -inf
        %5345 = vmax.xlane.f32.xlu0 %v5344
        %v5346 = vpop.xlane.xlu0 %5345
        %v5347 = vsub.f32 %v5335, %v5340
        %v5348 = vsub.f32 %v5336, %v5343
        %v5349 = vsub.f32 %v5337, %v5346
        %v5350 = vmul.f32 %v5347, 1.442695
        %v5351 = vpow.pop %v5350
        %v5352 = vmul.f32 %v5348, 1.442695
        %v5353 = vpow.pop %v5352
        %v5354 = vmul.f32 %v5349, 1.442695
        %v5355 = vpow.pop %v5354
        %v5356 = vsel %vm2156, %v5351, 0.0
        %5357 = vadd.xlane.f32.xlu0 %v5356
        %v5358 = vpop.xlane.xlu0 %5357
        %v5359 = vsel %vm2156, %v5353, 0.0
        %5360 = vadd.xlane.f32.xlu0 %v5359
        %v5361 = vpop.xlane.xlu0 %5360
        %v5362 = vsel %vm4449, %v5355, 0.0
        %5363 = vadd.xlane.f32.xlu0 %v5362
        %v5364 = vpop.xlane.xlu0 %5363
        %v5365 = vrcp.pop %v5358
        %v5366 = vrcp.pop %v5361
        %v5367 = vrcp.pop %v5364
        %v5368 = vmul.f32 %v5351, %v5365
        %v5369 = vmul.f32 %v5353, %v5366
        %v5370 = vmul.f32 %v5355, %v5367
        %v5371 = vmul.f32 %v5368, %v4526
        %v5372 = vmul.f32 %v5369, %v4526
        %v5373 = vmul.f32 %v5370, %v4526
        %v5374 = vadd.f32 %v5329, %v5371
        %v5375 = vadd.f32 %v5330, %v5372
        %v5376 = vadd.f32 %v5331, %v5373
        %v5377 = vmul.f32 %v5287, %v4327
        %v5378 = vmul.f32 %v5288, %v4328
        %v5379 = vmul.f32 %v5289, %v4329
        %v5380 = vadd.f32 %v5377, %v4336
        %v5381 = vadd.f32 %v5378, %v4337
        %v5382 = vadd.f32 %v5379, %v4338
        %v5383 = vsel %vm2156, %v5380, -inf
        %5384 = vmax.xlane.f32.xlu0 %v5383
        %v5385 = vpop.xlane.xlu0 %5384
        %v5386 = vsel %vm2156, %v5381, -inf
        %5387 = vmax.xlane.f32.xlu0 %v5386
        %v5388 = vpop.xlane.xlu0 %5387
        %v5389 = vsel %vm4449, %v5382, -inf
        %5390 = vmax.xlane.f32.xlu0 %v5389
        %v5391 = vpop.xlane.xlu0 %5390
        %v5392 = vsub.f32 %v5380, %v5385
        %v5393 = vsub.f32 %v5381, %v5388
        %v5394 = vsub.f32 %v5382, %v5391
        %v5395 = vmul.f32 %v5392, 1.442695
        %v5396 = vpow.pop %v5395
        %v5397 = vmul.f32 %v5393, 1.442695
        %v5398 = vpow.pop %v5397
        %v5399 = vmul.f32 %v5394, 1.442695
        %v5400 = vpow.pop %v5399
        %v5401 = vsel %vm2156, %v5396, 0.0
        %5402 = vadd.xlane.f32.xlu0 %v5401
        %v5403 = vpop.xlane.xlu0 %5402
        %v5404 = vsel %vm2156, %v5398, 0.0
        %5405 = vadd.xlane.f32.xlu0 %v5404
        %v5406 = vpop.xlane.xlu0 %5405
        %v5407 = vsel %vm4449, %v5400, 0.0
        %5408 = vadd.xlane.f32.xlu0 %v5407
        %v5409 = vpop.xlane.xlu0 %5408
        %v5410 = vrcp.pop %v5403
        %v5411 = vrcp.pop %v5406
        %v5412 = vrcp.pop %v5409
        %v5413 = vmul.f32 %v5396, %v5410
        %v5414 = vmul.f32 %v5398, %v5411
        %v5415 = vmul.f32 %v5400, %v5412
        %v5416 = vmul.f32 %v5413, %v4576
        %v5417 = vmul.f32 %v5414, %v4576
        %v5418 = vmul.f32 %v5415, %v4576
        %v5419 = vadd.f32 %v5374, %v5416
        %v5420 = vadd.f32 %v5375, %v5417
        %v5421 = vadd.f32 %v5376, %v5418
        %5422 = vrot.lane.b32.xlu0 %v4313, 80
        %v5423 = vpop.permute.xlu0 %5422
        %5424 = vrot.lane.b32.xlu0 %v4318, 80
        %v5425 = vpop.permute.xlu0 %5424
        %v5429 = vsel %vm2156, %v5419, 0
        %v5432 = vsel %vm2156, %v5420, 0
        %v5435 = vsel %vm2156, %v5421, 0
        %5437 = vmatprep.subr.mxu0 0.0
        %5438 = vmatpush1.msra.mxu0 0.0
        %5439 = vmatprep.subr.mxu0 0.0
        %5440 = vmatpush1.msra.mxu0 0.0
        %5441 = vmatprep.subr.mxu0 0.0
        %5442 = vmatpush1.msra.mxu0 0.0
        %5443 = vmatprep.subr.mxu0 0.0
        %5444 = vmatpush1.msra.mxu0 0.0
        %5445 = vmatprep.subr.mxu0 0.0
        %5446 = vmatpush1.msra.mxu0 0.0
        %5447 = vmatprep.subr.mxu0 0.0
        %5448 = vmatpush1.msra.mxu0 0.0
        %5449 = vmatprep.subr.mxu0 0.0
        %5450 = vmatpush1.msra.mxu0 0.0
        %5451 = vmatprep.subr.mxu0 0.0
        %5452 = vmatpush1.msra.mxu0 0.0
        %5453 = vmatprep.subr.mxu0 0.0
        %5454 = vmatpush1.msra.mxu0 0.0
        %5455 = vmatprep.subr.mxu0 0.0
        %5456 = vmatpush1.msra.mxu0 0.0
        %5457 = vmatprep.subr.mxu0 0.0
        %5458 = vmatpush1.msra.mxu0 0.0
        %5459 = vmatprep.subr.mxu0 0.0
        %5460 = vmatpush1.msra.mxu0 0.0
        %5461 = vmatprep.subr.mxu0 0.0
        %5462 = vmatpush1.msra.mxu0 0.0
        %5463 = vmatprep.subr.mxu0 0.0
        %5464 = vmatpush1.msra.mxu0 0.0
        %5465 = vmatprep.subr.mxu0 0.0
        %5466 = vmatpush1.msra.mxu0 %v5425
        %5467 = vmatprep.subr.mxu0 0.0
        %5468 = vmatpush1.msra.mxu0 %v5423
        %5469 = vmatprep.subr.mxu0 0.0
        %5470 = vmatpush2.msra.mxu0 0.0
        %5471 = vmatprep.subr.mxu0 0.0
        %5472 = vmatpush2.msra.mxu0 0.0
        %5473 = vmatprep.subr.mxu0 0.0
        %5474 = vmatpush2.msra.mxu0 0.0
        %5475 = vmatprep.subr.mxu0 0.0
        %5476 = vmatpush2.msra.mxu0 0.0
        %5477 = vmatprep.subr.mxu0 0.0
        %5478 = vmatpush2.msra.mxu0 0.0
        %5479 = vmatprep.subr.mxu0 0.0
        %5480 = vmatpush2.msra.mxu0 0.0
        %5481 = vmatprep.subr.mxu0 0.0
        %5482 = vmatpush2.msra.mxu0 0.0
        %5483 = vmatprep.subr.mxu0 0.0
        %5484 = vmatpush2.msra.mxu0 0.0
        %5485 = vmatprep.subr.mxu0 0.0
        %5486 = vmatpush2.msra.mxu0 0.0
        %5487 = vmatprep.subr.mxu0 0.0
        %5488 = vmatpush2.msra.mxu0 0.0
        %5489 = vmatprep.subr.mxu0 0.0
        %5490 = vmatpush2.msra.mxu0 0.0
        %5491 = vmatprep.subr.mxu0 0.0
        %5492 = vmatpush2.msra.mxu0 0.0
        %5493 = vmatprep.subr.mxu0 0.0
        %5494 = vmatpush2.msra.mxu0 0.0
        %5495 = vmatprep.subr.mxu0 0.0
        %5496 = vmatpush2.msra.mxu0 0.0
        %5497 = vmatprep.subr.mxu0 0.0
        %5498 = vmatpush2.msra.mxu0 0.0
        %5499 = vmatprep.subr.mxu0 0.0
        %5500 = vmatpush2.msra.mxu0 0.0
        %5501 = vmatprep.mubr.f32.mxu0 0.0
        %5502 = vmatmul.mubr.f32.gmra.mxu0 %v5429
        %v5503 = vpop.f32.mrf.mxu0
        %v5504 = vadd.f32 0.0, %v5503
        %v5505 = vpop.f32.mrf.mxu0
        %5506 = vmatprep.mubr.f32.mxu0 0.0
        %5507 = vmatmul.mubr.f32.gmra.mxu0 %v5432
        %v5508 = vpop.f32.mrf.mxu0
        %v5509 = vadd.f32 0.0, %v5508
        %v5510 = vpop.f32.mrf.mxu0
        %5511 = vmatprep.mubr.f32.mxu0 0.0
        %5512 = vmatmul.mubr.f32.gmra.mxu0 %v5435
        %v5513 = vpop.f32.mrf.mxu0
        %v5514 = vadd.f32 0.0, %v5513
        %v5515 = vpop.f32.mrf.mxu0
        %5516 = vdwg.mxu0
        %v5518 = vsel %vm2436, %v5504, 0
        %v5521 = vsel %vm2436, %v5509, 0
        %v5524 = vsel %vm2436, %v5514, 0
        %5526 = vmatprep.subr.mxu0 0.0
        %5527 = vmatpush1.msra.mxu0 0.0
        %5528 = vmatprep.subr.mxu0 0.0
        %5529 = vmatpush1.msra.mxu0 0.0
        %5530 = vmatprep.subr.mxu0 0.0
        %5531 = vmatpush1.msra.mxu0 0.0
        %5532 = vmatprep.subr.mxu0 0.0
        %5533 = vmatpush1.msra.mxu0 0.0
        %5534 = vmatprep.subr.mxu0 0.0
        %5535 = vmatpush1.msra.mxu0 0.0
        %5536 = vmatprep.subr.mxu0 0.0
        %5537 = vmatpush1.msra.mxu0 0.0
        %5538 = vmatprep.subr.mxu0 0.0
        %5539 = vmatpush1.msra.mxu0 0.0
        %5540 = vmatprep.subr.mxu0 0.0
        %5541 = vmatpush1.msra.mxu0 0.0
        %5542 = vmatprep.subr.mxu0 0.0
        %5543 = vmatpush1.msra.mxu0 0.0
        %5544 = vmatprep.subr.mxu0 0.0
        %5545 = vmatpush1.msra.mxu0 0.0
        %5546 = vmatprep.subr.mxu0 0.0
        %5547 = vmatpush1.msra.mxu0 0.0
        %5548 = vmatprep.subr.mxu0 0.0
        %5549 = vmatpush1.msra.mxu0 0.0
        %5550 = vmatprep.subr.mxu0 0.0
        %5551 = vmatpush1.msra.mxu0 0.0
        %5552 = vmatprep.subr.mxu0 0.0
        %5553 = vmatpush1.msra.mxu0 0.0
        %5554 = vmatprep.subr.mxu0 0.0
        %5555 = vmatpush1.msra.mxu0 0.0
        %5556 = vmatprep.subr.mxu0 0.0
        %5557 = vmatpush1.msra.mxu0 %v3969
        %5558 = vmatprep.subr.mxu0 0.0
        %5559 = vmatpush2.msra.mxu0 0.0
        %5560 = vmatprep.subr.mxu0 0.0
        %5561 = vmatpush2.msra.mxu0 0.0
        %5562 = vmatprep.subr.mxu0 0.0
        %5563 = vmatpush2.msra.mxu0 0.0
        %5564 = vmatprep.subr.mxu0 0.0
        %5565 = vmatpush2.msra.mxu0 0.0
        %5566 = vmatprep.subr.mxu0 0.0
        %5567 = vmatpush2.msra.mxu0 0.0
        %5568 = vmatprep.subr.mxu0 0.0
        %5569 = vmatpush2.msra.mxu0 0.0
        %5570 = vmatprep.subr.mxu0 0.0
        %5571 = vmatpush2.msra.mxu0 0.0
        %5572 = vmatprep.subr.mxu0 0.0
        %5573 = vmatpush2.msra.mxu0 0.0
        %5574 = vmatprep.subr.mxu0 0.0
        %5575 = vmatpush2.msra.mxu0 0.0
        %5576 = vmatprep.subr.mxu0 0.0
        %5577 = vmatpush2.msra.mxu0 0.0
        %5578 = vmatprep.subr.mxu0 0.0
        %5579 = vmatpush2.msra.mxu0 0.0
        %5580 = vmatprep.subr.mxu0 0.0
        %5581 = vmatpush2.msra.mxu0 0.0
        %5582 = vmatprep.subr.mxu0 0.0
        %5583 = vmatpush2.msra.mxu0 0.0
        %5584 = vmatprep.subr.mxu0 0.0
        %5585 = vmatpush2.msra.mxu0 0.0
        %5586 = vmatprep.subr.mxu0 0.0
        %5587 = vmatpush2.msra.mxu0 0.0
        %5588 = vmatprep.subr.mxu0 0.0
        %5589 = vmatpush2.msra.mxu0 0.0
        %5590 = vmatprep.mubr.f32.mxu0 0.0
        %5591 = vmatmul.mubr.f32.gmra.mxu0 %v5518
        %v5592 = vpop.f32.mrf.mxu0
        %v5593 = vadd.f32 0.0, %v5592
        %v5594 = vpop.f32.mrf.mxu0
        %5595 = vmatprep.mubr.f32.mxu0 0.0
        %5596 = vmatmul.mubr.f32.gmra.mxu0 %v5521
        %v5597 = vpop.f32.mrf.mxu0
        %v5598 = vadd.f32 0.0, %v5597
        %v5599 = vpop.f32.mrf.mxu0
        %5600 = vmatprep.mubr.f32.mxu0 0.0
        %5601 = vmatmul.mubr.f32.gmra.mxu0 %v5524
        %v5602 = vpop.f32.mrf.mxu0
        %v5603 = vadd.f32 0.0, %v5602
        %v5604 = vpop.f32.mrf.mxu0
        %5605 = vdwg.mxu0
        %v5606 = vadd.f32 %v5174, %v5593
        %v5607 = vadd.f32 %v5179, %v5598
        %v5608 = vadd.f32 %v5184, %v5603
        %5609 = vrot.lane.b32.xlu0 %v4221, 104
        %v5610 = vpop.permute.xlu0 %5609
        %5611 = vrot.lane.b32.xlu0 %v4226, 104
        %v5612 = vpop.permute.xlu0 %5611
        %5613 = vrot.lane.b32.xlu0 %v4231, 104
        %v5614 = vpop.permute.xlu0 %5613
        %5615 = vrot.lane.b32.xlu0 %v4313, 104
        %v5616 = vpop.permute.xlu0 %5615
        %5617 = vrot.lane.b32.xlu0 %v4318, 104
        %v5618 = vpop.permute.xlu0 %5617
        %v5619 = vsel %vm2436, %v5610, 0
        %v5621 = vsel %vm2436, %v5612, 0
        %v5623 = vsel %vm2436, %v5614, 0
        %v5625 = vsel %vm2436, %v5616, 0
        %v5627 = vsel %vm2436, %v5618, 0
        %5629 = vmatprep.subr.mxu0 0.0
        %5630 = vmatpush1.xpose.msra.mxu0 0.0
        %5631 = vmatprep.subr.mxu0 0.0
        %5632 = vmatpush1.xpose.msra.mxu0 0.0
        %5633 = vmatprep.subr.mxu0 0.0
        %5634 = vmatpush1.xpose.msra.mxu0 0.0
        %5635 = vmatprep.subr.mxu0 0.0
        %5636 = vmatpush1.xpose.msra.mxu0 0.0
        %5637 = vmatprep.subr.mxu0 0.0
        %5638 = vmatpush1.xpose.msra.mxu0 0.0
        %5639 = vmatprep.subr.mxu0 0.0
        %5640 = vmatpush1.xpose.msra.mxu0 0.0
        %5641 = vmatprep.subr.mxu0 0.0
        %5642 = vmatpush1.xpose.msra.mxu0 0.0
        %5643 = vmatprep.subr.mxu0 0.0
        %5644 = vmatpush1.xpose.msra.mxu0 0.0
        %5645 = vmatprep.subr.mxu0 0.0
        %5646 = vmatpush1.xpose.msra.mxu0 0.0
        %5647 = vmatprep.subr.mxu0 0.0
        %5648 = vmatpush1.xpose.msra.mxu0 0.0
        %5649 = vmatprep.subr.mxu0 0.0
        %5650 = vmatpush1.xpose.msra.mxu0 0.0
        %5651 = vmatprep.subr.mxu0 0.0
        %5652 = vmatpush1.xpose.msra.mxu0 0.0
        %5653 = vmatprep.subr.mxu0 0.0
        %5654 = vmatpush1.xpose.msra.mxu0 0.0
        %5655 = vmatprep.subr.mxu0 0.0
        %5656 = vmatpush1.xpose.msra.mxu0 0.0
        %5657 = vmatprep.subr.mxu0 0.0
        %5658 = vmatpush1.xpose.msra.mxu0 %v5627
        %5659 = vmatprep.subr.mxu0 0.0
        %5660 = vmatpush1.xpose.msra.mxu0 %v5625
        %5661 = vmatprep.subr.mxu0 0.0
        %5662 = vmatpush2.xpose.msra.mxu0 0.0
        %5663 = vmatprep.subr.mxu0 0.0
        %5664 = vmatpush2.xpose.msra.mxu0 0.0
        %5665 = vmatprep.subr.mxu0 0.0
        %5666 = vmatpush2.xpose.msra.mxu0 0.0
        %5667 = vmatprep.subr.mxu0 0.0
        %5668 = vmatpush2.xpose.msra.mxu0 0.0
        %5669 = vmatprep.subr.mxu0 0.0
        %5670 = vmatpush2.xpose.msra.mxu0 0.0
        %5671 = vmatprep.subr.mxu0 0.0
        %5672 = vmatpush2.xpose.msra.mxu0 0.0
        %5673 = vmatprep.subr.mxu0 0.0
        %5674 = vmatpush2.xpose.msra.mxu0 0.0
        %5675 = vmatprep.subr.mxu0 0.0
        %5676 = vmatpush2.xpose.msra.mxu0 0.0
        %5677 = vmatprep.subr.mxu0 0.0
        %5678 = vmatpush2.xpose.msra.mxu0 0.0
        %5679 = vmatprep.subr.mxu0 0.0
        %5680 = vmatpush2.xpose.msra.mxu0 0.0
        %5681 = vmatprep.subr.mxu0 0.0
        %5682 = vmatpush2.xpose.msra.mxu0 0.0
        %5683 = vmatprep.subr.mxu0 0.0
        %5684 = vmatpush2.xpose.msra.mxu0 0.0
        %5685 = vmatprep.subr.mxu0 0.0
        %5686 = vmatpush2.xpose.msra.mxu0 0.0
        %5687 = vmatprep.subr.mxu0 0.0
        %5688 = vmatpush2.xpose.msra.mxu0 0.0
        %5689 = vmatprep.subr.mxu0 0.0
        %5690 = vmatpush2.xpose.msra.mxu0 0.0
        %5691 = vmatprep.subr.mxu0 0.0
        %5692 = vmatpush2.xpose.msra.mxu0 0.0
        %5693 = vmatprep.mubr.f32.mxu0 0.0
        %5694 = vmatmul.mubr.f32.gmra.mxu0 %v5619
        %v5695 = vpop.f32.mrf.mxu0
        %v5696 = vadd.f32 0.0, %v5695
        %v5697 = vpop.f32.mrf.mxu0
        %5698 = vmatprep.mubr.f32.mxu0 0.0
        %5699 = vmatmul.mubr.f32.gmra.mxu0 %v5621
        %v5700 = vpop.f32.mrf.mxu0
        %v5701 = vadd.f32 0.0, %v5700
        %v5702 = vpop.f32.mrf.mxu0
        %5703 = vmatprep.mubr.f32.mxu0 0.0
        %5704 = vmatmul.mubr.f32.gmra.mxu0 %v5623
        %v5705 = vpop.f32.mrf.mxu0
        %v5706 = vadd.f32 0.0, %v5705
        %v5707 = vpop.f32.mrf.mxu0
        %5708 = vdwg.mxu0
        %v5709 = vmul.f32 %v5696, 0.35355338
        %v5710 = vmul.f32 %v5701, 0.35355338
        %v5711 = vmul.f32 %v5706, 0.35355338
        %v5712 = vmul.f32 %v5709, %v4321
        %v5713 = vmul.f32 %v5710, %v4322
        %v5714 = vmul.f32 %v5711, %v4323
        %v5715 = vadd.f32 %v5712, %v4330
        %v5716 = vadd.f32 %v5713, %v4331
        %v5717 = vadd.f32 %v5714, %v4332
        %v5718 = vsel %vm2156, %v5715, -inf
        %5719 = vmax.xlane.f32.xlu0 %v5718
        %v5720 = vpop.xlane.xlu0 %5719
        %v5721 = vsel %vm2156, %v5716, -inf
        %5722 = vmax.xlane.f32.xlu0 %v5721
        %v5723 = vpop.xlane.xlu0 %5722
        %v5724 = vsel %vm4449, %v5717, -inf
        %5725 = vmax.xlane.f32.xlu0 %v5724
        %v5726 = vpop.xlane.xlu0 %5725
        %v5727 = vsub.f32 %v5715, %v5720
        %v5728 = vsub.f32 %v5716, %v5723
        %v5729 = vsub.f32 %v5717, %v5726
        %v5730 = vmul.f32 %v5727, 1.442695
        %v5731 = vpow.pop %v5730
        %v5732 = vmul.f32 %v5728, 1.442695
        %v5733 = vpow.pop %v5732
        %v5734 = vmul.f32 %v5729, 1.442695
        %v5735 = vpow.pop %v5734
        %v5736 = vsel %vm2156, %v5731, 0.0
        %5737 = vadd.xlane.f32.xlu0 %v5736
        %v5738 = vpop.xlane.xlu0 %5737
        %v5739 = vsel %vm2156, %v5733, 0.0
        %5740 = vadd.xlane.f32.xlu0 %v5739
        %v5741 = vpop.xlane.xlu0 %5740
        %v5742 = vsel %vm4449, %v5735, 0.0
        %5743 = vadd.xlane.f32.xlu0 %v5742
        %v5744 = vpop.xlane.xlu0 %5743
        %v5745 = vrcp.pop %v5738
        %v5746 = vrcp.pop %v5741
        %v5747 = vrcp.pop %v5744
        %v5748 = vmul.f32 %v5731, %v5745
        %v5749 = vmul.f32 %v5733, %v5746
        %v5750 = vmul.f32 %v5735, %v5747
        %v5751 = vmul.f32 %v5748, %v4479
        %v5752 = vmul.f32 %v5749, %v4479
        %v5753 = vmul.f32 %v5750, %v4479
        %v5754 = vmul.f32 %v5709, %v4324
        %v5755 = vmul.f32 %v5710, %v4325
        %v5756 = vmul.f32 %v5711, %v4326
        %v5757 = vadd.f32 %v5754, %v4333
        %v5758 = vadd.f32 %v5755, %v4334
        %v5759 = vadd.f32 %v5756, %v4335
        %v5760 = vsel %vm2156, %v5757, -inf
        %5761 = vmax.xlane.f32.xlu0 %v5760
        %v5762 = vpop.xlane.xlu0 %5761
        %v5763 = vsel %vm2156, %v5758, -inf
        %5764 = vmax.xlane.f32.xlu0 %v5763
        %v5765 = vpop.xlane.xlu0 %5764
        %v5766 = vsel %vm4449, %v5759, -inf
        %5767 = vmax.xlane.f32.xlu0 %v5766
        %v5768 = vpop.xlane.xlu0 %5767
        %v5769 = vsub.f32 %v5757, %v5762
        %v5770 = vsub.f32 %v5758, %v5765
        %v5771 = vsub.f32 %v5759, %v5768
        %v5772 = vmul.f32 %v5769, 1.442695
        %v5773 = vpow.pop %v5772
        %v5774 = vmul.f32 %v5770, 1.442695
        %v5775 = vpow.pop %v5774
        %v5776 = vmul.f32 %v5771, 1.442695
        %v5777 = vpow.pop %v5776
        %v5778 = vsel %vm2156, %v5773, 0.0
        %5779 = vadd.xlane.f32.xlu0 %v5778
        %v5780 = vpop.xlane.xlu0 %5779
        %v5781 = vsel %vm2156, %v5775, 0.0
        %5782 = vadd.xlane.f32.xlu0 %v5781
        %v5783 = vpop.xlane.xlu0 %5782
        %v5784 = vsel %vm4449, %v5777, 0.0
        %5785 = vadd.xlane.f32.xlu0 %v5784
        %v5786 = vpop.xlane.xlu0 %5785
        %v5787 = vrcp.pop %v5780
        %v5788 = vrcp.pop %v5783
        %v5789 = vrcp.pop %v5786
        %v5790 = vmul.f32 %v5773, %v5787
        %v5791 = vmul.f32 %v5775, %v5788
        %v5792 = vmul.f32 %v5777, %v5789
        %v5793 = vmul.f32 %v5790, %v4526
        %v5794 = vmul.f32 %v5791, %v4526
        %v5795 = vmul.f32 %v5792, %v4526
        %v5796 = vadd.f32 %v5751, %v5793
        %v5797 = vadd.f32 %v5752, %v5794
        %v5798 = vadd.f32 %v5753, %v5795
        %v5799 = vmul.f32 %v5709, %v4327
        %v5800 = vmul.f32 %v5710, %v4328
        %v5801 = vmul.f32 %v5711, %v4329
        %v5802 = vadd.f32 %v5799, %v4336
        %v5803 = vadd.f32 %v5800, %v4337
        %v5804 = vadd.f32 %v5801, %v4338
        %v5805 = vsel %vm2156, %v5802, -inf
        %5806 = vmax.xlane.f32.xlu0 %v5805
        %v5807 = vpop.xlane.xlu0 %5806
        %v5808 = vsel %vm2156, %v5803, -inf
        %5809 = vmax.xlane.f32.xlu0 %v5808
        %v5810 = vpop.xlane.xlu0 %5809
        %v5811 = vsel %vm4449, %v5804, -inf
        %5812 = vmax.xlane.f32.xlu0 %v5811
        %v5813 = vpop.xlane.xlu0 %5812
        %v5814 = vsub.f32 %v5802, %v5807
        %v5815 = vsub.f32 %v5803, %v5810
        %v5816 = vsub.f32 %v5804, %v5813
        %v5817 = vmul.f32 %v5814, 1.442695
        %v5818 = vpow.pop %v5817
        %v5819 = vmul.f32 %v5815, 1.442695
        %v5820 = vpow.pop %v5819
        %v5821 = vmul.f32 %v5816, 1.442695
        %v5822 = vpow.pop %v5821
        %v5823 = vsel %vm2156, %v5818, 0.0
        %5824 = vadd.xlane.f32.xlu0 %v5823
        %v5825 = vpop.xlane.xlu0 %5824
        %v5826 = vsel %vm2156, %v5820, 0.0
        %5827 = vadd.xlane.f32.xlu0 %v5826
        %v5828 = vpop.xlane.xlu0 %5827
        %v5829 = vsel %vm4449, %v5822, 0.0
        %5830 = vadd.xlane.f32.xlu0 %v5829
        %v5831 = vpop.xlane.xlu0 %5830
        %v5832 = vrcp.pop %v5825
        %v5833 = vrcp.pop %v5828
        %v5834 = vrcp.pop %v5831
        %v5835 = vmul.f32 %v5818, %v5832
        %v5836 = vmul.f32 %v5820, %v5833
        %v5837 = vmul.f32 %v5822, %v5834
        %v5838 = vmul.f32 %v5835, %v4576
        %v5839 = vmul.f32 %v5836, %v4576
        %v5840 = vmul.f32 %v5837, %v4576
        %v5841 = vadd.f32 %v5796, %v5838
        %v5842 = vadd.f32 %v5797, %v5839
        %v5843 = vadd.f32 %v5798, %v5840
        %5844 = vrot.lane.b32.xlu0 %v4313, 72
        %v5845 = vpop.permute.xlu0 %5844
        %5846 = vrot.lane.b32.xlu0 %v4318, 72
        %v5847 = vpop.permute.xlu0 %5846
        %v5851 = vsel %vm2156, %v5841, 0
        %v5854 = vsel %vm2156, %v5842, 0
        %v5857 = vsel %vm2156, %v5843, 0
        %5859 = vmatprep.subr.mxu0 0.0
        %5860 = vmatpush1.msra.mxu0 0.0
        %5861 = vmatprep.subr.mxu0 0.0
        %5862 = vmatpush1.msra.mxu0 0.0
        %5863 = vmatprep.subr.mxu0 0.0
        %5864 = vmatpush1.msra.mxu0 0.0
        %5865 = vmatprep.subr.mxu0 0.0
        %5866 = vmatpush1.msra.mxu0 0.0
        %5867 = vmatprep.subr.mxu0 0.0
        %5868 = vmatpush1.msra.mxu0 0.0
        %5869 = vmatprep.subr.mxu0 0.0
        %5870 = vmatpush1.msra.mxu0 0.0
        %5871 = vmatprep.subr.mxu0 0.0
        %5872 = vmatpush1.msra.mxu0 0.0
        %5873 = vmatprep.subr.mxu0 0.0
        %5874 = vmatpush1.msra.mxu0 0.0
        %5875 = vmatprep.subr.mxu0 0.0
        %5876 = vmatpush1.msra.mxu0 0.0
        %5877 = vmatprep.subr.mxu0 0.0
        %5878 = vmatpush1.msra.mxu0 0.0
        %5879 = vmatprep.subr.mxu0 0.0
        %5880 = vmatpush1.msra.mxu0 0.0
        %5881 = vmatprep.subr.mxu0 0.0
        %5882 = vmatpush1.msra.mxu0 0.0
        %5883 = vmatprep.subr.mxu0 0.0
        %5884 = vmatpush1.msra.mxu0 0.0
        %5885 = vmatprep.subr.mxu0 0.0
        %5886 = vmatpush1.msra.mxu0 0.0
        %5887 = vmatprep.subr.mxu0 0.0
        %5888 = vmatpush1.msra.mxu0 %v5847
        %5889 = vmatprep.subr.mxu0 0.0
        %5890 = vmatpush1.msra.mxu0 %v5845
        %5891 = vmatprep.subr.mxu0 0.0
        %5892 = vmatpush2.msra.mxu0 0.0
        %5893 = vmatprep.subr.mxu0 0.0
        %5894 = vmatpush2.msra.mxu0 0.0
        %5895 = vmatprep.subr.mxu0 0.0
        %5896 = vmatpush2.msra.mxu0 0.0
        %5897 = vmatprep.subr.mxu0 0.0
        %5898 = vmatpush2.msra.mxu0 0.0
        %5899 = vmatprep.subr.mxu0 0.0
        %5900 = vmatpush2.msra.mxu0 0.0
        %5901 = vmatprep.subr.mxu0 0.0
        %5902 = vmatpush2.msra.mxu0 0.0
        %5903 = vmatprep.subr.mxu0 0.0
        %5904 = vmatpush2.msra.mxu0 0.0
        %5905 = vmatprep.subr.mxu0 0.0
        %5906 = vmatpush2.msra.mxu0 0.0
        %5907 = vmatprep.subr.mxu0 0.0
        %5908 = vmatpush2.msra.mxu0 0.0
        %5909 = vmatprep.subr.mxu0 0.0
        %5910 = vmatpush2.msra.mxu0 0.0
        %5911 = vmatprep.subr.mxu0 0.0
        %5912 = vmatpush2.msra.mxu0 0.0
        %5913 = vmatprep.subr.mxu0 0.0
        %5914 = vmatpush2.msra.mxu0 0.0
        %5915 = vmatprep.subr.mxu0 0.0
        %5916 = vmatpush2.msra.mxu0 0.0
        %5917 = vmatprep.subr.mxu0 0.0
        %5918 = vmatpush2.msra.mxu0 0.0
        %5919 = vmatprep.subr.mxu0 0.0
        %5920 = vmatpush2.msra.mxu0 0.0
        %5921 = vmatprep.subr.mxu0 0.0
        %5922 = vmatpush2.msra.mxu0 0.0
        %5923 = vmatprep.mubr.f32.mxu0 0.0
        %5924 = vmatmul.mubr.f32.gmra.mxu0 %v5851
        %v5925 = vpop.f32.mrf.mxu0
        %v5926 = vadd.f32 0.0, %v5925
        %v5927 = vpop.f32.mrf.mxu0
        %5928 = vmatprep.mubr.f32.mxu0 0.0
        %5929 = vmatmul.mubr.f32.gmra.mxu0 %v5854
        %v5930 = vpop.f32.mrf.mxu0
        %v5931 = vadd.f32 0.0, %v5930
        %v5932 = vpop.f32.mrf.mxu0
        %5933 = vmatprep.mubr.f32.mxu0 0.0
        %5934 = vmatmul.mubr.f32.gmra.mxu0 %v5857
        %v5935 = vpop.f32.mrf.mxu0
        %v5936 = vadd.f32 0.0, %v5935
        %v5937 = vpop.f32.mrf.mxu0
        %5938 = vdwg.mxu0
        %v5940 = vsel %vm2436, %v5926, 0
        %v5943 = vsel %vm2436, %v5931, 0
        %v5946 = vsel %vm2436, %v5936, 0
        %5948 = vmatprep.subr.mxu0 0.0
        %5949 = vmatpush1.msra.mxu0 0.0
        %5950 = vmatprep.subr.mxu0 0.0
        %5951 = vmatpush1.msra.mxu0 0.0
        %5952 = vmatprep.subr.mxu0 0.0
        %5953 = vmatpush1.msra.mxu0 0.0
        %5954 = vmatprep.subr.mxu0 0.0
        %5955 = vmatpush1.msra.mxu0 0.0
        %5956 = vmatprep.subr.mxu0 0.0
        %5957 = vmatpush1.msra.mxu0 0.0
        %5958 = vmatprep.subr.mxu0 0.0
        %5959 = vmatpush1.msra.mxu0 0.0
        %5960 = vmatprep.subr.mxu0 0.0
        %5961 = vmatpush1.msra.mxu0 0.0
        %5962 = vmatprep.subr.mxu0 0.0
        %5963 = vmatpush1.msra.mxu0 0.0
        %5964 = vmatprep.subr.mxu0 0.0
        %5965 = vmatpush1.msra.mxu0 0.0
        %5966 = vmatprep.subr.mxu0 0.0
        %5967 = vmatpush1.msra.mxu0 0.0
        %5968 = vmatprep.subr.mxu0 0.0
        %5969 = vmatpush1.msra.mxu0 0.0
        %5970 = vmatprep.subr.mxu0 0.0
        %5971 = vmatpush1.msra.mxu0 0.0
        %5972 = vmatprep.subr.mxu0 0.0
        %5973 = vmatpush1.msra.mxu0 0.0
        %5974 = vmatprep.subr.mxu0 0.0
        %5975 = vmatpush1.msra.mxu0 0.0
        %5976 = vmatprep.subr.mxu0 0.0
        %5977 = vmatpush1.msra.mxu0 0.0
        %5978 = vmatprep.subr.mxu0 0.0
        %5979 = vmatpush1.msra.mxu0 %v3970
        %5980 = vmatprep.subr.mxu0 0.0
        %5981 = vmatpush2.msra.mxu0 0.0
        %5982 = vmatprep.subr.mxu0 0.0
        %5983 = vmatpush2.msra.mxu0 0.0
        %5984 = vmatprep.subr.mxu0 0.0
        %5985 = vmatpush2.msra.mxu0 0.0
        %5986 = vmatprep.subr.mxu0 0.0
        %5987 = vmatpush2.msra.mxu0 0.0
        %5988 = vmatprep.subr.mxu0 0.0
        %5989 = vmatpush2.msra.mxu0 0.0
        %5990 = vmatprep.subr.mxu0 0.0
        %5991 = vmatpush2.msra.mxu0 0.0
        %5992 = vmatprep.subr.mxu0 0.0
        %5993 = vmatpush2.msra.mxu0 0.0
        %5994 = vmatprep.subr.mxu0 0.0
        %5995 = vmatpush2.msra.mxu0 0.0
        %5996 = vmatprep.subr.mxu0 0.0
        %5997 = vmatpush2.msra.mxu0 0.0
        %5998 = vmatprep.subr.mxu0 0.0
        %5999 = vmatpush2.msra.mxu0 0.0
        %6000 = vmatprep.subr.mxu0 0.0
        %6001 = vmatpush2.msra.mxu0 0.0
        %6002 = vmatprep.subr.mxu0 0.0
        %6003 = vmatpush2.msra.mxu0 0.0
        %6004 = vmatprep.subr.mxu0 0.0
        %6005 = vmatpush2.msra.mxu0 0.0
        %6006 = vmatprep.subr.mxu0 0.0
        %6007 = vmatpush2.msra.mxu0 0.0
        %6008 = vmatprep.subr.mxu0 0.0
        %6009 = vmatpush2.msra.mxu0 0.0
        %6010 = vmatprep.subr.mxu0 0.0
        %6011 = vmatpush2.msra.mxu0 0.0
        %6012 = vmatprep.mubr.f32.mxu0 0.0
        %6013 = vmatmul.mubr.f32.gmra.mxu0 %v5940
        %v6014 = vpop.f32.mrf.mxu0
        %v6015 = vadd.f32 0.0, %v6014
        %v6016 = vpop.f32.mrf.mxu0
        %6017 = vmatprep.mubr.f32.mxu0 0.0
        %6018 = vmatmul.mubr.f32.gmra.mxu0 %v5943
        %v6019 = vpop.f32.mrf.mxu0
        %v6020 = vadd.f32 0.0, %v6019
        %v6021 = vpop.f32.mrf.mxu0
        %6022 = vmatprep.mubr.f32.mxu0 0.0
        %6023 = vmatmul.mubr.f32.gmra.mxu0 %v5946
        %v6024 = vpop.f32.mrf.mxu0
        %v6025 = vadd.f32 0.0, %v6024
        %v6026 = vpop.f32.mrf.mxu0
        %6027 = vdwg.mxu0
        %v6028 = vadd.f32 %v5606, %v6015
        %v6029 = vadd.f32 %v5607, %v6020
        %v6030 = vadd.f32 %v5608, %v6025
        %v6032 = vlaneseq
        %v6033 = vshrl.u32 %v6032, 7
        %v6034 = vsub.s32 0, %v6033
        %v6035 = vrot.slane %v3971, %v6034
        %v6037 = vadd.f32 %v6028, %v6035
        %v6038 = vadd.f32 %v6029, %v6035
        %v6039 = vadd.f32 %v6030, %v6035
        %v6040 = vadd.f32 %v2032, %v6037
        %v6041 = vadd.f32 %v2033, %v6038
        %v6042 = vadd.f32 %v2034, %v6039
        %v6043 = vsel %vm2067, %v6040, 0.0
        %6044 = vadd.xlane.f32.xlu0 %v6043
        %v6045 = vpop.xlane.xlu0 %6044
        %v6046 = vsel %vm2067, %v6041, 0.0
        %6047 = vadd.xlane.f32.xlu0 %v6046
        %v6048 = vpop.xlane.xlu0 %6047
        %v6049 = vsel %vm2071, %v6042, 0.0
        %6050 = vadd.xlane.f32.xlu0 %v6049
        %v6051 = vpop.xlane.xlu0 %6050
        %v6052 = vmul.f32 %v6045, %v3896
        %v6053 = vmul.f32 %v6048, %v3896
        %v6054 = vmul.f32 %v6051, %v3896
        %v6055 = vsub.f32 %v6040, %v6052
        %v6056 = vsub.f32 %v6041, %v6053
        %v6057 = vsub.f32 %v6042, %v6054
        %v6058 = vmul.f32 %v6055, %v6055
        %v6059 = vmul.f32 %v6056, %v6056
        %v6060 = vmul.f32 %v6057, %v6057
        %v6061 = vsel %vm2067, %v6058, 0.0
        %6062 = vadd.xlane.f32.xlu0 %v6061
        %v6063 = vpop.xlane.xlu0 %6062
        %v6064 = vsel %vm2067, %v6059, 0.0
        %6065 = vadd.xlane.f32.xlu0 %v6064
        %v6066 = vpop.xlane.xlu0 %6065
        %v6067 = vsel %vm2071, %v6060, 0.0
        %6068 = vadd.xlane.f32.xlu0 %v6067
        %v6069 = vpop.xlane.xlu0 %6068
        %v6070 = vmul.f32 %v6063, %v3909
        %v6071 = vmul.f32 %v6066, %v3909
        %v6072 = vmul.f32 %v6069, %v3909
        %v6073 = vrsqrt.pop %v6070
        %v6074 = vmul.f32 %v6070, %v6073
        %vm6075 = vcmp.eq.f32.partialorder %v6070, inf
        %v6076 = vsel %vm6075, %v6070, %v6074
        %vm6077 = vcmp.eq.f32.partialorder %v6070, 0.0
        %v6078 = vand.u32 %v6070, 2147483648
        %v6079 = vsel %vm6077, %v6078, %v6076
        %v6080 = vrsqrt.pop %v6071
        %v6081 = vmul.f32 %v6071, %v6080
        %vm6082 = vcmp.eq.f32.partialorder %v6071, inf
        %v6083 = vsel %vm6082, %v6071, %v6081
        %vm6084 = vcmp.eq.f32.partialorder %v6071, 0.0
        %v6085 = vand.u32 %v6071, 2147483648
        %v6086 = vsel %vm6084, %v6085, %v6083
        %v6087 = vrsqrt.pop %v6072
        %v6088 = vmul.f32 %v6072, %v6087
        %vm6089 = vcmp.eq.f32.partialorder %v6072, inf
        %v6090 = vsel %vm6089, %v6072, %v6088
        %vm6091 = vcmp.eq.f32.partialorder %v6072, 0.0
        %v6092 = vand.u32 %v6072, 2147483648
        %v6093 = vsel %vm6091, %v6092, %v6090
        %v6094 = vadd.f32 %v6079, 1e-06
        %v6095 = vadd.f32 %v6086, 1e-06
        %v6096 = vadd.f32 %v6093, 1e-06
        %v6097 = vrcp.pop %v6094
        %v6098 = vmul.f32 1.0, %v6097
        %v6099 = vrcp.pop %v6095
        %v6100 = vmul.f32 1.0, %v6099
        %v6101 = vrcp.pop %v6096
        %v6102 = vmul.f32 1.0, %v6101
        %v6103 = vlaneseq
        %v6104 = vshrl.u32 %v6103, 7
        %v6105 = vsub.s32 1, %v6104
        %v6106 = vrot.slane %v2035, %v6105
        %v6107 = vmul.f32 %v6106, %v6055
        %v6108 = vmul.f32 %v6106, %v6056
        %v6109 = vmul.f32 %v6106, %v6057
        %v6110 = vmul.f32 %v6107, %v6098
        %v6111 = vmul.f32 %v6108, %v6100
        %v6112 = vmul.f32 %v6109, %v6102
        %v6113 = vlaneseq
        %v6114 = vshrl.u32 %v6113, 7
        %v6115 = vsub.s32 1, %v6114
        %v6116 = vrot.slane %v2036, %v6115
        %v6117 = vadd.f32 %v6110, %v6116
        %v6118 = vadd.f32 %v6111, %v6116
        %v6119 = vadd.f32 %v6112, %v6116
        %6120 = vst.msk [vmem:[#allocation2] sm:$0xff] %vm2067, %v3944
        %6121 = vst.msk [vmem:[#allocation2 + $0x8] sm:$0xff] %vm2067, %v3945
        %6122 = vst.msk [vmem:[#allocation2 + $0x10] sm:$0xff] %vm2067, %v6117
        %6123 = vst.msk [vmem:[#allocation2 + $0x18] sm:$0xff] %vm2067, %v6118
        %6124 = vst.msk [vmem:[#allocation2 + $0x20] sm:$0xf] %vm2071, %v6119
        %v6125 = vld [vmem:[#allocation2] sm:$0xff]
        %v6126 = vld [vmem:[#allocation2 + $0x8] sm:$0xff]
        %v6127 = vld [vmem:[#allocation2 + $0x10] sm:$0xff]
        %v6128 = vld [vmem:[#allocation2 + $0x18] sm:$0xff]
        %v6129 = vld [vmem:[#allocation2 + $0x20] sm:$0xf]
        %v6130 = vld [vmem:[%s1993] sm:$0xff]
        %v6131 = vld [vmem:[%s1993 + $0x8] sm:$0xff]
        %v6132 = vld [vmem:[%s1993 + $0x10] sm:$0xff]
        %v6133 = vld [vmem:[%s1993 + $0x18] sm:$0xff]
        %v6134 = vld [vmem:[%s1646] sm:$0x1]
        %v6136 = vlaneseq
        %v6137 = vshrl.u32 %v6136, 7
        %v6138 = vsub.s32 0, %v6137
        %v6139 = vrot.slane %v6134, %v6138
        %v6142 = vsel %vm2067, %v6125, 0
        %v6145 = vsel %vm2067, %v6126, 0
        %v6148 = vsel %vm2067, %v6127, 0
        %v6151 = vsel %vm2067, %v6128, 0
        %v6154 = vsel %vm2067, %v6129, 0
        %6156 = vmatprep.subr.mxu0 0.0
        %6157 = vmatpush1.msra.mxu0 0.0
        %6158 = vmatprep.subr.mxu0 0.0
        %6159 = vmatpush1.msra.mxu0 0.0
        %6160 = vmatprep.subr.mxu0 0.0
        %6161 = vmatpush1.msra.mxu0 0.0
        %6162 = vmatprep.subr.mxu0 0.0
        %6163 = vmatpush1.msra.mxu0 0.0
        %6164 = vmatprep.subr.mxu0 0.0
        %6165 = vmatpush1.msra.mxu0 0.0
        %6166 = vmatprep.subr.mxu0 0.0
        %6167 = vmatpush1.msra.mxu0 0.0
        %6168 = vmatprep.subr.mxu0 0.0
        %6169 = vmatpush1.msra.mxu0 0.0
        %6170 = vmatprep.subr.mxu0 0.0
        %6171 = vmatpush1.msra.mxu0 0.0
        %6172 = vmatprep.subr.mxu0 0.0
        %6173 = vmatpush1.msra.mxu0 0.0
        %6174 = vmatprep.subr.mxu0 0.0
        %6175 = vmatpush1.msra.mxu0 0.0
        %6176 = vmatprep.subr.mxu0 0.0
        %6177 = vmatpush1.msra.mxu0 0.0
        %6178 = vmatprep.subr.mxu0 0.0
        %6179 = vmatpush1.msra.mxu0 0.0
        %6180 = vmatprep.subr.mxu0 0.0
        %6181 = vmatpush1.msra.mxu0 %v6133
        %6182 = vmatprep.subr.mxu0 0.0
        %6183 = vmatpush1.msra.mxu0 %v6132
        %6184 = vmatprep.subr.mxu0 0.0
        %6185 = vmatpush1.msra.mxu0 %v6131
        %6186 = vmatprep.subr.mxu0 0.0
        %6187 = vmatpush1.msra.mxu0 %v6130
        %6188 = vmatprep.subr.mxu0 0.0
        %6189 = vmatpush2.msra.mxu0 0.0
        %6190 = vmatprep.subr.mxu0 0.0
        %6191 = vmatpush2.msra.mxu0 0.0
        %6192 = vmatprep.subr.mxu0 0.0
        %6193 = vmatpush2.msra.mxu0 0.0
        %6194 = vmatprep.subr.mxu0 0.0
        %6195 = vmatpush2.msra.mxu0 0.0
        %6196 = vmatprep.subr.mxu0 0.0
        %6197 = vmatpush2.msra.mxu0 0.0
        %6198 = vmatprep.subr.mxu0 0.0
        %6199 = vmatpush2.msra.mxu0 0.0
        %6200 = vmatprep.subr.mxu0 0.0
        %6201 = vmatpush2.msra.mxu0 0.0
        %6202 = vmatprep.subr.mxu0 0.0
        %6203 = vmatpush2.msra.mxu0 0.0
        %6204 = vmatprep.subr.mxu0 0.0
        %6205 = vmatpush2.msra.mxu0 0.0
        %6206 = vmatprep.subr.mxu0 0.0
        %6207 = vmatpush2.msra.mxu0 0.0
        %6208 = vmatprep.subr.mxu0 0.0
        %6209 = vmatpush2.msra.mxu0 0.0
        %6210 = vmatprep.subr.mxu0 0.0
        %6211 = vmatpush2.msra.mxu0 0.0
        %6212 = vmatprep.subr.mxu0 0.0
        %6213 = vmatpush2.msra.mxu0 0.0
        %6214 = vmatprep.subr.mxu0 0.0
        %6215 = vmatpush2.msra.mxu0 0.0
        %6216 = vmatprep.subr.mxu0 0.0
        %6217 = vmatpush2.msra.mxu0 0.0
        %6218 = vmatprep.subr.mxu0 0.0
        %6219 = vmatpush2.msra.mxu0 0.0
        %6220 = vmatprep.mubr.f32.mxu0 0.0
        %6221 = vmatmul.mubr.f32.gmra.mxu0 %v6142
        %v6222 = vpop.f32.mrf.mxu0
        %v6223 = vadd.f32 %v6139, %v6222
        %v6224 = vpop.f32.mrf.mxu0
        %6225 = vmatprep.mubr.f32.mxu0 0.0
        %6226 = vmatmul.mubr.f32.gmra.mxu0 %v6145
        %v6227 = vpop.f32.mrf.mxu0
        %v6228 = vadd.f32 %v6139, %v6227
        %v6229 = vpop.f32.mrf.mxu0
        %6230 = vmatprep.mubr.f32.mxu0 0.0
        %6231 = vmatmul.mubr.f32.gmra.mxu0 %v6148
        %v6232 = vpop.f32.mrf.mxu0
        %v6233 = vadd.f32 %v6139, %v6232
        %v6234 = vpop.f32.mrf.mxu0
        %6235 = vmatprep.mubr.f32.mxu0 0.0
        %6236 = vmatmul.mubr.f32.gmra.mxu0 %v6151
        %v6237 = vpop.f32.mrf.mxu0
        %v6238 = vadd.f32 %v6139, %v6237
        %v6239 = vpop.f32.mrf.mxu0
        %6240 = vmatprep.mubr.f32.mxu0 0.0
        %6241 = vmatmul.mubr.f32.gmra.mxu0 %v6154
        %v6242 = vpop.f32.mrf.mxu0
        %v6243 = vadd.f32 %v6139, %v6242
        %v6244 = vpop.f32.mrf.mxu0
        %6245 = vdwg.mxu0
        %v6246 = vld [vmem:[%s1938] sm:$0xff]
        %v6247 = vld [vmem:[%s1938 + $0x8] sm:$0xff]
        %v6248 = vld [vmem:[%s1938 + $0x10] sm:$0xff]
        %v6249 = vld [vmem:[%s1938 + $0x18] sm:$0xff]
        %v6250 = vld [vmem:[%s1938 + $0x20] sm:$0xf]
        %v6251 = vld [vmem:[%s1998] sm:$0xff]
        %v6252 = vld [vmem:[%s1998 + $0x8] sm:$0xff]
        %v6253 = vld [vmem:[%s1998 + $0x10] sm:$0xff]
        %v6254 = vld [vmem:[%s1998 + $0x18] sm:$0xff]
        %v6255 = vld [vmem:[%s1654] sm:$0x1]
        %v6256 = vsub.f32 1.0, %v6246
        %v6257 = vsub.f32 1.0, %v6247
        %v6258 = vsub.f32 1.0, %v6248
        %v6259 = vsub.f32 1.0, %v6249
        %v6260 = vsub.f32 1.0, %v6250
        %v6261 = vmul.f32 %v6246, -1e+09
        %v6262 = vmul.f32 %v6247, -1e+09
        %v6263 = vmul.f32 %v6248, -1e+09
        %v6264 = vmul.f32 %v6249, -1e+09
        %v6265 = vmul.f32 %v6250, -1e+09
        %6271 = vrot.lane.b32.xlu0 %v6223, 96
        %v6272 = vpop.permute.xlu0 %6271
        %6273 = vrot.lane.b32.xlu0 %v6228, 96
        %v6274 = vpop.permute.xlu0 %6273
        %6275 = vrot.lane.b32.xlu0 %v6233, 96
        %v6276 = vpop.permute.xlu0 %6275
        %6277 = vrot.lane.b32.xlu0 %v6238, 96
        %v6278 = vpop.permute.xlu0 %6277
        %6279 = vrot.lane.b32.xlu0 %v6243, 96
        %v6280 = vpop.permute.xlu0 %6279
        %v6281 = vsel %vm2436, %v6223, 0
        %v6283 = vsel %vm2436, %v6228, 0
        %v6285 = vsel %vm2436, %v6233, 0
        %v6287 = vsel %vm2436, %v6238, 0
        %v6289 = vsel %vm2436, %v6243, 0
        %v6291 = vsel %vm2436, %v6272, 0
        %v6293 = vsel %vm2436, %v6274, 0
        %v6295 = vsel %vm2436, %v6276, 0
        %v6297 = vsel %vm2436, %v6278, 0
        %v6299 = vsel %vm2436, %v6280, 0
        %6301 = vmatprep.subr.mxu0 0.0
        %6302 = vmatpush1.xpose.msra.mxu0 0.0
        %6303 = vmatprep.subr.mxu0 0.0
        %6304 = vmatpush1.xpose.msra.mxu0 0.0
        %6305 = vmatprep.subr.mxu0 0.0
        %6306 = vmatpush1.xpose.msra.mxu0 0.0
        %6307 = vmatprep.subr.mxu0 0.0
        %6308 = vmatpush1.xpose.msra.mxu0 0.0
        %6309 = vmatprep.subr.mxu0 0.0
        %6310 = vmatpush1.xpose.msra.mxu0 0.0
        %6311 = vmatprep.subr.mxu0 0.0
        %6312 = vmatpush1.xpose.msra.mxu0 0.0
        %6313 = vmatprep.subr.mxu0 0.0
        %6314 = vmatpush1.xpose.msra.mxu0 0.0
        %6315 = vmatprep.subr.mxu0 0.0
        %6316 = vmatpush1.xpose.msra.mxu0 0.0
        %6317 = vmatprep.subr.mxu0 0.0
        %6318 = vmatpush1.xpose.msra.mxu0 0.0
        %6319 = vmatprep.subr.mxu0 0.0
        %6320 = vmatpush1.xpose.msra.mxu0 0.0
        %6321 = vmatprep.subr.mxu0 0.0
        %6322 = vmatpush1.xpose.msra.mxu0 0.0
        %6323 = vmatprep.subr.mxu0 0.0
        %6324 = vmatpush1.xpose.msra.mxu0 %v6299
        %6325 = vmatprep.subr.mxu0 0.0
        %6326 = vmatpush1.xpose.msra.mxu0 %v6297
        %6327 = vmatprep.subr.mxu0 0.0
        %6328 = vmatpush1.xpose.msra.mxu0 %v6295
        %6329 = vmatprep.subr.mxu0 0.0
        %6330 = vmatpush1.xpose.msra.mxu0 %v6293
        %6331 = vmatprep.subr.mxu0 0.0
        %6332 = vmatpush1.xpose.msra.mxu0 %v6291
        %6333 = vmatprep.subr.mxu0 0.0
        %6334 = vmatpush2.xpose.msra.mxu0 0.0
        %6335 = vmatprep.subr.mxu0 0.0
        %6336 = vmatpush2.xpose.msra.mxu0 0.0
        %6337 = vmatprep.subr.mxu0 0.0
        %6338 = vmatpush2.xpose.msra.mxu0 0.0
        %6339 = vmatprep.subr.mxu0 0.0
        %6340 = vmatpush2.xpose.msra.mxu0 0.0
        %6341 = vmatprep.subr.mxu0 0.0
        %6342 = vmatpush2.xpose.msra.mxu0 0.0
        %6343 = vmatprep.subr.mxu0 0.0
        %6344 = vmatpush2.xpose.msra.mxu0 0.0
        %6345 = vmatprep.subr.mxu0 0.0
        %6346 = vmatpush2.xpose.msra.mxu0 0.0
        %6347 = vmatprep.subr.mxu0 0.0
        %6348 = vmatpush2.xpose.msra.mxu0 0.0
        %6349 = vmatprep.subr.mxu0 0.0
        %6350 = vmatpush2.xpose.msra.mxu0 0.0
        %6351 = vmatprep.subr.mxu0 0.0
        %6352 = vmatpush2.xpose.msra.mxu0 0.0
        %6353 = vmatprep.subr.mxu0 0.0
        %6354 = vmatpush2.xpose.msra.mxu0 0.0
        %6355 = vmatprep.subr.mxu0 0.0
        %6356 = vmatpush2.xpose.msra.mxu0 0.0
        %6357 = vmatprep.subr.mxu0 0.0
        %6358 = vmatpush2.xpose.msra.mxu0 0.0
        %6359 = vmatprep.subr.mxu0 0.0
        %6360 = vmatpush2.xpose.msra.mxu0 0.0
        %6361 = vmatprep.subr.mxu0 0.0
        %6362 = vmatpush2.xpose.msra.mxu0 0.0
        %6363 = vmatprep.subr.mxu0 0.0
        %6364 = vmatpush2.xpose.msra.mxu0 0.0
        %6365 = vmatprep.mubr.f32.mxu0 0.0
        %6366 = vmatmul.mubr.f32.gmra.mxu0 %v6281
        %v6367 = vpop.f32.mrf.mxu0
        %v6368 = vadd.f32 0.0, %v6367
        %v6369 = vpop.f32.mrf.mxu0
        %6370 = vmatprep.mubr.f32.mxu0 0.0
        %6371 = vmatmul.mubr.f32.gmra.mxu0 %v6283
        %v6372 = vpop.f32.mrf.mxu0
        %v6373 = vadd.f32 0.0, %v6372
        %v6374 = vpop.f32.mrf.mxu0
        %6375 = vmatprep.mubr.f32.mxu0 0.0
        %6376 = vmatmul.mubr.f32.gmra.mxu0 %v6285
        %v6377 = vpop.f32.mrf.mxu0
        %v6378 = vadd.f32 0.0, %v6377
        %v6379 = vpop.f32.mrf.mxu0
        %6380 = vmatprep.mubr.f32.mxu0 0.0
        %6381 = vmatmul.mubr.f32.gmra.mxu0 %v6287
        %v6382 = vpop.f32.mrf.mxu0
        %v6383 = vadd.f32 0.0, %v6382
        %v6384 = vpop.f32.mrf.mxu0
        %6385 = vmatprep.mubr.f32.mxu0 0.0
        %6386 = vmatmul.mubr.f32.gmra.mxu0 %v6289
        %v6387 = vpop.f32.mrf.mxu0
        %v6388 = vadd.f32 0.0, %v6387
        %v6389 = vpop.f32.mrf.mxu0
        %6390 = vdwg.mxu0
        %v6391 = vmul.f32 %v6368, 0.35355338
        %v6392 = vmul.f32 %v6373, 0.35355338
        %v6393 = vmul.f32 %v6378, 0.35355338
        %v6394 = vmul.f32 %v6383, 0.35355338
        %v6395 = vmul.f32 %v6388, 0.35355338
        %v6396 = vmul.f32 %v6391, %v6256
        %v6397 = vmul.f32 %v6392, %v6257
        %v6398 = vmul.f32 %v6393, %v6258
        %v6399 = vmul.f32 %v6394, %v6259
        %v6400 = vmul.f32 %v6395, %v6260
        %v6401 = vadd.f32 %v6396, %v6261
        %v6402 = vadd.f32 %v6397, %v6262
        %v6403 = vadd.f32 %v6398, %v6263
        %v6404 = vadd.f32 %v6399, %v6264
        %v6405 = vadd.f32 %v6400, %v6265
        %vm6406 = vcmask 293888
        %v6407 = vsel %vm6406, %v6401, -inf
        %6408 = vmax.xlane.f32.xlu0 %v6407
        %v6409 = vpop.xlane.xlu0 %6408
        %v6410 = vsel %vm6406, %v6402, -inf
        %6411 = vmax.xlane.f32.xlu0 %v6410
        %v6412 = vpop.xlane.xlu0 %6411
        %v6413 = vsel %vm6406, %v6403, -inf
        %6414 = vmax.xlane.f32.xlu0 %v6413
        %v6415 = vpop.xlane.xlu0 %6414
        %v6416 = vsel %vm6406, %v6404, -inf
        %6417 = vmax.xlane.f32.xlu0 %v6416
        %v6418 = vpop.xlane.xlu0 %6417
        %vm6419 = vcmask 289792
        %v6420 = vsel %vm6419, %v6405, -inf
        %6421 = vmax.xlane.f32.xlu0 %v6420
        %v6422 = vpop.xlane.xlu0 %6421
        %v6423 = vsub.f32 %v6401, %v6409
        %v6424 = vsub.f32 %v6402, %v6412
        %v6425 = vsub.f32 %v6403, %v6415
        %v6426 = vsub.f32 %v6404, %v6418
        %v6427 = vsub.f32 %v6405, %v6422
        %v6428 = vmul.f32 %v6423, 1.442695
        %v6429 = vpow.pop %v6428
        %v6430 = vmul.f32 %v6424, 1.442695
        %v6431 = vpow.pop %v6430
        %v6432 = vmul.f32 %v6425, 1.442695
        %v6433 = vpow.pop %v6432
        %v6434 = vmul.f32 %v6426, 1.442695
        %v6435 = vpow.pop %v6434
        %v6436 = vmul.f32 %v6427, 1.442695
        %v6437 = vpow.pop %v6436
        %v6438 = vsel %vm6406, %v6429, 0.0
        %6439 = vadd.xlane.f32.xlu0 %v6438
        %v6440 = vpop.xlane.xlu0 %6439
        %v6441 = vsel %vm6406, %v6431, 0.0
        %6442 = vadd.xlane.f32.xlu0 %v6441
        %v6443 = vpop.xlane.xlu0 %6442
        %v6444 = vsel %vm6406, %v6433, 0.0
        %6445 = vadd.xlane.f32.xlu0 %v6444
        %v6446 = vpop.xlane.xlu0 %6445
        %v6447 = vsel %vm6406, %v6435, 0.0
        %6448 = vadd.xlane.f32.xlu0 %v6447
        %v6449 = vpop.xlane.xlu0 %6448
        %v6450 = vsel %vm6419, %v6437, 0.0
        %6451 = vadd.xlane.f32.xlu0 %v6450
        %v6452 = vpop.xlane.xlu0 %6451
        %v6453 = vrcp.pop %v6440
        %v6454 = vrcp.pop %v6443
        %v6455 = vrcp.pop %v6446
        %v6456 = vrcp.pop %v6449
        %v6457 = vrcp.pop %v6452
        %v6458 = vmul.f32 %v6429, %v6453
        %v6459 = vmul.f32 %v6431, %v6454
        %v6460 = vmul.f32 %v6433, %v6455
        %v6461 = vmul.f32 %v6435, %v6456
        %v6462 = vmul.f32 %v6437, %v6457
        %6463 = vrot.lane.b32.xlu0 %v6223, 64
        %v6464 = vpop.permute.xlu0 %6463
        %6465 = vrot.lane.b32.xlu0 %v6228, 64
        %v6466 = vpop.permute.xlu0 %6465
        %6467 = vrot.lane.b32.xlu0 %v6233, 64
        %v6468 = vpop.permute.xlu0 %6467
        %6469 = vrot.lane.b32.xlu0 %v6238, 64
        %v6470 = vpop.permute.xlu0 %6469
        %6471 = vrot.lane.b32.xlu0 %v6243, 64
        %v6472 = vpop.permute.xlu0 %6471
        %v6478 = vsel %vm6406, %v6458, 0
        %v6481 = vsel %vm6406, %v6459, 0
        %v6484 = vsel %vm6406, %v6460, 0
        %v6487 = vsel %vm6406, %v6461, 0
        %v6490 = vsel %vm6406, %v6462, 0
        %v6492 = vsel %vm2646, %v6472, 0
        %6494 = vmatprep.subr.mxu0 0.0
        %6495 = vmatpush1.msra.mxu0 0.0
        %6496 = vmatprep.subr.mxu0 0.0
        %6497 = vmatpush1.msra.mxu0 0.0
        %6498 = vmatprep.subr.mxu0 0.0
        %6499 = vmatpush1.msra.mxu0 0.0
        %6500 = vmatprep.subr.mxu0 0.0
        %6501 = vmatpush1.msra.mxu0 0.0
        %6502 = vmatprep.subr.mxu0 0.0
        %6503 = vmatpush1.msra.mxu0 0.0
        %6504 = vmatprep.subr.mxu0 0.0
        %6505 = vmatpush1.msra.mxu0 0.0
        %6506 = vmatprep.subr.mxu0 0.0
        %6507 = vmatpush1.msra.mxu0 0.0
        %6508 = vmatprep.subr.mxu0 0.0
        %6509 = vmatpush1.msra.mxu0 0.0
        %6510 = vmatprep.subr.mxu0 0.0
        %6511 = vmatpush1.msra.mxu0 0.0
        %6512 = vmatprep.subr.mxu0 0.0
        %6513 = vmatpush1.msra.mxu0 0.0
        %6514 = vmatprep.subr.mxu0 0.0
        %6515 = vmatpush1.msra.mxu0 0.0
        %6516 = vmatprep.subr.mxu0 0.0
        %6517 = vmatpush1.msra.mxu0 %v6492
        %6518 = vmatprep.subr.mxu0 0.0
        %6519 = vmatpush1.msra.mxu0 %v6470
        %6520 = vmatprep.subr.mxu0 0.0
        %6521 = vmatpush1.msra.mxu0 %v6468
        %6522 = vmatprep.subr.mxu0 0.0
        %6523 = vmatpush1.msra.mxu0 %v6466
        %6524 = vmatprep.subr.mxu0 0.0
        %6525 = vmatpush1.msra.mxu0 %v6464
        %6526 = vmatprep.subr.mxu0 0.0
        %6527 = vmatpush2.msra.mxu0 0.0
        %6528 = vmatprep.subr.mxu0 0.0
        %6529 = vmatpush2.msra.mxu0 0.0
        %6530 = vmatprep.subr.mxu0 0.0
        %6531 = vmatpush2.msra.mxu0 0.0
        %6532 = vmatprep.subr.mxu0 0.0
        %6533 = vmatpush2.msra.mxu0 0.0
        %6534 = vmatprep.subr.mxu0 0.0
        %6535 = vmatpush2.msra.mxu0 0.0
        %6536 = vmatprep.subr.mxu0 0.0
        %6537 = vmatpush2.msra.mxu0 0.0
        %6538 = vmatprep.subr.mxu0 0.0
        %6539 = vmatpush2.msra.mxu0 0.0
        %6540 = vmatprep.subr.mxu0 0.0
        %6541 = vmatpush2.msra.mxu0 0.0
        %6542 = vmatprep.subr.mxu0 0.0
        %6543 = vmatpush2.msra.mxu0 0.0
        %6544 = vmatprep.subr.mxu0 0.0
        %6545 = vmatpush2.msra.mxu0 0.0
        %6546 = vmatprep.subr.mxu0 0.0
        %6547 = vmatpush2.msra.mxu0 0.0
        %6548 = vmatprep.subr.mxu0 0.0
        %6549 = vmatpush2.msra.mxu0 0.0
        %6550 = vmatprep.subr.mxu0 0.0
        %6551 = vmatpush2.msra.mxu0 0.0
        %6552 = vmatprep.subr.mxu0 0.0
        %6553 = vmatpush2.msra.mxu0 0.0
        %6554 = vmatprep.subr.mxu0 0.0
        %6555 = vmatpush2.msra.mxu0 0.0
        %6556 = vmatprep.subr.mxu0 0.0
        %6557 = vmatpush2.msra.mxu0 0.0
        %6558 = vmatprep.mubr.f32.mxu0 0.0
        %6559 = vmatmul.mubr.f32.gmra.mxu0 %v6478
        %v6560 = vpop.f32.mrf.mxu0
        %v6561 = vadd.f32 0.0, %v6560
        %v6562 = vpop.f32.mrf.mxu0
        %6563 = vmatprep.mubr.f32.mxu0 0.0
        %6564 = vmatmul.mubr.f32.gmra.mxu0 %v6481
        %v6565 = vpop.f32.mrf.mxu0
        %v6566 = vadd.f32 0.0, %v6565
        %v6567 = vpop.f32.mrf.mxu0
        %6568 = vmatprep.mubr.f32.mxu0 0.0
        %6569 = vmatmul.mubr.f32.gmra.mxu0 %v6484
        %v6570 = vpop.f32.mrf.mxu0
        %v6571 = vadd.f32 0.0, %v6570
        %v6572 = vpop.f32.mrf.mxu0
        %6573 = vmatprep.mubr.f32.mxu0 0.0
        %6574 = vmatmul.mubr.f32.gmra.mxu0 %v6487
        %v6575 = vpop.f32.mrf.mxu0
        %v6576 = vadd.f32 0.0, %v6575
        %v6577 = vpop.f32.mrf.mxu0
        %6578 = vmatprep.mubr.f32.mxu0 0.0
        %6579 = vmatmul.mubr.f32.gmra.mxu0 %v6490
        %v6580 = vpop.f32.mrf.mxu0
        %v6581 = vadd.f32 0.0, %v6580
        %v6582 = vpop.f32.mrf.mxu0
        %6583 = vdwg.mxu0
        %6584 = vrot.lane.b32.xlu0 %v6223, 120
        %v6585 = vpop.permute.xlu0 %6584
        %6586 = vrot.lane.b32.xlu0 %v6228, 120
        %v6587 = vpop.permute.xlu0 %6586
        %6588 = vrot.lane.b32.xlu0 %v6233, 120
        %v6589 = vpop.permute.xlu0 %6588
        %6590 = vrot.lane.b32.xlu0 %v6238, 120
        %v6591 = vpop.permute.xlu0 %6590
        %6592 = vrot.lane.b32.xlu0 %v6243, 120
        %v6593 = vpop.permute.xlu0 %6592
        %6594 = vrot.lane.b32.xlu0 %v6223, 88
        %v6595 = vpop.permute.xlu0 %6594
        %6596 = vrot.lane.b32.xlu0 %v6228, 88
        %v6597 = vpop.permute.xlu0 %6596
        %6598 = vrot.lane.b32.xlu0 %v6233, 88
        %v6599 = vpop.permute.xlu0 %6598
        %6600 = vrot.lane.b32.xlu0 %v6238, 88
        %v6601 = vpop.permute.xlu0 %6600
        %6602 = vrot.lane.b32.xlu0 %v6243, 88
        %v6603 = vpop.permute.xlu0 %6602
        %v6604 = vsel %vm2436, %v6585, 0
        %v6606 = vsel %vm2436, %v6587, 0
        %v6608 = vsel %vm2436, %v6589, 0
        %v6610 = vsel %vm2436, %v6591, 0
        %v6612 = vsel %vm2436, %v6593, 0
        %v6614 = vsel %vm2436, %v6595, 0
        %v6616 = vsel %vm2436, %v6597, 0
        %v6618 = vsel %vm2436, %v6599, 0
        %v6620 = vsel %vm2436, %v6601, 0
        %v6622 = vsel %vm2436, %v6603, 0
        %6624 = vmatprep.subr.mxu0 0.0
        %6625 = vmatpush1.xpose.msra.mxu0 0.0
        %6626 = vmatprep.subr.mxu0 0.0
        %6627 = vmatpush1.xpose.msra.mxu0 0.0
        %6628 = vmatprep.subr.mxu0 0.0
        %6629 = vmatpush1.xpose.msra.mxu0 0.0
        %6630 = vmatprep.subr.mxu0 0.0
        %6631 = vmatpush1.xpose.msra.mxu0 0.0
        %6632 = vmatprep.subr.mxu0 0.0
        %6633 = vmatpush1.xpose.msra.mxu0 0.0
        %6634 = vmatprep.subr.mxu0 0.0
        %6635 = vmatpush1.xpose.msra.mxu0 0.0
        %6636 = vmatprep.subr.mxu0 0.0
        %6637 = vmatpush1.xpose.msra.mxu0 0.0
        %6638 = vmatprep.subr.mxu0 0.0
        %6639 = vmatpush1.xpose.msra.mxu0 0.0
        %6640 = vmatprep.subr.mxu0 0.0
        %6641 = vmatpush1.xpose.msra.mxu0 0.0
        %6642 = vmatprep.subr.mxu0 0.0
        %6643 = vmatpush1.xpose.msra.mxu0 0.0
        %6644 = vmatprep.subr.mxu0 0.0
        %6645 = vmatpush1.xpose.msra.mxu0 0.0
        %6646 = vmatprep.subr.mxu0 0.0
        %6647 = vmatpush1.xpose.msra.mxu0 %v6622
        %6648 = vmatprep.subr.mxu0 0.0
        %6649 = vmatpush1.xpose.msra.mxu0 %v6620
        %6650 = vmatprep.subr.mxu0 0.0
        %6651 = vmatpush1.xpose.msra.mxu0 %v6618
        %6652 = vmatprep.subr.mxu0 0.0
        %6653 = vmatpush1.xpose.msra.mxu0 %v6616
        %6654 = vmatprep.subr.mxu0 0.0
        %6655 = vmatpush1.xpose.msra.mxu0 %v6614
        %6656 = vmatprep.subr.mxu0 0.0
        %6657 = vmatpush2.xpose.msra.mxu0 0.0
        %6658 = vmatprep.subr.mxu0 0.0
        %6659 = vmatpush2.xpose.msra.mxu0 0.0
        %6660 = vmatprep.subr.mxu0 0.0
        %6661 = vmatpush2.xpose.msra.mxu0 0.0
        %6662 = vmatprep.subr.mxu0 0.0
        %6663 = vmatpush2.xpose.msra.mxu0 0.0
        %6664 = vmatprep.subr.mxu0 0.0
        %6665 = vmatpush2.xpose.msra.mxu0 0.0
        %6666 = vmatprep.subr.mxu0 0.0
        %6667 = vmatpush2.xpose.msra.mxu0 0.0
        %6668 = vmatprep.subr.mxu0 0.0
        %6669 = vmatpush2.xpose.msra.mxu0 0.0
        %6670 = vmatprep.subr.mxu0 0.0
        %6671 = vmatpush2.xpose.msra.mxu0 0.0
        %6672 = vmatprep.subr.mxu0 0.0
        %6673 = vmatpush2.xpose.msra.mxu0 0.0
        %6674 = vmatprep.subr.mxu0 0.0
        %6675 = vmatpush2.xpose.msra.mxu0 0.0
        %6676 = vmatprep.subr.mxu0 0.0
        %6677 = vmatpush2.xpose.msra.mxu0 0.0
        %6678 = vmatprep.subr.mxu0 0.0
        %6679 = vmatpush2.xpose.msra.mxu0 0.0
        %6680 = vmatprep.subr.mxu0 0.0
        %6681 = vmatpush2.xpose.msra.mxu0 0.0
        %6682 = vmatprep.subr.mxu0 0.0
        %6683 = vmatpush2.xpose.msra.mxu0 0.0
        %6684 = vmatprep.subr.mxu0 0.0
        %6685 = vmatpush2.xpose.msra.mxu0 0.0
        %6686 = vmatprep.subr.mxu0 0.0
        %6687 = vmatpush2.xpose.msra.mxu0 0.0
        %6688 = vmatprep.mubr.f32.mxu0 0.0
        %6689 = vmatmul.mubr.f32.gmra.mxu0 %v6604
        %v6690 = vpop.f32.mrf.mxu0
        %v6691 = vadd.f32 0.0, %v6690
        %v6692 = vpop.f32.mrf.mxu0
        %6693 = vmatprep.mubr.f32.mxu0 0.0
        %6694 = vmatmul.mubr.f32.gmra.mxu0 %v6606
        %v6695 = vpop.f32.mrf.mxu0
        %v6696 = vadd.f32 0.0, %v6695
        %v6697 = vpop.f32.mrf.mxu0
        %6698 = vmatprep.mubr.f32.mxu0 0.0
        %6699 = vmatmul.mubr.f32.gmra.mxu0 %v6608
        %v6700 = vpop.f32.mrf.mxu0
        %v6701 = vadd.f32 0.0, %v6700
        %v6702 = vpop.f32.mrf.mxu0
        %6703 = vmatprep.mubr.f32.mxu0 0.0
        %6704 = vmatmul.mubr.f32.gmra.mxu0 %v6610
        %v6705 = vpop.f32.mrf.mxu0
        %v6706 = vadd.f32 0.0, %v6705
        %v6707 = vpop.f32.mrf.mxu0
        %6708 = vmatprep.mubr.f32.mxu0 0.0
        %6709 = vmatmul.mubr.f32.gmra.mxu0 %v6612
        %v6710 = vpop.f32.mrf.mxu0
        %v6711 = vadd.f32 0.0, %v6710
        %v6712 = vpop.f32.mrf.mxu0
        %6713 = vdwg.mxu0
        %v6714 = vmul.f32 %v6691, 0.35355338
        %v6715 = vmul.f32 %v6696, 0.35355338
        %v6716 = vmul.f32 %v6701, 0.35355338
        %v6717 = vmul.f32 %v6706, 0.35355338
        %v6718 = vmul.f32 %v6711, 0.35355338
        %v6719 = vmul.f32 %v6714, %v6256
        %v6720 = vmul.f32 %v6715, %v6257
        %v6721 = vmul.f32 %v6716, %v6258
        %v6722 = vmul.f32 %v6717, %v6259
        %v6723 = vmul.f32 %v6718, %v6260
        %v6724 = vadd.f32 %v6719, %v6261
        %v6725 = vadd.f32 %v6720, %v6262
        %v6726 = vadd.f32 %v6721, %v6263
        %v6727 = vadd.f32 %v6722, %v6264
        %v6728 = vadd.f32 %v6723, %v6265
        %v6729 = vsel %vm6406, %v6724, -inf
        %6730 = vmax.xlane.f32.xlu0 %v6729
        %v6731 = vpop.xlane.xlu0 %6730
        %v6732 = vsel %vm6406, %v6725, -inf
        %6733 = vmax.xlane.f32.xlu0 %v6732
        %v6734 = vpop.xlane.xlu0 %6733
        %v6735 = vsel %vm6406, %v6726, -inf
        %6736 = vmax.xlane.f32.xlu0 %v6735
        %v6737 = vpop.xlane.xlu0 %6736
        %v6738 = vsel %vm6406, %v6727, -inf
        %6739 = vmax.xlane.f32.xlu0 %v6738
        %v6740 = vpop.xlane.xlu0 %6739
        %v6741 = vsel %vm6419, %v6728, -inf
        %6742 = vmax.xlane.f32.xlu0 %v6741
        %v6743 = vpop.xlane.xlu0 %6742
        %v6744 = vsub.f32 %v6724, %v6731
        %v6745 = vsub.f32 %v6725, %v6734
        %v6746 = vsub.f32 %v6726, %v6737
        %v6747 = vsub.f32 %v6727, %v6740
        %v6748 = vsub.f32 %v6728, %v6743
        %v6749 = vmul.f32 %v6744, 1.442695
        %v6750 = vpow.pop %v6749
        %v6751 = vmul.f32 %v6745, 1.442695
        %v6752 = vpow.pop %v6751
        %v6753 = vmul.f32 %v6746, 1.442695
        %v6754 = vpow.pop %v6753
        %v6755 = vmul.f32 %v6747, 1.442695
        %v6756 = vpow.pop %v6755
        %v6757 = vmul.f32 %v6748, 1.442695
        %v6758 = vpow.pop %v6757
        %v6759 = vsel %vm6406, %v6750, 0.0
        %6760 = vadd.xlane.f32.xlu0 %v6759
        %v6761 = vpop.xlane.xlu0 %6760
        %v6762 = vsel %vm6406, %v6752, 0.0
        %6763 = vadd.xlane.f32.xlu0 %v6762
        %v6764 = vpop.xlane.xlu0 %6763
        %v6765 = vsel %vm6406, %v6754, 0.0
        %6766 = vadd.xlane.f32.xlu0 %v6765
        %v6767 = vpop.xlane.xlu0 %6766
        %v6768 = vsel %vm6406, %v6756, 0.0
        %6769 = vadd.xlane.f32.xlu0 %v6768
        %v6770 = vpop.xlane.xlu0 %6769
        %v6771 = vsel %vm6419, %v6758, 0.0
        %6772 = vadd.xlane.f32.xlu0 %v6771
        %v6773 = vpop.xlane.xlu0 %6772
        %v6774 = vrcp.pop %v6761
        %v6775 = vrcp.pop %v6764
        %v6776 = vrcp.pop %v6767
        %v6777 = vrcp.pop %v6770
        %v6778 = vrcp.pop %v6773
        %v6779 = vmul.f32 %v6750, %v6774
        %v6780 = vmul.f32 %v6752, %v6775
        %v6781 = vmul.f32 %v6754, %v6776
        %v6782 = vmul.f32 %v6756, %v6777
        %v6783 = vmul.f32 %v6758, %v6778
        %6784 = vrot.lane.b32.xlu0 %v6223, 56
        %v6785 = vpop.permute.xlu0 %6784
        %6786 = vrot.lane.b32.xlu0 %v6228, 56
        %v6787 = vpop.permute.xlu0 %6786
        %6788 = vrot.lane.b32.xlu0 %v6233, 56
        %v6789 = vpop.permute.xlu0 %6788
        %6790 = vrot.lane.b32.xlu0 %v6238, 56
        %v6791 = vpop.permute.xlu0 %6790
        %6792 = vrot.lane.b32.xlu0 %v6243, 56
        %v6793 = vpop.permute.xlu0 %6792
        %v6799 = vsel %vm6406, %v6779, 0
        %v6802 = vsel %vm6406, %v6780, 0
        %v6805 = vsel %vm6406, %v6781, 0
        %v6808 = vsel %vm6406, %v6782, 0
        %v6811 = vsel %vm6406, %v6783, 0
        %v6813 = vsel %vm2646, %v6793, 0
        %6815 = vmatprep.subr.mxu0 0.0
        %6816 = vmatpush1.msra.mxu0 0.0
        %6817 = vmatprep.subr.mxu0 0.0
        %6818 = vmatpush1.msra.mxu0 0.0
        %6819 = vmatprep.subr.mxu0 0.0
        %6820 = vmatpush1.msra.mxu0 0.0
        %6821 = vmatprep.subr.mxu0 0.0
        %6822 = vmatpush1.msra.mxu0 0.0
        %6823 = vmatprep.subr.mxu0 0.0
        %6824 = vmatpush1.msra.mxu0 0.0
        %6825 = vmatprep.subr.mxu0 0.0
        %6826 = vmatpush1.msra.mxu0 0.0
        %6827 = vmatprep.subr.mxu0 0.0
        %6828 = vmatpush1.msra.mxu0 0.0
        %6829 = vmatprep.subr.mxu0 0.0
        %6830 = vmatpush1.msra.mxu0 0.0
        %6831 = vmatprep.subr.mxu0 0.0
        %6832 = vmatpush1.msra.mxu0 0.0
        %6833 = vmatprep.subr.mxu0 0.0
        %6834 = vmatpush1.msra.mxu0 0.0
        %6835 = vmatprep.subr.mxu0 0.0
        %6836 = vmatpush1.msra.mxu0 0.0
        %6837 = vmatprep.subr.mxu0 0.0
        %6838 = vmatpush1.msra.mxu0 %v6813
        %6839 = vmatprep.subr.mxu0 0.0
        %6840 = vmatpush1.msra.mxu0 %v6791
        %6841 = vmatprep.subr.mxu0 0.0
        %6842 = vmatpush1.msra.mxu0 %v6789
        %6843 = vmatprep.subr.mxu0 0.0
        %6844 = vmatpush1.msra.mxu0 %v6787
        %6845 = vmatprep.subr.mxu0 0.0
        %6846 = vmatpush1.msra.mxu0 %v6785
        %6847 = vmatprep.subr.mxu0 0.0
        %6848 = vmatpush2.msra.mxu0 0.0
        %6849 = vmatprep.subr.mxu0 0.0
        %6850 = vmatpush2.msra.mxu0 0.0
        %6851 = vmatprep.subr.mxu0 0.0
        %6852 = vmatpush2.msra.mxu0 0.0
        %6853 = vmatprep.subr.mxu0 0.0
        %6854 = vmatpush2.msra.mxu0 0.0
        %6855 = vmatprep.subr.mxu0 0.0
        %6856 = vmatpush2.msra.mxu0 0.0
        %6857 = vmatprep.subr.mxu0 0.0
        %6858 = vmatpush2.msra.mxu0 0.0
        %6859 = vmatprep.subr.mxu0 0.0
        %6860 = vmatpush2.msra.mxu0 0.0
        %6861 = vmatprep.subr.mxu0 0.0
        %6862 = vmatpush2.msra.mxu0 0.0
        %6863 = vmatprep.subr.mxu0 0.0
        %6864 = vmatpush2.msra.mxu0 0.0
        %6865 = vmatprep.subr.mxu0 0.0
        %6866 = vmatpush2.msra.mxu0 0.0
        %6867 = vmatprep.subr.mxu0 0.0
        %6868 = vmatpush2.msra.mxu0 0.0
        %6869 = vmatprep.subr.mxu0 0.0
        %6870 = vmatpush2.msra.mxu0 0.0
        %6871 = vmatprep.subr.mxu0 0.0
        %6872 = vmatpush2.msra.mxu0 0.0
        %6873 = vmatprep.subr.mxu0 0.0
        %6874 = vmatpush2.msra.mxu0 0.0
        %6875 = vmatprep.subr.mxu0 0.0
        %6876 = vmatpush2.msra.mxu0 0.0
        %6877 = vmatprep.subr.mxu0 0.0
        %6878 = vmatpush2.msra.mxu0 0.0
        %6879 = vmatprep.mubr.f32.mxu0 0.0
        %6880 = vmatmul.mubr.f32.gmra.mxu0 %v6799
        %v6881 = vpop.f32.mrf.mxu0
        %v6882 = vadd.f32 0.0, %v6881
        %v6883 = vpop.f32.mrf.mxu0
        %6884 = vmatprep.mubr.f32.mxu0 0.0
        %6885 = vmatmul.mubr.f32.gmra.mxu0 %v6802
        %v6886 = vpop.f32.mrf.mxu0
        %v6887 = vadd.f32 0.0, %v6886
        %v6888 = vpop.f32.mrf.mxu0
        %6889 = vmatprep.mubr.f32.mxu0 0.0
        %6890 = vmatmul.mubr.f32.gmra.mxu0 %v6805
        %v6891 = vpop.f32.mrf.mxu0
        %v6892 = vadd.f32 0.0, %v6891
        %v6893 = vpop.f32.mrf.mxu0
        %6894 = vmatprep.mubr.f32.mxu0 0.0
        %6895 = vmatmul.mubr.f32.gmra.mxu0 %v6808
        %v6896 = vpop.f32.mrf.mxu0
        %v6897 = vadd.f32 0.0, %v6896
        %v6898 = vpop.f32.mrf.mxu0
        %6899 = vmatprep.mubr.f32.mxu0 0.0
        %6900 = vmatmul.mubr.f32.gmra.mxu0 %v6811
        %v6901 = vpop.f32.mrf.mxu0
        %v6902 = vadd.f32 0.0, %v6901
        %v6903 = vpop.f32.mrf.mxu0
        %6904 = vdwg.mxu0
        %v6906 = vsel %vm2436, %v6882, 0
        %v6909 = vsel %vm2436, %v6887, 0
        %v6912 = vsel %vm2436, %v6892, 0
        %v6915 = vsel %vm2436, %v6897, 0
        %v6918 = vsel %vm2436, %v6902, 0
        %6920 = vmatprep.subr.mxu0 0.0
        %6921 = vmatpush1.msra.mxu0 0.0
        %6922 = vmatprep.subr.mxu0 0.0
        %6923 = vmatpush1.msra.mxu0 0.0
        %6924 = vmatprep.subr.mxu0 0.0
        %6925 = vmatpush1.msra.mxu0 0.0
        %6926 = vmatprep.subr.mxu0 0.0
        %6927 = vmatpush1.msra.mxu0 0.0
        %6928 = vmatprep.subr.mxu0 0.0
        %6929 = vmatpush1.msra.mxu0 0.0
        %6930 = vmatprep.subr.mxu0 0.0
        %6931 = vmatpush1.msra.mxu0 0.0
        %6932 = vmatprep.subr.mxu0 0.0
        %6933 = vmatpush1.msra.mxu0 0.0
        %6934 = vmatprep.subr.mxu0 0.0
        %6935 = vmatpush1.msra.mxu0 0.0
        %6936 = vmatprep.subr.mxu0 0.0
        %6937 = vmatpush1.msra.mxu0 0.0
        %6938 = vmatprep.subr.mxu0 0.0
        %6939 = vmatpush1.msra.mxu0 0.0
        %6940 = vmatprep.subr.mxu0 0.0
        %6941 = vmatpush1.msra.mxu0 0.0
        %6942 = vmatprep.subr.mxu0 0.0
        %6943 = vmatpush1.msra.mxu0 0.0
        %6944 = vmatprep.subr.mxu0 0.0
        %6945 = vmatpush1.msra.mxu0 0.0
        %6946 = vmatprep.subr.mxu0 0.0
        %6947 = vmatpush1.msra.mxu0 0.0
        %6948 = vmatprep.subr.mxu0 0.0
        %6949 = vmatpush1.msra.mxu0 0.0
        %6950 = vmatprep.subr.mxu0 0.0
        %6951 = vmatpush1.msra.mxu0 %v6252
        %6952 = vmatprep.subr.mxu0 0.0
        %6953 = vmatpush2.msra.mxu0 0.0
        %6954 = vmatprep.subr.mxu0 0.0
        %6955 = vmatpush2.msra.mxu0 0.0
        %6956 = vmatprep.subr.mxu0 0.0
        %6957 = vmatpush2.msra.mxu0 0.0
        %6958 = vmatprep.subr.mxu0 0.0
        %6959 = vmatpush2.msra.mxu0 0.0
        %6960 = vmatprep.subr.mxu0 0.0
        %6961 = vmatpush2.msra.mxu0 0.0
        %6962 = vmatprep.subr.mxu0 0.0
        %6963 = vmatpush2.msra.mxu0 0.0
        %6964 = vmatprep.subr.mxu0 0.0
        %6965 = vmatpush2.msra.mxu0 0.0
        %6966 = vmatprep.subr.mxu0 0.0
        %6967 = vmatpush2.msra.mxu0 0.0
        %6968 = vmatprep.subr.mxu0 0.0
        %6969 = vmatpush2.msra.mxu0 0.0
        %6970 = vmatprep.subr.mxu0 0.0
        %6971 = vmatpush2.msra.mxu0 0.0
        %6972 = vmatprep.subr.mxu0 0.0
        %6973 = vmatpush2.msra.mxu0 0.0
        %6974 = vmatprep.subr.mxu0 0.0
        %6975 = vmatpush2.msra.mxu0 0.0
        %6976 = vmatprep.subr.mxu0 0.0
        %6977 = vmatpush2.msra.mxu0 0.0
        %6978 = vmatprep.subr.mxu0 0.0
        %6979 = vmatpush2.msra.mxu0 0.0
        %6980 = vmatprep.subr.mxu0 0.0
        %6981 = vmatpush2.msra.mxu0 0.0
        %6982 = vmatprep.subr.mxu0 0.0
        %6983 = vmatpush2.msra.mxu0 0.0
        %6984 = vmatprep.mubr.f32.mxu0 0.0
        %6985 = vmatmul.mubr.f32.gmra.mxu0 %v6906
        %v6986 = vpop.f32.mrf.mxu0
        %v6987 = vadd.f32 0.0, %v6986
        %v6988 = vpop.f32.mrf.mxu0
        %6989 = vmatprep.mubr.f32.mxu0 0.0
        %6990 = vmatmul.mubr.f32.gmra.mxu0 %v6909
        %v6991 = vpop.f32.mrf.mxu0
        %v6992 = vadd.f32 0.0, %v6991
        %v6993 = vpop.f32.mrf.mxu0
        %6994 = vmatprep.mubr.f32.mxu0 0.0
        %6995 = vmatmul.mubr.f32.gmra.mxu0 %v6912
        %v6996 = vpop.f32.mrf.mxu0
        %v6997 = vadd.f32 0.0, %v6996
        %v6998 = vpop.f32.mrf.mxu0
        %6999 = vmatprep.mubr.f32.mxu0 0.0
        %7000 = vmatmul.mubr.f32.gmra.mxu0 %v6915
        %v7001 = vpop.f32.mrf.mxu0
        %v7002 = vadd.f32 0.0, %v7001
        %v7003 = vpop.f32.mrf.mxu0
        %7004 = vmatprep.mubr.f32.mxu0 0.0
        %7005 = vmatmul.mubr.f32.gmra.mxu0 %v6918
        %v7006 = vpop.f32.mrf.mxu0
        %v7007 = vadd.f32 0.0, %v7006
        %v7008 = vpop.f32.mrf.mxu0
        %7009 = vdwg.mxu0
        %v7011 = vsel %vm2436, %v6561, 0
        %v7014 = vsel %vm2436, %v6566, 0
        %v7017 = vsel %vm2436, %v6571, 0
        %v7020 = vsel %vm2436, %v6576, 0
        %v7023 = vsel %vm2436, %v6581, 0
        %7025 = vmatprep.subr.mxu0 0.0
        %7026 = vmatpush1.msra.mxu0 0.0
        %7027 = vmatprep.subr.mxu0 0.0
        %7028 = vmatpush1.msra.mxu0 0.0
        %7029 = vmatprep.subr.mxu0 0.0
        %7030 = vmatpush1.msra.mxu0 0.0
        %7031 = vmatprep.subr.mxu0 0.0
        %7032 = vmatpush1.msra.mxu0 0.0
        %7033 = vmatprep.subr.mxu0 0.0
        %7034 = vmatpush1.msra.mxu0 0.0
        %7035 = vmatprep.subr.mxu0 0.0
        %7036 = vmatpush1.msra.mxu0 0.0
        %7037 = vmatprep.subr.mxu0 0.0
        %7038 = vmatpush1.msra.mxu0 0.0
        %7039 = vmatprep.subr.mxu0 0.0
        %7040 = vmatpush1.msra.mxu0 0.0
        %7041 = vmatprep.subr.mxu0 0.0
        %7042 = vmatpush1.msra.mxu0 0.0
        %7043 = vmatprep.subr.mxu0 0.0
        %7044 = vmatpush1.msra.mxu0 0.0
        %7045 = vmatprep.subr.mxu0 0.0
        %7046 = vmatpush1.msra.mxu0 0.0
        %7047 = vmatprep.subr.mxu0 0.0
        %7048 = vmatpush1.msra.mxu0 0.0
        %7049 = vmatprep.subr.mxu0 0.0
        %7050 = vmatpush1.msra.mxu0 0.0
        %7051 = vmatprep.subr.mxu0 0.0
        %7052 = vmatpush1.msra.mxu0 0.0
        %7053 = vmatprep.subr.mxu0 0.0
        %7054 = vmatpush1.msra.mxu0 0.0
        %7055 = vmatprep.subr.mxu0 0.0
        %7056 = vmatpush1.msra.mxu0 %v6251
        %7057 = vmatprep.subr.mxu0 0.0
        %7058 = vmatpush2.msra.mxu0 0.0
        %7059 = vmatprep.subr.mxu0 0.0
        %7060 = vmatpush2.msra.mxu0 0.0
        %7061 = vmatprep.subr.mxu0 0.0
        %7062 = vmatpush2.msra.mxu0 0.0
        %7063 = vmatprep.subr.mxu0 0.0
        %7064 = vmatpush2.msra.mxu0 0.0
        %7065 = vmatprep.subr.mxu0 0.0
        %7066 = vmatpush2.msra.mxu0 0.0
        %7067 = vmatprep.subr.mxu0 0.0
        %7068 = vmatpush2.msra.mxu0 0.0
        %7069 = vmatprep.subr.mxu0 0.0
        %7070 = vmatpush2.msra.mxu0 0.0
        %7071 = vmatprep.subr.mxu0 0.0
        %7072 = vmatpush2.msra.mxu0 0.0
        %7073 = vmatprep.subr.mxu0 0.0
        %7074 = vmatpush2.msra.mxu0 0.0
        %7075 = vmatprep.subr.mxu0 0.0
        %7076 = vmatpush2.msra.mxu0 0.0
        %7077 = vmatprep.subr.mxu0 0.0
        %7078 = vmatpush2.msra.mxu0 0.0
        %7079 = vmatprep.subr.mxu0 0.0
        %7080 = vmatpush2.msra.mxu0 0.0
        %7081 = vmatprep.subr.mxu0 0.0
        %7082 = vmatpush2.msra.mxu0 0.0
        %7083 = vmatprep.subr.mxu0 0.0
        %7084 = vmatpush2.msra.mxu0 0.0
        %7085 = vmatprep.subr.mxu0 0.0
        %7086 = vmatpush2.msra.mxu0 0.0
        %7087 = vmatprep.subr.mxu0 0.0
        %7088 = vmatpush2.msra.mxu0 0.0
        %7089 = vmatprep.mubr.f32.mxu0 0.0
        %7090 = vmatmul.mubr.f32.gmra.mxu0 %v7011
        %v7091 = vpop.f32.mrf.mxu0
        %v7092 = vadd.f32 %v6987, %v7091
        %v7093 = vpop.f32.mrf.mxu0
        %7094 = vmatprep.mubr.f32.mxu0 0.0
        %7095 = vmatmul.mubr.f32.gmra.mxu0 %v7014
        %v7096 = vpop.f32.mrf.mxu0
        %v7097 = vadd.f32 %v6992, %v7096
        %v7098 = vpop.f32.mrf.mxu0
        %7099 = vmatprep.mubr.f32.mxu0 0.0
        %7100 = vmatmul.mubr.f32.gmra.mxu0 %v7017
        %v7101 = vpop.f32.mrf.mxu0
        %v7102 = vadd.f32 %v6997, %v7101
        %v7103 = vpop.f32.mrf.mxu0
        %7104 = vmatprep.mubr.f32.mxu0 0.0
        %7105 = vmatmul.mubr.f32.gmra.mxu0 %v7020
        %v7106 = vpop.f32.mrf.mxu0
        %v7107 = vadd.f32 %v7002, %v7106
        %v7108 = vpop.f32.mrf.mxu0
        %7109 = vmatprep.mubr.f32.mxu0 0.0
        %7110 = vmatmul.mubr.f32.gmra.mxu0 %v7023
        %v7111 = vpop.f32.mrf.mxu0
        %v7112 = vadd.f32 %v7007, %v7111
        %v7113 = vpop.f32.mrf.mxu0
        %7114 = vdwg.mxu0
        %7115 = vrot.lane.b32.xlu0 %v6223, 112
        %v7116 = vpop.permute.xlu0 %7115
        %7117 = vrot.lane.b32.xlu0 %v6228, 112
        %v7118 = vpop.permute.xlu0 %7117
        %7119 = vrot.lane.b32.xlu0 %v6233, 112
        %v7120 = vpop.permute.xlu0 %7119
        %7121 = vrot.lane.b32.xlu0 %v6238, 112
        %v7122 = vpop.permute.xlu0 %7121
        %7123 = vrot.lane.b32.xlu0 %v6243, 112
        %v7124 = vpop.permute.xlu0 %7123
        %7125 = vrot.lane.b32.xlu0 %v6223, 80
        %v7126 = vpop.permute.xlu0 %7125
        %7127 = vrot.lane.b32.xlu0 %v6228, 80
        %v7128 = vpop.permute.xlu0 %7127
        %7129 = vrot.lane.b32.xlu0 %v6233, 80
        %v7130 = vpop.permute.xlu0 %7129
        %7131 = vrot.lane.b32.xlu0 %v6238, 80
        %v7132 = vpop.permute.xlu0 %7131
        %7133 = vrot.lane.b32.xlu0 %v6243, 80
        %v7134 = vpop.permute.xlu0 %7133
        %v7135 = vsel %vm2436, %v7116, 0
        %v7137 = vsel %vm2436, %v7118, 0
        %v7139 = vsel %vm2436, %v7120, 0
        %v7141 = vsel %vm2436, %v7122, 0
        %v7143 = vsel %vm2436, %v7124, 0
        %v7145 = vsel %vm2436, %v7126, 0
        %v7147 = vsel %vm2436, %v7128, 0
        %v7149 = vsel %vm2436, %v7130, 0
        %v7151 = vsel %vm2436, %v7132, 0
        %v7153 = vsel %vm2436, %v7134, 0
        %7155 = vmatprep.subr.mxu0 0.0
        %7156 = vmatpush1.xpose.msra.mxu0 0.0
        %7157 = vmatprep.subr.mxu0 0.0
        %7158 = vmatpush1.xpose.msra.mxu0 0.0
        %7159 = vmatprep.subr.mxu0 0.0
        %7160 = vmatpush1.xpose.msra.mxu0 0.0
        %7161 = vmatprep.subr.mxu0 0.0
        %7162 = vmatpush1.xpose.msra.mxu0 0.0
        %7163 = vmatprep.subr.mxu0 0.0
        %7164 = vmatpush1.xpose.msra.mxu0 0.0
        %7165 = vmatprep.subr.mxu0 0.0
        %7166 = vmatpush1.xpose.msra.mxu0 0.0
        %7167 = vmatprep.subr.mxu0 0.0
        %7168 = vmatpush1.xpose.msra.mxu0 0.0
        %7169 = vmatprep.subr.mxu0 0.0
        %7170 = vmatpush1.xpose.msra.mxu0 0.0
        %7171 = vmatprep.subr.mxu0 0.0
        %7172 = vmatpush1.xpose.msra.mxu0 0.0
        %7173 = vmatprep.subr.mxu0 0.0
        %7174 = vmatpush1.xpose.msra.mxu0 0.0
        %7175 = vmatprep.subr.mxu0 0.0
        %7176 = vmatpush1.xpose.msra.mxu0 0.0
        %7177 = vmatprep.subr.mxu0 0.0
        %7178 = vmatpush1.xpose.msra.mxu0 %v7153
        %7179 = vmatprep.subr.mxu0 0.0
        %7180 = vmatpush1.xpose.msra.mxu0 %v7151
        %7181 = vmatprep.subr.mxu0 0.0
        %7182 = vmatpush1.xpose.msra.mxu0 %v7149
        %7183 = vmatprep.subr.mxu0 0.0
        %7184 = vmatpush1.xpose.msra.mxu0 %v7147
        %7185 = vmatprep.subr.mxu0 0.0
        %7186 = vmatpush1.xpose.msra.mxu0 %v7145
        %7187 = vmatprep.subr.mxu0 0.0
        %7188 = vmatpush2.xpose.msra.mxu0 0.0
        %7189 = vmatprep.subr.mxu0 0.0
        %7190 = vmatpush2.xpose.msra.mxu0 0.0
        %7191 = vmatprep.subr.mxu0 0.0
        %7192 = vmatpush2.xpose.msra.mxu0 0.0
        %7193 = vmatprep.subr.mxu0 0.0
        %7194 = vmatpush2.xpose.msra.mxu0 0.0
        %7195 = vmatprep.subr.mxu0 0.0
        %7196 = vmatpush2.xpose.msra.mxu0 0.0
        %7197 = vmatprep.subr.mxu0 0.0
        %7198 = vmatpush2.xpose.msra.mxu0 0.0
        %7199 = vmatprep.subr.mxu0 0.0
        %7200 = vmatpush2.xpose.msra.mxu0 0.0
        %7201 = vmatprep.subr.mxu0 0.0
        %7202 = vmatpush2.xpose.msra.mxu0 0.0
        %7203 = vmatprep.subr.mxu0 0.0
        %7204 = vmatpush2.xpose.msra.mxu0 0.0
        %7205 = vmatprep.subr.mxu0 0.0
        %7206 = vmatpush2.xpose.msra.mxu0 0.0
        %7207 = vmatprep.subr.mxu0 0.0
        %7208 = vmatpush2.xpose.msra.mxu0 0.0
        %7209 = vmatprep.subr.mxu0 0.0
        %7210 = vmatpush2.xpose.msra.mxu0 0.0
        %7211 = vmatprep.subr.mxu0 0.0
        %7212 = vmatpush2.xpose.msra.mxu0 0.0
        %7213 = vmatprep.subr.mxu0 0.0
        %7214 = vmatpush2.xpose.msra.mxu0 0.0
        %7215 = vmatprep.subr.mxu0 0.0
        %7216 = vmatpush2.xpose.msra.mxu0 0.0
        %7217 = vmatprep.subr.mxu0 0.0
        %7218 = vmatpush2.xpose.msra.mxu0 0.0
        %7219 = vmatprep.mubr.f32.mxu0 0.0
        %7220 = vmatmul.mubr.f32.gmra.mxu0 %v7135
        %v7221 = vpop.f32.mrf.mxu0
        %v7222 = vadd.f32 0.0, %v7221
        %v7223 = vpop.f32.mrf.mxu0
        %7224 = vmatprep.mubr.f32.mxu0 0.0
        %7225 = vmatmul.mubr.f32.gmra.mxu0 %v7137
        %v7226 = vpop.f32.mrf.mxu0
        %v7227 = vadd.f32 0.0, %v7226
        %v7228 = vpop.f32.mrf.mxu0
        %7229 = vmatprep.mubr.f32.mxu0 0.0
        %7230 = vmatmul.mubr.f32.gmra.mxu0 %v7139
        %v7231 = vpop.f32.mrf.mxu0
        %v7232 = vadd.f32 0.0, %v7231
        %v7233 = vpop.f32.mrf.mxu0
        %7234 = vmatprep.mubr.f32.mxu0 0.0
        %7235 = vmatmul.mubr.f32.gmra.mxu0 %v7141
        %v7236 = vpop.f32.mrf.mxu0
        %v7237 = vadd.f32 0.0, %v7236
        %v7238 = vpop.f32.mrf.mxu0
        %7239 = vmatprep.mubr.f32.mxu0 0.0
        %7240 = vmatmul.mubr.f32.gmra.mxu0 %v7143
        %v7241 = vpop.f32.mrf.mxu0
        %v7242 = vadd.f32 0.0, %v7241
        %v7243 = vpop.f32.mrf.mxu0
        %7244 = vdwg.mxu0
        %v7245 = vmul.f32 %v7222, 0.35355338
        %v7246 = vmul.f32 %v7227, 0.35355338
        %v7247 = vmul.f32 %v7232, 0.35355338
        %v7248 = vmul.f32 %v7237, 0.35355338
        %v7249 = vmul.f32 %v7242, 0.35355338
        %v7250 = vmul.f32 %v7245, %v6256
        %v7251 = vmul.f32 %v7246, %v6257
        %v7252 = vmul.f32 %v7247, %v6258
        %v7253 = vmul.f32 %v7248, %v6259
        %v7254 = vmul.f32 %v7249, %v6260
        %v7255 = vadd.f32 %v7250, %v6261
        %v7256 = vadd.f32 %v7251, %v6262
        %v7257 = vadd.f32 %v7252, %v6263
        %v7258 = vadd.f32 %v7253, %v6264
        %v7259 = vadd.f32 %v7254, %v6265
        %v7260 = vsel %vm6406, %v7255, -inf
        %7261 = vmax.xlane.f32.xlu0 %v7260
        %v7262 = vpop.xlane.xlu0 %7261
        %v7263 = vsel %vm6406, %v7256, -inf
        %7264 = vmax.xlane.f32.xlu0 %v7263
        %v7265 = vpop.xlane.xlu0 %7264
        %v7266 = vsel %vm6406, %v7257, -inf
        %7267 = vmax.xlane.f32.xlu0 %v7266
        %v7268 = vpop.xlane.xlu0 %7267
        %v7269 = vsel %vm6406, %v7258, -inf
        %7270 = vmax.xlane.f32.xlu0 %v7269
        %v7271 = vpop.xlane.xlu0 %7270
        %v7272 = vsel %vm6419, %v7259, -inf
        %7273 = vmax.xlane.f32.xlu0 %v7272
        %v7274 = vpop.xlane.xlu0 %7273
        %v7275 = vsub.f32 %v7255, %v7262
        %v7276 = vsub.f32 %v7256, %v7265
        %v7277 = vsub.f32 %v7257, %v7268
        %v7278 = vsub.f32 %v7258, %v7271
        %v7279 = vsub.f32 %v7259, %v7274
        %v7280 = vmul.f32 %v7275, 1.442695
        %v7281 = vpow.pop %v7280
        %v7282 = vmul.f32 %v7276, 1.442695
        %v7283 = vpow.pop %v7282
        %v7284 = vmul.f32 %v7277, 1.442695
        %v7285 = vpow.pop %v7284
        %v7286 = vmul.f32 %v7278, 1.442695
        %v7287 = vpow.pop %v7286
        %v7288 = vmul.f32 %v7279, 1.442695
        %v7289 = vpow.pop %v7288
        %v7290 = vsel %vm6406, %v7281, 0.0
        %7291 = vadd.xlane.f32.xlu0 %v7290
        %v7292 = vpop.xlane.xlu0 %7291
        %v7293 = vsel %vm6406, %v7283, 0.0
        %7294 = vadd.xlane.f32.xlu0 %v7293
        %v7295 = vpop.xlane.xlu0 %7294
        %v7296 = vsel %vm6406, %v7285, 0.0
        %7297 = vadd.xlane.f32.xlu0 %v7296
        %v7298 = vpop.xlane.xlu0 %7297
        %v7299 = vsel %vm6406, %v7287, 0.0
        %7300 = vadd.xlane.f32.xlu0 %v7299
        %v7301 = vpop.xlane.xlu0 %7300
        %v7302 = vsel %vm6419, %v7289, 0.0
        %7303 = vadd.xlane.f32.xlu0 %v7302
        %v7304 = vpop.xlane.xlu0 %7303
        %v7305 = vrcp.pop %v7292
        %v7306 = vrcp.pop %v7295
        %v7307 = vrcp.pop %v7298
        %v7308 = vrcp.pop %v7301
        %v7309 = vrcp.pop %v7304
        %v7310 = vmul.f32 %v7281, %v7305
        %v7311 = vmul.f32 %v7283, %v7306
        %v7312 = vmul.f32 %v7285, %v7307
        %v7313 = vmul.f32 %v7287, %v7308
        %v7314 = vmul.f32 %v7289, %v7309
        %7315 = vrot.lane.b32.xlu0 %v6223, 48
        %v7316 = vpop.permute.xlu0 %7315
        %7317 = vrot.lane.b32.xlu0 %v6228, 48
        %v7318 = vpop.permute.xlu0 %7317
        %7319 = vrot.lane.b32.xlu0 %v6233, 48
        %v7320 = vpop.permute.xlu0 %7319
        %7321 = vrot.lane.b32.xlu0 %v6238, 48
        %v7322 = vpop.permute.xlu0 %7321
        %7323 = vrot.lane.b32.xlu0 %v6243, 48
        %v7324 = vpop.permute.xlu0 %7323
        %v7330 = vsel %vm6406, %v7310, 0
        %v7333 = vsel %vm6406, %v7311, 0
        %v7336 = vsel %vm6406, %v7312, 0
        %v7339 = vsel %vm6406, %v7313, 0
        %v7342 = vsel %vm6406, %v7314, 0
        %v7344 = vsel %vm2646, %v7324, 0
        %7346 = vmatprep.subr.mxu0 0.0
        %7347 = vmatpush1.msra.mxu0 0.0
        %7348 = vmatprep.subr.mxu0 0.0
        %7349 = vmatpush1.msra.mxu0 0.0
        %7350 = vmatprep.subr.mxu0 0.0
        %7351 = vmatpush1.msra.mxu0 0.0
        %7352 = vmatprep.subr.mxu0 0.0
        %7353 = vmatpush1.msra.mxu0 0.0
        %7354 = vmatprep.subr.mxu0 0.0
        %7355 = vmatpush1.msra.mxu0 0.0
        %7356 = vmatprep.subr.mxu0 0.0
        %7357 = vmatpush1.msra.mxu0 0.0
        %7358 = vmatprep.subr.mxu0 0.0
        %7359 = vmatpush1.msra.mxu0 0.0
        %7360 = vmatprep.subr.mxu0 0.0
        %7361 = vmatpush1.msra.mxu0 0.0
        %7362 = vmatprep.subr.mxu0 0.0
        %7363 = vmatpush1.msra.mxu0 0.0
        %7364 = vmatprep.subr.mxu0 0.0
        %7365 = vmatpush1.msra.mxu0 0.0
        %7366 = vmatprep.subr.mxu0 0.0
        %7367 = vmatpush1.msra.mxu0 0.0
        %7368 = vmatprep.subr.mxu0 0.0
        %7369 = vmatpush1.msra.mxu0 %v7344
        %7370 = vmatprep.subr.mxu0 0.0
        %7371 = vmatpush1.msra.mxu0 %v7322
        %7372 = vmatprep.subr.mxu0 0.0
        %7373 = vmatpush1.msra.mxu0 %v7320
        %7374 = vmatprep.subr.mxu0 0.0
        %7375 = vmatpush1.msra.mxu0 %v7318
        %7376 = vmatprep.subr.mxu0 0.0
        %7377 = vmatpush1.msra.mxu0 %v7316
        %7378 = vmatprep.subr.mxu0 0.0
        %7379 = vmatpush2.msra.mxu0 0.0
        %7380 = vmatprep.subr.mxu0 0.0
        %7381 = vmatpush2.msra.mxu0 0.0
        %7382 = vmatprep.subr.mxu0 0.0
        %7383 = vmatpush2.msra.mxu0 0.0
        %7384 = vmatprep.subr.mxu0 0.0
        %7385 = vmatpush2.msra.mxu0 0.0
        %7386 = vmatprep.subr.mxu0 0.0
        %7387 = vmatpush2.msra.mxu0 0.0
        %7388 = vmatprep.subr.mxu0 0.0
        %7389 = vmatpush2.msra.mxu0 0.0
        %7390 = vmatprep.subr.mxu0 0.0
        %7391 = vmatpush2.msra.mxu0 0.0
        %7392 = vmatprep.subr.mxu0 0.0
        %7393 = vmatpush2.msra.mxu0 0.0
        %7394 = vmatprep.subr.mxu0 0.0
        %7395 = vmatpush2.msra.mxu0 0.0
        %7396 = vmatprep.subr.mxu0 0.0
        %7397 = vmatpush2.msra.mxu0 0.0
        %7398 = vmatprep.subr.mxu0 0.0
        %7399 = vmatpush2.msra.mxu0 0.0
        %7400 = vmatprep.subr.mxu0 0.0
        %7401 = vmatpush2.msra.mxu0 0.0
        %7402 = vmatprep.subr.mxu0 0.0
        %7403 = vmatpush2.msra.mxu0 0.0
        %7404 = vmatprep.subr.mxu0 0.0
        %7405 = vmatpush2.msra.mxu0 0.0
        %7406 = vmatprep.subr.mxu0 0.0
        %7407 = vmatpush2.msra.mxu0 0.0
        %7408 = vmatprep.subr.mxu0 0.0
        %7409 = vmatpush2.msra.mxu0 0.0
        %7410 = vmatprep.mubr.f32.mxu0 0.0
        %7411 = vmatmul.mubr.f32.gmra.mxu0 %v7330
        %v7412 = vpop.f32.mrf.mxu0
        %v7413 = vadd.f32 0.0, %v7412
        %v7414 = vpop.f32.mrf.mxu0
        %7415 = vmatprep.mubr.f32.mxu0 0.0
        %7416 = vmatmul.mubr.f32.gmra.mxu0 %v7333
        %v7417 = vpop.f32.mrf.mxu0
        %v7418 = vadd.f32 0.0, %v7417
        %v7419 = vpop.f32.mrf.mxu0
        %7420 = vmatprep.mubr.f32.mxu0 0.0
        %7421 = vmatmul.mubr.f32.gmra.mxu0 %v7336
        %v7422 = vpop.f32.mrf.mxu0
        %v7423 = vadd.f32 0.0, %v7422
        %v7424 = vpop.f32.mrf.mxu0
        %7425 = vmatprep.mubr.f32.mxu0 0.0
        %7426 = vmatmul.mubr.f32.gmra.mxu0 %v7339
        %v7427 = vpop.f32.mrf.mxu0
        %v7428 = vadd.f32 0.0, %v7427
        %v7429 = vpop.f32.mrf.mxu0
        %7430 = vmatprep.mubr.f32.mxu0 0.0
        %7431 = vmatmul.mubr.f32.gmra.mxu0 %v7342
        %v7432 = vpop.f32.mrf.mxu0
        %v7433 = vadd.f32 0.0, %v7432
        %v7434 = vpop.f32.mrf.mxu0
        %7435 = vdwg.mxu0
        %v7437 = vsel %vm2436, %v7413, 0
        %v7440 = vsel %vm2436, %v7418, 0
        %v7443 = vsel %vm2436, %v7423, 0
        %v7446 = vsel %vm2436, %v7428, 0
        %v7449 = vsel %vm2436, %v7433, 0
        %7451 = vmatprep.subr.mxu0 0.0
        %7452 = vmatpush1.msra.mxu0 0.0
        %7453 = vmatprep.subr.mxu0 0.0
        %7454 = vmatpush1.msra.mxu0 0.0
        %7455 = vmatprep.subr.mxu0 0.0
        %7456 = vmatpush1.msra.mxu0 0.0
        %7457 = vmatprep.subr.mxu0 0.0
        %7458 = vmatpush1.msra.mxu0 0.0
        %7459 = vmatprep.subr.mxu0 0.0
        %7460 = vmatpush1.msra.mxu0 0.0
        %7461 = vmatprep.subr.mxu0 0.0
        %7462 = vmatpush1.msra.mxu0 0.0
        %7463 = vmatprep.subr.mxu0 0.0
        %7464 = vmatpush1.msra.mxu0 0.0
        %7465 = vmatprep.subr.mxu0 0.0
        %7466 = vmatpush1.msra.mxu0 0.0
        %7467 = vmatprep.subr.mxu0 0.0
        %7468 = vmatpush1.msra.mxu0 0.0
        %7469 = vmatprep.subr.mxu0 0.0
        %7470 = vmatpush1.msra.mxu0 0.0
        %7471 = vmatprep.subr.mxu0 0.0
        %7472 = vmatpush1.msra.mxu0 0.0
        %7473 = vmatprep.subr.mxu0 0.0
        %7474 = vmatpush1.msra.mxu0 0.0
        %7475 = vmatprep.subr.mxu0 0.0
        %7476 = vmatpush1.msra.mxu0 0.0
        %7477 = vmatprep.subr.mxu0 0.0
        %7478 = vmatpush1.msra.mxu0 0.0
        %7479 = vmatprep.subr.mxu0 0.0
        %7480 = vmatpush1.msra.mxu0 0.0
        %7481 = vmatprep.subr.mxu0 0.0
        %7482 = vmatpush1.msra.mxu0 %v6253
        %7483 = vmatprep.subr.mxu0 0.0
        %7484 = vmatpush2.msra.mxu0 0.0
        %7485 = vmatprep.subr.mxu0 0.0
        %7486 = vmatpush2.msra.mxu0 0.0
        %7487 = vmatprep.subr.mxu0 0.0
        %7488 = vmatpush2.msra.mxu0 0.0
        %7489 = vmatprep.subr.mxu0 0.0
        %7490 = vmatpush2.msra.mxu0 0.0
        %7491 = vmatprep.subr.mxu0 0.0
        %7492 = vmatpush2.msra.mxu0 0.0
        %7493 = vmatprep.subr.mxu0 0.0
        %7494 = vmatpush2.msra.mxu0 0.0
        %7495 = vmatprep.subr.mxu0 0.0
        %7496 = vmatpush2.msra.mxu0 0.0
        %7497 = vmatprep.subr.mxu0 0.0
        %7498 = vmatpush2.msra.mxu0 0.0
        %7499 = vmatprep.subr.mxu0 0.0
        %7500 = vmatpush2.msra.mxu0 0.0
        %7501 = vmatprep.subr.mxu0 0.0
        %7502 = vmatpush2.msra.mxu0 0.0
        %7503 = vmatprep.subr.mxu0 0.0
        %7504 = vmatpush2.msra.mxu0 0.0
        %7505 = vmatprep.subr.mxu0 0.0
        %7506 = vmatpush2.msra.mxu0 0.0
        %7507 = vmatprep.subr.mxu0 0.0
        %7508 = vmatpush2.msra.mxu0 0.0
        %7509 = vmatprep.subr.mxu0 0.0
        %7510 = vmatpush2.msra.mxu0 0.0
        %7511 = vmatprep.subr.mxu0 0.0
        %7512 = vmatpush2.msra.mxu0 0.0
        %7513 = vmatprep.subr.mxu0 0.0
        %7514 = vmatpush2.msra.mxu0 0.0
        %7515 = vmatprep.mubr.f32.mxu0 0.0
        %7516 = vmatmul.mubr.f32.gmra.mxu0 %v7437
        %v7517 = vpop.f32.mrf.mxu0
        %v7518 = vadd.f32 0.0, %v7517
        %v7519 = vpop.f32.mrf.mxu0
        %7520 = vmatprep.mubr.f32.mxu0 0.0
        %7521 = vmatmul.mubr.f32.gmra.mxu0 %v7440
        %v7522 = vpop.f32.mrf.mxu0
        %v7523 = vadd.f32 0.0, %v7522
        %v7524 = vpop.f32.mrf.mxu0
        %7525 = vmatprep.mubr.f32.mxu0 0.0
        %7526 = vmatmul.mubr.f32.gmra.mxu0 %v7443
        %v7527 = vpop.f32.mrf.mxu0
        %v7528 = vadd.f32 0.0, %v7527
        %v7529 = vpop.f32.mrf.mxu0
        %7530 = vmatprep.mubr.f32.mxu0 0.0
        %7531 = vmatmul.mubr.f32.gmra.mxu0 %v7446
        %v7532 = vpop.f32.mrf.mxu0
        %v7533 = vadd.f32 0.0, %v7532
        %v7534 = vpop.f32.mrf.mxu0
        %7535 = vmatprep.mubr.f32.mxu0 0.0
        %7536 = vmatmul.mubr.f32.gmra.mxu0 %v7449
        %v7537 = vpop.f32.mrf.mxu0
        %v7538 = vadd.f32 0.0, %v7537
        %v7539 = vpop.f32.mrf.mxu0
        %7540 = vdwg.mxu0
        %v7541 = vadd.f32 %v7092, %v7518
        %v7542 = vadd.f32 %v7097, %v7523
        %v7543 = vadd.f32 %v7102, %v7528
        %v7544 = vadd.f32 %v7107, %v7533
        %v7545 = vadd.f32 %v7112, %v7538
        %7546 = vrot.lane.b32.xlu0 %v6223, 104
        %v7547 = vpop.permute.xlu0 %7546
        %7548 = vrot.lane.b32.xlu0 %v6228, 104
        %v7549 = vpop.permute.xlu0 %7548
        %7550 = vrot.lane.b32.xlu0 %v6233, 104
        %v7551 = vpop.permute.xlu0 %7550
        %7552 = vrot.lane.b32.xlu0 %v6238, 104
        %v7553 = vpop.permute.xlu0 %7552
        %7554 = vrot.lane.b32.xlu0 %v6243, 104
        %v7555 = vpop.permute.xlu0 %7554
        %7556 = vrot.lane.b32.xlu0 %v6223, 72
        %v7557 = vpop.permute.xlu0 %7556
        %7558 = vrot.lane.b32.xlu0 %v6228, 72
        %v7559 = vpop.permute.xlu0 %7558
        %7560 = vrot.lane.b32.xlu0 %v6233, 72
        %v7561 = vpop.permute.xlu0 %7560
        %7562 = vrot.lane.b32.xlu0 %v6238, 72
        %v7563 = vpop.permute.xlu0 %7562
        %7564 = vrot.lane.b32.xlu0 %v6243, 72
        %v7565 = vpop.permute.xlu0 %7564
        %v7566 = vsel %vm2436, %v7547, 0
        %v7568 = vsel %vm2436, %v7549, 0
        %v7570 = vsel %vm2436, %v7551, 0
        %v7572 = vsel %vm2436, %v7553, 0
        %v7574 = vsel %vm2436, %v7555, 0
        %v7576 = vsel %vm2436, %v7557, 0
        %v7578 = vsel %vm2436, %v7559, 0
        %v7580 = vsel %vm2436, %v7561, 0
        %v7582 = vsel %vm2436, %v7563, 0
        %v7584 = vsel %vm2436, %v7565, 0
        %7586 = vmatprep.subr.mxu0 0.0
        %7587 = vmatpush1.xpose.msra.mxu0 0.0
        %7588 = vmatprep.subr.mxu0 0.0
        %7589 = vmatpush1.xpose.msra.mxu0 0.0
        %7590 = vmatprep.subr.mxu0 0.0
        %7591 = vmatpush1.xpose.msra.mxu0 0.0
        %7592 = vmatprep.subr.mxu0 0.0
        %7593 = vmatpush1.xpose.msra.mxu0 0.0
        %7594 = vmatprep.subr.mxu0 0.0
        %7595 = vmatpush1.xpose.msra.mxu0 0.0
        %7596 = vmatprep.subr.mxu0 0.0
        %7597 = vmatpush1.xpose.msra.mxu0 0.0
        %7598 = vmatprep.subr.mxu0 0.0
        %7599 = vmatpush1.xpose.msra.mxu0 0.0
        %7600 = vmatprep.subr.mxu0 0.0
        %7601 = vmatpush1.xpose.msra.mxu0 0.0
        %7602 = vmatprep.subr.mxu0 0.0
        %7603 = vmatpush1.xpose.msra.mxu0 0.0
        %7604 = vmatprep.subr.mxu0 0.0
        %7605 = vmatpush1.xpose.msra.mxu0 0.0
        %7606 = vmatprep.subr.mxu0 0.0
        %7607 = vmatpush1.xpose.msra.mxu0 0.0
        %7608 = vmatprep.subr.mxu0 0.0
        %7609 = vmatpush1.xpose.msra.mxu0 %v7584
        %7610 = vmatprep.subr.mxu0 0.0
        %7611 = vmatpush1.xpose.msra.mxu0 %v7582
        %7612 = vmatprep.subr.mxu0 0.0
        %7613 = vmatpush1.xpose.msra.mxu0 %v7580
        %7614 = vmatprep.subr.mxu0 0.0
        %7615 = vmatpush1.xpose.msra.mxu0 %v7578
        %7616 = vmatprep.subr.mxu0 0.0
        %7617 = vmatpush1.xpose.msra.mxu0 %v7576
        %7618 = vmatprep.subr.mxu0 0.0
        %7619 = vmatpush2.xpose.msra.mxu0 0.0
        %7620 = vmatprep.subr.mxu0 0.0
        %7621 = vmatpush2.xpose.msra.mxu0 0.0
        %7622 = vmatprep.subr.mxu0 0.0
        %7623 = vmatpush2.xpose.msra.mxu0 0.0
        %7624 = vmatprep.subr.mxu0 0.0
        %7625 = vmatpush2.xpose.msra.mxu0 0.0
        %7626 = vmatprep.subr.mxu0 0.0
        %7627 = vmatpush2.xpose.msra.mxu0 0.0
        %7628 = vmatprep.subr.mxu0 0.0
        %7629 = vmatpush2.xpose.msra.mxu0 0.0
        %7630 = vmatprep.subr.mxu0 0.0
        %7631 = vmatpush2.xpose.msra.mxu0 0.0
        %7632 = vmatprep.subr.mxu0 0.0
        %7633 = vmatpush2.xpose.msra.mxu0 0.0
        %7634 = vmatprep.subr.mxu0 0.0
        %7635 = vmatpush2.xpose.msra.mxu0 0.0
        %7636 = vmatprep.subr.mxu0 0.0
        %7637 = vmatpush2.xpose.msra.mxu0 0.0
        %7638 = vmatprep.subr.mxu0 0.0
        %7639 = vmatpush2.xpose.msra.mxu0 0.0
        %7640 = vmatprep.subr.mxu0 0.0
        %7641 = vmatpush2.xpose.msra.mxu0 0.0
        %7642 = vmatprep.subr.mxu0 0.0
        %7643 = vmatpush2.xpose.msra.mxu0 0.0
        %7644 = vmatprep.subr.mxu0 0.0
        %7645 = vmatpush2.xpose.msra.mxu0 0.0
        %7646 = vmatprep.subr.mxu0 0.0
        %7647 = vmatpush2.xpose.msra.mxu0 0.0
        %7648 = vmatprep.subr.mxu0 0.0
        %7649 = vmatpush2.xpose.msra.mxu0 0.0
        %7650 = vmatprep.mubr.f32.mxu0 0.0
        %7651 = vmatmul.mubr.f32.gmra.mxu0 %v7566
        %v7652 = vpop.f32.mrf.mxu0
        %v7653 = vadd.f32 0.0, %v7652
        %v7654 = vpop.f32.mrf.mxu0
        %7655 = vmatprep.mubr.f32.mxu0 0.0
        %7656 = vmatmul.mubr.f32.gmra.mxu0 %v7568
        %v7657 = vpop.f32.mrf.mxu0
        %v7658 = vadd.f32 0.0, %v7657
        %v7659 = vpop.f32.mrf.mxu0
        %7660 = vmatprep.mubr.f32.mxu0 0.0
        %7661 = vmatmul.mubr.f32.gmra.mxu0 %v7570
        %v7662 = vpop.f32.mrf.mxu0
        %v7663 = vadd.f32 0.0, %v7662
        %v7664 = vpop.f32.mrf.mxu0
        %7665 = vmatprep.mubr.f32.mxu0 0.0
        %7666 = vmatmul.mubr.f32.gmra.mxu0 %v7572
        %v7667 = vpop.f32.mrf.mxu0
        %v7668 = vadd.f32 0.0, %v7667
        %v7669 = vpop.f32.mrf.mxu0
        %7670 = vmatprep.mubr.f32.mxu0 0.0
        %7671 = vmatmul.mubr.f32.gmra.mxu0 %v7574
        %v7672 = vpop.f32.mrf.mxu0
        %v7673 = vadd.f32 0.0, %v7672
        %v7674 = vpop.f32.mrf.mxu0
        %7675 = vdwg.mxu0
        %v7676 = vmul.f32 %v7653, 0.35355338
        %v7677 = vmul.f32 %v7658, 0.35355338
        %v7678 = vmul.f32 %v7663, 0.35355338
        %v7679 = vmul.f32 %v7668, 0.35355338
        %v7680 = vmul.f32 %v7673, 0.35355338
        %v7681 = vmul.f32 %v7676, %v6256
        %v7682 = vmul.f32 %v7677, %v6257
        %v7683 = vmul.f32 %v7678, %v6258
        %v7684 = vmul.f32 %v7679, %v6259
        %v7685 = vmul.f32 %v7680, %v6260
        %v7686 = vadd.f32 %v7681, %v6261
        %v7687 = vadd.f32 %v7682, %v6262
        %v7688 = vadd.f32 %v7683, %v6263
        %v7689 = vadd.f32 %v7684, %v6264
        %v7690 = vadd.f32 %v7685, %v6265
        %v7691 = vsel %vm6406, %v7686, -inf
        %7692 = vmax.xlane.f32.xlu0 %v7691
        %v7693 = vpop.xlane.xlu0 %7692
        %v7694 = vsel %vm6406, %v7687, -inf
        %7695 = vmax.xlane.f32.xlu0 %v7694
        %v7696 = vpop.xlane.xlu0 %7695
        %v7697 = vsel %vm6406, %v7688, -inf
        %7698 = vmax.xlane.f32.xlu0 %v7697
        %v7699 = vpop.xlane.xlu0 %7698
        %v7700 = vsel %vm6406, %v7689, -inf
        %7701 = vmax.xlane.f32.xlu0 %v7700
        %v7702 = vpop.xlane.xlu0 %7701
        %v7703 = vsel %vm6419, %v7690, -inf
        %7704 = vmax.xlane.f32.xlu0 %v7703
        %v7705 = vpop.xlane.xlu0 %7704
        %v7706 = vsub.f32 %v7686, %v7693
        %v7707 = vsub.f32 %v7687, %v7696
        %v7708 = vsub.f32 %v7688, %v7699
        %v7709 = vsub.f32 %v7689, %v7702
        %v7710 = vsub.f32 %v7690, %v7705
        %v7711 = vmul.f32 %v7706, 1.442695
        %v7712 = vpow.pop %v7711
        %v7713 = vmul.f32 %v7707, 1.442695
        %v7714 = vpow.pop %v7713
        %v7715 = vmul.f32 %v7708, 1.442695
        %v7716 = vpow.pop %v7715
        %v7717 = vmul.f32 %v7709, 1.442695
        %v7718 = vpow.pop %v7717
        %v7719 = vmul.f32 %v7710, 1.442695
        %v7720 = vpow.pop %v7719
        %v7721 = vsel %vm6406, %v7712, 0.0
        %7722 = vadd.xlane.f32.xlu0 %v7721
        %v7723 = vpop.xlane.xlu0 %7722
        %v7724 = vsel %vm6406, %v7714, 0.0
        %7725 = vadd.xlane.f32.xlu0 %v7724
        %v7726 = vpop.xlane.xlu0 %7725
        %v7727 = vsel %vm6406, %v7716, 0.0
        %7728 = vadd.xlane.f32.xlu0 %v7727
        %v7729 = vpop.xlane.xlu0 %7728
        %v7730 = vsel %vm6406, %v7718, 0.0
        %7731 = vadd.xlane.f32.xlu0 %v7730
        %v7732 = vpop.xlane.xlu0 %7731
        %v7733 = vsel %vm6419, %v7720, 0.0
        %7734 = vadd.xlane.f32.xlu0 %v7733
        %v7735 = vpop.xlane.xlu0 %7734
        %v7736 = vrcp.pop %v7723
        %v7737 = vrcp.pop %v7726
        %v7738 = vrcp.pop %v7729
        %v7739 = vrcp.pop %v7732
        %v7740 = vrcp.pop %v7735
        %v7741 = vmul.f32 %v7712, %v7736
        %v7742 = vmul.f32 %v7714, %v7737
        %v7743 = vmul.f32 %v7716, %v7738
        %v7744 = vmul.f32 %v7718, %v7739
        %v7745 = vmul.f32 %v7720, %v7740
        %7746 = vrot.lane.b32.xlu0 %v6223, 40
        %v7747 = vpop.permute.xlu0 %7746
        %7748 = vrot.lane.b32.xlu0 %v6228, 40
        %v7749 = vpop.permute.xlu0 %7748
        %7750 = vrot.lane.b32.xlu0 %v6233, 40
        %v7751 = vpop.permute.xlu0 %7750
        %7752 = vrot.lane.b32.xlu0 %v6238, 40
        %v7753 = vpop.permute.xlu0 %7752
        %7754 = vrot.lane.b32.xlu0 %v6243, 40
        %v7755 = vpop.permute.xlu0 %7754
        %v7761 = vsel %vm6406, %v7741, 0
        %v7764 = vsel %vm6406, %v7742, 0
        %v7767 = vsel %vm6406, %v7743, 0
        %v7770 = vsel %vm6406, %v7744, 0
        %v7773 = vsel %vm6406, %v7745, 0
        %v7775 = vsel %vm2646, %v7755, 0
        %7777 = vmatprep.subr.mxu0 0.0
        %7778 = vmatpush1.msra.mxu0 0.0
        %7779 = vmatprep.subr.mxu0 0.0
        %7780 = vmatpush1.msra.mxu0 0.0
        %7781 = vmatprep.subr.mxu0 0.0
        %7782 = vmatpush1.msra.mxu0 0.0
        %7783 = vmatprep.subr.mxu0 0.0
        %7784 = vmatpush1.msra.mxu0 0.0
        %7785 = vmatprep.subr.mxu0 0.0
        %7786 = vmatpush1.msra.mxu0 0.0
        %7787 = vmatprep.subr.mxu0 0.0
        %7788 = vmatpush1.msra.mxu0 0.0
        %7789 = vmatprep.subr.mxu0 0.0
        %7790 = vmatpush1.msra.mxu0 0.0
        %7791 = vmatprep.subr.mxu0 0.0
        %7792 = vmatpush1.msra.mxu0 0.0
        %7793 = vmatprep.subr.mxu0 0.0
        %7794 = vmatpush1.msra.mxu0 0.0
        %7795 = vmatprep.subr.mxu0 0.0
        %7796 = vmatpush1.msra.mxu0 0.0
        %7797 = vmatprep.subr.mxu0 0.0
        %7798 = vmatpush1.msra.mxu0 0.0
        %7799 = vmatprep.subr.mxu0 0.0
        %7800 = vmatpush1.msra.mxu0 %v7775
        %7801 = vmatprep.subr.mxu0 0.0
        %7802 = vmatpush1.msra.mxu0 %v7753
        %7803 = vmatprep.subr.mxu0 0.0
        %7804 = vmatpush1.msra.mxu0 %v7751
        %7805 = vmatprep.subr.mxu0 0.0
        %7806 = vmatpush1.msra.mxu0 %v7749
        %7807 = vmatprep.subr.mxu0 0.0
        %7808 = vmatpush1.msra.mxu0 %v7747
        %7809 = vmatprep.subr.mxu0 0.0
        %7810 = vmatpush2.msra.mxu0 0.0
        %7811 = vmatprep.subr.mxu0 0.0
        %7812 = vmatpush2.msra.mxu0 0.0
        %7813 = vmatprep.subr.mxu0 0.0
        %7814 = vmatpush2.msra.mxu0 0.0
        %7815 = vmatprep.subr.mxu0 0.0
        %7816 = vmatpush2.msra.mxu0 0.0
        %7817 = vmatprep.subr.mxu0 0.0
        %7818 = vmatpush2.msra.mxu0 0.0
        %7819 = vmatprep.subr.mxu0 0.0
        %7820 = vmatpush2.msra.mxu0 0.0
        %7821 = vmatprep.subr.mxu0 0.0
        %7822 = vmatpush2.msra.mxu0 0.0
        %7823 = vmatprep.subr.mxu0 0.0
        %7824 = vmatpush2.msra.mxu0 0.0
        %7825 = vmatprep.subr.mxu0 0.0
        %7826 = vmatpush2.msra.mxu0 0.0
        %7827 = vmatprep.subr.mxu0 0.0
        %7828 = vmatpush2.msra.mxu0 0.0
        %7829 = vmatprep.subr.mxu0 0.0
        %7830 = vmatpush2.msra.mxu0 0.0
        %7831 = vmatprep.subr.mxu0 0.0
        %7832 = vmatpush2.msra.mxu0 0.0
        %7833 = vmatprep.subr.mxu0 0.0
        %7834 = vmatpush2.msra.mxu0 0.0
        %7835 = vmatprep.subr.mxu0 0.0
        %7836 = vmatpush2.msra.mxu0 0.0
        %7837 = vmatprep.subr.mxu0 0.0
        %7838 = vmatpush2.msra.mxu0 0.0
        %7839 = vmatprep.subr.mxu0 0.0
        %7840 = vmatpush2.msra.mxu0 0.0
        %7841 = vmatprep.mubr.f32.mxu0 0.0
        %7842 = vmatmul.mubr.f32.gmra.mxu0 %v7761
        %v7843 = vpop.f32.mrf.mxu0
        %v7844 = vadd.f32 0.0, %v7843
        %v7845 = vpop.f32.mrf.mxu0
        %7846 = vmatprep.mubr.f32.mxu0 0.0
        %7847 = vmatmul.mubr.f32.gmra.mxu0 %v7764
        %v7848 = vpop.f32.mrf.mxu0
        %v7849 = vadd.f32 0.0, %v7848
        %v7850 = vpop.f32.mrf.mxu0
        %7851 = vmatprep.mubr.f32.mxu0 0.0
        %7852 = vmatmul.mubr.f32.gmra.mxu0 %v7767
        %v7853 = vpop.f32.mrf.mxu0
        %v7854 = vadd.f32 0.0, %v7853
        %v7855 = vpop.f32.mrf.mxu0
        %7856 = vmatprep.mubr.f32.mxu0 0.0
        %7857 = vmatmul.mubr.f32.gmra.mxu0 %v7770
        %v7858 = vpop.f32.mrf.mxu0
        %v7859 = vadd.f32 0.0, %v7858
        %v7860 = vpop.f32.mrf.mxu0
        %7861 = vmatprep.mubr.f32.mxu0 0.0
        %7862 = vmatmul.mubr.f32.gmra.mxu0 %v7773
        %v7863 = vpop.f32.mrf.mxu0
        %v7864 = vadd.f32 0.0, %v7863
        %v7865 = vpop.f32.mrf.mxu0
        %7866 = vdwg.mxu0
        %v7868 = vsel %vm2436, %v7844, 0
        %v7871 = vsel %vm2436, %v7849, 0
        %v7874 = vsel %vm2436, %v7854, 0
        %v7877 = vsel %vm2436, %v7859, 0
        %v7880 = vsel %vm2436, %v7864, 0
        %7882 = vmatprep.subr.mxu0 0.0
        %7883 = vmatpush1.msra.mxu0 0.0
        %7884 = vmatprep.subr.mxu0 0.0
        %7885 = vmatpush1.msra.mxu0 0.0
        %7886 = vmatprep.subr.mxu0 0.0
        %7887 = vmatpush1.msra.mxu0 0.0
        %7888 = vmatprep.subr.mxu0 0.0
        %7889 = vmatpush1.msra.mxu0 0.0
        %7890 = vmatprep.subr.mxu0 0.0
        %7891 = vmatpush1.msra.mxu0 0.0
        %7892 = vmatprep.subr.mxu0 0.0
        %7893 = vmatpush1.msra.mxu0 0.0
        %7894 = vmatprep.subr.mxu0 0.0
        %7895 = vmatpush1.msra.mxu0 0.0
        %7896 = vmatprep.subr.mxu0 0.0
        %7897 = vmatpush1.msra.mxu0 0.0
        %7898 = vmatprep.subr.mxu0 0.0
        %7899 = vmatpush1.msra.mxu0 0.0
        %7900 = vmatprep.subr.mxu0 0.0
        %7901 = vmatpush1.msra.mxu0 0.0
        %7902 = vmatprep.subr.mxu0 0.0
        %7903 = vmatpush1.msra.mxu0 0.0
        %7904 = vmatprep.subr.mxu0 0.0
        %7905 = vmatpush1.msra.mxu0 0.0
        %7906 = vmatprep.subr.mxu0 0.0
        %7907 = vmatpush1.msra.mxu0 0.0
        %7908 = vmatprep.subr.mxu0 0.0
        %7909 = vmatpush1.msra.mxu0 0.0
        %7910 = vmatprep.subr.mxu0 0.0
        %7911 = vmatpush1.msra.mxu0 0.0
        %7912 = vmatprep.subr.mxu0 0.0
        %7913 = vmatpush1.msra.mxu0 %v6254
        %7914 = vmatprep.subr.mxu0 0.0
        %7915 = vmatpush2.msra.mxu0 0.0
        %7916 = vmatprep.subr.mxu0 0.0
        %7917 = vmatpush2.msra.mxu0 0.0
        %7918 = vmatprep.subr.mxu0 0.0
        %7919 = vmatpush2.msra.mxu0 0.0
        %7920 = vmatprep.subr.mxu0 0.0
        %7921 = vmatpush2.msra.mxu0 0.0
        %7922 = vmatprep.subr.mxu0 0.0
        %7923 = vmatpush2.msra.mxu0 0.0
        %7924 = vmatprep.subr.mxu0 0.0
        %7925 = vmatpush2.msra.mxu0 0.0
        %7926 = vmatprep.subr.mxu0 0.0
        %7927 = vmatpush2.msra.mxu0 0.0
        %7928 = vmatprep.subr.mxu0 0.0
        %7929 = vmatpush2.msra.mxu0 0.0
        %7930 = vmatprep.subr.mxu0 0.0
        %7931 = vmatpush2.msra.mxu0 0.0
        %7932 = vmatprep.subr.mxu0 0.0
        %7933 = vmatpush2.msra.mxu0 0.0
        %7934 = vmatprep.subr.mxu0 0.0
        %7935 = vmatpush2.msra.mxu0 0.0
        %7936 = vmatprep.subr.mxu0 0.0
        %7937 = vmatpush2.msra.mxu0 0.0
        %7938 = vmatprep.subr.mxu0 0.0
        %7939 = vmatpush2.msra.mxu0 0.0
        %7940 = vmatprep.subr.mxu0 0.0
        %7941 = vmatpush2.msra.mxu0 0.0
        %7942 = vmatprep.subr.mxu0 0.0
        %7943 = vmatpush2.msra.mxu0 0.0
        %7944 = vmatprep.subr.mxu0 0.0
        %7945 = vmatpush2.msra.mxu0 0.0
        %7946 = vmatprep.mubr.f32.mxu0 0.0
        %7947 = vmatmul.mubr.f32.gmra.mxu0 %v7868
        %v7948 = vpop.f32.mrf.mxu0
        %v7949 = vadd.f32 0.0, %v7948
        %v7950 = vpop.f32.mrf.mxu0
        %7951 = vmatprep.mubr.f32.mxu0 0.0
        %7952 = vmatmul.mubr.f32.gmra.mxu0 %v7871
        %v7953 = vpop.f32.mrf.mxu0
        %v7954 = vadd.f32 0.0, %v7953
        %v7955 = vpop.f32.mrf.mxu0
        %7956 = vmatprep.mubr.f32.mxu0 0.0
        %7957 = vmatmul.mubr.f32.gmra.mxu0 %v7874
        %v7958 = vpop.f32.mrf.mxu0
        %v7959 = vadd.f32 0.0, %v7958
        %v7960 = vpop.f32.mrf.mxu0
        %7961 = vmatprep.mubr.f32.mxu0 0.0
        %7962 = vmatmul.mubr.f32.gmra.mxu0 %v7877
        %v7963 = vpop.f32.mrf.mxu0
        %v7964 = vadd.f32 0.0, %v7963
        %v7965 = vpop.f32.mrf.mxu0
        %7966 = vmatprep.mubr.f32.mxu0 0.0
        %7967 = vmatmul.mubr.f32.gmra.mxu0 %v7880
        %v7968 = vpop.f32.mrf.mxu0
        %v7969 = vadd.f32 0.0, %v7968
        %v7970 = vpop.f32.mrf.mxu0
        %7971 = vdwg.mxu0
        %v7972 = vadd.f32 %v7541, %v7949
        %v7973 = vadd.f32 %v7542, %v7954
        %v7974 = vadd.f32 %v7543, %v7959
        %v7975 = vadd.f32 %v7544, %v7964
        %v7976 = vadd.f32 %v7545, %v7969
        %v7978 = vlaneseq
        %v7979 = vshrl.u32 %v7978, 7
        %v7980 = vsub.s32 0, %v7979
        %v7981 = vrot.slane %v6255, %v7980
        %v7983 = vadd.f32 %v7972, %v7981
        %v7984 = vadd.f32 %v7973, %v7981
        %v7985 = vadd.f32 %v7974, %v7981
        %v7986 = vadd.f32 %v7975, %v7981
        %v7987 = vadd.f32 %v7976, %v7981
        %v7988 = vadd.f32 %v6125, %v7983
        %v7989 = vadd.f32 %v6126, %v7984
        %v7990 = vadd.f32 %v6127, %v7985
        %v7991 = vadd.f32 %v6128, %v7986
        %v7992 = vadd.f32 %v6129, %v7987
        %v7993 = vsel %vm2067, %v7988, 0.0
        %7994 = vadd.xlane.f32.xlu0 %v7993
        %v7995 = vpop.xlane.xlu0 %7994
        %v7996 = vsel %vm2067, %v7989, 0.0
        %7997 = vadd.xlane.f32.xlu0 %v7996
        %v7998 = vpop.xlane.xlu0 %7997
        %v7999 = vsel %vm2067, %v7990, 0.0
        %8000 = vadd.xlane.f32.xlu0 %v7999
        %v8001 = vpop.xlane.xlu0 %8000
        %v8002 = vsel %vm2067, %v7991, 0.0
        %8003 = vadd.xlane.f32.xlu0 %v8002
        %v8004 = vpop.xlane.xlu0 %8003
        %v8005 = vsel %vm2071, %v7992, 0.0
        %8006 = vadd.xlane.f32.xlu0 %v8005
        %v8007 = vpop.xlane.xlu0 %8006
        %v8008 = vmul.f32 %v7995, %v3896
        %v8009 = vmul.f32 %v7998, %v3896
        %v8010 = vmul.f32 %v8001, %v3896
        %v8011 = vmul.f32 %v8004, %v3896
        %v8012 = vmul.f32 %v8007, %v3896
        %v8013 = vsub.f32 %v7988, %v8008
        %v8014 = vsub.f32 %v7989, %v8009
        %v8015 = vsub.f32 %v7990, %v8010
        %v8016 = vsub.f32 %v7991, %v8011
        %v8017 = vsub.f32 %v7992, %v8012
        %v8018 = vmul.f32 %v8013, %v8013
        %v8019 = vmul.f32 %v8014, %v8014
        %v8020 = vmul.f32 %v8015, %v8015
        %v8021 = vmul.f32 %v8016, %v8016
        %v8022 = vmul.f32 %v8017, %v8017
        %v8023 = vsel %vm2067, %v8018, 0.0
        %8024 = vadd.xlane.f32.xlu0 %v8023
        %v8025 = vpop.xlane.xlu0 %8024
        %v8026 = vsel %vm2067, %v8019, 0.0
        %8027 = vadd.xlane.f32.xlu0 %v8026
        %v8028 = vpop.xlane.xlu0 %8027
        %v8029 = vsel %vm2067, %v8020, 0.0
        %8030 = vadd.xlane.f32.xlu0 %v8029
        %v8031 = vpop.xlane.xlu0 %8030
        %v8032 = vsel %vm2067, %v8021, 0.0
        %8033 = vadd.xlane.f32.xlu0 %v8032
        %v8034 = vpop.xlane.xlu0 %8033
        %v8035 = vsel %vm2071, %v8022, 0.0
        %8036 = vadd.xlane.f32.xlu0 %v8035
        %v8037 = vpop.xlane.xlu0 %8036
        %v8038 = vmul.f32 %v8025, %v3909
        %v8039 = vmul.f32 %v8028, %v3909
        %v8040 = vmul.f32 %v8031, %v3909
        %v8041 = vmul.f32 %v8034, %v3909
        %v8042 = vmul.f32 %v8037, %v3909
        %v8043 = vrsqrt.pop %v8038
        %v8044 = vmul.f32 %v8038, %v8043
        %vm8045 = vcmp.eq.f32.partialorder %v8038, inf
        %v8046 = vsel %vm8045, %v8038, %v8044
        %vm8047 = vcmp.eq.f32.partialorder %v8038, 0.0
        %v8048 = vand.u32 %v8038, 2147483648
        %v8049 = vsel %vm8047, %v8048, %v8046
        %v8050 = vrsqrt.pop %v8039
        %v8051 = vmul.f32 %v8039, %v8050
        %vm8052 = vcmp.eq.f32.partialorder %v8039, inf
        %v8053 = vsel %vm8052, %v8039, %v8051
        %vm8054 = vcmp.eq.f32.partialorder %v8039, 0.0
        %v8055 = vand.u32 %v8039, 2147483648
        %v8056 = vsel %vm8054, %v8055, %v8053
        %v8057 = vrsqrt.pop %v8040
        %v8058 = vmul.f32 %v8040, %v8057
        %vm8059 = vcmp.eq.f32.partialorder %v8040, inf
        %v8060 = vsel %vm8059, %v8040, %v8058
        %vm8061 = vcmp.eq.f32.partialorder %v8040, 0.0
        %v8062 = vand.u32 %v8040, 2147483648
        %v8063 = vsel %vm8061, %v8062, %v8060
        %v8064 = vrsqrt.pop %v8041
        %v8065 = vmul.f32 %v8041, %v8064
        %vm8066 = vcmp.eq.f32.partialorder %v8041, inf
        %v8067 = vsel %vm8066, %v8041, %v8065
        %vm8068 = vcmp.eq.f32.partialorder %v8041, 0.0
        %v8069 = vand.u32 %v8041, 2147483648
        %v8070 = vsel %vm8068, %v8069, %v8067
        %v8071 = vrsqrt.pop %v8042
        %v8072 = vmul.f32 %v8042, %v8071
        %vm8073 = vcmp.eq.f32.partialorder %v8042, inf
        %v8074 = vsel %vm8073, %v8042, %v8072
        %vm8075 = vcmp.eq.f32.partialorder %v8042, 0.0
        %v8076 = vand.u32 %v8042, 2147483648
        %v8077 = vsel %vm8075, %v8076, %v8074
        %v8078 = vadd.f32 %v8049, 1e-06
        %v8079 = vadd.f32 %v8056, 1e-06
        %v8080 = vadd.f32 %v8063, 1e-06
        %v8081 = vadd.f32 %v8070, 1e-06
        %v8082 = vadd.f32 %v8077, 1e-06
        %v8083 = vrcp.pop %v8078
        %v8084 = vmul.f32 1.0, %v8083
        %v8085 = vrcp.pop %v8079
        %v8086 = vmul.f32 1.0, %v8085
        %v8087 = vrcp.pop %v8080
        %v8088 = vmul.f32 1.0, %v8087
        %v8089 = vrcp.pop %v8081
        %v8090 = vmul.f32 1.0, %v8089
        %v8091 = vrcp.pop %v8082
        %v8092 = vmul.f32 1.0, %v8091
        %v8093 = vlaneseq
        %v8094 = vshrl.u32 %v8093, 7
        %v8095 = vsub.s32 2, %v8094
        %v8096 = vrot.slane %v2035, %v8095
        %v8097 = vmul.f32 %v8096, %v8013
        %v8098 = vmul.f32 %v8096, %v8014
        %v8099 = vmul.f32 %v8096, %v8015
        %v8100 = vmul.f32 %v8096, %v8016
        %v8101 = vmul.f32 %v8096, %v8017
        %v8102 = vmul.f32 %v8097, %v8084
        %v8103 = vmul.f32 %v8098, %v8086
        %v8104 = vmul.f32 %v8099, %v8088
        %v8105 = vmul.f32 %v8100, %v8090
        %v8106 = vmul.f32 %v8101, %v8092
        %v8107 = vlaneseq
        %v8108 = vshrl.u32 %v8107, 7
        %v8109 = vsub.s32 2, %v8108
        %v8110 = vrot.slane %v2036, %v8109
        %v8111 = vadd.f32 %v8102, %v8110
        %v8112 = vadd.f32 %v8103, %v8110
        %v8113 = vadd.f32 %v8104, %v8110
        %v8114 = vadd.f32 %v8105, %v8110
        %v8115 = vadd.f32 %v8106, %v8110
        %v8116 = vld [vmem:[%s2003] sm:$0xff]
        %v8117 = vld [vmem:[%s2003 + $0x8] sm:$0xff]
        %v8118 = vld [vmem:[%s2003 + $0x10] sm:$0xff]
        %v8119 = vld [vmem:[%s2003 + $0x18] sm:$0xff]
        %v8120 = vld [vmem:[%s1662] sm:$0x1]
        %v8122 = vlaneseq
        %v8123 = vshrl.u32 %v8122, 7
        %v8124 = vsub.s32 0, %v8123
        %v8125 = vrot.slane %v8120, %v8124
        %v8128 = vsel %vm2067, %v8111, 0
        %v8131 = vsel %vm2067, %v8112, 0
        %v8134 = vsel %vm2067, %v8113, 0
        %v8137 = vsel %vm2067, %v8114, 0
        %v8140 = vsel %vm2067, %v8115, 0
        %8142 = vmatprep.subr.mxu0 0.0
        %8143 = vmatpush1.msra.mxu0 0.0
        %8144 = vmatprep.subr.mxu0 0.0
        %8145 = vmatpush1.msra.mxu0 0.0
        %8146 = vmatprep.subr.mxu0 0.0
        %8147 = vmatpush1.msra.mxu0 0.0
        %8148 = vmatprep.subr.mxu0 0.0
        %8149 = vmatpush1.msra.mxu0 0.0
        %8150 = vmatprep.subr.mxu0 0.0
        %8151 = vmatpush1.msra.mxu0 0.0
        %8152 = vmatprep.subr.mxu0 0.0
        %8153 = vmatpush1.msra.mxu0 0.0
        %8154 = vmatprep.subr.mxu0 0.0
        %8155 = vmatpush1.msra.mxu0 0.0
        %8156 = vmatprep.subr.mxu0 0.0
        %8157 = vmatpush1.msra.mxu0 0.0
        %8158 = vmatprep.subr.mxu0 0.0
        %8159 = vmatpush1.msra.mxu0 0.0
        %8160 = vmatprep.subr.mxu0 0.0
        %8161 = vmatpush1.msra.mxu0 0.0
        %8162 = vmatprep.subr.mxu0 0.0
        %8163 = vmatpush1.msra.mxu0 0.0
        %8164 = vmatprep.subr.mxu0 0.0
        %8165 = vmatpush1.msra.mxu0 0.0
        %8166 = vmatprep.subr.mxu0 0.0
        %8167 = vmatpush1.msra.mxu0 %v8119
        %8168 = vmatprep.subr.mxu0 0.0
        %8169 = vmatpush1.msra.mxu0 %v8118
        %8170 = vmatprep.subr.mxu0 0.0
        %8171 = vmatpush1.msra.mxu0 %v8117
        %8172 = vmatprep.subr.mxu0 0.0
        %8173 = vmatpush1.msra.mxu0 %v8116
        %8174 = vmatprep.subr.mxu0 0.0
        %8175 = vmatpush2.msra.mxu0 0.0
        %8176 = vmatprep.subr.mxu0 0.0
        %8177 = vmatpush2.msra.mxu0 0.0
        %8178 = vmatprep.subr.mxu0 0.0
        %8179 = vmatpush2.msra.mxu0 0.0
        %8180 = vmatprep.subr.mxu0 0.0
        %8181 = vmatpush2.msra.mxu0 0.0
        %8182 = vmatprep.subr.mxu0 0.0
        %8183 = vmatpush2.msra.mxu0 0.0
        %8184 = vmatprep.subr.mxu0 0.0
        %8185 = vmatpush2.msra.mxu0 0.0
        %8186 = vmatprep.subr.mxu0 0.0
        %8187 = vmatpush2.msra.mxu0 0.0
        %8188 = vmatprep.subr.mxu0 0.0
        %8189 = vmatpush2.msra.mxu0 0.0
        %8190 = vmatprep.subr.mxu0 0.0
        %8191 = vmatpush2.msra.mxu0 0.0
        %8192 = vmatprep.subr.mxu0 0.0
        %8193 = vmatpush2.msra.mxu0 0.0
        %8194 = vmatprep.subr.mxu0 0.0
        %8195 = vmatpush2.msra.mxu0 0.0
        %8196 = vmatprep.subr.mxu0 0.0
        %8197 = vmatpush2.msra.mxu0 0.0
        %8198 = vmatprep.subr.mxu0 0.0
        %8199 = vmatpush2.msra.mxu0 0.0
        %8200 = vmatprep.subr.mxu0 0.0
        %8201 = vmatpush2.msra.mxu0 0.0
        %8202 = vmatprep.subr.mxu0 0.0
        %8203 = vmatpush2.msra.mxu0 0.0
        %8204 = vmatprep.subr.mxu0 0.0
        %8205 = vmatpush2.msra.mxu0 0.0
        %8206 = vmatprep.mubr.f32.mxu0 0.0
        %8207 = vmatmul.mubr.f32.gmra.mxu0 %v8128
        %v8208 = vpop.f32.mrf.mxu0
        %v8209 = vadd.f32 %v8125, %v8208
        %v8210 = vpop.f32.mrf.mxu0
        %8211 = vmatprep.mubr.f32.mxu0 0.0
        %8212 = vmatmul.mubr.f32.gmra.mxu0 %v8131
        %v8213 = vpop.f32.mrf.mxu0
        %v8214 = vadd.f32 %v8125, %v8213
        %v8215 = vpop.f32.mrf.mxu0
        %8216 = vmatprep.mubr.f32.mxu0 0.0
        %8217 = vmatmul.mubr.f32.gmra.mxu0 %v8134
        %v8218 = vpop.f32.mrf.mxu0
        %v8219 = vadd.f32 %v8125, %v8218
        %v8220 = vpop.f32.mrf.mxu0
        %8221 = vmatprep.mubr.f32.mxu0 0.0
        %8222 = vmatmul.mubr.f32.gmra.mxu0 %v8137
        %v8223 = vpop.f32.mrf.mxu0
        %v8224 = vadd.f32 %v8125, %v8223
        %v8225 = vpop.f32.mrf.mxu0
        %8226 = vmatprep.mubr.f32.mxu0 0.0
        %8227 = vmatmul.mubr.f32.gmra.mxu0 %v8140
        %v8228 = vpop.f32.mrf.mxu0
        %v8229 = vadd.f32 %v8125, %v8228
        %v8230 = vpop.f32.mrf.mxu0
        %8231 = vdwg.mxu0
        %v8232 = vmax.f32 %v8209, 0.0
        %v8233 = vmax.f32 %v8214, 0.0
        %v8234 = vmax.f32 %v8219, 0.0
        %v8235 = vmax.f32 %v8224, 0.0
        %v8236 = vmax.f32 %v8229, 0.0
        %v8237 = vld [vmem:[%s2008] sm:$0xff]
        %v8238 = vld [vmem:[%s2008 + $0x8] sm:$0xff]
        %v8239 = vld [vmem:[%s2008 + $0x10] sm:$0xff]
        %v8240 = vld [vmem:[%s2008 + $0x18] sm:$0xff]
        %v8241 = vld [vmem:[%s2008 + $0x20] sm:$0xff]
        %v8242 = vld [vmem:[%s2008 + $0x28] sm:$0xff]
        %v8243 = vld [vmem:[%s2008 + $0x30] sm:$0xff]
        %v8244 = vld [vmem:[%s2008 + $0x38] sm:$0xff]
        %v8245 = vld [vmem:[%s1670] sm:$0x1]
        %v8247 = vlaneseq
        %v8248 = vshrl.u32 %v8247, 7
        %v8249 = vsub.s32 0, %v8248
        %v8250 = vrot.slane %v8245, %v8249
        %vm8252 = vcmask 523264
        %v8254 = vsel %vm8252, %v8232, 0
        %v8257 = vsel %vm8252, %v8233, 0
        %v8260 = vsel %vm8252, %v8234, 0
        %v8263 = vsel %vm8252, %v8235, 0
        %v8266 = vsel %vm8252, %v8236, 0
        %8268 = vmatprep.subr.mxu0 0.0
        %8269 = vmatpush1.msra.mxu0 0.0
        %8270 = vmatprep.subr.mxu0 0.0
        %8271 = vmatpush1.msra.mxu0 0.0
        %8272 = vmatprep.subr.mxu0 0.0
        %8273 = vmatpush1.msra.mxu0 0.0
        %8274 = vmatprep.subr.mxu0 0.0
        %8275 = vmatpush1.msra.mxu0 0.0
        %8276 = vmatprep.subr.mxu0 0.0
        %8277 = vmatpush1.msra.mxu0 0.0
        %8278 = vmatprep.subr.mxu0 0.0
        %8279 = vmatpush1.msra.mxu0 0.0
        %8280 = vmatprep.subr.mxu0 0.0
        %8281 = vmatpush1.msra.mxu0 0.0
        %8282 = vmatprep.subr.mxu0 0.0
        %8283 = vmatpush1.msra.mxu0 0.0
        %8284 = vmatprep.subr.mxu0 0.0
        %8285 = vmatpush1.msra.mxu0 %v8244
        %8286 = vmatprep.subr.mxu0 0.0
        %8287 = vmatpush1.msra.mxu0 %v8243
        %8288 = vmatprep.subr.mxu0 0.0
        %8289 = vmatpush1.msra.mxu0 %v8242
        %8290 = vmatprep.subr.mxu0 0.0
        %8291 = vmatpush1.msra.mxu0 %v8241
        %8292 = vmatprep.subr.mxu0 0.0
        %8293 = vmatpush1.msra.mxu0 %v8240
        %8294 = vmatprep.subr.mxu0 0.0
        %8295 = vmatpush1.msra.mxu0 %v8239
        %8296 = vmatprep.subr.mxu0 0.0
        %8297 = vmatpush1.msra.mxu0 %v8238
        %8298 = vmatprep.subr.mxu0 0.0
        %8299 = vmatpush1.msra.mxu0 %v8237
        %8300 = vmatprep.subr.mxu0 0.0
        %8301 = vmatpush2.msra.mxu0 0.0
        %8302 = vmatprep.subr.mxu0 0.0
        %8303 = vmatpush2.msra.mxu0 0.0
        %8304 = vmatprep.subr.mxu0 0.0
        %8305 = vmatpush2.msra.mxu0 0.0
        %8306 = vmatprep.subr.mxu0 0.0
        %8307 = vmatpush2.msra.mxu0 0.0
        %8308 = vmatprep.subr.mxu0 0.0
        %8309 = vmatpush2.msra.mxu0 0.0
        %8310 = vmatprep.subr.mxu0 0.0
        %8311 = vmatpush2.msra.mxu0 0.0
        %8312 = vmatprep.subr.mxu0 0.0
        %8313 = vmatpush2.msra.mxu0 0.0
        %8314 = vmatprep.subr.mxu0 0.0
        %8315 = vmatpush2.msra.mxu0 0.0
        %8316 = vmatprep.subr.mxu0 0.0
        %8317 = vmatpush2.msra.mxu0 0.0
        %8318 = vmatprep.subr.mxu0 0.0
        %8319 = vmatpush2.msra.mxu0 0.0
        %8320 = vmatprep.subr.mxu0 0.0
        %8321 = vmatpush2.msra.mxu0 0.0
        %8322 = vmatprep.subr.mxu0 0.0
        %8323 = vmatpush2.msra.mxu0 0.0
        %8324 = vmatprep.subr.mxu0 0.0
        %8325 = vmatpush2.msra.mxu0 0.0
        %8326 = vmatprep.subr.mxu0 0.0
        %8327 = vmatpush2.msra.mxu0 0.0
        %8328 = vmatprep.subr.mxu0 0.0
        %8329 = vmatpush2.msra.mxu0 0.0
        %8330 = vmatprep.subr.mxu0 0.0
        %8331 = vmatpush2.msra.mxu0 0.0
        %8332 = vmatprep.mubr.f32.mxu0 0.0
        %8333 = vmatmul.mubr.f32.gmra.mxu0 %v8254
        %v8334 = vpop.f32.mrf.mxu0
        %v8335 = vadd.f32 %v8250, %v8334
        %v8336 = vpop.f32.mrf.mxu0
        %8337 = vmatprep.mubr.f32.mxu0 0.0
        %8338 = vmatmul.mubr.f32.gmra.mxu0 %v8257
        %v8339 = vpop.f32.mrf.mxu0
        %v8340 = vadd.f32 %v8250, %v8339
        %v8341 = vpop.f32.mrf.mxu0
        %8342 = vmatprep.mubr.f32.mxu0 0.0
        %8343 = vmatmul.mubr.f32.gmra.mxu0 %v8260
        %v8344 = vpop.f32.mrf.mxu0
        %v8345 = vadd.f32 %v8250, %v8344
        %v8346 = vpop.f32.mrf.mxu0
        %8347 = vmatprep.mubr.f32.mxu0 0.0
        %8348 = vmatmul.mubr.f32.gmra.mxu0 %v8263
        %v8349 = vpop.f32.mrf.mxu0
        %v8350 = vadd.f32 %v8250, %v8349
        %v8351 = vpop.f32.mrf.mxu0
        %8352 = vmatprep.mubr.f32.mxu0 0.0
        %8353 = vmatmul.mubr.f32.gmra.mxu0 %v8266
        %v8354 = vpop.f32.mrf.mxu0
        %v8355 = vadd.f32 %v8250, %v8354
        %v8356 = vpop.f32.mrf.mxu0
        %8357 = vdwg.mxu0
        %v8358 = vadd.f32 %v8111, %v8335
        %v8359 = vadd.f32 %v8112, %v8340
        %v8360 = vadd.f32 %v8113, %v8345
        %v8361 = vadd.f32 %v8114, %v8350
        %v8362 = vadd.f32 %v8115, %v8355
        %v8363 = vsel %vm2067, %v8358, 0.0
        %8364 = vadd.xlane.f32.xlu0 %v8363
        %v8365 = vpop.xlane.xlu0 %8364
        %v8366 = vsel %vm2067, %v8359, 0.0
        %8367 = vadd.xlane.f32.xlu0 %v8366
        %v8368 = vpop.xlane.xlu0 %8367
        %v8369 = vsel %vm2067, %v8360, 0.0
        %8370 = vadd.xlane.f32.xlu0 %v8369
        %v8371 = vpop.xlane.xlu0 %8370
        %v8372 = vsel %vm2067, %v8361, 0.0
        %8373 = vadd.xlane.f32.xlu0 %v8372
        %v8374 = vpop.xlane.xlu0 %8373
        %v8375 = vsel %vm2071, %v8362, 0.0
        %8376 = vadd.xlane.f32.xlu0 %v8375
        %v8377 = vpop.xlane.xlu0 %8376
        %v8378 = vmul.f32 %v8365, %v3896
        %v8379 = vmul.f32 %v8368, %v3896
        %v8380 = vmul.f32 %v8371, %v3896
        %v8381 = vmul.f32 %v8374, %v3896
        %v8382 = vmul.f32 %v8377, %v3896
        %v8383 = vsub.f32 %v8358, %v8378
        %v8384 = vsub.f32 %v8359, %v8379
        %v8385 = vsub.f32 %v8360, %v8380
        %v8386 = vsub.f32 %v8361, %v8381
        %v8387 = vsub.f32 %v8362, %v8382
        %v8388 = vmul.f32 %v8383, %v8383
        %v8389 = vmul.f32 %v8384, %v8384
        %v8390 = vmul.f32 %v8385, %v8385
        %v8391 = vmul.f32 %v8386, %v8386
        %v8392 = vmul.f32 %v8387, %v8387
        %v8393 = vsel %vm2067, %v8388, 0.0
        %8394 = vadd.xlane.f32.xlu0 %v8393
        %v8395 = vpop.xlane.xlu0 %8394
        %v8396 = vsel %vm2067, %v8389, 0.0
        %8397 = vadd.xlane.f32.xlu0 %v8396
        %v8398 = vpop.xlane.xlu0 %8397
        %v8399 = vsel %vm2067, %v8390, 0.0
        %8400 = vadd.xlane.f32.xlu0 %v8399
        %v8401 = vpop.xlane.xlu0 %8400
        %v8402 = vsel %vm2067, %v8391, 0.0
        %8403 = vadd.xlane.f32.xlu0 %v8402
        %v8404 = vpop.xlane.xlu0 %8403
        %v8405 = vsel %vm2071, %v8392, 0.0
        %8406 = vadd.xlane.f32.xlu0 %v8405
        %v8407 = vpop.xlane.xlu0 %8406
        %v8408 = vmul.f32 %v8395, %v3909
        %v8409 = vmul.f32 %v8398, %v3909
        %v8410 = vmul.f32 %v8401, %v3909
        %v8411 = vmul.f32 %v8404, %v3909
        %v8412 = vmul.f32 %v8407, %v3909
        %v8413 = vrsqrt.pop %v8408
        %v8414 = vmul.f32 %v8408, %v8413
        %vm8415 = vcmp.eq.f32.partialorder %v8408, inf
        %v8416 = vsel %vm8415, %v8408, %v8414
        %vm8417 = vcmp.eq.f32.partialorder %v8408, 0.0
        %v8418 = vand.u32 %v8408, 2147483648
        %v8419 = vsel %vm8417, %v8418, %v8416
        %v8420 = vrsqrt.pop %v8409
        %v8421 = vmul.f32 %v8409, %v8420
        %vm8422 = vcmp.eq.f32.partialorder %v8409, inf
        %v8423 = vsel %vm8422, %v8409, %v8421
        %vm8424 = vcmp.eq.f32.partialorder %v8409, 0.0
        %v8425 = vand.u32 %v8409, 2147483648
        %v8426 = vsel %vm8424, %v8425, %v8423
        %v8427 = vrsqrt.pop %v8410
        %v8428 = vmul.f32 %v8410, %v8427
        %vm8429 = vcmp.eq.f32.partialorder %v8410, inf
        %v8430 = vsel %vm8429, %v8410, %v8428
        %vm8431 = vcmp.eq.f32.partialorder %v8410, 0.0
        %v8432 = vand.u32 %v8410, 2147483648
        %v8433 = vsel %vm8431, %v8432, %v8430
        %v8434 = vrsqrt.pop %v8411
        %v8435 = vmul.f32 %v8411, %v8434
        %vm8436 = vcmp.eq.f32.partialorder %v8411, inf
        %v8437 = vsel %vm8436, %v8411, %v8435
        %vm8438 = vcmp.eq.f32.partialorder %v8411, 0.0
        %v8439 = vand.u32 %v8411, 2147483648
        %v8440 = vsel %vm8438, %v8439, %v8437
        %v8441 = vrsqrt.pop %v8412
        %v8442 = vmul.f32 %v8412, %v8441
        %vm8443 = vcmp.eq.f32.partialorder %v8412, inf
        %v8444 = vsel %vm8443, %v8412, %v8442
        %vm8445 = vcmp.eq.f32.partialorder %v8412, 0.0
        %v8446 = vand.u32 %v8412, 2147483648
        %v8447 = vsel %vm8445, %v8446, %v8444
        %v8448 = vadd.f32 %v8419, 1e-06
        %v8449 = vadd.f32 %v8426, 1e-06
        %v8450 = vadd.f32 %v8433, 1e-06
        %v8451 = vadd.f32 %v8440, 1e-06
        %v8452 = vadd.f32 %v8447, 1e-06
        %v8453 = vrcp.pop %v8448
        %v8454 = vmul.f32 1.0, %v8453
        %v8455 = vrcp.pop %v8449
        %v8456 = vmul.f32 1.0, %v8455
        %v8457 = vrcp.pop %v8450
        %v8458 = vmul.f32 1.0, %v8457
        %v8459 = vrcp.pop %v8451
        %v8460 = vmul.f32 1.0, %v8459
        %v8461 = vrcp.pop %v8452
        %v8462 = vmul.f32 1.0, %v8461
        %v8463 = vlaneseq
        %v8464 = vshrl.u32 %v8463, 7
        %v8465 = vsub.s32 3, %v8464
        %v8466 = vrot.slane %v2035, %v8465
        %v8467 = vmul.f32 %v8466, %v8383
        %v8468 = vmul.f32 %v8466, %v8384
        %v8469 = vmul.f32 %v8466, %v8385
        %v8470 = vmul.f32 %v8466, %v8386
        %v8471 = vmul.f32 %v8466, %v8387
        %v8472 = vmul.f32 %v8467, %v8454
        %v8473 = vmul.f32 %v8468, %v8456
        %v8474 = vmul.f32 %v8469, %v8458
        %v8475 = vmul.f32 %v8470, %v8460
        %v8476 = vmul.f32 %v8471, %v8462
        %v8477 = vlaneseq
        %v8478 = vshrl.u32 %v8477, 7
        %v8479 = vsub.s32 3, %v8478
        %v8480 = vrot.slane %v2036, %v8479
        %v8481 = vadd.f32 %v8472, %v8480
        %v8482 = vadd.f32 %v8473, %v8480
        %v8483 = vadd.f32 %v8474, %v8480
        %v8484 = vadd.f32 %v8475, %v8480
        %v8485 = vadd.f32 %v8476, %v8480
        %8486 = vst.msk [vmem:[#allocation2] sm:$0xff] %vm2067, %v8481
        %8487 = vst.msk [vmem:[#allocation2 + $0x8] sm:$0xff] %vm2067, %v8482
        %8488 = vst.msk [vmem:[#allocation2 + $0x10] sm:$0xff] %vm2067, %v8483
        %8489 = vst.msk [vmem:[#allocation2 + $0x18] sm:$0xff] %vm2067, %v8484
        %8490 = vst.msk [vmem:[#allocation2 + $0x20] sm:$0xf] %vm2071, %v8485
        %p8491 = scmp.eq.s32.totalorder %s113, 1
        // Predicated region
        $region289: #{_lambda_.1} parent=219 // pred_check
          %p8492 = pneg %p8491
        $region290: #{_lambda_.1} parent=219 // pred_check_branch
          %8494 = sbr.rel (%p8492) target = $region292
        $region291: #{_lambda_.1} parent=219 // pred_region
          %8495 = vst.msk [vmem:[%s1916] sm:$0xff] %vm2067, %v8481
          %8496 = vst.msk [vmem:[%s1916 + $0x8] sm:$0xff] %vm2067, %v8482
          %8497 = vst.msk [vmem:[%s2013] sm:$0xff] %vm2067, %v8483
          %8498 = vst.msk [vmem:[%s2013 + $0x8] sm:$0xff] %vm2067, %v8484
          %8499 = vst.msk [vmem:[%s2013 + $0x10] sm:$0xf] %vm2071, %v8485
        $region292: #{_lambda_.1} parent=219 // pred_fallthru
          _
        %s8500 = sand.u32 %s986, 1
        %s8501 = scalar_lea.sflag [#allocation7], %s8500
        %s8502 = sand.u32 %s986, 1
        %s8503 = smul.addr %s8502, 16
        %s8504 = scalar_lea.vmem [#allocation28], %s8503
        %p8505 = scmp.lt.s32.totalorder %s112, 1
        %s8506 = scalar_select %p8505, %s112, 1
        %s8507 = smul.addr %s8506, 3
        %s8508 = smul.addr %s8507, 8
        %s8509 = scalar_lea.vmem %s69, %s8508
        // Predicated region
        $region293: #{_lambda_.1} parent=219 // pred_check
          %p8510 = pneg %p996
        $region294: #{_lambda_.1} parent=219 // pred_check_branch
          %8512 = sbr.rel (%p8510) target = $region296
        $region295: #{_lambda_.1} parent=219 // pred_region
          %s8514 = ssub.s32 256, 256
          %8515 = vsyncadd %s8501, %s8514
          %s8516 = smul.addr %s112, 2
          %s8517 = smul.addr %s8516, 128
          %s8518 = scalar_lea.hbm %s67, %s8517
          %s8519 = sshll.u32 %s8504, 4
          %s8520 = int_to_ptr.vmem [resolvable:$true] %s8519
          %8525 = dma.vmem_to_hbm [thread:$0]  %s8520, 256, %s8518, %s8501, 128, 128, 8
        $region296: #{_lambda_.1} parent=219 // pred_fallthru
          _
        // Predicated region
        $region297: #{_lambda_.1} parent=219 // pred_check
          %p8526 = pneg %p1022
        $region298: #{_lambda_.1} parent=219 // pred_check_branch
          %8528 = sbr.rel (%p8526) target = $region300
        $region299: #{_lambda_.1} parent=219 // pred_region
          _
        $region300: #{_lambda_.1} parent=219 // pred_fallthru
          _
      $region220: #{_lambda_.1} parent=5 // pred_fallthru
        _
      %p8529 = scmp.le.s32.totalorder 2, %s103
      // Predicated region
      $region301: #{_lambda_.1} parent=5 // pred_check
        %p8530 = pneg %p8529
      $region302: #{_lambda_.1} parent=5 // pred_check_branch
        %8532 = sbr.rel (%p8530) target = $region304
      $region303: #{_lambda_.1} parent=5 // pred_region
        %s8533 = ssub.s32 %s103, 2
        // Predicated region
        $region305: #{_lambda_.1} parent=303 // pred_check
          %p8534 = pneg %p1002
        $region306: #{_lambda_.1} parent=303 // pred_check_branch
          %8536 = sbr.rel (%p8534) target = $region308
        $region307: #{_lambda_.1} parent=303 // pred_region
          %s8537 = sand.u32 %s987, 1
          %s8538 = scalar_lea.sflag [#allocation7], %s8537
          %s8539 = sand.u32 %s987, 1
          %s8540 = smul.addr %s8539, 16
          %s8541 = scalar_lea.vmem [#allocation28], %s8540
          %8542 = dma.done %s8538, 256
        $region308: #{_lambda_.1} parent=303 // pred_fallthru
          _
        // Predicated region
        $region309: #{_lambda_.1} parent=303 // pred_check
          %p8543 = pneg %p1028
        $region310: #{_lambda_.1} parent=303 // pred_check_branch
          %8545 = sbr.rel (%p8543) target = $region312
        $region311: #{_lambda_.1} parent=303 // pred_region
          %p8546 = scmp.lt.s32.totalorder %s114, 1
          %s8547 = scalar_select %p8546, %s114, 1
          %s8548 = smul.addr %s8547, 3
          %s8549 = smul.addr %s8548, 8
          %s8550 = scalar_lea.vmem %s69, %s8549
        $region312: #{_lambda_.1} parent=303 // pred_fallthru
          _
      $region304: #{_lambda_.1} parent=5 // pred_fallthru
        _
    $region6: #{_lambda_.1} parent=1 // loop_footer
      %s107 = sadd.s32 1, %s103
    $region7: #{_lambda_.1} parent=1 // loop_footer_branch
      %102 = sbr.rel target = $region3
    $region8: #{_lambda_.1} parent=1 // loop_exit
      _
    %8551 = vsyncpa [#allocation6], 1
    %s8552 = scalar_lea.sflag [#allocation6], 1
    %8553 = vsyncpa %s8552, 1
    %8554 = vsyncpa [#allocation9], 1
    %s8555 = scalar_lea.sflag [#allocation9], 1
    %8556 = vsyncpa %s8555, 1
    %8557 = vsyncpa [#allocation12], 1
    %s8558 = scalar_lea.sflag [#allocation12], 1
    %8559 = vsyncpa %s8558, 1
    %8560 = vsyncpa [#allocation15], 1
    %s8561 = scalar_lea.sflag [#allocation15], 1
    %8562 = vsyncpa %s8561, 1
    %8563 = vsyncpa [#allocation18], 1
    %s8564 = scalar_lea.sflag [#allocation18], 1
    %8565 = vsyncpa %s8564, 1
    %8566 = vsyncpa [#allocation21], 1
    %s8567 = scalar_lea.sflag [#allocation21], 1
    %8568 = vsyncpa %s8567, 1
    %8569 = vsyncpa [#allocation24], 1
    %s8570 = scalar_lea.sflag [#allocation24], 1
    %8571 = vsyncpa %s8570, 1
    %8572 = vsyncpa [#allocation27], 1
    %s8573 = scalar_lea.sflag [#allocation27], 1
    %8574 = vsyncpa %s8573, 1
    %8575 = vsyncpa [#allocation7], 1
    %s8576 = scalar_lea.sflag [#allocation7], 1
    %8577 = vsyncpa %s8576, 1

</llo_original>
